<compile_context>
chip_gen: v6e
topology: v6e:2x2x1
jax: 0.10.0
libtpu: 0.0.40
codegen_flags: <defaults>
</compile_context>

<pallas_src>
import functools
import jax
import jax.numpy as jnp
from jax.experimental import pallas as pl
from jax.experimental.pallas import tpu as pltpu

# --------------------------- synthetic config -------------------------------
BATCH = 2
RAW_LEN = 320                          # raw audio samples
CONV_LAYERS = [(128, 10, 5),           # (out_channels, kernel, stride)
               (128, 3, 2)]
CONV_DIM = 128                         # feature-extractor output channels
HIDDEN = 128                           # encoder hidden size ("num_features")
NUM_HEADS = 2
HEAD_DIM = HIDDEN // NUM_HEADS
FFN_DIM = 512
NUM_LAYERS = 2
POS_CONV_KERNEL = 4
POS_CONV_GROUPS = 4
EPS = 1e-5


def _gelu(x):
    # TODO(synk): HF wav2vec2 uses exact erf-GELU; tanh approximation kept for Mosaic-safe lowering.
    return jax.nn.gelu(x, approximate=True)


def _ln(x, g, b):
    mu = jnp.mean(x, axis=-1, keepdims=True)
    var = jnp.mean(jnp.square(x - mu), axis=-1, keepdims=True)
    return (x - mu) * jax.lax.rsqrt(var + EPS) * g + b


def _bf16_dot(a, w, bias=None):
    y = jnp.dot(a.astype(jnp.bfloat16), w.astype(jnp.bfloat16),
                preferred_element_type=jnp.float32)
    if bias is not None:
        y = y + bias
    return y


# ----------------------- weight layout preprocessing ------------------------
def strided_tap_weights(w, stride):
    """torch Conv1d weight (Cout, Cin, K) with stride s -> taps (J, s*Cin, Cout)
    so that out[t] = sum_j x_reshaped[t + j, :] @ taps[j],
    where x_reshaped[m, r*Cin + ci] = x[m*s + r, ci]."""
    c_out, c_in, k = w.shape
    j = -(-k // stride)
    wp = jnp.pad(w, ((0, 0), (0, 0), (0, j * stride - k)))
    wr = wp.reshape(c_out, c_in, j, stride)
    wr = jnp.transpose(wr, (2, 3, 1, 0))          # (J, r, Cin, Cout)
    return wr.reshape(j, stride * c_in, c_out)


def grouped_tap_weights(w, groups):
    """grouped Conv1d weight (Cout, Cin/groups, K) -> (K*G, Cin/g, Cout/g)."""
    c_out, cpg, k = w.shape
    opg = c_out // groups
    wr = w.reshape(groups, opg, cpg, k)           # [g, col, cil, k]
    wr = jnp.transpose(wr, (3, 0, 2, 1))          # (k, g, cil, col)
    return wr.reshape(k * groups, cpg, opg)


# ------------------------------- Pallas kernels -----------------------------
def _conv0_gn_gelu_kernel(x_ref, w_ref, g_ref, b_ref, o_ref, *, taps, l_out):
    """First feature-extractor conv (bias=False) + GroupNorm(C,C) + GELU."""
    x = x_ref[0].astype(jnp.float32)                    # (frames, stride*Cin)
    c_out = w_ref.shape[-1]
    acc = jnp.zeros((l_out, c_out), jnp.float32)
    # Cin=1 raw audio => tiny contraction; kept as small f32 matmuls.
    for j in range(taps):
        acc = acc + jnp.dot(x[j:j + l_out, :], w_ref[j].astype(jnp.float32),
                            preferred_element_type=jnp.float32)
    # GroupNorm(num_groups=C, num_channels=C): per-channel stats over time (sublane axis)
    mu = jnp.mean(acc, axis=0, keepdims=True)
    var = jnp.mean(jnp.square(acc - mu), axis=0, keepdims=True)
    y = (acc - mu) * jax.lax.rsqrt(var + EPS) * g_ref[...] + b_ref[...]
    o_ref[0] = _gelu(y).astype(o_ref.dtype)


def _conv1_gelu_ln_proj_kernel(x_ref, w_ref, lng_ref, lnb_ref, pw_ref, pb_ref,
                               o_ref, *, taps, l_out):
    """Second conv (bias=False) + GELU + feature-projection LayerNorm + Linear."""
    x = x_ref[0].astype(jnp.float32)                    # (frames, stride*Cin)
    acc = jnp.zeros((l_out, w_ref.shape[-1]), jnp.float32)
    for j in range(taps):
        acc = acc + _bf16_dot(x[j:j + l_out, :], w_ref[j])
    y = _gelu(acc)
    y = _ln(y, lng_ref[...], lnb_ref[...])              # feature-projection LN (f32)
    y = _bf16_dot(y, pw_ref[...], pb_ref[...])          # projection to HIDDEN
    o_ref[0] = y.astype(o_ref.dtype)


def _posconv_encln_kernel(x_ref, w_ref, pb_ref, g_ref, b_ref, o_ref,
                          *, kernel, groups, cpg, seq):
    """Grouped positional conv + GELU + residual add + encoder pre-layer LayerNorm."""
    x = x_ref[0].astype(jnp.float32)                    # (seq + kernel, H), time-padded
    pad = kernel // 2
    res = x[pad:pad + seq, :]
    group_out = []
    for g in range(groups):                             # true grouped conv: per-group matmuls
        acc = jnp.zeros((seq, w_ref.shape[-1]), jnp.float32)
        for k in range(kernel):
            xg = x[k:k + seq, g * cpg:(g + 1) * cpg]
            acc = acc + _bf16_dot(xg, w_ref[k * groups + g])
        group_out.append(acc)
    pos = jnp.concatenate(group_out, axis=-1) + pb_ref[...]
    # even kernel: SamePad removes the last frame -> only `seq` frames computed
    y = res + _gelu(pos)
    y = _ln(y, g_ref[...], b_ref[...])                  # encoder LayerNorm
    o_ref[0] = y.astype(o_ref.dtype)


def _encoder_layer_kernel(h_ref, qkvw_ref, qkvb_ref, ow_ref, ob_ref,
                          ln1g_ref, ln1b_ref, f1w_ref, f1b_ref, f2w_ref,
                          f2b_ref, ln2g_ref, ln2b_ref, o_ref,
                          *, num_heads, head_dim):
    """Whole post-norm wav2vec2 encoder layer fused into one kernel per batch."""
    x = h_ref[0].astype(jnp.float32)                    # (T, H)
    hid = x.shape[-1]
    qkv = _bf16_dot(x, qkvw_ref[...], qkvb_ref[...])    # fused Q|K|V: (T, 3H)
    scale = 1.0 / float(head_dim) ** 0.5
    q = qkv[:, 0:hid] * scale
    k = qkv[:, hid:2 * hid]
    v = qkv[:, 2 * hid:3 * hid]
    ctx_heads = []
    for hd in range(num_heads):                         # all heads in one invocation
        lo, hi = hd * head_dim, (hd + 1) * head_dim
        qh = q[:, lo:hi].astype(jnp.bfloat16)
        kh = k[:, lo:hi].astype(jnp.bfloat16)
        vh = v[:, lo:hi].astype(jnp.bfloat16)
        s = jax.lax.dot_general(qh, kh, (((1,), (1,)), ((), ())),
                                preferred_element_type=jnp.float32)
        s = s - jnp.max(s, axis=-1, keepdims=True)
        p = jnp.exp(s)
        p = p * pl.reciprocal(jnp.sum(p, axis=-1, keepdims=True), approx=True)
        ctx_heads.append(jnp.dot(p.astype(jnp.bfloat16), vh,
                                 preferred_element_type=jnp.float32))
    ctx = jnp.concatenate(ctx_heads, axis=-1)           # (T, H) lane-dense
    attn = _bf16_dot(ctx, ow_ref[...], ob_ref[...])
    x = _ln(x + attn, ln1g_ref[...], ln1b_ref[...])     # post-norm
    ff = _gelu(_bf16_dot(x, f1w_ref[...], f1b_ref[...]))
    ff = _bf16_dot(ff, f2w_ref[...], f2b_ref[...])
    x = _ln(x + ff, ln2g_ref[...], ln2b_ref[...])
    o_ref[0] = x.astype(o_ref.dtype)


# ----------------------------- pallas_call wrappers --------------------------
_PARALLEL = pltpu.CompilerParams(dimension_semantics=("parallel",))


def _rep_spec(arr):
    nd = arr.ndim
    return pl.BlockSpec(arr.shape, lambda i, _n=nd: (0,) * _n)


def _batched_spec(shape):
    nd = len(shape)
    return pl.BlockSpec((1,) + tuple(shape[1:]),
                        lambda i, _n=nd: (i,) + (0,) * (_n - 1))


def feature_extractor(x, p):
    """x: (B, RAW_LEN) raw waveform -> projected hidden states (B, T, HIDDEN)."""
    b, length = x.shape
    c0, k0, s0 = CONV_LAYERS[0]
    taps0 = p["conv0_taps"]
    j0 = taps0.shape[0]
    l_out0 = (length - k0) // s0 + 1
    need0 = (l_out0 + j0 - 1) * s0
    xp = x[:, :need0] if need0 <= length else jnp.pad(x, ((0, 0), (0, need0 - length)))
    xr = xp.reshape(b, need0 // s0, s0)                 # stride folded into lanes (no im2col)
    h = pl.pallas_call(
        functools.partial(_conv0_gn_gelu_kernel, taps=j0, l_out=l_out0),
        out_shape=jax.ShapeDtypeStruct((b, l_out0, c0), jnp.float32),
        grid=(b,),
        in_specs=[_batched_spec(xr.shape), _rep_spec(taps0),
                  _rep_spec(p["gn_g2"]), _rep_spec(p["gn_b2"])],
        out_specs=_batched_spec((b, l_out0, c0)),
        compiler_params=_PARALLEL,
    )(xr, taps0, p["gn_g2"], p["gn_b2"])

    c1, k1, s1 = CONV_LAYERS[1]
    taps1 = p["conv1_taps"]
    j1 = taps1.shape[0]
    l_out1 = (l_out0 - k1) // s1 + 1
    need1 = (l_out1 + j1 - 1) * s1
    hp = h[:, :need1, :] if need1 <= l_out0 else jnp.pad(
        h, ((0, 0), (0, need1 - l_out0), (0, 0)))
    hr = hp.reshape(b, need1 // s1, s1 * c0)
    out = pl.pallas_call(
        functools.partial(_conv1_gelu_ln_proj_kernel, taps=j1, l_out=l_out1),
        out_shape=jax.ShapeDtypeStruct((b, l_out1, HIDDEN), jnp.float32),
        grid=(b,),
        in_specs=[_batched_spec(hr.shape), _rep_spec(taps1),
                  _rep_spec(p["fp_ln_g2"]), _rep_spec(p["fp_ln_b2"]),
                  _rep_spec(p["fp_w"]), _rep_spec(p["fp_b2"])],
        out_specs=_batched_spec((b, l_out1, HIDDEN)),
        compiler_params=_PARALLEL,
    )(hr, taps1, p["fp_ln_g2"], p["fp_ln_b2"], p["fp_w"], p["fp_b2"])
    return out


def pos_conv_encoder_prenorm(h, p):
    b, t, hdim = h.shape
    k = POS_CONV_KERNEL
    pad = k // 2
    hp = jnp.pad(h, ((0, 0), (pad, pad), (0, 0)))
    taps = p["pos_taps"]
    cpg = hdim // POS_CONV_GROUPS
    return pl.pallas_call(
        functools.partial(_posconv_encln_kernel, kernel=k,
                          groups=POS_CONV_GROUPS, cpg=cpg, seq=t),
        out_shape=jax.ShapeDtypeStruct((b, t, hdim), jnp.float32),
        grid=(b,),
        in_specs=[_batched_spec(hp.shape), _rep_spec(taps),
                  _rep_spec(p["pos_b2"]), _rep_spec(p["enc_ln_g2"]),
                  _rep_spec(p["enc_ln_b2"])],
        out_specs=_batched_spec((b, t, hdim)),
        compiler_params=_PARALLEL,
    )(hp, taps, p["pos_b2"], p["enc_ln_g2"], p["enc_ln_b2"])


def encoder_layer(h, lp):
    b, t, hdim = h.shape
    weights = (lp["qkv_w"], lp["qkv_b2"], lp["o_w"], lp["o_b2"],
               lp["ln1_g2"], lp["ln1_b2"], lp["ff1_w"], lp["ff1_b2"],
               lp["ff2_w"], lp["ff2_b2"], lp["ln2_g2"], lp["ln2_b2"])
    return pl.pallas_call(
        functools.partial(_encoder_layer_kernel,
                          num_heads=NUM_HEADS, head_dim=HEAD_DIM),
        out_shape=jax.ShapeDtypeStruct((b, t, hdim), jnp.float32),
        grid=(b,),
        in_specs=[_batched_spec((b, t, hdim))] + [_rep_spec(w) for w in weights],
        out_specs=_batched_spec((b, t, hdim)),
        compiler_params=_PARALLEL,
    )(h, *weights)


def wav2vec2_forward(x, p):
    """x: (B, RAW_LEN) == Wav2Vec2Model input_values.
    Returns last_hidden_state (B, T, HIDDEN); head is None (num_classes=None)."""
    h = feature_extractor(x, p)               # conv stack + feature projection
    h = pos_conv_encoder_prenorm(h, p)        # pos-conv embed + residual + LN
    for lp in p["layers"]:                    # post-norm transformer layers
        h = encoder_layer(h, lp)
    return h


# ------------------------------ param init ----------------------------------
def init_params(key):
    keys = [key]

    def nxt():
        keys[0], sub = jax.random.split(keys[0])
        return sub

    def normal(shape, scale=0.02):
        return (scale * jax.random.normal(nxt(), shape)).astype(jnp.float32)

    def row(v):
        return v.reshape(1, -1)

    p = {}
    # feature-extractor convs (torch weight layout (Cout, Cin, K), bias=False)
    w0 = normal((CONV_LAYERS[0][0], 1, CONV_LAYERS[0][1]))
    w1 = normal((CONV_LAYERS[1][0], CONV_LAYERS[0][0], CONV_LAYERS[1][1]))
    p["conv0_taps"] = strided_tap_weights(w0, CONV_LAYERS[0][2])
    p["conv1_taps"] = strided_tap_weights(w1, CONV_LAYERS[1][2])
    p["gn_g2"] = row(jnp.ones((CONV_DIM,), jnp.float32))
    p["gn_b2"] = row(jnp.zeros((CONV_DIM,), jnp.float32))
    # feature projection
    p["fp_ln_g2"] = row(jnp.ones((CONV_DIM,), jnp.float32))
    p["fp_ln_b2"] = row(jnp.zeros((CONV_DIM,), jnp.float32))
    p["fp_w"] = normal((CONV_DIM, HIDDEN))
    p["fp_b2"] = row(jnp.zeros((HIDDEN,), jnp.float32))
    # positional conv embedding (weight-norm reparameterization materialized)
    w_pos = normal((HIDDEN, HIDDEN // POS_CONV_GROUPS, POS_CONV_KERNEL))
    p["pos_taps"] = grouped_tap_weights(w_pos, POS_CONV_GROUPS)
    p["pos_b2"] = row(jnp.zeros((HIDDEN,), jnp.float32))
    p["enc_ln_g2"] = row(jnp.ones((HIDDEN,), jnp.float32))
    p["enc_ln_b2"] = row(jnp.zeros((HIDDEN,), jnp.float32))
    # transformer layers (fused Q|K|V weight)
    layers = []
    for _ in range(NUM_LAYERS):
        layers.append(dict(
            qkv_w=normal((HIDDEN, 3 * HIDDEN)),
            qkv_b2=row(jnp.zeros((3 * HIDDEN,), jnp.float32)),
            o_w=normal((HIDDEN, HIDDEN)),
            o_b2=row(jnp.zeros((HIDDEN,), jnp.float32)),
            ln1_g2=row(jnp.ones((HIDDEN,), jnp.float32)),
            ln1_b2=row(jnp.zeros((HIDDEN,), jnp.float32)),
            ff1_w=normal((HIDDEN, FFN_DIM)),
            ff1_b2=row(jnp.zeros((FFN_DIM,), jnp.float32)),
            ff2_w=normal((FFN_DIM, HIDDEN)),
            ff2_b2=row(jnp.zeros((HIDDEN,), jnp.float32)),
            ln2_g2=row(jnp.ones((HIDDEN,), jnp.float32)),
            ln2_b2=row(jnp.zeros((HIDDEN,), jnp.float32)),
        ))
    p["layers"] = layers
    return p


if __name__ == "__main__":
    key = jax.random.PRNGKey(0)
    pkey, xkey = jax.random.split(key)
    params = init_params(pkey)
    x = jax.random.normal(xkey, (BATCH, RAW_LEN), dtype=jnp.float32)

    fwd = jax.jit(wav2vec2_forward)
    out = jax.block_until_ready(fwd(x, params))

    # frames: (320-10)//5+1 = 63 -> (63-3)//2+1 = 31
    assert out.shape == (BATCH, 31, HIDDEN), out.shape
    assert bool(jnp.all(jnp.isfinite(out)))
    print("KERNEL_OK")
</pallas_src>

<mosaic_0001>
module attributes {stable_mosaic.version = 11 : i64} {
  func.func @_conv0_gn_gelu_kernel(%arg0: i32, %arg1: memref<1x64x5xf32, #tpu.memory_space<vmem>>, %arg2: memref<2x5x128xf32, #tpu.memory_space<vmem>>, %arg3: memref<1x128xf32, #tpu.memory_space<vmem>>, %arg4: memref<1x128xf32, #tpu.memory_space<vmem>>, %arg5: memref<1x63x128xf32, #tpu.memory_space<vmem>>) attributes {dimension_semantics = [#tpu.dimension_semantics<parallel>], iteration_bounds = array<i64: 2>, scalar_prefetch = 0 : i64, scratch_operands = 0 : i64, tpu.core_type = #tpu.core_type<tc>, window_params = [{transform_indices = @transform_0, window_bounds = array<i64: 1, 64, 5>}, {pipeline_mode = #tpu.pipeline_mode<synchronous>, transform_indices = @transform_1, window_bounds = array<i64: 2, 5, 128>}, {pipeline_mode = #tpu.pipeline_mode<synchronous>, transform_indices = @transform_2, window_bounds = array<i64: 1, 128>}, {pipeline_mode = #tpu.pipeline_mode<synchronous>, transform_indices = @transform_3, window_bounds = array<i64: 1, 128>}, {transform_indices = @transform_4, window_bounds = array<i64: 1, 63, 128>}]} {
    %c0 = arith.constant 0 : index
    %c0_0 = arith.constant 0 : index
    %c0_1 = arith.constant 0 : index
    %0 = vector.load %arg1[%c0, %c0_0, %c0_1] : memref<1x64x5xf32, #tpu.memory_space<vmem>>, vector<1x64x5xf32>
    %1 = vector.shape_cast %0 : vector<1x64x5xf32> to vector<64x5xf32>
    %cst = arith.constant 0.000000e+00 : f32
    %2 = vector.broadcast %cst : f32 to vector<63x128xf32>
    %3 = vector.extract_strided_slice %1 {offsets = [0, 0], sizes = [63, 5], strides = [1, 1]} : vector<64x5xf32> to vector<63x5xf32>
    %c0_2 = arith.constant 0 : index
    %c0_3 = arith.constant 0 : index
    %c0_4 = arith.constant 0 : index
    %4 = vector.load %arg2[%c0_2, %c0_3, %c0_4] : memref<2x5x128xf32, #tpu.memory_space<vmem>>, vector<1x5x128xf32>
    %5 = vector.shape_cast %4 : vector<1x5x128xf32> to vector<5x128xf32>
    %cst_5 = arith.constant dense<0.000000e+00> : vector<63x128xf32>
    %6 = tpu.matmul %3, %5, %cst_5 {dimension_numbers = #tpu.dot_dimension_numbers<[1], [0], [0], [1], [0, 0, 1, 1], [], []>} : vector<63x5xf32>, vector<5x128xf32>, vector<63x128xf32> -> vector<63x128xf32>
    %7 = arith.addf %2, %6 : vector<63x128xf32>
    %8 = vector.extract_strided_slice %1 {offsets = [1, 0], sizes = [63, 5], strides = [1, 1]} : vector<64x5xf32> to vector<63x5xf32>
    %c1 = arith.constant 1 : index
    %c0_6 = arith.constant 0 : index
    %c0_7 = arith.constant 0 : index
    %9 = vector.load %arg2[%c1, %c0_6, %c0_7] : memref<2x5x128xf32, #tpu.memory_space<vmem>>, vector<1x5x128xf32>
    %10 = vector.shape_cast %9 : vector<1x5x128xf32> to vector<5x128xf32>
    %cst_8 = arith.constant dense<0.000000e+00> : vector<63x128xf32>
    %11 = tpu.matmul %8, %10, %cst_8 {dimension_numbers = #tpu.dot_dimension_numbers<[1], [0], [0], [1], [0, 0, 1, 1], [], []>} : vector<63x5xf32>, vector<5x128xf32>, vector<63x128xf32> -> vector<63x128xf32>
    %12 = arith.addf %7, %11 : vector<63x128xf32>
    %cst_9 = arith.constant dense<0.000000e+00> : vector<128xf32>
    %13 = vector.multi_reduction <add>, %12, %cst_9 [0] : vector<63x128xf32> to vector<128xf32>
    %14 = vector.shape_cast %13 : vector<128xf32> to vector<1x128xf32>
    %cst_10 = arith.constant 6.300000e+01 : f32
    %15 = vector.broadcast %cst_10 : f32 to vector<1x128xf32>
    %16 = arith.divf %14, %15 : vector<1x128xf32>
    %17 = vector.broadcast %16 : vector<1x128xf32> to vector<63x128xf32>
    %18 = arith.subf %12, %17 : vector<63x128xf32>
    %19 = arith.mulf %18, %18 : vector<63x128xf32>
    %cst_11 = arith.constant dense<0.000000e+00> : vector<128xf32>
    %20 = vector.multi_reduction <add>, %19, %cst_11 [0] : vector<63x128xf32> to vector<128xf32>
    %21 = vector.shape_cast %20 : vector<128xf32> to vector<1x128xf32>
    %cst_12 = arith.constant 6.300000e+01 : f32
    %22 = vector.broadcast %cst_12 : f32 to vector<1x128xf32>
    %23 = arith.divf %21, %22 : vector<1x128xf32>
    %24 = vector.broadcast %16 : vector<1x128xf32> to vector<63x128xf32>
    %25 = arith.subf %12, %24 : vector<63x128xf32>
    %cst_13 = arith.constant 9.99999974E-6 : f32
    %26 = vector.broadcast %cst_13 : f32 to vector<1x128xf32>
    %27 = arith.addf %23, %26 : vector<1x128xf32>
    %28 = math.rsqrt %27 : vector<1x128xf32>
    %29 = vector.broadcast %28 : vector<1x128xf32> to vector<63x128xf32>
    %30 = arith.mulf %25, %29 : vector<63x128xf32>
    %c0_14 = arith.constant 0 : index
    %c0_15 = arith.constant 0 : index
    %31 = vector.load %arg3[%c0_14, %c0_15] : memref<1x128xf32, #tpu.memory_space<vmem>>, vector<1x128xf32>
    %32 = vector.broadcast %31 : vector<1x128xf32> to vector<63x128xf32>
    %33 = arith.mulf %30, %32 : vector<63x128xf32>
    %c0_16 = arith.constant 0 : index
    %c0_17 = arith.constant 0 : index
    %34 = vector.load %arg4[%c0_16, %c0_17] : memref<1x128xf32, #tpu.memory_space<vmem>>, vector<1x128xf32>
    %35 = vector.broadcast %34 : vector<1x128xf32> to vector<63x128xf32>
    %36 = arith.addf %33, %35 : vector<63x128xf32>
    %37 = arith.mulf %36, %36 : vector<63x128xf32>
    %38 = arith.mulf %36, %37 : vector<63x128xf32>
    %cst_18 = arith.constant 4.471500e-02 : f32
    %39 = vector.broadcast %cst_18 : f32 to vector<63x128xf32>
    %40 = arith.mulf %39, %38 : vector<63x128xf32>
    %41 = arith.addf %36, %40 : vector<63x128xf32>
    %cst_19 = arith.constant 0.797884583 : f32
    %42 = vector.broadcast %cst_19 : f32 to vector<63x128xf32>
    %43 = arith.mulf %42, %41 : vector<63x128xf32>
    %44 = math.tanh %43 : vector<63x128xf32>
    %cst_20 = arith.constant 1.000000e+00 : f32
    %45 = vector.broadcast %cst_20 : f32 to vector<63x128xf32>
    %46 = arith.addf %45, %44 : vector<63x128xf32>
    %cst_21 = arith.constant 5.000000e-01 : f32
    %47 = vector.broadcast %cst_21 : f32 to vector<63x128xf32>
    %48 = arith.mulf %47, %46 : vector<63x128xf32>
    %49 = arith.mulf %36, %48 : vector<63x128xf32>
    %c0_22 = arith.constant 0 : index
    %c0_23 = arith.constant 0 : index
    %c0_24 = arith.constant 0 : index
    %50 = vector.load %arg5[%c0_22, %c0_23, %c0_24] : memref<1x63x128xf32, #tpu.memory_space<vmem>>, vector<1x63x128xf32>
    %51 = vector.shape_cast %50 : vector<1x63x128xf32> to vector<63x128xf32>
    %52 = vector.shape_cast %49 : vector<63x128xf32> to vector<1x63x128xf32>
    tpu.vector_store %arg5[%c0_22, %c0_23, %c0_24], %52 {strides = array<i32>} : memref<1x63x128xf32, #tpu.memory_space<vmem>>, vector<1x63x128xf32>,
    return
  }
  func.func @transform_0(%arg0: i32) -> (i32, i32, i32) {
    %c0_i32 = arith.constant 0 : i32
    %c0_i32_0 = arith.constant 0 : i32
    %c0_i32_1 = arith.constant 0 : i32
    return %arg0, %c0_i32, %c0_i32_0 : i32, i32, i32
  }
  func.func @transform_1(%arg0: i32) -> (i32, i32, i32) {
    %c0_i32 = arith.constant 0 : i32
    %c0_i32_0 = arith.constant 0 : i32
    %c0_i32_1 = arith.constant 0 : i32
    %c0_i32_2 = arith.constant 0 : i32
    return %c0_i32, %c0_i32_0, %c0_i32_1 : i32, i32, i32
  }
  func.func @transform_2(%arg0: i32) -> (i32, i32) {
    %c0_i32 = arith.constant 0 : i32
    %c0_i32_0 = arith.constant 0 : i32
    %c0_i32_1 = arith.constant 0 : i32
    return %c0_i32, %c0_i32_0 : i32, i32
  }
  func.func @transform_3(%arg0: i32) -> (i32, i32) {
    %c0_i32 = arith.constant 0 : i32
    %c0_i32_0 = arith.constant 0 : i32
    %c0_i32_1 = arith.constant 0 : i32
    return %c0_i32, %c0_i32_0 : i32, i32
  }
  func.func @transform_4(%arg0: i32) -> (i32, i32, i32) {
    %c0_i32 = arith.constant 0 : i32
    %c0_i32_0 = arith.constant 0 : i32
    %c0_i32_1 = arith.constant 0 : i32
    return %arg0, %c0_i32, %c0_i32_0 : i32, i32, i32
  }
}

module attributes {stable_mosaic.version = 11 : i64} {
  func.func @_conv1_gelu_ln_proj_kernel(%arg0: i32, %arg1: memref<1x32x256xf32, #tpu.memory_space<vmem>>, %arg2: memref<2x256x128xf32, #tpu.memory_space<vmem>>, %arg3: memref<1x128xf32, #tpu.memory_space<vmem>>, %arg4: memref<1x128xf32, #tpu.memory_space<vmem>>, %arg5: memref<128x128xf32, #tpu.memory_space<vmem>>, %arg6: memref<1x128xf32, #tpu.memory_space<vmem>>, %arg7: memref<1x31x128xf32, #tpu.memory_space<vmem>>) attributes {dimension_semantics = [#tpu.dimension_semantics<parallel>], iteration_bounds = array<i64: 2>, scalar_prefetch = 0 : i64, scratch_operands = 0 : i64, tpu.core_type = #tpu.core_type<tc>, window_params = [{transform_indices = @transform_0, window_bounds = array<i64: 1, 32, 256>}, {pipeline_mode = #tpu.pipeline_mode<synchronous>, transform_indices = @transform_1, window_bounds = array<i64: 2, 256, 128>}, {pipeline_mode = #tpu.pipeline_mode<synchronous>, transform_indices = @transform_2, window_bounds = array<i64: 1, 128>}, {pipeline_mode = #tpu.pipeline_mode<synchronous>, transform_indices = @transform_3, window_bounds = array<i64: 1, 128>}, {pipeline_mode = #tpu.pipeline_mode<synchronous>, transform_indices = @transform_4, window_bounds = array<i64: 128, 128>}, {pipeline_mode = #tpu.pipeline_mode<synchronous>, transform_indices = @transform_5, window_bounds = array<i64: 1, 128>}, {transform_indices = @transform_6, window_bounds = array<i64: 1, 31, 128>}]} {
    %c0 = arith.constant 0 : index
    %c0_0 = arith.constant 0 : index
    %c0_1 = arith.constant 0 : index
    %0 = vector.load %arg1[%c0, %c0_0, %c0_1] : memref<1x32x256xf32, #tpu.memory_space<vmem>>, vector<1x32x256xf32>
    %1 = vector.shape_cast %0 : vector<1x32x256xf32> to vector<32x256xf32>
    %cst = arith.constant 0.000000e+00 : f32
    %2 = vector.broadcast %cst : f32 to vector<31x128xf32>
    %3 = vector.extract_strided_slice %1 {offsets = [0, 0], sizes = [31, 256], strides = [1, 1]} : vector<32x256xf32> to vector<31x256xf32>
    %c0_2 = arith.constant 0 : index
    %c0_3 = arith.constant 0 : index
    %c0_4 = arith.constant 0 : index
    %4 = vector.load %arg2[%c0_2, %c0_3, %c0_4] : memref<2x256x128xf32, #tpu.memory_space<vmem>>, vector<1x256x128xf32>
    %5 = vector.shape_cast %4 : vector<1x256x128xf32> to vector<256x128xf32>
    %6 = arith.truncf %3 : vector<31x256xf32> to vector<31x256xbf16>
    %7 = arith.truncf %5 : vector<256x128xf32> to vector<256x128xbf16>
    %cst_5 = arith.constant dense<0.000000e+00> : vector<31x128xf32>
    %8 = tpu.matmul %6, %7, %cst_5 {dimension_numbers = #tpu.dot_dimension_numbers<[1], [0], [0], [1], [0, 0, 1, 1], [], []>} : vector<31x256xbf16>, vector<256x128xbf16>, vector<31x128xf32> -> vector<31x128xf32>
    %9 = arith.addf %2, %8 : vector<31x128xf32>
    %10 = vector.extract_strided_slice %1 {offsets = [1, 0], sizes = [31, 256], strides = [1, 1]} : vector<32x256xf32> to vector<31x256xf32>
    %c1 = arith.constant 1 : index
    %c0_6 = arith.constant 0 : index
    %c0_7 = arith.constant 0 : index
    %11 = vector.load %arg2[%c1, %c0_6, %c0_7] : memref<2x256x128xf32, #tpu.memory_space<vmem>>, vector<1x256x128xf32>
    %12 = vector.shape_cast %11 : vector<1x256x128xf32> to vector<256x128xf32>
    %13 = arith.truncf %10 : vector<31x256xf32> to vector<31x256xbf16>
    %14 = arith.truncf %12 : vector<256x128xf32> to vector<256x128xbf16>
    %cst_8 = arith.constant dense<0.000000e+00> : vector<31x128xf32>
    %15 = tpu.matmul %13, %14, %cst_8 {dimension_numbers = #tpu.dot_dimension_numbers<[1], [0], [0], [1], [0, 0, 1, 1], [], []>} : vector<31x256xbf16>, vector<256x128xbf16>, vector<31x128xf32> -> vector<31x128xf32>
    %16 = arith.addf %9, %15 : vector<31x128xf32>
    %17 = arith.mulf %16, %16 : vector<31x128xf32>
    %18 = arith.mulf %16, %17 : vector<31x128xf32>
    %cst_9 = arith.constant 4.471500e-02 : f32
    %19 = vector.broadcast %cst_9 : f32 to vector<31x128xf32>
    %20 = arith.mulf %19, %18 : vector<31x128xf32>
    %21 = arith.addf %16, %20 : vector<31x128xf32>
    %cst_10 = arith.constant 0.797884583 : f32
    %22 = vector.broadcast %cst_10 : f32 to vector<31x128xf32>
    %23 = arith.mulf %22, %21 : vector<31x128xf32>
    %24 = math.tanh %23 : vector<31x128xf32>
    %cst_11 = arith.constant 1.000000e+00 : f32
    %25 = vector.broadcast %cst_11 : f32 to vector<31x128xf32>
    %26 = arith.addf %25, %24 : vector<31x128xf32>
    %cst_12 = arith.constant 5.000000e-01 : f32
    %27 = vector.broadcast %cst_12 : f32 to vector<31x128xf32>
    %28 = arith.mulf %27, %26 : vector<31x128xf32>
    %29 = arith.mulf %16, %28 : vector<31x128xf32>
    %c0_13 = arith.constant 0 : index
    %c0_14 = arith.constant 0 : index
    %30 = vector.load %arg3[%c0_13, %c0_14] : memref<1x128xf32, #tpu.memory_space<vmem>>, vector<1x128xf32>
    %c0_15 = arith.constant 0 : index
    %c0_16 = arith.constant 0 : index
    %31 = vector.load %arg4[%c0_15, %c0_16] : memref<1x128xf32, #tpu.memory_space<vmem>>, vector<1x128xf32>
    %cst_17 = arith.constant dense<0.000000e+00> : vector<31xf32>
    %32 = vector.multi_reduction <add>, %29, %cst_17 [1] : vector<31x128xf32> to vector<31xf32>
    %33 = vector.shape_cast %32 : vector<31xf32> to vector<31x1xf32>
    %cst_18 = arith.constant 1.280000e+02 : f32
    %34 = vector.broadcast %cst_18 : f32 to vector<31x1xf32>
    %35 = arith.divf %33, %34 : vector<31x1xf32>
    %36 = vector.broadcast %35 : vector<31x1xf32> to vector<31x128xf32>
    %37 = arith.subf %29, %36 : vector<31x128xf32>
    %38 = arith.mulf %37, %37 : vector<31x128xf32>
    %cst_19 = arith.constant dense<0.000000e+00> : vector<31xf32>
    %39 = vector.multi_reduction <add>, %38, %cst_19 [1] : vector<31x128xf32> to vector<31xf32>
    %40 = vector.shape_cast %39 : vector<31xf32> to vector<31x1xf32>
    %cst_20 = arith.constant 1.280000e+02 : f32
    %41 = vector.broadcast %cst_20 : f32 to vector<31x1xf32>
    %42 = arith.divf %40, %41 : vector<31x1xf32>
    %43 = vector.broadcast %35 : vector<31x1xf32> to vector<31x128xf32>
    %44 = arith.subf %29, %43 : vector<31x128xf32>
    %cst_21 = arith.constant 9.99999974E-6 : f32
    %45 = vector.broadcast %cst_21 : f32 to vector<31x1xf32>
    %46 = arith.addf %42, %45 : vector<31x1xf32>
    %47 = math.rsqrt %46 : vector<31x1xf32>
    %48 = vector.broadcast %47 : vector<31x1xf32> to vector<31x128xf32>
    %49 = arith.mulf %44, %48 : vector<31x128xf32>
    %50 = vector.broadcast %30 : vector<1x128xf32> to vector<31x128xf32>
    %51 = arith.mulf %49, %50 : vector<31x128xf32>
    %52 = vector.broadcast %31 : vector<1x128xf32> to vector<31x128xf32>
    %53 = arith.addf %51, %52 : vector<31x128xf32>
    %c0_22 = arith.constant 0 : index
    %c0_23 = arith.constant 0 : index
    %54 = vector.load %arg5[%c0_22, %c0_23] : memref<128x128xf32, #tpu.memory_space<vmem>>, vector<128x128xf32>
    %c0_24 = arith.constant 0 : index
    %c0_25 = arith.constant 0 : index
    %55 = vector.load %arg6[%c0_24, %c0_25] : memref<1x128xf32, #tpu.memory_space<vmem>>, vector<1x128xf32>
    %56 = arith.truncf %53 : vector<31x128xf32> to vector<31x128xbf16>
    %57 = arith.truncf %54 : vector<128x128xf32> to vector<128x128xbf16>
    %cst_26 = arith.constant dense<0.000000e+00> : vector<31x128xf32>
    %58 = tpu.matmul %56, %57, %cst_26 {dimension_numbers = #tpu.dot_dimension_numbers<[1], [0], [0], [1], [0, 0, 1, 1], [], []>} : vector<31x128xbf16>, vector<128x128xbf16>, vector<31x128xf32> -> vector<31x128xf32>
    %59 = vector.broadcast %55 : vector<1x128xf32> to vector<31x128xf32>
    %60 = arith.addf %58, %59 : vector<31x128xf32>
    %c0_27 = arith.constant 0 : index
    %c0_28 = arith.constant 0 : index
    %c0_29 = arith.constant 0 : index
    %61 = vector.load %arg7[%c0_27, %c0_28, %c0_29] : memref<1x31x128xf32, #tpu.memory_space<vmem>>, vector<1x31x128xf32>
    %62 = vector.shape_cast %61 : vector<1x31x128xf32> to vector<31x128xf32>
    %63 = vector.shape_cast %60 : vector<31x128xf32> to vector<1x31x128xf32>
    tpu.vector_store %arg7[%c0_27, %c0_28, %c0_29], %63 {strides = array<i32>} : memref<1x31x128xf32, #tpu.memory_space<vmem>>, vector<1x31x128xf32>,
    return
  }
  func.func @transform_0(%arg0: i32) -> (i32, i32, i32) {
    %c0_i32 = arith.constant 0 : i32
    %c0_i32_0 = arith.constant 0 : i32
    %c0_i32_1 = arith.constant 0 : i32
    return %arg0, %c0_i32, %c0_i32_0 : i32, i32, i32
  }
  func.func @transform_1(%arg0: i32) -> (i32, i32, i32) {
    %c0_i32 = arith.constant 0 : i32
    %c0_i32_0 = arith.constant 0 : i32
    %c0_i32_1 = arith.constant 0 : i32
    %c0_i32_2 = arith.constant 0 : i32
    return %c0_i32, %c0_i32_0, %c0_i32_1 : i32, i32, i32
  }
  func.func @transform_2(%arg0: i32) -> (i32, i32) {
    %c0_i32 = arith.constant 0 : i32
    %c0_i32_0 = arith.constant 0 : i32
    %c0_i32_1 = arith.constant 0 : i32
    return %c0_i32, %c0_i32_0 : i32, i32
  }
  func.func @transform_3(%arg0: i32) -> (i32, i32) {
    %c0_i32 = arith.constant 0 : i32
    %c0_i32_0 = arith.constant 0 : i32
    %c0_i32_1 = arith.constant 0 : i32
    return %c0_i32, %c0_i32_0 : i32, i32
  }
  func.func @transform_4(%arg0: i32) -> (i32, i32) {
    %c0_i32 = arith.constant 0 : i32
    %c0_i32_0 = arith.constant 0 : i32
    %c0_i32_1 = arith.constant 0 : i32
    return %c0_i32, %c0_i32_0 : i32, i32
  }
  func.func @transform_5(%arg0: i32) -> (i32, i32) {
    %c0_i32 = arith.constant 0 : i32
    %c0_i32_0 = arith.constant 0 : i32
    %c0_i32_1 = arith.constant 0 : i32
    return %c0_i32, %c0_i32_0 : i32, i32
  }
  func.func @transform_6(%arg0: i32) -> (i32, i32, i32) {
    %c0_i32 = arith.constant 0 : i32
    %c0_i32_0 = arith.constant 0 : i32
    %c0_i32_1 = arith.constant 0 : i32
    return %arg0, %c0_i32, %c0_i32_0 : i32, i32, i32
  }
}

module attributes {stable_mosaic.version = 11 : i64} {
  func.func @_posconv_encln_kernel(%arg0: i32, %arg1: memref<1x35x128xf32, #tpu.memory_space<vmem>>, %arg2: memref<16x32x32xf32, #tpu.memory_space<vmem>>, %arg3: memref<1x128xf32, #tpu.memory_space<vmem>>, %arg4: memref<1x128xf32, #tpu.memory_space<vmem>>, %arg5: memref<1x128xf32, #tpu.memory_space<vmem>>, %arg6: memref<1x31x128xf32, #tpu.memory_space<vmem>>) attributes {dimension_semantics = [#tpu.dimension_semantics<parallel>], iteration_bounds = array<i64: 2>, scalar_prefetch = 0 : i64, scratch_operands = 0 : i64, tpu.core_type = #tpu.core_type<tc>, window_params = [{transform_indices = @transform_0, window_bounds = array<i64: 1, 35, 128>}, {pipeline_mode = #tpu.pipeline_mode<synchronous>, transform_indices = @transform_1, window_bounds = array<i64: 16, 32, 32>}, {pipeline_mode = #tpu.pipeline_mode<synchronous>, transform_indices = @transform_2, window_bounds = array<i64: 1, 128>}, {pipeline_mode = #tpu.pipeline_mode<synchronous>, transform_indices = @transform_3, window_bounds = array<i64: 1, 128>}, {pipeline_mode = #tpu.pipeline_mode<synchronous>, transform_indices = @transform_4, window_bounds = array<i64: 1, 128>}, {transform_indices = @transform_5, window_bounds = array<i64: 1, 31, 128>}]} {
    %c0 = arith.constant 0 : index
    %c0_0 = arith.constant 0 : index
    %c0_1 = arith.constant 0 : index
    %0 = vector.load %arg1[%c0, %c0_0, %c0_1] : memref<1x35x128xf32, #tpu.memory_space<vmem>>, vector<1x35x128xf32>
    %1 = vector.shape_cast %0 : vector<1x35x128xf32> to vector<35x128xf32>
    %2 = vector.extract_strided_slice %1 {offsets = [2, 0], sizes = [31, 128], strides = [1, 1]} : vector<35x128xf32> to vector<31x128xf32>
    %cst = arith.constant 0.000000e+00 : f32
    %3 = vector.broadcast %cst : f32 to vector<31x32xf32>
    %4 = vector.extract_strided_slice %1 {offsets = [0, 0], sizes = [31, 32], strides = [1, 1]} : vector<35x128xf32> to vector<31x32xf32>
    %c0_2 = arith.constant 0 : index
    %c0_3 = arith.constant 0 : index
    %c0_4 = arith.constant 0 : index
    %5 = vector.load %arg2[%c0_2, %c0_3, %c0_4] : memref<16x32x32xf32, #tpu.memory_space<vmem>>, vector<1x32x32xf32>
    %6 = vector.shape_cast %5 : vector<1x32x32xf32> to vector<32x32xf32>
    %7 = arith.truncf %4 : vector<31x32xf32> to vector<31x32xbf16>
    %8 = arith.truncf %6 : vector<32x32xf32> to vector<32x32xbf16>
    %cst_5 = arith.constant dense<0.000000e+00> : vector<31x32xf32>
    %9 = tpu.matmul %7, %8, %cst_5 {dimension_numbers = #tpu.dot_dimension_numbers<[1], [0], [0], [1], [0, 0, 1, 1], [], []>} : vector<31x32xbf16>, vector<32x32xbf16>, vector<31x32xf32> -> vector<31x32xf32>
    %10 = arith.addf %3, %9 : vector<31x32xf32>
    %11 = vector.extract_strided_slice %1 {offsets = [1, 0], sizes = [31, 32], strides = [1, 1]} : vector<35x128xf32> to vector<31x32xf32>
    %c4 = arith.constant 4 : index
    %c0_6 = arith.constant 0 : index
    %c0_7 = arith.constant 0 : index
    %12 = vector.load %arg2[%c4, %c0_6, %c0_7] : memref<16x32x32xf32, #tpu.memory_space<vmem>>, vector<1x32x32xf32>
    %13 = vector.shape_cast %12 : vector<1x32x32xf32> to vector<32x32xf32>
    %14 = arith.truncf %11 : vector<31x32xf32> to vector<31x32xbf16>
    %15 = arith.truncf %13 : vector<32x32xf32> to vector<32x32xbf16>
    %cst_8 = arith.constant dense<0.000000e+00> : vector<31x32xf32>
    %16 = tpu.matmul %14, %15, %cst_8 {dimension_numbers = #tpu.dot_dimension_numbers<[1], [0], [0], [1], [0, 0, 1, 1], [], []>} : vector<31x32xbf16>, vector<32x32xbf16>, vector<31x32xf32> -> vector<31x32xf32>
    %17 = arith.addf %10, %16 : vector<31x32xf32>
    %18 = vector.extract_strided_slice %1 {offsets = [2, 0], sizes = [31, 32], strides = [1, 1]} : vector<35x128xf32> to vector<31x32xf32>
    %c8 = arith.constant 8 : index
    %c0_9 = arith.constant 0 : index
    %c0_10 = arith.constant 0 : index
    %19 = vector.load %arg2[%c8, %c0_9, %c0_10] : memref<16x32x32xf32, #tpu.memory_space<vmem>>, vector<1x32x32xf32>
    %20 = vector.shape_cast %19 : vector<1x32x32xf32> to vector<32x32xf32>
    %21 = arith.truncf %18 : vector<31x32xf32> to vector<31x32xbf16>
    %22 = arith.truncf %20 : vector<32x32xf32> to vector<32x32xbf16>
    %cst_11 = arith.constant dense<0.000000e+00> : vector<31x32xf32>
    %23 = tpu.matmul %21, %22, %cst_11 {dimension_numbers = #tpu.dot_dimension_numbers<[1], [0], [0], [1], [0, 0, 1, 1], [], []>} : vector<31x32xbf16>, vector<32x32xbf16>, vector<31x32xf32> -> vector<31x32xf32>
    %24 = arith.addf %17, %23 : vector<31x32xf32>
    %25 = vector.extract_strided_slice %1 {offsets = [3, 0], sizes = [31, 32], strides = [1, 1]} : vector<35x128xf32> to vector<31x32xf32>
    %c12 = arith.constant 12 : index
    %c0_12 = arith.constant 0 : index
    %c0_13 = arith.constant 0 : index
    %26 = vector.load %arg2[%c12, %c0_12, %c0_13] : memref<16x32x32xf32, #tpu.memory_space<vmem>>, vector<1x32x32xf32>
    %27 = vector.shape_cast %26 : vector<1x32x32xf32> to vector<32x32xf32>
    %28 = arith.truncf %25 : vector<31x32xf32> to vector<31x32xbf16>
    %29 = arith.truncf %27 : vector<32x32xf32> to vector<32x32xbf16>
    %cst_14 = arith.constant dense<0.000000e+00> : vector<31x32xf32>
    %30 = tpu.matmul %28, %29, %cst_14 {dimension_numbers = #tpu.dot_dimension_numbers<[1], [0], [0], [1], [0, 0, 1, 1], [], []>} : vector<31x32xbf16>, vector<32x32xbf16>, vector<31x32xf32> -> vector<31x32xf32>
    %31 = arith.addf %24, %30 : vector<31x32xf32>
    %cst_15 = arith.constant 0.000000e+00 : f32
    %32 = vector.broadcast %cst_15 : f32 to vector<31x32xf32>
    %33 = vector.extract_strided_slice %1 {offsets = [0, 32], sizes = [31, 32], strides = [1, 1]} : vector<35x128xf32> to vector<31x32xf32>
    %c1 = arith.constant 1 : index
    %c0_16 = arith.constant 0 : index
    %c0_17 = arith.constant 0 : index
    %34 = vector.load %arg2[%c1, %c0_16, %c0_17] : memref<16x32x32xf32, #tpu.memory_space<vmem>>, vector<1x32x32xf32>
    %35 = vector.shape_cast %34 : vector<1x32x32xf32> to vector<32x32xf32>
    %36 = arith.truncf %33 : vector<31x32xf32> to vector<31x32xbf16>
    %37 = arith.truncf %35 : vector<32x32xf32> to vector<32x32xbf16>
    %cst_18 = arith.constant dense<0.000000e+00> : vector<31x32xf32>
    %38 = tpu.matmul %36, %37, %cst_18 {dimension_numbers = #tpu.dot_dimension_numbers<[1], [0], [0], [1], [0, 0, 1, 1], [], []>} : vector<31x32xbf16>, vector<32x32xbf16>, vector<31x32xf32> -> vector<31x32xf32>
    %39 = arith.addf %32, %38 : vector<31x32xf32>
    %40 = vector.extract_strided_slice %1 {offsets = [1, 32], sizes = [31, 32], strides = [1, 1]} : vector<35x128xf32> to vector<31x32xf32>
    %c5 = arith.constant 5 : index
    %c0_19 = arith.constant 0 : index
    %c0_20 = arith.constant 0 : index
    %41 = vector.load %arg2[%c5, %c0_19, %c0_20] : memref<16x32x32xf32, #tpu.memory_space<vmem>>, vector<1x32x32xf32>
    %42 = vector.shape_cast %41 : vector<1x32x32xf32> to vector<32x32xf32>
    %43 = arith.truncf %40 : vector<31x32xf32> to vector<31x32xbf16>
    %44 = arith.truncf %42 : vector<32x32xf32> to vector<32x32xbf16>
    %cst_21 = arith.constant dense<0.000000e+00> : vector<31x32xf32>
    %45 = tpu.matmul %43, %44, %cst_21 {dimension_numbers = #tpu.dot_dimension_numbers<[1], [0], [0], [1], [0, 0, 1, 1], [], []>} : vector<31x32xbf16>, vector<32x32xbf16>, vector<31x32xf32> -> vector<31x32xf32>
    %46 = arith.addf %39, %45 : vector<31x32xf32>
    %47 = vector.extract_strided_slice %1 {offsets = [2, 32], sizes = [31, 32], strides = [1, 1]} : vector<35x128xf32> to vector<31x32xf32>
    %c9 = arith.constant 9 : index
    %c0_22 = arith.constant 0 : index
    %c0_23 = arith.constant 0 : index
    %48 = vector.load %arg2[%c9, %c0_22, %c0_23] : memref<16x32x32xf32, #tpu.memory_space<vmem>>, vector<1x32x32xf32>
    %49 = vector.shape_cast %48 : vector<1x32x32xf32> to vector<32x32xf32>
    %50 = arith.truncf %47 : vector<31x32xf32> to vector<31x32xbf16>
    %51 = arith.truncf %49 : vector<32x32xf32> to vector<32x32xbf16>
    %cst_24 = arith.constant dense<0.000000e+00> : vector<31x32xf32>
    %52 = tpu.matmul %50, %51, %cst_24 {dimension_numbers = #tpu.dot_dimension_numbers<[1], [0], [0], [1], [0, 0, 1, 1], [], []>} : vector<31x32xbf16>, vector<32x32xbf16>, vector<31x32xf32> -> vector<31x32xf32>
    %53 = arith.addf %46, %52 : vector<31x32xf32>
    %54 = vector.extract_strided_slice %1 {offsets = [3, 32], sizes = [31, 32], strides = [1, 1]} : vector<35x128xf32> to vector<31x32xf32>
    %c13 = arith.constant 13 : index
    %c0_25 = arith.constant 0 : index
    %c0_26 = arith.constant 0 : index
    %55 = vector.load %arg2[%c13, %c0_25, %c0_26] : memref<16x32x32xf32, #tpu.memory_space<vmem>>, vector<1x32x32xf32>
    %56 = vector.shape_cast %55 : vector<1x32x32xf32> to vector<32x32xf32>
    %57 = arith.truncf %54 : vector<31x32xf32> to vector<31x32xbf16>
    %58 = arith.truncf %56 : vector<32x32xf32> to vector<32x32xbf16>
    %cst_27 = arith.constant dense<0.000000e+00> : vector<31x32xf32>
    %59 = tpu.matmul %57, %58, %cst_27 {dimension_numbers = #tpu.dot_dimension_numbers<[1], [0], [0], [1], [0, 0, 1, 1], [], []>} : vector<31x32xbf16>, vector<32x32xbf16>, vector<31x32xf32> -> vector<31x32xf32>
    %60 = arith.addf %53, %59 : vector<31x32xf32>
    %cst_28 = arith.constant 0.000000e+00 : f32
    %61 = vector.broadcast %cst_28 : f32 to vector<31x32xf32>
    %62 = vector.extract_strided_slice %1 {offsets = [0, 64], sizes = [31, 32], strides = [1, 1]} : vector<35x128xf32> to vector<31x32xf32>
    %c2 = arith.constant 2 : index
    %c0_29 = arith.constant 0 : index
    %c0_30 = arith.constant 0 : index
    %63 = vector.load %arg2[%c2, %c0_29, %c0_30] : memref<16x32x32xf32, #tpu.memory_space<vmem>>, vector<1x32x32xf32>
    %64 = vector.shape_cast %63 : vector<1x32x32xf32> to vector<32x32xf32>
    %65 = arith.truncf %62 : vector<31x32xf32> to vector<31x32xbf16>
    %66 = arith.truncf %64 : vector<32x32xf32> to vector<32x32xbf16>
    %cst_31 = arith.constant dense<0.000000e+00> : vector<31x32xf32>
    %67 = tpu.matmul %65, %66, %cst_31 {dimension_numbers = #tpu.dot_dimension_numbers<[1], [0], [0], [1], [0, 0, 1, 1], [], []>} : vector<31x32xbf16>, vector<32x32xbf16>, vector<31x32xf32> -> vector<31x32xf32>
    %68 = arith.addf %61, %67 : vector<31x32xf32>
    %69 = vector.extract_strided_slice %1 {offsets = [1, 64], sizes = [31, 32], strides = [1, 1]} : vector<35x128xf32> to vector<31x32xf32>
    %c6 = arith.constant 6 : index
    %c0_32 = arith.constant 0 : index
    %c0_33 = arith.constant 0 : index
    %70 = vector.load %arg2[%c6, %c0_32, %c0_33] : memref<16x32x32xf32, #tpu.memory_space<vmem>>, vector<1x32x32xf32>
    %71 = vector.shape_cast %70 : vector<1x32x32xf32> to vector<32x32xf32>
    %72 = arith.truncf %69 : vector<31x32xf32> to vector<31x32xbf16>
    %73 = arith.truncf %71 : vector<32x32xf32> to vector<32x32xbf16>
    %cst_34 = arith.constant dense<0.000000e+00> : vector<31x32xf32>
    %74 = tpu.matmul %72, %73, %cst_34 {dimension_numbers = #tpu.dot_dimension_numbers<[1], [0], [0], [1], [0, 0, 1, 1], [], []>} : vector<31x32xbf16>, vector<32x32xbf16>, vector<31x32xf32> -> vector<31x32xf32>
    %75 = arith.addf %68, %74 : vector<31x32xf32>
    %76 = vector.extract_strided_slice %1 {offsets = [2, 64], sizes = [31, 32], strides = [1, 1]} : vector<35x128xf32> to vector<31x32xf32>
    %c10 = arith.constant 10 : index
    %c0_35 = arith.constant 0 : index
    %c0_36 = arith.constant 0 : index
    %77 = vector.load %arg2[%c10, %c0_35, %c0_36] : memref<16x32x32xf32, #tpu.memory_space<vmem>>, vector<1x32x32xf32>
    %78 = vector.shape_cast %77 : vector<1x32x32xf32> to vector<32x32xf32>
    %79 = arith.truncf %76 : vector<31x32xf32> to vector<31x32xbf16>
    %80 = arith.truncf %78 : vector<32x32xf32> to vector<32x32xbf16>
    %cst_37 = arith.constant dense<0.000000e+00> : vector<31x32xf32>
    %81 = tpu.matmul %79, %80, %cst_37 {dimension_numbers = #tpu.dot_dimension_numbers<[1], [0], [0], [1], [0, 0, 1, 1], [], []>} : vector<31x32xbf16>, vector<32x32xbf16>, vector<31x32xf32> -> vector<31x32xf32>
    %82 = arith.addf %75, %81 : vector<31x32xf32>
    %83 = vector.extract_strided_slice %1 {offsets = [3, 64], sizes = [31, 32], strides = [1, 1]} : vector<35x128xf32> to vector<31x32xf32>
    %c14 = arith.constant 14 : index
    %c0_38 = arith.constant 0 : index
    %c0_39 = arith.constant 0 : index
    %84 = vector.load %arg2[%c14, %c0_38, %c0_39] : memref<16x32x32xf32, #tpu.memory_space<vmem>>, vector<1x32x32xf32>
    %85 = vector.shape_cast %84 : vector<1x32x32xf32> to vector<32x32xf32>
    %86 = arith.truncf %83 : vector<31x32xf32> to vector<31x32xbf16>
    %87 = arith.truncf %85 : vector<32x32xf32> to vector<32x32xbf16>
    %cst_40 = arith.constant dense<0.000000e+00> : vector<31x32xf32>
    %88 = tpu.matmul %86, %87, %cst_40 {dimension_numbers = #tpu.dot_dimension_numbers<[1], [0], [0], [1], [0, 0, 1, 1], [], []>} : vector<31x32xbf16>, vector<32x32xbf16>, vector<31x32xf32> -> vector<31x32xf32>
    %89 = arith.addf %82, %88 : vector<31x32xf32>
    %cst_41 = arith.constant 0.000000e+00 : f32
    %90 = vector.broadcast %cst_41 : f32 to vector<31x32xf32>
    %91 = vector.extract_strided_slice %1 {offsets = [0, 96], sizes = [31, 32], strides = [1, 1]} : vector<35x128xf32> to vector<31x32xf32>
    %c3 = arith.constant 3 : index
    %c0_42 = arith.constant 0 : index
    %c0_43 = arith.constant 0 : index
    %92 = vector.load %arg2[%c3, %c0_42, %c0_43] : memref<16x32x32xf32, #tpu.memory_space<vmem>>, vector<1x32x32xf32>
    %93 = vector.shape_cast %92 : vector<1x32x32xf32> to vector<32x32xf32>
    %94 = arith.truncf %91 : vector<31x32xf32> to vector<31x32xbf16>
    %95 = arith.truncf %93 : vector<32x32xf32> to vector<32x32xbf16>
    %cst_44 = arith.constant dense<0.000000e+00> : vector<31x32xf32>
    %96 = tpu.matmul %94, %95, %cst_44 {dimension_numbers = #tpu.dot_dimension_numbers<[1], [0], [0], [1], [0, 0, 1, 1], [], []>} : vector<31x32xbf16>, vector<32x32xbf16>, vector<31x32xf32> -> vector<31x32xf32>
    %97 = arith.addf %90, %96 : vector<31x32xf32>
    %98 = vector.extract_strided_slice %1 {offsets = [1, 96], sizes = [31, 32], strides = [1, 1]} : vector<35x128xf32> to vector<31x32xf32>
    %c7 = arith.constant 7 : index
    %c0_45 = arith.constant 0 : index
    %c0_46 = arith.constant 0 : index
    %99 = vector.load %arg2[%c7, %c0_45, %c0_46] : memref<16x32x32xf32, #tpu.memory_space<vmem>>, vector<1x32x32xf32>
    %100 = vector.shape_cast %99 : vector<1x32x32xf32> to vector<32x32xf32>
    %101 = arith.truncf %98 : vector<31x32xf32> to vector<31x32xbf16>
    %102 = arith.truncf %100 : vector<32x32xf32> to vector<32x32xbf16>
    %cst_47 = arith.constant dense<0.000000e+00> : vector<31x32xf32>
    %103 = tpu.matmul %101, %102, %cst_47 {dimension_numbers = #tpu.dot_dimension_numbers<[1], [0], [0], [1], [0, 0, 1, 1], [], []>} : vector<31x32xbf16>, vector<32x32xbf16>, vector<31x32xf32> -> vector<31x32xf32>
    %104 = arith.addf %97, %103 : vector<31x32xf32>
    %105 = vector.extract_strided_slice %1 {offsets = [2, 96], sizes = [31, 32], strides = [1, 1]} : vector<35x128xf32> to vector<31x32xf32>
    %c11 = arith.constant 11 : index
    %c0_48 = arith.constant 0 : index
    %c0_49 = arith.constant 0 : index
    %106 = vector.load %arg2[%c11, %c0_48, %c0_49] : memref<16x32x32xf32, #tpu.memory_space<vmem>>, vector<1x32x32xf32>
    %107 = vector.shape_cast %106 : vector<1x32x32xf32> to vector<32x32xf32>
    %108 = arith.truncf %105 : vector<31x32xf32> to vector<31x32xbf16>
    %109 = arith.truncf %107 : vector<32x32xf32> to vector<32x32xbf16>
    %cst_50 = arith.constant dense<0.000000e+00> : vector<31x32xf32>
    %110 = tpu.matmul %108, %109, %cst_50 {dimension_numbers = #tpu.dot_dimension_numbers<[1], [0], [0], [1], [0, 0, 1, 1], [], []>} : vector<31x32xbf16>, vector<32x32xbf16>, vector<31x32xf32> -> vector<31x32xf32>
    %111 = arith.addf %104, %110 : vector<31x32xf32>
    %112 = vector.extract_strided_slice %1 {offsets = [3, 96], sizes = [31, 32], strides = [1, 1]} : vector<35x128xf32> to vector<31x32xf32>
    %c15 = arith.constant 15 : index
    %c0_51 = arith.constant 0 : index
    %c0_52 = arith.constant 0 : index
    %113 = vector.load %arg2[%c15, %c0_51, %c0_52] : memref<16x32x32xf32, #tpu.memory_space<vmem>>, vector<1x32x32xf32>
    %114 = vector.shape_cast %113 : vector<1x32x32xf32> to vector<32x32xf32>
    %115 = arith.truncf %112 : vector<31x32xf32> to vector<31x32xbf16>
    %116 = arith.truncf %114 : vector<32x32xf32> to vector<32x32xbf16>
    %cst_53 = arith.constant dense<0.000000e+00> : vector<31x32xf32>
    %117 = tpu.matmul %115, %116, %cst_53 {dimension_numbers = #tpu.dot_dimension_numbers<[1], [0], [0], [1], [0, 0, 1, 1], [], []>} : vector<31x32xbf16>, vector<32x32xbf16>, vector<31x32xf32> -> vector<31x32xf32>
    %118 = arith.addf %111, %117 : vector<31x32xf32>
    %119 = tpu.concatenate %31, %60, %89, %118 in 1 : vector<31x32xf32>, vector<31x32xf32>, vector<31x32xf32>, vector<31x32xf32> -> vector<31x128xf32>
    %c0_54 = arith.constant 0 : index
    %c0_55 = arith.constant 0 : index
    %120 = vector.load %arg3[%c0_54, %c0_55] : memref<1x128xf32, #tpu.memory_space<vmem>>, vector<1x128xf32>
    %121 = vector.broadcast %120 : vector<1x128xf32> to vector<31x128xf32>
    %122 = arith.addf %119, %121 : vector<31x128xf32>
    %123 = arith.mulf %122, %122 : vector<31x128xf32>
    %124 = arith.mulf %122, %123 : vector<31x128xf32>
    %cst_56 = arith.constant 4.471500e-02 : f32
    %125 = vector.broadcast %cst_56 : f32 to vector<31x128xf32>
    %126 = arith.mulf %125, %124 : vector<31x128xf32>
    %127 = arith.addf %122, %126 : vector<31x128xf32>
    %cst_57 = arith.constant 0.797884583 : f32
    %128 = vector.broadcast %cst_57 : f32 to vector<31x128xf32>
    %129 = arith.mulf %128, %127 : vector<31x128xf32>
    %130 = math.tanh %129 : vector<31x128xf32>
    %cst_58 = arith.constant 1.000000e+00 : f32
    %131 = vector.broadcast %cst_58 : f32 to vector<31x128xf32>
    %132 = arith.addf %131, %130 : vector<31x128xf32>
    %cst_59 = arith.constant 5.000000e-01 : f32
    %133 = vector.broadcast %cst_59 : f32 to vector<31x128xf32>
    %134 = arith.mulf %133, %132 : vector<31x128xf32>
    %135 = arith.mulf %122, %134 : vector<31x128xf32>
    %136 = arith.addf %2, %135 : vector<31x128xf32>
    %c0_60 = arith.constant 0 : index
    %c0_61 = arith.constant 0 : index
    %137 = vector.load %arg4[%c0_60, %c0_61] : memref<1x128xf32, #tpu.memory_space<vmem>>, vector<1x128xf32>
    %c0_62 = arith.constant 0 : index
    %c0_63 = arith.constant 0 : index
    %138 = vector.load %arg5[%c0_62, %c0_63] : memref<1x128xf32, #tpu.memory_space<vmem>>, vector<1x128xf32>
    %cst_64 = arith.constant dense<0.000000e+00> : vector<31xf32>
    %139 = vector.multi_reduction <add>, %136, %cst_64 [1] : vector<31x128xf32> to vector<31xf32>
    %140 = vector.shape_cast %139 : vector<31xf32> to vector<31x1xf32>
    %cst_65 = arith.constant 1.280000e+02 : f32
    %141 = vector.broadcast %cst_65 : f32 to vector<31x1xf32>
    %142 = arith.divf %140, %141 : vector<31x1xf32>
    %143 = vector.broadcast %142 : vector<31x1xf32> to vector<31x128xf32>
    %144 = arith.subf %136, %143 : vector<31x128xf32>
    %145 = arith.mulf %144, %144 : vector<31x128xf32>
    %cst_66 = arith.constant dense<0.000000e+00> : vector<31xf32>
    %146 = vector.multi_reduction <add>, %145, %cst_66 [1] : vector<31x128xf32> to vector<31xf32>
    %147 = vector.shape_cast %146 : vector<31xf32> to vector<31x1xf32>
    %cst_67 = arith.constant 1.280000e+02 : f32
    %148 = vector.broadcast %cst_67 : f32 to vector<31x1xf32>
    %149 = arith.divf %147, %148 : vector<31x1xf32>
    %150 = vector.broadcast %142 : vector<31x1xf32> to vector<31x128xf32>
    %151 = arith.subf %136, %150 : vector<31x128xf32>
    %cst_68 = arith.constant 9.99999974E-6 : f32
    %152 = vector.broadcast %cst_68 : f32 to vector<31x1xf32>
    %153 = arith.addf %149, %152 : vector<31x1xf32>
    %154 = math.rsqrt %153 : vector<31x1xf32>
    %155 = vector.broadcast %154 : vector<31x1xf32> to vector<31x128xf32>
    %156 = arith.mulf %151, %155 : vector<31x128xf32>
    %157 = vector.broadcast %137 : vector<1x128xf32> to vector<31x128xf32>
    %158 = arith.mulf %156, %157 : vector<31x128xf32>
    %159 = vector.broadcast %138 : vector<1x128xf32> to vector<31x128xf32>
    %160 = arith.addf %158, %159 : vector<31x128xf32>
    %c0_69 = arith.constant 0 : index
    %c0_70 = arith.constant 0 : index
    %c0_71 = arith.constant 0 : index
    %161 = vector.load %arg6[%c0_69, %c0_70, %c0_71] : memref<1x31x128xf32, #tpu.memory_space<vmem>>, vector<1x31x128xf32>
    %162 = vector.shape_cast %161 : vector<1x31x128xf32> to vector<31x128xf32>
    %163 = vector.shape_cast %160 : vector<31x128xf32> to vector<1x31x128xf32>
    tpu.vector_store %arg6[%c0_69, %c0_70, %c0_71], %163 {strides = array<i32>} : memref<1x31x128xf32, #tpu.memory_space<vmem>>, vector<1x31x128xf32>,
    return
  }
  func.func @transform_0(%arg0: i32) -> (i32, i32, i32) {
    %c0_i32 = arith.constant 0 : i32
    %c0_i32_0 = arith.constant 0 : i32
    %c0_i32_1 = arith.constant 0 : i32
    return %arg0, %c0_i32, %c0_i32_0 : i32, i32, i32
  }
  func.func @transform_1(%arg0: i32) -> (i32, i32, i32) {
    %c0_i32 = arith.constant 0 : i32
    %c0_i32_0 = arith.constant 0 : i32
    %c0_i32_1 = arith.constant 0 : i32
    %c0_i32_2 = arith.constant 0 : i32
    return %c0_i32, %c0_i32_0, %c0_i32_1 : i32, i32, i32
  }
  func.func @transform_2(%arg0: i32) -> (i32, i32) {
    %c0_i32 = arith.constant 0 : i32
    %c0_i32_0 = arith.constant 0 : i32
    %c0_i32_1 = arith.constant 0 : i32
    return %c0_i32, %c0_i32_0 : i32, i32
  }
  func.func @transform_3(%arg0: i32) -> (i32, i32) {
    %c0_i32 = arith.constant 0 : i32
    %c0_i32_0 = arith.constant 0 : i32
    %c0_i32_1 = arith.constant 0 : i32
    return %c0_i32, %c0_i32_0 : i32, i32
  }
  func.func @transform_4(%arg0: i32) -> (i32, i32) {
    %c0_i32 = arith.constant 0 : i32
    %c0_i32_0 = arith.constant 0 : i32
    %c0_i32_1 = arith.constant 0 : i32
    return %c0_i32, %c0_i32_0 : i32, i32
  }
  func.func @transform_5(%arg0: i32) -> (i32, i32, i32) {
    %c0_i32 = arith.constant 0 : i32
    %c0_i32_0 = arith.constant 0 : i32
    %c0_i32_1 = arith.constant 0 : i32
    return %arg0, %c0_i32, %c0_i32_0 : i32, i32, i32
  }
}

module attributes {stable_mosaic.version = 11 : i64} {
  func.func @_encoder_layer_kernel(%arg0: i32, %arg1: memref<1x31x128xf32, #tpu.memory_space<vmem>>, %arg2: memref<128x384xf32, #tpu.memory_space<vmem>>, %arg3: memref<1x384xf32, #tpu.memory_space<vmem>>, %arg4: memref<128x128xf32, #tpu.memory_space<vmem>>, %arg5: memref<1x128xf32, #tpu.memory_space<vmem>>, %arg6: memref<1x128xf32, #tpu.memory_space<vmem>>, %arg7: memref<1x128xf32, #tpu.memory_space<vmem>>, %arg8: memref<128x512xf32, #tpu.memory_space<vmem>>, %arg9: memref<1x512xf32, #tpu.memory_space<vmem>>, %arg10: memref<512x128xf32, #tpu.memory_space<vmem>>, %arg11: memref<1x128xf32, #tpu.memory_space<vmem>>, %arg12: memref<1x128xf32, #tpu.memory_space<vmem>>, %arg13: memref<1x128xf32, #tpu.memory_space<vmem>>, %arg14: memref<1x31x128xf32, #tpu.memory_space<vmem>>) attributes {dimension_semantics = [#tpu.dimension_semantics<parallel>], iteration_bounds = array<i64: 2>, scalar_prefetch = 0 : i64, scratch_operands = 0 : i64, tpu.core_type = #tpu.core_type<tc>, window_params = [{transform_indices = @transform_0, window_bounds = array<i64: 1, 31, 128>}, {pipeline_mode = #tpu.pipeline_mode<synchronous>, transform_indices = @transform_1, window_bounds = array<i64: 128, 384>}, {pipeline_mode = #tpu.pipeline_mode<synchronous>, transform_indices = @transform_2, window_bounds = array<i64: 1, 384>}, {pipeline_mode = #tpu.pipeline_mode<synchronous>, transform_indices = @transform_3, window_bounds = array<i64: 128, 128>}, {pipeline_mode = #tpu.pipeline_mode<synchronous>, transform_indices = @transform_4, window_bounds = array<i64: 1, 128>}, {pipeline_mode = #tpu.pipeline_mode<synchronous>, transform_indices = @transform_5, window_bounds = array<i64: 1, 128>}, {pipeline_mode = #tpu.pipeline_mode<synchronous>, transform_indices = @transform_6, window_bounds = array<i64: 1, 128>}, {pipeline_mode = #tpu.pipeline_mode<synchronous>, transform_indices = @transform_7, window_bounds = array<i64: 128, 512>}, {pipeline_mode = #tpu.pipeline_mode<synchronous>, transform_indices = @transform_8, window_bounds = array<i64: 1, 512>}, {pipeline_mode = #tpu.pipeline_mode<synchronous>, transform_indices = @transform_9, window_bounds = array<i64: 512, 128>}, {pipeline_mode = #tpu.pipeline_mode<synchronous>, transform_indices = @transform_10, window_bounds = array<i64: 1, 128>}, {pipeline_mode = #tpu.pipeline_mode<synchronous>, transform_indices = @transform_11, window_bounds = array<i64: 1, 128>}, {pipeline_mode = #tpu.pipeline_mode<synchronous>, transform_indices = @transform_12, window_bounds = array<i64: 1, 128>}, {transform_indices = @transform_13, window_bounds = array<i64: 1, 31, 128>}]} {
    %c0 = arith.constant 0 : index
    %c0_0 = arith.constant 0 : index
    %c0_1 = arith.constant 0 : index
    %0 = vector.load %arg1[%c0, %c0_0, %c0_1] : memref<1x31x128xf32, #tpu.memory_space<vmem>>, vector<1x31x128xf32>
    %1 = vector.shape_cast %0 : vector<1x31x128xf32> to vector<31x128xf32>
    %c0_2 = arith.constant 0 : index
    %c0_3 = arith.constant 0 : index
    %2 = vector.load %arg2[%c0_2, %c0_3] : memref<128x384xf32, #tpu.memory_space<vmem>>, vector<128x384xf32>
    %c0_4 = arith.constant 0 : index
    %c0_5 = arith.constant 0 : index
    %3 = vector.load %arg3[%c0_4, %c0_5] : memref<1x384xf32, #tpu.memory_space<vmem>>, vector<1x384xf32>
    %4 = arith.truncf %1 : vector<31x128xf32> to vector<31x128xbf16>
    %5 = arith.truncf %2 : vector<128x384xf32> to vector<128x384xbf16>
    %cst = arith.constant dense<0.000000e+00> : vector<31x384xf32>
    %6 = tpu.matmul %4, %5, %cst {dimension_numbers = #tpu.dot_dimension_numbers<[1], [0], [0], [1], [0, 0, 1, 1], [], []>} : vector<31x128xbf16>, vector<128x384xbf16>, vector<31x384xf32> -> vector<31x384xf32>
    %7 = vector.broadcast %3 : vector<1x384xf32> to vector<31x384xf32>
    %8 = arith.addf %6, %7 : vector<31x384xf32>
    %9 = vector.extract_strided_slice %8 {offsets = [0, 0], sizes = [31, 128], strides = [1, 1]} : vector<31x384xf32> to vector<31x128xf32>
    %cst_6 = arith.constant 1.250000e-01 : f32
    %10 = vector.broadcast %cst_6 : f32 to vector<31x128xf32>
    %11 = arith.mulf %9, %10 : vector<31x128xf32>
    %12 = vector.extract_strided_slice %8 {offsets = [0, 128], sizes = [31, 128], strides = [1, 1]} : vector<31x384xf32> to vector<31x128xf32>
    %13 = vector.extract_strided_slice %8 {offsets = [0, 256], sizes = [31, 128], strides = [1, 1]} : vector<31x384xf32> to vector<31x128xf32>
    %14 = vector.extract_strided_slice %11 {offsets = [0, 0], sizes = [31, 64], strides = [1, 1]} : vector<31x128xf32> to vector<31x64xf32>
    %15 = arith.truncf %14 : vector<31x64xf32> to vector<31x64xbf16>
    %16 = vector.extract_strided_slice %12 {offsets = [0, 0], sizes = [31, 64], strides = [1, 1]} : vector<31x128xf32> to vector<31x64xf32>
    %17 = arith.truncf %16 : vector<31x64xf32> to vector<31x64xbf16>
    %18 = vector.extract_strided_slice %13 {offsets = [0, 0], sizes = [31, 64], strides = [1, 1]} : vector<31x128xf32> to vector<31x64xf32>
    %19 = arith.truncf %18 : vector<31x64xf32> to vector<31x64xbf16>
    %cst_7 = arith.constant dense<0.000000e+00> : vector<31x31xf32>
    %20 = tpu.matmul %15, %17, %cst_7 {dimension_numbers = #tpu.dot_dimension_numbers<[1], [1], [0], [0], [0, 0, 1, 0], [], []>} : vector<31x64xbf16>, vector<31x64xbf16>, vector<31x31xf32> -> vector<31x31xf32>
    %cst_8 = arith.constant dense<0xFF800000> : vector<31xf32>
    %21 = vector.multi_reduction <maximumf>, %20, %cst_8 [1] : vector<31x31xf32> to vector<31xf32>
    %22 = vector.shape_cast %21 : vector<31xf32> to vector<31x1xf32>
    %23 = vector.broadcast %22 : vector<31x1xf32> to vector<31x31xf32>
    %24 = arith.subf %20, %23 : vector<31x31xf32>
    %25 = math.exp %24 : vector<31x31xf32>
    %cst_9 = arith.constant dense<0.000000e+00> : vector<31xf32>
    %26 = vector.multi_reduction <add>, %25, %cst_9 [1] : vector<31x31xf32> to vector<31xf32>
    %27 = vector.shape_cast %26 : vector<31xf32> to vector<31x1xf32>
    %28 = tpu.reciprocal %27 {approx = true} : vector<31x1xf32> -> vector<31x1xf32>
    %29 = vector.broadcast %28 : vector<31x1xf32> to vector<31x31xf32>
    %30 = arith.mulf %25, %29 : vector<31x31xf32>
    %31 = arith.truncf %30 : vector<31x31xf32> to vector<31x31xbf16>
    %cst_10 = arith.constant dense<0.000000e+00> : vector<31x64xf32>
    %32 = tpu.matmul %31, %19, %cst_10 {dimension_numbers = #tpu.dot_dimension_numbers<[1], [0], [0], [1], [0, 0, 1, 1], [], []>} : vector<31x31xbf16>, vector<31x64xbf16>, vector<31x64xf32> -> vector<31x64xf32>
    %33 = vector.extract_strided_slice %11 {offsets = [0, 64], sizes = [31, 64], strides = [1, 1]} : vector<31x128xf32> to vector<31x64xf32>
    %34 = arith.truncf %33 : vector<31x64xf32> to vector<31x64xbf16>
    %35 = vector.extract_strided_slice %12 {offsets = [0, 64], sizes = [31, 64], strides = [1, 1]} : vector<31x128xf32> to vector<31x64xf32>
    %36 = arith.truncf %35 : vector<31x64xf32> to vector<31x64xbf16>
    %37 = vector.extract_strided_slice %13 {offsets = [0, 64], sizes = [31, 64], strides = [1, 1]} : vector<31x128xf32> to vector<31x64xf32>
    %38 = arith.truncf %37 : vector<31x64xf32> to vector<31x64xbf16>
    %cst_11 = arith.constant dense<0.000000e+00> : vector<31x31xf32>
    %39 = tpu.matmul %34, %36, %cst_11 {dimension_numbers = #tpu.dot_dimension_numbers<[1], [1], [0], [0], [0, 0, 1, 0], [], []>} : vector<31x64xbf16>, vector<31x64xbf16>, vector<31x31xf32> -> vector<31x31xf32>
    %cst_12 = arith.constant dense<0xFF800000> : vector<31xf32>
    %40 = vector.multi_reduction <maximumf>, %39, %cst_12 [1] : vector<31x31xf32> to vector<31xf32>
    %41 = vector.shape_cast %40 : vector<31xf32> to vector<31x1xf32>
    %42 = vector.broadcast %41 : vector<31x1xf32> to vector<31x31xf32>
    %43 = arith.subf %39, %42 : vector<31x31xf32>
    %44 = math.exp %43 : vector<31x31xf32>
    %cst_13 = arith.constant dense<0.000000e+00> : vector<31xf32>
    %45 = vector.multi_reduction <add>, %44, %cst_13 [1] : vector<31x31xf32> to vector<31xf32>
    %46 = vector.shape_cast %45 : vector<31xf32> to vector<31x1xf32>
    %47 = tpu.reciprocal %46 {approx = true} : vector<31x1xf32> -> vector<31x1xf32>
    %48 = vector.broadcast %47 : vector<31x1xf32> to vector<31x31xf32>
    %49 = arith.mulf %44, %48 : vector<31x31xf32>
    %50 = arith.truncf %49 : vector<31x31xf32> to vector<31x31xbf16>
    %cst_14 = arith.constant dense<0.000000e+00> : vector<31x64xf32>
    %51 = tpu.matmul %50, %38, %cst_14 {dimension_numbers = #tpu.dot_dimension_numbers<[1], [0], [0], [1], [0, 0, 1, 1], [], []>} : vector<31x31xbf16>, vector<31x64xbf16>, vector<31x64xf32> -> vector<31x64xf32>
    %52 = tpu.concatenate %32, %51 in 1 : vector<31x64xf32>, vector<31x64xf32> -> vector<31x128xf32>
    %c0_15 = arith.constant 0 : index
    %c0_16 = arith.constant 0 : index
    %53 = vector.load %arg4[%c0_15, %c0_16] : memref<128x128xf32, #tpu.memory_space<vmem>>, vector<128x128xf32>
    %c0_17 = arith.constant 0 : index
    %c0_18 = arith.constant 0 : index
    %54 = vector.load %arg5[%c0_17, %c0_18] : memref<1x128xf32, #tpu.memory_space<vmem>>, vector<1x128xf32>
    %55 = arith.truncf %52 : vector<31x128xf32> to vector<31x128xbf16>
    %56 = arith.truncf %53 : vector<128x128xf32> to vector<128x128xbf16>
    %cst_19 = arith.constant dense<0.000000e+00> : vector<31x128xf32>
    %57 = tpu.matmul %55, %56, %cst_19 {dimension_numbers = #tpu.dot_dimension_numbers<[1], [0], [0], [1], [0, 0, 1, 1], [], []>} : vector<31x128xbf16>, vector<128x128xbf16>, vector<31x128xf32> -> vector<31x128xf32>
    %58 = vector.broadcast %54 : vector<1x128xf32> to vector<31x128xf32>
    %59 = arith.addf %57, %58 : vector<31x128xf32>
    %60 = arith.addf %1, %59 : vector<31x128xf32>
    %c0_20 = arith.constant 0 : index
    %c0_21 = arith.constant 0 : index
    %61 = vector.load %arg6[%c0_20, %c0_21] : memref<1x128xf32, #tpu.memory_space<vmem>>, vector<1x128xf32>
    %c0_22 = arith.constant 0 : index
    %c0_23 = arith.constant 0 : index
    %62 = vector.load %arg7[%c0_22, %c0_23] : memref<1x128xf32, #tpu.memory_space<vmem>>, vector<1x128xf32>
    %cst_24 = arith.constant dense<0.000000e+00> : vector<31xf32>
    %63 = vector.multi_reduction <add>, %60, %cst_24 [1] : vector<31x128xf32> to vector<31xf32>
    %64 = vector.shape_cast %63 : vector<31xf32> to vector<31x1xf32>
    %cst_25 = arith.constant 1.280000e+02 : f32
    %65 = vector.broadcast %cst_25 : f32 to vector<31x1xf32>
    %66 = arith.divf %64, %65 : vector<31x1xf32>
    %67 = vector.broadcast %66 : vector<31x1xf32> to vector<31x128xf32>
    %68 = arith.subf %60, %67 : vector<31x128xf32>
    %69 = arith.mulf %68, %68 : vector<31x128xf32>
    %cst_26 = arith.constant dense<0.000000e+00> : vector<31xf32>
    %70 = vector.multi_reduction <add>, %69, %cst_26 [1] : vector<31x128xf32> to vector<31xf32>
    %71 = vector.shape_cast %70 : vector<31xf32> to vector<31x1xf32>
    %cst_27 = arith.constant 1.280000e+02 : f32
    %72 = vector.broadcast %cst_27 : f32 to vector<31x1xf32>
    %73 = arith.divf %71, %72 : vector<31x1xf32>
    %74 = vector.broadcast %66 : vector<31x1xf32> to vector<31x128xf32>
    %75 = arith.subf %60, %74 : vector<31x128xf32>
    %cst_28 = arith.constant 9.99999974E-6 : f32
    %76 = vector.broadcast %cst_28 : f32 to vector<31x1xf32>
    %77 = arith.addf %73, %76 : vector<31x1xf32>
    %78 = math.rsqrt %77 : vector<31x1xf32>
    %79 = vector.broadcast %78 : vector<31x1xf32> to vector<31x128xf32>
    %80 = arith.mulf %75, %79 : vector<31x128xf32>
    %81 = vector.broadcast %61 : vector<1x128xf32> to vector<31x128xf32>
    %82 = arith.mulf %80, %81 : vector<31x128xf32>
    %83 = vector.broadcast %62 : vector<1x128xf32> to vector<31x128xf32>
    %84 = arith.addf %82, %83 : vector<31x128xf32>
    %c0_29 = arith.constant 0 : index
    %c0_30 = arith.constant 0 : index
    %85 = vector.load %arg8[%c0_29, %c0_30] : memref<128x512xf32, #tpu.memory_space<vmem>>, vector<128x512xf32>
    %c0_31 = arith.constant 0 : index
    %c0_32 = arith.constant 0 : index
    %86 = vector.load %arg9[%c0_31, %c0_32] : memref<1x512xf32, #tpu.memory_space<vmem>>, vector<1x512xf32>
    %87 = arith.truncf %84 : vector<31x128xf32> to vector<31x128xbf16>
    %88 = arith.truncf %85 : vector<128x512xf32> to vector<128x512xbf16>
    %cst_33 = arith.constant dense<0.000000e+00> : vector<31x512xf32>
    %89 = tpu.matmul %87, %88, %cst_33 {dimension_numbers = #tpu.dot_dimension_numbers<[1], [0], [0], [1], [0, 0, 1, 1], [], []>} : vector<31x128xbf16>, vector<128x512xbf16>, vector<31x512xf32> -> vector<31x512xf32>
    %90 = vector.broadcast %86 : vector<1x512xf32> to vector<31x512xf32>
    %91 = arith.addf %89, %90 : vector<31x512xf32>
    %92 = arith.mulf %91, %91 : vector<31x512xf32>
    %93 = arith.mulf %91, %92 : vector<31x512xf32>
    %cst_34 = arith.constant 4.471500e-02 : f32
    %94 = vector.broadcast %cst_34 : f32 to vector<31x512xf32>
    %95 = arith.mulf %94, %93 : vector<31x512xf32>
    %96 = arith.addf %91, %95 : vector<31x512xf32>
    %cst_35 = arith.constant 0.797884583 : f32
    %97 = vector.broadcast %cst_35 : f32 to vector<31x512xf32>
    %98 = arith.mulf %97, %96 : vector<31x512xf32>
    %99 = math.tanh %98 : vector<31x512xf32>
    %cst_36 = arith.constant 1.000000e+00 : f32
    %100 = vector.broadcast %cst_36 : f32 to vector<31x512xf32>
    %101 = arith.addf %100, %99 : vector<31x512xf32>
    %cst_37 = arith.constant 5.000000e-01 : f32
    %102 = vector.broadcast %cst_37 : f32 to vector<31x512xf32>
    %103 = arith.mulf %102, %101 : vector<31x512xf32>
    %104 = arith.mulf %91, %103 : vector<31x512xf32>
    %c0_38 = arith.constant 0 : index
    %c0_39 = arith.constant 0 : index
    %105 = vector.load %arg10[%c0_38, %c0_39] : memref<512x128xf32, #tpu.memory_space<vmem>>, vector<512x128xf32>
    %c0_40 = arith.constant 0 : index
    %c0_41 = arith.constant 0 : index
    %106 = vector.load %arg11[%c0_40, %c0_41] : memref<1x128xf32, #tpu.memory_space<vmem>>, vector<1x128xf32>
    %107 = arith.truncf %104 : vector<31x512xf32> to vector<31x512xbf16>
    %108 = arith.truncf %105 : vector<512x128xf32> to vector<512x128xbf16>
    %cst_42 = arith.constant dense<0.000000e+00> : vector<31x128xf32>
    %109 = tpu.matmul %107, %108, %cst_42 {dimension_numbers = #tpu.dot_dimension_numbers<[1], [0], [0], [1], [0, 0, 1, 1], [], []>} : vector<31x512xbf16>, vector<512x128xbf16>, vector<31x128xf32> -> vector<31x128xf32>
    %110 = vector.broadcast %106 : vector<1x128xf32> to vector<31x128xf32>
    %111 = arith.addf %109, %110 : vector<31x128xf32>
    %112 = arith.addf %84, %111 : vector<31x128xf32>
    %c0_43 = arith.constant 0 : index
    %c0_44 = arith.constant 0 : index
    %113 = vector.load %arg12[%c0_43, %c0_44] : memref<1x128xf32, #tpu.memory_space<vmem>>, vector<1x128xf32>
    %c0_45 = arith.constant 0 : index
    %c0_46 = arith.constant 0 : index
    %114 = vector.load %arg13[%c0_45, %c0_46] : memref<1x128xf32, #tpu.memory_space<vmem>>, vector<1x128xf32>
    %cst_47 = arith.constant dense<0.000000e+00> : vector<31xf32>
    %115 = vector.multi_reduction <add>, %112, %cst_47 [1] : vector<31x128xf32> to vector<31xf32>
    %116 = vector.shape_cast %115 : vector<31xf32> to vector<31x1xf32>
    %cst_48 = arith.constant 1.280000e+02 : f32
    %117 = vector.broadcast %cst_48 : f32 to vector<31x1xf32>
    %118 = arith.divf %116, %117 : vector<31x1xf32>
    %119 = vector.broadcast %118 : vector<31x1xf32> to vector<31x128xf32>
    %120 = arith.subf %112, %119 : vector<31x128xf32>
    %121 = arith.mulf %120, %120 : vector<31x128xf32>
    %cst_49 = arith.constant dense<0.000000e+00> : vector<31xf32>
    %122 = vector.multi_reduction <add>, %121, %cst_49 [1] : vector<31x128xf32> to vector<31xf32>
    %123 = vector.shape_cast %122 : vector<31xf32> to vector<31x1xf32>
    %cst_50 = arith.constant 1.280000e+02 : f32
    %124 = vector.broadcast %cst_50 : f32 to vector<31x1xf32>
    %125 = arith.divf %123, %124 : vector<31x1xf32>
    %126 = vector.broadcast %118 : vector<31x1xf32> to vector<31x128xf32>
    %127 = arith.subf %112, %126 : vector<31x128xf32>
    %cst_51 = arith.constant 9.99999974E-6 : f32
    %128 = vector.broadcast %cst_51 : f32 to vector<31x1xf32>
    %129 = arith.addf %125, %128 : vector<31x1xf32>
    %130 = math.rsqrt %129 : vector<31x1xf32>
    %131 = vector.broadcast %130 : vector<31x1xf32> to vector<31x128xf32>
    %132 = arith.mulf %127, %131 : vector<31x128xf32>
    %133 = vector.broadcast %113 : vector<1x128xf32> to vector<31x128xf32>
    %134 = arith.mulf %132, %133 : vector<31x128xf32>
    %135 = vector.broadcast %114 : vector<1x128xf32> to vector<31x128xf32>
    %136 = arith.addf %134, %135 : vector<31x128xf32>
    %c0_52 = arith.constant 0 : index
    %c0_53 = arith.constant 0 : index
    %c0_54 = arith.constant 0 : index
    %137 = vector.load %arg14[%c0_52, %c0_53, %c0_54] : memref<1x31x128xf32, #tpu.memory_space<vmem>>, vector<1x31x128xf32>
    %138 = vector.shape_cast %137 : vector<1x31x128xf32> to vector<31x128xf32>
    %139 = vector.shape_cast %136 : vector<31x128xf32> to vector<1x31x128xf32>
    tpu.vector_store %arg14[%c0_52, %c0_53, %c0_54], %139 {strides = array<i32>} : memref<1x31x128xf32, #tpu.memory_space<vmem>>, vector<1x31x128xf32>,
    return
  }
  func.func @transform_0(%arg0: i32) -> (i32, i32, i32) {
    %c0_i32 = arith.constant 0 : i32
    %c0_i32_0 = arith.constant 0 : i32
    %c0_i32_1 = arith.constant 0 : i32
    return %arg0, %c0_i32, %c0_i32_0 : i32, i32, i32
  }
  func.func @transform_1(%arg0: i32) -> (i32, i32) {
    %c0_i32 = arith.constant 0 : i32
    %c0_i32_0 = arith.constant 0 : i32
    %c0_i32_1 = arith.constant 0 : i32
    return %c0_i32, %c0_i32_0 : i32, i32
  }
  func.func @transform_2(%arg0: i32) -> (i32, i32) {
    %c0_i32 = arith.constant 0 : i32
    %c0_i32_0 = arith.constant 0 : i32
    %c0_i32_1 = arith.constant 0 : i32
    return %c0_i32, %c0_i32_0 : i32, i32
  }
  func.func @transform_3(%arg0: i32) -> (i32, i32) {
    %c0_i32 = arith.constant 0 : i32
    %c0_i32_0 = arith.constant 0 : i32
    %c0_i32_1 = arith.constant 0 : i32
    return %c0_i32, %c0_i32_0 : i32, i32
  }
  func.func @transform_4(%arg0: i32) -> (i32, i32) {
    %c0_i32 = arith.constant 0 : i32
    %c0_i32_0 = arith.constant 0 : i32
    %c0_i32_1 = arith.constant 0 : i32
    return %c0_i32, %c0_i32_0 : i32, i32
  }
  func.func @transform_5(%arg0: i32) -> (i32, i32) {
    %c0_i32 = arith.constant 0 : i32
    %c0_i32_0 = arith.constant 0 : i32
    %c0_i32_1 = arith.constant 0 : i32
    return %c0_i32, %c0_i32_0 : i32, i32
  }
  func.func @transform_6(%arg0: i32) -> (i32, i32) {
    %c0_i32 = arith.constant 0 : i32
    %c0_i32_0 = arith.constant 0 : i32
    %c0_i32_1 = arith.constant 0 : i32
    return %c0_i32, %c0_i32_0 : i32, i32
  }
  func.func @transform_7(%arg0: i32) -> (i32, i32) {
    %c0_i32 = arith.constant 0 : i32
    %c0_i32_0 = arith.constant 0 : i32
    %c0_i32_1 = arith.constant 0 : i32
    return %c0_i32, %c0_i32_0 : i32, i32
  }
  func.func @transform_8(%arg0: i32) -> (i32, i32) {
    %c0_i32 = arith.constant 0 : i32
    %c0_i32_0 = arith.constant 0 : i32
    %c0_i32_1 = arith.constant 0 : i32
    return %c0_i32, %c0_i32_0 : i32, i32
  }
  func.func @transform_9(%arg0: i32) -> (i32, i32) {
    %c0_i32 = arith.constant 0 : i32
    %c0_i32_0 = arith.constant 0 : i32
    %c0_i32_1 = arith.constant 0 : i32
    return %c0_i32, %c0_i32_0 : i32, i32
  }
  func.func @transform_10(%arg0: i32) -> (i32, i32) {
    %c0_i32 = arith.constant 0 : i32
    %c0_i32_0 = arith.constant 0 : i32
    %c0_i32_1 = arith.constant 0 : i32
    return %c0_i32, %c0_i32_0 : i32, i32
  }
  func.func @transform_11(%arg0: i32) -> (i32, i32) {
    %c0_i32 = arith.constant 0 : i32
    %c0_i32_0 = arith.constant 0 : i32
    %c0_i32_1 = arith.constant 0 : i32
    return %c0_i32, %c0_i32_0 : i32, i32
  }
  func.func @transform_12(%arg0: i32) -> (i32, i32) {
    %c0_i32 = arith.constant 0 : i32
    %c0_i32_0 = arith.constant 0 : i32
    %c0_i32_1 = arith.constant 0 : i32
    return %c0_i32, %c0_i32_0 : i32, i32
  }
  func.func @transform_13(%arg0: i32) -> (i32, i32, i32) {
    %c0_i32 = arith.constant 0 : i32
    %c0_i32_0 = arith.constant 0 : i32
    %c0_i32_1 = arith.constant 0 : i32
    return %arg0, %c0_i32, %c0_i32_0 : i32, i32, i32
  }
}

module attributes {stable_mosaic.version = 11 : i64} {
  func.func @_encoder_layer_kernel(%arg0: i32, %arg1: memref<1x31x128xf32, #tpu.memory_space<vmem>>, %arg2: memref<128x384xf32, #tpu.memory_space<vmem>>, %arg3: memref<1x384xf32, #tpu.memory_space<vmem>>, %arg4: memref<128x128xf32, #tpu.memory_space<vmem>>, %arg5: memref<1x128xf32, #tpu.memory_space<vmem>>, %arg6: memref<1x128xf32, #tpu.memory_space<vmem>>, %arg7: memref<1x128xf32, #tpu.memory_space<vmem>>, %arg8: memref<128x512xf32, #tpu.memory_space<vmem>>, %arg9: memref<1x512xf32, #tpu.memory_space<vmem>>, %arg10: memref<512x128xf32, #tpu.memory_space<vmem>>, %arg11: memref<1x128xf32, #tpu.memory_space<vmem>>, %arg12: memref<1x128xf32, #tpu.memory_space<vmem>>, %arg13: memref<1x128xf32, #tpu.memory_space<vmem>>, %arg14: memref<1x31x128xf32, #tpu.memory_space<vmem>>) attributes {dimension_semantics = [#tpu.dimension_semantics<parallel>], iteration_bounds = array<i64: 2>, scalar_prefetch = 0 : i64, scratch_operands = 0 : i64, tpu.core_type = #tpu.core_type<tc>, window_params = [{transform_indices = @transform_0, window_bounds = array<i64: 1, 31, 128>}, {pipeline_mode = #tpu.pipeline_mode<synchronous>, transform_indices = @transform_1, window_bounds = array<i64: 128, 384>}, {pipeline_mode = #tpu.pipeline_mode<synchronous>, transform_indices = @transform_2, window_bounds = array<i64: 1, 384>}, {pipeline_mode = #tpu.pipeline_mode<synchronous>, transform_indices = @transform_3, window_bounds = array<i64: 128, 128>}, {pipeline_mode = #tpu.pipeline_mode<synchronous>, transform_indices = @transform_4, window_bounds = array<i64: 1, 128>}, {pipeline_mode = #tpu.pipeline_mode<synchronous>, transform_indices = @transform_5, window_bounds = array<i64: 1, 128>}, {pipeline_mode = #tpu.pipeline_mode<synchronous>, transform_indices = @transform_6, window_bounds = array<i64: 1, 128>}, {pipeline_mode = #tpu.pipeline_mode<synchronous>, transform_indices = @transform_7, window_bounds = array<i64: 128, 512>}, {pipeline_mode = #tpu.pipeline_mode<synchronous>, transform_indices = @transform_8, window_bounds = array<i64: 1, 512>}, {pipeline_mode = #tpu.pipeline_mode<synchronous>, transform_indices = @transform_9, window_bounds = array<i64: 512, 128>}, {pipeline_mode = #tpu.pipeline_mode<synchronous>, transform_indices = @transform_10, window_bounds = array<i64: 1, 128>}, {pipeline_mode = #tpu.pipeline_mode<synchronous>, transform_indices = @transform_11, window_bounds = array<i64: 1, 128>}, {pipeline_mode = #tpu.pipeline_mode<synchronous>, transform_indices = @transform_12, window_bounds = array<i64: 1, 128>}, {transform_indices = @transform_13, window_bounds = array<i64: 1, 31, 128>}]} {
    %c0 = arith.constant 0 : index
    %c0_0 = arith.constant 0 : index
    %c0_1 = arith.constant 0 : index
    %0 = vector.load %arg1[%c0, %c0_0, %c0_1] : memref<1x31x128xf32, #tpu.memory_space<vmem>>, vector<1x31x128xf32>
    %1 = vector.shape_cast %0 : vector<1x31x128xf32> to vector<31x128xf32>
    %c0_2 = arith.constant 0 : index
    %c0_3 = arith.constant 0 : index
    %2 = vector.load %arg2[%c0_2, %c0_3] : memref<128x384xf32, #tpu.memory_space<vmem>>, vector<128x384xf32>
    %c0_4 = arith.constant 0 : index
    %c0_5 = arith.constant 0 : index
    %3 = vector.load %arg3[%c0_4, %c0_5] : memref<1x384xf32, #tpu.memory_space<vmem>>, vector<1x384xf32>
    %4 = arith.truncf %1 : vector<31x128xf32> to vector<31x128xbf16>
    %5 = arith.truncf %2 : vector<128x384xf32> to vector<128x384xbf16>
    %cst = arith.constant dense<0.000000e+00> : vector<31x384xf32>
    %6 = tpu.matmul %4, %5, %cst {dimension_numbers = #tpu.dot_dimension_numbers<[1], [0], [0], [1], [0, 0, 1, 1], [], []>} : vector<31x128xbf16>, vector<128x384xbf16>, vector<31x384xf32> -> vector<31x384xf32>
    %7 = vector.broadcast %3 : vector<1x384xf32> to vector<31x384xf32>
    %8 = arith.addf %6, %7 : vector<31x384xf32>
    %9 = vector.extract_strided_slice %8 {offsets = [0, 0], sizes = [31, 128], strides = [1, 1]} : vector<31x384xf32> to vector<31x128xf32>
    %cst_6 = arith.constant 1.250000e-01 : f32
    %10 = vector.broadcast %cst_6 : f32 to vector<31x128xf32>
    %11 = arith.mulf %9, %10 : vector<31x128xf32>
    %12 = vector.extract_strided_slice %8 {offsets = [0, 128], sizes = [31, 128], strides = [1, 1]} : vector<31x384xf32> to vector<31x128xf32>
    %13 = vector.extract_strided_slice %8 {offsets = [0, 256], sizes = [31, 128], strides = [1, 1]} : vector<31x384xf32> to vector<31x128xf32>
    %14 = vector.extract_strided_slice %11 {offsets = [0, 0], sizes = [31, 64], strides = [1, 1]} : vector<31x128xf32> to vector<31x64xf32>
    %15 = arith.truncf %14 : vector<31x64xf32> to vector<31x64xbf16>
    %16 = vector.extract_strided_slice %12 {offsets = [0, 0], sizes = [31, 64], strides = [1, 1]} : vector<31x128xf32> to vector<31x64xf32>
    %17 = arith.truncf %16 : vector<31x64xf32> to vector<31x64xbf16>
    %18 = vector.extract_strided_slice %13 {offsets = [0, 0], sizes = [31, 64], strides = [1, 1]} : vector<31x128xf32> to vector<31x64xf32>
    %19 = arith.truncf %18 : vector<31x64xf32> to vector<31x64xbf16>
    %cst_7 = arith.constant dense<0.000000e+00> : vector<31x31xf32>
    %20 = tpu.matmul %15, %17, %cst_7 {dimension_numbers = #tpu.dot_dimension_numbers<[1], [1], [0], [0], [0, 0, 1, 0], [], []>} : vector<31x64xbf16>, vector<31x64xbf16>, vector<31x31xf32> -> vector<31x31xf32>
    %cst_8 = arith.constant dense<0xFF800000> : vector<31xf32>
    %21 = vector.multi_reduction <maximumf>, %20, %cst_8 [1] : vector<31x31xf32> to vector<31xf32>
    %22 = vector.shape_cast %21 : vector<31xf32> to vector<31x1xf32>
    %23 = vector.broadcast %22 : vector<31x1xf32> to vector<31x31xf32>
    %24 = arith.subf %20, %23 : vector<31x31xf32>
    %25 = math.exp %24 : vector<31x31xf32>
    %cst_9 = arith.constant dense<0.000000e+00> : vector<31xf32>
    %26 = vector.multi_reduction <add>, %25, %cst_9 [1] : vector<31x31xf32> to vector<31xf32>
    %27 = vector.shape_cast %26 : vector<31xf32> to vector<31x1xf32>
    %28 = tpu.reciprocal %27 {approx = true} : vector<31x1xf32> -> vector<31x1xf32>
    %29 = vector.broadcast %28 : vector<31x1xf32> to vector<31x31xf32>
    %30 = arith.mulf %25, %29 : vector<31x31xf32>
    %31 = arith.truncf %30 : vector<31x31xf32> to vector<31x31xbf16>
    %cst_10 = arith.constant dense<0.000000e+00> : vector<31x64xf32>
    %32 = tpu.matmul %31, %19, %cst_10 {dimension_numbers = #tpu.dot_dimension_numbers<[1], [0], [0], [1], [0, 0, 1, 1], [], []>} : vector<31x31xbf16>, vector<31x64xbf16>, vector<31x64xf32> -> vector<31x64xf32>
    %33 = vector.extract_strided_slice %11 {offsets = [0, 64], sizes = [31, 64], strides = [1, 1]} : vector<31x128xf32> to vector<31x64xf32>
    %34 = arith.truncf %33 : vector<31x64xf32> to vector<31x64xbf16>
    %35 = vector.extract_strided_slice %12 {offsets = [0, 64], sizes = [31, 64], strides = [1, 1]} : vector<31x128xf32> to vector<31x64xf32>
    %36 = arith.truncf %35 : vector<31x64xf32> to vector<31x64xbf16>
    %37 = vector.extract_strided_slice %13 {offsets = [0, 64], sizes = [31, 64], strides = [1, 1]} : vector<31x128xf32> to vector<31x64xf32>
    %38 = arith.truncf %37 : vector<31x64xf32> to vector<31x64xbf16>
    %cst_11 = arith.constant dense<0.000000e+00> : vector<31x31xf32>
    %39 = tpu.matmul %34, %36, %cst_11 {dimension_numbers = #tpu.dot_dimension_numbers<[1], [1], [0], [0], [0, 0, 1, 0], [], []>} : vector<31x64xbf16>, vector<31x64xbf16>, vector<31x31xf32> -> vector<31x31xf32>
    %cst_12 = arith.constant dense<0xFF800000> : vector<31xf32>
    %40 = vector.multi_reduction <maximumf>, %39, %cst_12 [1] : vector<31x31xf32> to vector<31xf32>
    %41 = vector.shape_cast %40 : vector<31xf32> to vector<31x1xf32>
    %42 = vector.broadcast %41 : vector<31x1xf32> to vector<31x31xf32>
    %43 = arith.subf %39, %42 : vector<31x31xf32>
    %44 = math.exp %43 : vector<31x31xf32>
    %cst_13 = arith.constant dense<0.000000e+00> : vector<31xf32>
    %45 = vector.multi_reduction <add>, %44, %cst_13 [1] : vector<31x31xf32> to vector<31xf32>
    %46 = vector.shape_cast %45 : vector<31xf32> to vector<31x1xf32>
    %47 = tpu.reciprocal %46 {approx = true} : vector<31x1xf32> -> vector<31x1xf32>
    %48 = vector.broadcast %47 : vector<31x1xf32> to vector<31x31xf32>
    %49 = arith.mulf %44, %48 : vector<31x31xf32>
    %50 = arith.truncf %49 : vector<31x31xf32> to vector<31x31xbf16>
    %cst_14 = arith.constant dense<0.000000e+00> : vector<31x64xf32>
    %51 = tpu.matmul %50, %38, %cst_14 {dimension_numbers = #tpu.dot_dimension_numbers<[1], [0], [0], [1], [0, 0, 1, 1], [], []>} : vector<31x31xbf16>, vector<31x64xbf16>, vector<31x64xf32> -> vector<31x64xf32>
    %52 = tpu.concatenate %32, %51 in 1 : vector<31x64xf32>, vector<31x64xf32> -> vector<31x128xf32>
    %c0_15 = arith.constant 0 : index
    %c0_16 = arith.constant 0 : index
    %53 = vector.load %arg4[%c0_15, %c0_16] : memref<128x128xf32, #tpu.memory_space<vmem>>, vector<128x128xf32>
    %c0_17 = arith.constant 0 : index
    %c0_18 = arith.constant 0 : index
    %54 = vector.load %arg5[%c0_17, %c0_18] : memref<1x128xf32, #tpu.memory_space<vmem>>, vector<1x128xf32>
    %55 = arith.truncf %52 : vector<31x128xf32> to vector<31x128xbf16>
    %56 = arith.truncf %53 : vector<128x128xf32> to vector<128x128xbf16>
    %cst_19 = arith.constant dense<0.000000e+00> : vector<31x128xf32>
    %57 = tpu.matmul %55, %56, %cst_19 {dimension_numbers = #tpu.dot_dimension_numbers<[1], [0], [0], [1], [0, 0, 1, 1], [], []>} : vector<31x128xbf16>, vector<128x128xbf16>, vector<31x128xf32> -> vector<31x128xf32>
    %58 = vector.broadcast %54 : vector<1x128xf32> to vector<31x128xf32>
    %59 = arith.addf %57, %58 : vector<31x128xf32>
    %60 = arith.addf %1, %59 : vector<31x128xf32>
    %c0_20 = arith.constant 0 : index
    %c0_21 = arith.constant 0 : index
    %61 = vector.load %arg6[%c0_20, %c0_21] : memref<1x128xf32, #tpu.memory_space<vmem>>, vector<1x128xf32>
    %c0_22 = arith.constant 0 : index
    %c0_23 = arith.constant 0 : index
    %62 = vector.load %arg7[%c0_22, %c0_23] : memref<1x128xf32, #tpu.memory_space<vmem>>, vector<1x128xf32>
    %cst_24 = arith.constant dense<0.000000e+00> : vector<31xf32>
    %63 = vector.multi_reduction <add>, %60, %cst_24 [1] : vector<31x128xf32> to vector<31xf32>
    %64 = vector.shape_cast %63 : vector<31xf32> to vector<31x1xf32>
    %cst_25 = arith.constant 1.280000e+02 : f32
    %65 = vector.broadcast %cst_25 : f32 to vector<31x1xf32>
    %66 = arith.divf %64, %65 : vector<31x1xf32>
    %67 = vector.broadcast %66 : vector<31x1xf32> to vector<31x128xf32>
    %68 = arith.subf %60, %67 : vector<31x128xf32>
    %69 = arith.mulf %68, %68 : vector<31x128xf32>
    %cst_26 = arith.constant dense<0.000000e+00> : vector<31xf32>
    %70 = vector.multi_reduction <add>, %69, %cst_26 [1] : vector<31x128xf32> to vector<31xf32>
    %71 = vector.shape_cast %70 : vector<31xf32> to vector<31x1xf32>
    %cst_27 = arith.constant 1.280000e+02 : f32
    %72 = vector.broadcast %cst_27 : f32 to vector<31x1xf32>
    %73 = arith.divf %71, %72 : vector<31x1xf32>
    %74 = vector.broadcast %66 : vector<31x1xf32> to vector<31x128xf32>
    %75 = arith.subf %60, %74 : vector<31x128xf32>
    %cst_28 = arith.constant 9.99999974E-6 : f32
    %76 = vector.broadcast %cst_28 : f32 to vector<31x1xf32>
    %77 = arith.addf %73, %76 : vector<31x1xf32>
    %78 = math.rsqrt %77 : vector<31x1xf32>
    %79 = vector.broadcast %78 : vector<31x1xf32> to vector<31x128xf32>
    %80 = arith.mulf %75, %79 : vector<31x128xf32>
    %81 = vector.broadcast %61 : vector<1x128xf32> to vector<31x128xf32>
    %82 = arith.mulf %80, %81 : vector<31x128xf32>
    %83 = vector.broadcast %62 : vector<1x128xf32> to vector<31x128xf32>
    %84 = arith.addf %82, %83 : vector<31x128xf32>
    %c0_29 = arith.constant 0 : index
    %c0_30 = arith.constant 0 : index
    %85 = vector.load %arg8[%c0_29, %c0_30] : memref<128x512xf32, #tpu.memory_space<vmem>>, vector<128x512xf32>
    %c0_31 = arith.constant 0 : index
    %c0_32 = arith.constant 0 : index
    %86 = vector.load %arg9[%c0_31, %c0_32] : memref<1x512xf32, #tpu.memory_space<vmem>>, vector<1x512xf32>
    %87 = arith.truncf %84 : vector<31x128xf32> to vector<31x128xbf16>
    %88 = arith.truncf %85 : vector<128x512xf32> to vector<128x512xbf16>
    %cst_33 = arith.constant dense<0.000000e+00> : vector<31x512xf32>
    %89 = tpu.matmul %87, %88, %cst_33 {dimension_numbers = #tpu.dot_dimension_numbers<[1], [0], [0], [1], [0, 0, 1, 1], [], []>} : vector<31x128xbf16>, vector<128x512xbf16>, vector<31x512xf32> -> vector<31x512xf32>
    %90 = vector.broadcast %86 : vector<1x512xf32> to vector<31x512xf32>
    %91 = arith.addf %89, %90 : vector<31x512xf32>
    %92 = arith.mulf %91, %91 : vector<31x512xf32>
    %93 = arith.mulf %91, %92 : vector<31x512xf32>
    %cst_34 = arith.constant 4.471500e-02 : f32
    %94 = vector.broadcast %cst_34 : f32 to vector<31x512xf32>
    %95 = arith.mulf %94, %93 : vector<31x512xf32>
    %96 = arith.addf %91, %95 : vector<31x512xf32>
    %cst_35 = arith.constant 0.797884583 : f32
    %97 = vector.broadcast %cst_35 : f32 to vector<31x512xf32>
    %98 = arith.mulf %97, %96 : vector<31x512xf32>
    %99 = math.tanh %98 : vector<31x512xf32>
    %cst_36 = arith.constant 1.000000e+00 : f32
    %100 = vector.broadcast %cst_36 : f32 to vector<31x512xf32>
    %101 = arith.addf %100, %99 : vector<31x512xf32>
    %cst_37 = arith.constant 5.000000e-01 : f32
    %102 = vector.broadcast %cst_37 : f32 to vector<31x512xf32>
    %103 = arith.mulf %102, %101 : vector<31x512xf32>
    %104 = arith.mulf %91, %103 : vector<31x512xf32>
    %c0_38 = arith.constant 0 : index
    %c0_39 = arith.constant 0 : index
    %105 = vector.load %arg10[%c0_38, %c0_39] : memref<512x128xf32, #tpu.memory_space<vmem>>, vector<512x128xf32>
    %c0_40 = arith.constant 0 : index
    %c0_41 = arith.constant 0 : index
    %106 = vector.load %arg11[%c0_40, %c0_41] : memref<1x128xf32, #tpu.memory_space<vmem>>, vector<1x128xf32>
    %107 = arith.truncf %104 : vector<31x512xf32> to vector<31x512xbf16>
    %108 = arith.truncf %105 : vector<512x128xf32> to vector<512x128xbf16>
    %cst_42 = arith.constant dense<0.000000e+00> : vector<31x128xf32>
    %109 = tpu.matmul %107, %108, %cst_42 {dimension_numbers = #tpu.dot_dimension_numbers<[1], [0], [0], [1], [0, 0, 1, 1], [], []>} : vector<31x512xbf16>, vector<512x128xbf16>, vector<31x128xf32> -> vector<31x128xf32>
    %110 = vector.broadcast %106 : vector<1x128xf32> to vector<31x128xf32>
    %111 = arith.addf %109, %110 : vector<31x128xf32>
    %112 = arith.addf %84, %111 : vector<31x128xf32>
    %c0_43 = arith.constant 0 : index
    %c0_44 = arith.constant 0 : index
    %113 = vector.load %arg12[%c0_43, %c0_44] : memref<1x128xf32, #tpu.memory_space<vmem>>, vector<1x128xf32>
    %c0_45 = arith.constant 0 : index
    %c0_46 = arith.constant 0 : index
    %114 = vector.load %arg13[%c0_45, %c0_46] : memref<1x128xf32, #tpu.memory_space<vmem>>, vector<1x128xf32>
    %cst_47 = arith.constant dense<0.000000e+00> : vector<31xf32>
    %115 = vector.multi_reduction <add>, %112, %cst_47 [1] : vector<31x128xf32> to vector<31xf32>
    %116 = vector.shape_cast %115 : vector<31xf32> to vector<31x1xf32>
    %cst_48 = arith.constant 1.280000e+02 : f32
    %117 = vector.broadcast %cst_48 : f32 to vector<31x1xf32>
    %118 = arith.divf %116, %117 : vector<31x1xf32>
    %119 = vector.broadcast %118 : vector<31x1xf32> to vector<31x128xf32>
    %120 = arith.subf %112, %119 : vector<31x128xf32>
    %121 = arith.mulf %120, %120 : vector<31x128xf32>
    %cst_49 = arith.constant dense<0.000000e+00> : vector<31xf32>
    %122 = vector.multi_reduction <add>, %121, %cst_49 [1] : vector<31x128xf32> to vector<31xf32>
    %123 = vector.shape_cast %122 : vector<31xf32> to vector<31x1xf32>
    %cst_50 = arith.constant 1.280000e+02 : f32
    %124 = vector.broadcast %cst_50 : f32 to vector<31x1xf32>
    %125 = arith.divf %123, %124 : vector<31x1xf32>
    %126 = vector.broadcast %118 : vector<31x1xf32> to vector<31x128xf32>
    %127 = arith.subf %112, %126 : vector<31x128xf32>
    %cst_51 = arith.constant 9.99999974E-6 : f32
    %128 = vector.broadcast %cst_51 : f32 to vector<31x1xf32>
    %129 = arith.addf %125, %128 : vector<31x1xf32>
    %130 = math.rsqrt %129 : vector<31x1xf32>
    %131 = vector.broadcast %130 : vector<31x1xf32> to vector<31x128xf32>
    %132 = arith.mulf %127, %131 : vector<31x128xf32>
    %133 = vector.broadcast %113 : vector<1x128xf32> to vector<31x128xf32>
    %134 = arith.mulf %132, %133 : vector<31x128xf32>
    %135 = vector.broadcast %114 : vector<1x128xf32> to vector<31x128xf32>
    %136 = arith.addf %134, %135 : vector<31x128xf32>
    %c0_52 = arith.constant 0 : index
    %c0_53 = arith.constant 0 : index
    %c0_54 = arith.constant 0 : index
    %137 = vector.load %arg14[%c0_52, %c0_53, %c0_54] : memref<1x31x128xf32, #tpu.memory_space<vmem>>, vector<1x31x128xf32>
    %138 = vector.shape_cast %137 : vector<1x31x128xf32> to vector<31x128xf32>
    %139 = vector.shape_cast %136 : vector<31x128xf32> to vector<1x31x128xf32>
    tpu.vector_store %arg14[%c0_52, %c0_53, %c0_54], %139 {strides = array<i32>} : memref<1x31x128xf32, #tpu.memory_space<vmem>>, vector<1x31x128xf32>,
    return
  }
  func.func @transform_0(%arg0: i32) -> (i32, i32, i32) {
    %c0_i32 = arith.constant 0 : i32
    %c0_i32_0 = arith.constant 0 : i32
    %c0_i32_1 = arith.constant 0 : i32
    return %arg0, %c0_i32, %c0_i32_0 : i32, i32, i32
  }
  func.func @transform_1(%arg0: i32) -> (i32, i32) {
    %c0_i32 = arith.constant 0 : i32
    %c0_i32_0 = arith.constant 0 : i32
    %c0_i32_1 = arith.constant 0 : i32
    return %c0_i32, %c0_i32_0 : i32, i32
  }
  func.func @transform_2(%arg0: i32) -> (i32, i32) {
    %c0_i32 = arith.constant 0 : i32
    %c0_i32_0 = arith.constant 0 : i32
    %c0_i32_1 = arith.constant 0 : i32
    return %c0_i32, %c0_i32_0 : i32, i32
  }
  func.func @transform_3(%arg0: i32) -> (i32, i32) {
    %c0_i32 = arith.constant 0 : i32
    %c0_i32_0 = arith.constant 0 : i32
    %c0_i32_1 = arith.constant 0 : i32
    return %c0_i32, %c0_i32_0 : i32, i32
  }
  func.func @transform_4(%arg0: i32) -> (i32, i32) {
    %c0_i32 = arith.constant 0 : i32
    %c0_i32_0 = arith.constant 0 : i32
    %c0_i32_1 = arith.constant 0 : i32
    return %c0_i32, %c0_i32_0 : i32, i32
  }
  func.func @transform_5(%arg0: i32) -> (i32, i32) {
    %c0_i32 = arith.constant 0 : i32
    %c0_i32_0 = arith.constant 0 : i32
    %c0_i32_1 = arith.constant 0 : i32
    return %c0_i32, %c0_i32_0 : i32, i32
  }
  func.func @transform_6(%arg0: i32) -> (i32, i32) {
    %c0_i32 = arith.constant 0 : i32
    %c0_i32_0 = arith.constant 0 : i32
    %c0_i32_1 = arith.constant 0 : i32
    return %c0_i32, %c0_i32_0 : i32, i32
  }
  func.func @transform_7(%arg0: i32) -> (i32, i32) {
    %c0_i32 = arith.constant 0 : i32
    %c0_i32_0 = arith.constant 0 : i32
    %c0_i32_1 = arith.constant 0 : i32
    return %c0_i32, %c0_i32_0 : i32, i32
  }
  func.func @transform_8(%arg0: i32) -> (i32, i32) {
    %c0_i32 = arith.constant 0 : i32
    %c0_i32_0 = arith.constant 0 : i32
    %c0_i32_1 = arith.constant 0 : i32
    return %c0_i32, %c0_i32_0 : i32, i32
  }
  func.func @transform_9(%arg0: i32) -> (i32, i32) {
    %c0_i32 = arith.constant 0 : i32
    %c0_i32_0 = arith.constant 0 : i32
    %c0_i32_1 = arith.constant 0 : i32
    return %c0_i32, %c0_i32_0 : i32, i32
  }
  func.func @transform_10(%arg0: i32) -> (i32, i32) {
    %c0_i32 = arith.constant 0 : i32
    %c0_i32_0 = arith.constant 0 : i32
    %c0_i32_1 = arith.constant 0 : i32
    return %c0_i32, %c0_i32_0 : i32, i32
  }
  func.func @transform_11(%arg0: i32) -> (i32, i32) {
    %c0_i32 = arith.constant 0 : i32
    %c0_i32_0 = arith.constant 0 : i32
    %c0_i32_1 = arith.constant 0 : i32
    return %c0_i32, %c0_i32_0 : i32, i32
  }
  func.func @transform_12(%arg0: i32) -> (i32, i32) {
    %c0_i32 = arith.constant 0 : i32
    %c0_i32_0 = arith.constant 0 : i32
    %c0_i32_1 = arith.constant 0 : i32
    return %c0_i32, %c0_i32_0 : i32, i32
  }
  func.func @transform_13(%arg0: i32) -> (i32, i32, i32) {
    %c0_i32 = arith.constant 0 : i32
    %c0_i32_0 = arith.constant 0 : i32
    %c0_i32_1 = arith.constant 0 : i32
    return %arg0, %c0_i32, %c0_i32_0 : i32, i32, i32
  }
}

</mosaic_0001>

<llo_original>
// kernel: wav2vec2_forward.5
$region0: #{wav2vec2_forward.5}
  #allocation0 [shape = 'u32[]', space=smem, size = 0x4, offset = 0x4, fixed_abs, tag = 'smem constant byte address 0x4 - core index']
  #allocation1 [shape = 'u32[144,128]{1,0:T(1,128)}', space=vmem, size = 0x12000, scoped, tag = 'internal scratch']
  %s0 = inlined_call_operand.vmem [shape: f32[2,64,5], index: 0, kind: input, shape index: {}]
  %s1 = inlined_call_operand.vmem [shape: f32[2,5,128], index: 1, kind: input, shape index: {}]
  %s2 = inlined_call_operand.vmem [shape: f32[1,128], index: 2, kind: input, shape index: {}]
  %s3 = inlined_call_operand.vmem [shape: f32[1,128], index: 3, kind: input, shape index: {}]
  %s4 = inlined_call_operand.vmem [shape: f32[2,63,128], index: 4, kind: output, shape index: {}]
  %s5 = sld [smem:[#allocation0]]
  $region49: #{wav2vec2_forward.5} parent=0
    _
  %s7 = ssub.s32 1, %s5
  %s8 = scalar_select 0, %s7, %s5
  loop: start=0, step=1, limit=4
  $region2: #{wav2vec2_forward.5} parent=0 // loop_pre_header
    _
  $region3: #{wav2vec2_forward.5} parent=0 // loop_header
    %s10 = sphi 0, %s14
    %p11 = scmp.ge.s32.totalorder %s10, 4
    %s20 = sphi 0, %s22
    %s23 = sphi 0, %s20
    %s24 = sphi 0, %s23
    %s40 = sphi 0, %s24
    %s44 = sphi 0, %s44
    %s46 = sphi 0, %s44
    %s47 = sphi 0, %s46
    %s61 = sphi 0, %s47
    %s65 = sphi 0, %s65
    %s67 = sphi 0, %s65
    %s68 = sphi 0, %s67
    %s82 = sphi 0, %s68
    %s86 = sphi 0, %s86
    %s88 = sphi 0, %s86
    %s89 = sphi 0, %s88
    %s103 = sphi 0, %s89
    %s109 = sphi 0, %s111
    %s112 = sphi 0, %s109
    %s113 = sphi 0, %s112
    %s129 = sphi 0, %s113
  $region4: #{wav2vec2_forward.5} parent=0 // loop_header_branch
    %13 = sbr.rel (%p11) target = $region8
  $region5: #{wav2vec2_forward.5} parent=0 // loop_body
    %s15 = ssub.s32 %s10, 1
    %s16 = ssub.s32 %s10, 2
    %s17 = sadd.s32 %s10, 1
    %s18 = ssub.s32 %s10, %s17
    %p19 = scmp.eq.s32.totalorder %s18, 0
    %s21 = sadd.s32 %s20, 1
    %s22 = scalar_select %p19, %s20, %s21
    %p25 = pneg %p19
    %p26 = scmp.eq.s32.totalorder %s10, 1
    %p27 = por %p25, %p26
    %p28 = scmp.ne.s32.totalorder %s20, %s23
    %p29 = scmp.eq.s32.totalorder %s10, 0
    %p30 = por %p28, %p29
    %p31 = scmp.ne.s32.totalorder %s20, %s23
    %p32 = scmp.eq.s32.totalorder %s15, 1
    %p33 = por %p31, %p32
    %p34 = scmp.ne.s32.totalorder %s23, %s24
    %p35 = scmp.eq.s32.totalorder %s15, 0
    %p36 = por %p34, %p35
    %p37 = scmp.ne.s32.totalorder %s23, %s24
    %p38 = scmp.eq.s32.totalorder %s16, 1
    %p39 = por %p37, %p38
    %p41 = scmp.ne.s32.totalorder %s24, %s40
    %p42 = scmp.eq.s32.totalorder %s16, 0
    %p43 = por %p41, %p42
    %s45 = sadd.s32 %s44, 1
    %p48 = scmp.eq.s32.totalorder %s10, 1
    %p49 = scmp.ne.s32.totalorder %s44, %s46
    %p50 = scmp.eq.s32.totalorder %s10, 0
    %p51 = por %p49, %p50
    %p52 = scmp.ne.s32.totalorder %s44, %s46
    %p53 = scmp.eq.s32.totalorder %s15, 1
    %p54 = por %p52, %p53
    %p55 = scmp.ne.s32.totalorder %s46, %s47
    %p56 = scmp.eq.s32.totalorder %s15, 0
    %p57 = por %p55, %p56
    %p58 = scmp.ne.s32.totalorder %s46, %s47
    %p59 = scmp.eq.s32.totalorder %s16, 1
    %p60 = por %p58, %p59
    %p62 = scmp.ne.s32.totalorder %s47, %s61
    %p63 = scmp.eq.s32.totalorder %s16, 0
    %p64 = por %p62, %p63
    %s66 = sadd.s32 %s65, 1
    %p69 = scmp.eq.s32.totalorder %s10, 1
    %p70 = scmp.ne.s32.totalorder %s65, %s67
    %p71 = scmp.eq.s32.totalorder %s10, 0
    %p72 = por %p70, %p71
    %p73 = scmp.ne.s32.totalorder %s65, %s67
    %p74 = scmp.eq.s32.totalorder %s15, 1
    %p75 = por %p73, %p74
    %p76 = scmp.ne.s32.totalorder %s67, %s68
    %p77 = scmp.eq.s32.totalorder %s15, 0
    %p78 = por %p76, %p77
    %p79 = scmp.ne.s32.totalorder %s67, %s68
    %p80 = scmp.eq.s32.totalorder %s16, 1
    %p81 = por %p79, %p80
    %p83 = scmp.ne.s32.totalorder %s68, %s82
    %p84 = scmp.eq.s32.totalorder %s16, 0
    %p85 = por %p83, %p84
    %s87 = sadd.s32 %s86, 1
    %p90 = scmp.eq.s32.totalorder %s10, 1
    %p91 = scmp.ne.s32.totalorder %s86, %s88
    %p92 = scmp.eq.s32.totalorder %s10, 0
    %p93 = por %p91, %p92
    %p94 = scmp.ne.s32.totalorder %s86, %s88
    %p95 = scmp.eq.s32.totalorder %s15, 1
    %p96 = por %p94, %p95
    %p97 = scmp.ne.s32.totalorder %s88, %s89
    %p98 = scmp.eq.s32.totalorder %s15, 0
    %p99 = por %p97, %p98
    %p100 = scmp.ne.s32.totalorder %s88, %s89
    %p101 = scmp.eq.s32.totalorder %s16, 1
    %p102 = por %p100, %p101
    %p104 = scmp.ne.s32.totalorder %s89, %s103
    %p105 = scmp.eq.s32.totalorder %s16, 0
    %p106 = por %p104, %p105
    %s107 = ssub.s32 %s10, %s17
    %p108 = scmp.eq.s32.totalorder %s107, 0
    %s110 = sadd.s32 %s109, 1
    %s111 = scalar_select %p108, %s109, %s110
    %p114 = pneg %p108
    %p115 = scmp.eq.s32.totalorder %s10, 1
    %p116 = por %p114, %p115
    %p117 = scmp.ne.s32.totalorder %s109, %s112
    %p118 = scmp.eq.s32.totalorder %s10, 0
    %p119 = por %p117, %p118
    %p120 = scmp.ne.s32.totalorder %s109, %s112
    %p121 = scmp.eq.s32.totalorder %s15, 1
    %p122 = por %p120, %p121
    %p123 = scmp.ne.s32.totalorder %s112, %s113
    %p124 = scmp.eq.s32.totalorder %s15, 0
    %p125 = por %p123, %p124
    %p126 = scmp.ne.s32.totalorder %s112, %s113
    %p127 = scmp.eq.s32.totalorder %s16, 1
    %p128 = por %p126, %p127
    %p130 = scmp.ne.s32.totalorder %s113, %s129
    %p131 = scmp.eq.s32.totalorder %s16, 0
    %p132 = por %p130, %p131
    %p133 = scmp.le.s32.totalorder 1, %s10
    %p134 = scmp.lt.s32.totalorder %s10, 3
    %p135 = pnand %p133, %p134
    %p136 = pneg %p135
    // Predicated region
    $region9: #{wav2vec2_forward.5} parent=5 // pred_check
      _
    $region10: #{wav2vec2_forward.5} parent=5 // pred_check_branch
      %138 = sbr.rel (%p135) target = $region12
    $region11: #{wav2vec2_forward.5} parent=5 // pred_region
      %s139 = ssub.s32 %s10, 1
      // Predicated region
      $region13: #{wav2vec2_forward.5} parent=11 // pred_check
        %p140 = pneg %p57
      $region14: #{wav2vec2_forward.5} parent=11 // pred_check_branch
        %142 = sbr.rel (%p140) target = $region16
      $region15: #{wav2vec2_forward.5} parent=11 // pred_region
        _
      $region16: #{wav2vec2_forward.5} parent=11 // pred_fallthru
        _
      // Predicated region
      $region17: #{wav2vec2_forward.5} parent=11 // pred_check
        %p143 = pneg %p78
      $region18: #{wav2vec2_forward.5} parent=11 // pred_check_branch
        %145 = sbr.rel (%p143) target = $region20
      $region19: #{wav2vec2_forward.5} parent=11 // pred_region
        _
      $region20: #{wav2vec2_forward.5} parent=11 // pred_fallthru
        _
      // Predicated region
      $region21: #{wav2vec2_forward.5} parent=11 // pred_check
        %p146 = pneg %p99
      $region22: #{wav2vec2_forward.5} parent=11 // pred_check_branch
        %148 = sbr.rel (%p146) target = $region24
      $region23: #{wav2vec2_forward.5} parent=11 // pred_region
        _
      $region24: #{wav2vec2_forward.5} parent=11 // pred_fallthru
        _
    $region12: #{wav2vec2_forward.5} parent=5 // pred_fallthru
      _
    %p149 = scmp.lt.s32.totalorder %s10, 2
    // Predicated region
    $region25: #{wav2vec2_forward.5} parent=5 // pred_check
      %p150 = pneg %p149
    $region26: #{wav2vec2_forward.5} parent=5 // pred_check_branch
      %152 = sbr.rel (%p150) target = $region28
    $region27: #{wav2vec2_forward.5} parent=5 // pred_region
      // Predicated region
      $region29: #{wav2vec2_forward.5} parent=27 // pred_check
        %p153 = pneg %p30
      $region30: #{wav2vec2_forward.5} parent=27 // pred_check_branch
        %155 = sbr.rel (%p153) target = $region32
      $region31: #{wav2vec2_forward.5} parent=27 // pred_region
        %p156 = scmp.lt.s32.totalorder %s10, 1
        %s157 = scalar_select %p156, %s10, 1
        %s158 = smul.addr %s157, 8
        %s159 = smul.addr %s158, 8
        %s160 = scalar_lea.vmem %s0, %s159
      $region32: #{wav2vec2_forward.5} parent=27 // pred_fallthru
        _
    $region28: #{wav2vec2_forward.5} parent=5 // pred_fallthru
      _
    %p161 = scmp.le.s32.totalorder 1, %s10
    %p162 = scmp.lt.s32.totalorder %s10, 3
    %p163 = pnand %p161, %p162
    %p164 = pneg %p163
    // Predicated region
    $region33: #{wav2vec2_forward.5} parent=5 // pred_check
      _
    $region34: #{wav2vec2_forward.5} parent=5 // pred_check_branch
      %166 = sbr.rel (%p163) target = $region36
    $region35: #{wav2vec2_forward.5} parent=5 // pred_region
      %s167 = ssub.s32 %s10, 1
      %p168 = scmp.lt.s32.totalorder %s15, 1
      %s169 = scalar_select %p168, %s15, 1
      %s170 = smul.addr %s169, 8
      %s171 = smul.addr %s170, 8
      %s172 = scalar_lea.vmem %s0, %s171
      %p173 = pneg %p36
      %p174 = pneg %p33
      %p175 = pneg %p57
      %p176 = pneg %p54
      %p177 = pneg %p78
      %p178 = pneg %p75
      %p179 = pneg %p99
      %p180 = pneg %p96
      %p181 = pneg %p125
      %p182 = pneg %p122
      %p183 = scmp.lt.s32.totalorder %s15, 1
      %s184 = scalar_select %p183, %s15, 1
      %s185 = smul.addr %s184, 8
      %s186 = smul.addr %s185, 8
      %s187 = scalar_lea.vmem %s4, %s186
      %p188 = scmp.lt.s32.totalorder %s15, 1
      %s189 = scalar_select %p188, %s15, 1
      %s190 = smul.addr %s189, 8
      %s191 = smul.addr %s190, 8
      %s192 = scalar_lea.vmem %s0, %s191
      %p193 = scmp.lt.s32.totalorder %s15, 1
      %s194 = scalar_select %p193, %s15, 1
      %s195 = smul.addr %s194, 8
      %s196 = smul.addr %s195, 8
      %s197 = scalar_lea.vmem %s4, %s196
      %v198 = vld [vmem:[%s192] sm:$0xff]
      %v199 = vld [vmem:[%s192 + $0x8] sm:$0xff]
      %v200 = vld [vmem:[%s192 + $0x10] sm:$0xff]
      %v201 = vld [vmem:[%s192 + $0x18] sm:$0xff]
      %v202 = vld [vmem:[%s192 + $0x20] sm:$0xff]
      %v203 = vld [vmem:[%s192 + $0x28] sm:$0xff]
      %v204 = vld [vmem:[%s192 + $0x30] sm:$0xff]
      %v205 = vld [vmem:[%s192 + $0x38] sm:$0xff]
      %v206 = vld [vmem:[%s1] sm:$0x1f]
      %s207 = scalar_lea.vmem %s1, 8
      %v208 = vld [vmem:[%s207] sm:$0x1f]
      %vm217 = vcmask 1046528
      %v218 = vrot.slane %v198, 1
      %v219 = vrot.slane %v199, 1
      %v220 = vsel %vm217, %v218, %v219
      %v221 = vrot.slane %v200, 1
      %v222 = vsel %vm217, %v219, %v221
      %v223 = vrot.slane %v201, 1
      %v224 = vsel %vm217, %v221, %v223
      %v225 = vrot.slane %v202, 1
      %v226 = vsel %vm217, %v223, %v225
      %v227 = vrot.slane %v203, 1
      %v228 = vsel %vm217, %v225, %v227
      %v229 = vrot.slane %v204, 1
      %v230 = vsel %vm217, %v227, %v229
      %v231 = vrot.slane %v205, 1
      %v232 = vsel %vm217, %v229, %v231
      %vm233 = vcmask 39936
      %v234 = vsel %vm233, %v220, 0
      %v236 = vsel %vm233, %v222, 0
      %v238 = vsel %vm233, %v224, 0
      %v240 = vsel %vm233, %v226, 0
      %v242 = vsel %vm233, %v228, 0
      %v244 = vsel %vm233, %v230, 0
      %v246 = vsel %vm233, %v232, 0
      %v248 = vsel %vm233, %v231, 0
      %vm250 = vcmask 1044480
      %v252 = vsel %vm250, %v208, 0
      %254 = vmatprep.subr.mxu0 0.0
      %255 = vmatpush1.msra.mxu0 0.0
      %256 = vmatprep.subr.mxu0 0.0
      %257 = vmatpush1.msra.mxu0 0.0
      %258 = vmatprep.subr.mxu0 0.0
      %259 = vmatpush1.msra.mxu0 0.0
      %260 = vmatprep.subr.mxu0 0.0
      %261 = vmatpush1.msra.mxu0 0.0
      %262 = vmatprep.subr.mxu0 0.0
      %263 = vmatpush1.msra.mxu0 0.0
      %264 = vmatprep.subr.mxu0 0.0
      %265 = vmatpush1.msra.mxu0 0.0
      %266 = vmatprep.subr.mxu0 0.0
      %267 = vmatpush1.msra.mxu0 0.0
      %268 = vmatprep.subr.mxu0 0.0
      %269 = vmatpush1.msra.mxu0 0.0
      %270 = vmatprep.subr.mxu0 0.0
      %271 = vmatpush1.msra.mxu0 0.0
      %272 = vmatprep.subr.mxu0 0.0
      %273 = vmatpush1.msra.mxu0 0.0
      %274 = vmatprep.subr.mxu0 0.0
      %275 = vmatpush1.msra.mxu0 0.0
      %276 = vmatprep.subr.mxu0 0.0
      %277 = vmatpush1.msra.mxu0 0.0
      %278 = vmatprep.subr.mxu0 0.0
      %279 = vmatpush1.msra.mxu0 0.0
      %280 = vmatprep.subr.mxu0 0.0
      %281 = vmatpush1.msra.mxu0 0.0
      %282 = vmatprep.subr.mxu0 0.0
      %283 = vmatpush1.msra.mxu0 0.0
      %284 = vmatprep.subr.mxu0 0.0
      %285 = vmatpush1.msra.mxu0 %v252
      %286 = vmatprep.subr.mxu0 0.0
      %287 = vmatpush2.msra.mxu0 0.0
      %288 = vmatprep.subr.mxu0 0.0
      %289 = vmatpush2.msra.mxu0 0.0
      %290 = vmatprep.subr.mxu0 0.0
      %291 = vmatpush2.msra.mxu0 0.0
      %292 = vmatprep.subr.mxu0 0.0
      %293 = vmatpush2.msra.mxu0 0.0
      %294 = vmatprep.subr.mxu0 0.0
      %295 = vmatpush2.msra.mxu0 0.0
      %296 = vmatprep.subr.mxu0 0.0
      %297 = vmatpush2.msra.mxu0 0.0
      %298 = vmatprep.subr.mxu0 0.0
      %299 = vmatpush2.msra.mxu0 0.0
      %300 = vmatprep.subr.mxu0 0.0
      %301 = vmatpush2.msra.mxu0 0.0
      %302 = vmatprep.subr.mxu0 0.0
      %303 = vmatpush2.msra.mxu0 0.0
      %304 = vmatprep.subr.mxu0 0.0
      %305 = vmatpush2.msra.mxu0 0.0
      %306 = vmatprep.subr.mxu0 0.0
      %307 = vmatpush2.msra.mxu0 0.0
      %308 = vmatprep.subr.mxu0 0.0
      %309 = vmatpush2.msra.mxu0 0.0
      %310 = vmatprep.subr.mxu0 0.0
      %311 = vmatpush2.msra.mxu0 0.0
      %312 = vmatprep.subr.mxu0 0.0
      %313 = vmatpush2.msra.mxu0 0.0
      %314 = vmatprep.subr.mxu0 0.0
      %315 = vmatpush2.msra.mxu0 0.0
      %316 = vmatprep.subr.mxu0 0.0
      %317 = vmatpush2.msra.mxu0 0.0
      %318 = vmatprep.mubr.f32.mxu0 0.0
      %319 = vmatmul.mubr.f32.gmra.mxu0 %v234
      %v320 = vpop.f32.mrf.mxu0
      %v321 = vadd.f32 0.0, %v320
      %v322 = vpop.f32.mrf.mxu0
      %323 = vmatprep.mubr.f32.mxu0 0.0
      %324 = vmatmul.mubr.f32.gmra.mxu0 %v236
      %v325 = vpop.f32.mrf.mxu0
      %v326 = vadd.f32 0.0, %v325
      %v327 = vpop.f32.mrf.mxu0
      %328 = vmatprep.mubr.f32.mxu0 0.0
      %329 = vmatmul.mubr.f32.gmra.mxu0 %v238
      %v330 = vpop.f32.mrf.mxu0
      %v331 = vadd.f32 0.0, %v330
      %v332 = vpop.f32.mrf.mxu0
      %333 = vmatprep.mubr.f32.mxu0 0.0
      %334 = vmatmul.mubr.f32.gmra.mxu0 %v240
      %v335 = vpop.f32.mrf.mxu0
      %v336 = vadd.f32 0.0, %v335
      %v337 = vpop.f32.mrf.mxu0
      %338 = vmatprep.mubr.f32.mxu0 0.0
      %339 = vmatmul.mubr.f32.gmra.mxu0 %v242
      %v340 = vpop.f32.mrf.mxu0
      %v341 = vadd.f32 0.0, %v340
      %v342 = vpop.f32.mrf.mxu0
      %343 = vmatprep.mubr.f32.mxu0 0.0
      %344 = vmatmul.mubr.f32.gmra.mxu0 %v244
      %v345 = vpop.f32.mrf.mxu0
      %v346 = vadd.f32 0.0, %v345
      %v347 = vpop.f32.mrf.mxu0
      %348 = vmatprep.mubr.f32.mxu0 0.0
      %349 = vmatmul.mubr.f32.gmra.mxu0 %v246
      %v350 = vpop.f32.mrf.mxu0
      %v351 = vadd.f32 0.0, %v350
      %v352 = vpop.f32.mrf.mxu0
      %353 = vmatprep.mubr.f32.mxu0 0.0
      %354 = vmatmul.mubr.f32.gmra.mxu0 %v248
      %v355 = vpop.f32.mrf.mxu0
      %v356 = vadd.f32 0.0, %v355
      %v357 = vpop.f32.mrf.mxu0
      %358 = vdwg.mxu0
      %v359 = vsel %vm233, %v198, 0
      %v361 = vsel %vm233, %v199, 0
      %v363 = vsel %vm233, %v200, 0
      %v365 = vsel %vm233, %v201, 0
      %v367 = vsel %vm233, %v202, 0
      %v369 = vsel %vm233, %v203, 0
      %v371 = vsel %vm233, %v204, 0
      %v373 = vsel %vm233, %v205, 0
      %v376 = vsel %vm250, %v206, 0
      %378 = vmatprep.subr.mxu0 0.0
      %379 = vmatpush1.msra.mxu0 0.0
      %380 = vmatprep.subr.mxu0 0.0
      %381 = vmatpush1.msra.mxu0 0.0
      %382 = vmatprep.subr.mxu0 0.0
      %383 = vmatpush1.msra.mxu0 0.0
      %384 = vmatprep.subr.mxu0 0.0
      %385 = vmatpush1.msra.mxu0 0.0
      %386 = vmatprep.subr.mxu0 0.0
      %387 = vmatpush1.msra.mxu0 0.0
      %388 = vmatprep.subr.mxu0 0.0
      %389 = vmatpush1.msra.mxu0 0.0
      %390 = vmatprep.subr.mxu0 0.0
      %391 = vmatpush1.msra.mxu0 0.0
      %392 = vmatprep.subr.mxu0 0.0
      %393 = vmatpush1.msra.mxu0 0.0
      %394 = vmatprep.subr.mxu0 0.0
      %395 = vmatpush1.msra.mxu0 0.0
      %396 = vmatprep.subr.mxu0 0.0
      %397 = vmatpush1.msra.mxu0 0.0
      %398 = vmatprep.subr.mxu0 0.0
      %399 = vmatpush1.msra.mxu0 0.0
      %400 = vmatprep.subr.mxu0 0.0
      %401 = vmatpush1.msra.mxu0 0.0
      %402 = vmatprep.subr.mxu0 0.0
      %403 = vmatpush1.msra.mxu0 0.0
      %404 = vmatprep.subr.mxu0 0.0
      %405 = vmatpush1.msra.mxu0 0.0
      %406 = vmatprep.subr.mxu0 0.0
      %407 = vmatpush1.msra.mxu0 0.0
      %408 = vmatprep.subr.mxu0 0.0
      %409 = vmatpush1.msra.mxu0 %v376
      %410 = vmatprep.subr.mxu0 0.0
      %411 = vmatpush2.msra.mxu0 0.0
      %412 = vmatprep.subr.mxu0 0.0
      %413 = vmatpush2.msra.mxu0 0.0
      %414 = vmatprep.subr.mxu0 0.0
      %415 = vmatpush2.msra.mxu0 0.0
      %416 = vmatprep.subr.mxu0 0.0
      %417 = vmatpush2.msra.mxu0 0.0
      %418 = vmatprep.subr.mxu0 0.0
      %419 = vmatpush2.msra.mxu0 0.0
      %420 = vmatprep.subr.mxu0 0.0
      %421 = vmatpush2.msra.mxu0 0.0
      %422 = vmatprep.subr.mxu0 0.0
      %423 = vmatpush2.msra.mxu0 0.0
      %424 = vmatprep.subr.mxu0 0.0
      %425 = vmatpush2.msra.mxu0 0.0
      %426 = vmatprep.subr.mxu0 0.0
      %427 = vmatpush2.msra.mxu0 0.0
      %428 = vmatprep.subr.mxu0 0.0
      %429 = vmatpush2.msra.mxu0 0.0
      %430 = vmatprep.subr.mxu0 0.0
      %431 = vmatpush2.msra.mxu0 0.0
      %432 = vmatprep.subr.mxu0 0.0
      %433 = vmatpush2.msra.mxu0 0.0
      %434 = vmatprep.subr.mxu0 0.0
      %435 = vmatpush2.msra.mxu0 0.0
      %436 = vmatprep.subr.mxu0 0.0
      %437 = vmatpush2.msra.mxu0 0.0
      %438 = vmatprep.subr.mxu0 0.0
      %439 = vmatpush2.msra.mxu0 0.0
      %440 = vmatprep.subr.mxu0 0.0
      %441 = vmatpush2.msra.mxu0 0.0
      %442 = vmatprep.mubr.f32.mxu0 0.0
      %443 = vmatmul.mubr.f32.gmra.mxu0 %v359
      %v444 = vpop.f32.mrf.mxu0
      %v445 = vadd.f32 %v321, %v444
      %v446 = vpop.f32.mrf.mxu0
      %447 = vmatprep.mubr.f32.mxu0 0.0
      %448 = vmatmul.mubr.f32.gmra.mxu0 %v361
      %v449 = vpop.f32.mrf.mxu0
      %v450 = vadd.f32 %v326, %v449
      %v451 = vpop.f32.mrf.mxu0
      %452 = vmatprep.mubr.f32.mxu0 0.0
      %453 = vmatmul.mubr.f32.gmra.mxu0 %v363
      %v454 = vpop.f32.mrf.mxu0
      %v455 = vadd.f32 %v331, %v454
      %v456 = vpop.f32.mrf.mxu0
      %457 = vmatprep.mubr.f32.mxu0 0.0
      %458 = vmatmul.mubr.f32.gmra.mxu0 %v365
      %v459 = vpop.f32.mrf.mxu0
      %v460 = vadd.f32 %v336, %v459
      %v461 = vpop.f32.mrf.mxu0
      %462 = vmatprep.mubr.f32.mxu0 0.0
      %463 = vmatmul.mubr.f32.gmra.mxu0 %v367
      %v464 = vpop.f32.mrf.mxu0
      %v465 = vadd.f32 %v341, %v464
      %v466 = vpop.f32.mrf.mxu0
      %467 = vmatprep.mubr.f32.mxu0 0.0
      %468 = vmatmul.mubr.f32.gmra.mxu0 %v369
      %v469 = vpop.f32.mrf.mxu0
      %v470 = vadd.f32 %v346, %v469
      %v471 = vpop.f32.mrf.mxu0
      %472 = vmatprep.mubr.f32.mxu0 0.0
      %473 = vmatmul.mubr.f32.gmra.mxu0 %v371
      %v474 = vpop.f32.mrf.mxu0
      %v475 = vadd.f32 %v351, %v474
      %v476 = vpop.f32.mrf.mxu0
      %477 = vmatprep.mubr.f32.mxu0 0.0
      %478 = vmatmul.mubr.f32.gmra.mxu0 %v373
      %v479 = vpop.f32.mrf.mxu0
      %v480 = vadd.f32 %v356, %v479
      %v481 = vpop.f32.mrf.mxu0
      %482 = vdwg.mxu0
      %v483 = vadd.f32 %v445, %v450
      %v484 = vadd.f32 %v483, %v455
      %v485 = vadd.f32 %v484, %v460
      %v486 = vadd.f32 %v485, %v465
      %v487 = vadd.f32 %v486, %v470
      %v488 = vadd.f32 %v487, %v475
      %v489 = vsel %vm217, %v480, 0.0
      %v490 = vadd.f32 %v488, %v489
      %v491 = vrot.slane %v490, 4
      %v492 = vadd.f32 %v490, %v491
      %v493 = vrot.slane %v492, 2
      %v494 = vadd.f32 %v492, %v493
      %v495 = vrot.slane %v494, 1
      %v496 = vadd.f32 %v494, %v495
      %v497 = vrcp.pop 63.0
      %v498 = vmul.f32 %v496, %v497
      %v499 = vsub.f32 %v445, %v498
      %v500 = vsub.f32 %v450, %v498
      %v501 = vsub.f32 %v455, %v498
      %v502 = vsub.f32 %v460, %v498
      %v503 = vsub.f32 %v465, %v498
      %v504 = vsub.f32 %v470, %v498
      %v505 = vsub.f32 %v475, %v498
      %v506 = vsub.f32 %v480, %v498
      %v507 = vmul.f32 %v499, %v499
      %v508 = vmul.f32 %v500, %v500
      %v509 = vmul.f32 %v501, %v501
      %v510 = vmul.f32 %v502, %v502
      %v511 = vmul.f32 %v503, %v503
      %v512 = vmul.f32 %v504, %v504
      %v513 = vmul.f32 %v505, %v505
      %v514 = vmul.f32 %v506, %v506
      %v515 = vadd.f32 %v507, %v508
      %v516 = vadd.f32 %v515, %v509
      %v517 = vadd.f32 %v516, %v510
      %v518 = vadd.f32 %v517, %v511
      %v519 = vadd.f32 %v518, %v512
      %v520 = vadd.f32 %v519, %v513
      %v521 = vsel %vm217, %v514, 0.0
      %v522 = vadd.f32 %v520, %v521
      %v523 = vrot.slane %v522, 4
      %v524 = vadd.f32 %v522, %v523
      %v525 = vrot.slane %v524, 2
      %v526 = vadd.f32 %v524, %v525
      %v527 = vrot.slane %v526, 1
      %v528 = vadd.f32 %v526, %v527
      %v529 = vmul.f32 %v528, %v497
      %v530 = vadd.f32 %v529, 1e-05
      %v531 = vrsqrt.pop %v530
      %v532 = vmul.f32 %v499, %v531
      %v533 = vmul.f32 %v500, %v531
      %v534 = vmul.f32 %v501, %v531
      %v535 = vmul.f32 %v502, %v531
      %v536 = vmul.f32 %v503, %v531
      %v537 = vmul.f32 %v504, %v531
      %v538 = vmul.f32 %v505, %v531
      %v539 = vmul.f32 %v506, %v531
      %v540 = vld [vmem:[%s2] sm:$0x1]
      %v542 = vlaneseq
      %v543 = vshrl.u32 %v542, 7
      %v544 = vsub.s32 0, %v543
      %v545 = vrot.slane %v540, %v544
      %v547 = vmul.f32 %v532, %v545
      %v548 = vmul.f32 %v533, %v545
      %v549 = vmul.f32 %v534, %v545
      %v550 = vmul.f32 %v535, %v545
      %v551 = vmul.f32 %v536, %v545
      %v552 = vmul.f32 %v537, %v545
      %v553 = vmul.f32 %v538, %v545
      %v554 = vmul.f32 %v539, %v545
      %v555 = vld [vmem:[%s3] sm:$0x1]
      %v557 = vlaneseq
      %v558 = vshrl.u32 %v557, 7
      %v559 = vsub.s32 0, %v558
      %v560 = vrot.slane %v555, %v559
      %v562 = vadd.f32 %v547, %v560
      %v563 = vadd.f32 %v548, %v560
      %v564 = vadd.f32 %v549, %v560
      %v565 = vadd.f32 %v550, %v560
      %v566 = vadd.f32 %v551, %v560
      %v567 = vadd.f32 %v552, %v560
      %v568 = vadd.f32 %v553, %v560
      %v569 = vadd.f32 %v554, %v560
      %v570 = vmul.f32 %v562, %v562
      %v571 = vmul.f32 %v563, %v563
      %v572 = vmul.f32 %v564, %v564
      %v573 = vmul.f32 %v565, %v565
      %v574 = vmul.f32 %v566, %v566
      %v575 = vmul.f32 %v567, %v567
      %v576 = vmul.f32 %v568, %v568
      %v577 = vmul.f32 %v569, %v569
      %v578 = vmul.f32 %v562, %v570
      %v579 = vmul.f32 %v563, %v571
      %v580 = vmul.f32 %v564, %v572
      %v581 = vmul.f32 %v565, %v573
      %v582 = vmul.f32 %v566, %v574
      %v583 = vmul.f32 %v567, %v575
      %v584 = vmul.f32 %v568, %v576
      %v585 = vmul.f32 %v569, %v577
      %v586 = vmul.f32 %v578, 0.044715
      %v587 = vmul.f32 %v579, 0.044715
      %v588 = vmul.f32 %v580, 0.044715
      %v589 = vmul.f32 %v581, 0.044715
      %v590 = vmul.f32 %v582, 0.044715
      %v591 = vmul.f32 %v583, 0.044715
      %v592 = vmul.f32 %v584, 0.044715
      %v593 = vmul.f32 %v585, 0.044715
      %v594 = vadd.f32 %v562, %v586
      %v595 = vadd.f32 %v563, %v587
      %v596 = vadd.f32 %v564, %v588
      %v597 = vadd.f32 %v565, %v589
      %v598 = vadd.f32 %v566, %v590
      %v599 = vadd.f32 %v567, %v591
      %v600 = vadd.f32 %v568, %v592
      %v601 = vadd.f32 %v569, %v593
      %v602 = vmul.f32 %v594, 0.7978846
      %v603 = vmul.f32 %v595, 0.7978846
      %v604 = vmul.f32 %v596, 0.7978846
      %v605 = vmul.f32 %v597, 0.7978846
      %v606 = vmul.f32 %v598, 0.7978846
      %v607 = vmul.f32 %v599, 0.7978846
      %v608 = vmul.f32 %v600, 0.7978846
      %v609 = vmul.f32 %v601, 0.7978846
      %v610 = vtanh.pop %v602
      %v611 = vtanh.pop %v603
      %v612 = vtanh.pop %v604
      %v613 = vtanh.pop %v605
      %v614 = vtanh.pop %v606
      %v615 = vtanh.pop %v607
      %v616 = vtanh.pop %v608
      %v617 = vtanh.pop %v609
      %v618 = vadd.f32 %v610, 1.0
      %v619 = vadd.f32 %v611, 1.0
      %v620 = vadd.f32 %v612, 1.0
      %v621 = vadd.f32 %v613, 1.0
      %v622 = vadd.f32 %v614, 1.0
      %v623 = vadd.f32 %v615, 1.0
      %v624 = vadd.f32 %v616, 1.0
      %v625 = vadd.f32 %v617, 1.0
      %v626 = vmul.f32 %v618, 0.5
      %v627 = vmul.f32 %v619, 0.5
      %v628 = vmul.f32 %v620, 0.5
      %v629 = vmul.f32 %v621, 0.5
      %v630 = vmul.f32 %v622, 0.5
      %v631 = vmul.f32 %v623, 0.5
      %v632 = vmul.f32 %v624, 0.5
      %v633 = vmul.f32 %v625, 0.5
      %v634 = vmul.f32 %v562, %v626
      %v635 = vmul.f32 %v563, %v627
      %v636 = vmul.f32 %v564, %v628
      %v637 = vmul.f32 %v565, %v629
      %v638 = vmul.f32 %v566, %v630
      %v639 = vmul.f32 %v567, %v631
      %v640 = vmul.f32 %v568, %v632
      %v641 = vmul.f32 %v569, %v633
      %642 = vst [vmem:[%s197] sm:$0xff] %v634
      %643 = vst [vmem:[%s197 + $0x8] sm:$0xff] %v635
      %644 = vst [vmem:[%s197 + $0x10] sm:$0xff] %v636
      %645 = vst [vmem:[%s197 + $0x18] sm:$0xff] %v637
      %646 = vst [vmem:[%s197 + $0x20] sm:$0xff] %v638
      %647 = vst [vmem:[%s197 + $0x28] sm:$0xff] %v639
      %648 = vst [vmem:[%s197 + $0x30] sm:$0xff] %v640
      %649 = vst [vmem:[%s197 + $0x38] sm:$0x7f] %v641
      %p650 = scmp.lt.s32.totalorder %s15, 1
      %s651 = scalar_select %p650, %s15, 1
      %s652 = smul.addr %s651, 8
      %s653 = smul.addr %s652, 8
      %s654 = scalar_lea.vmem %s4, %s653
      // Predicated region
      $region37: #{wav2vec2_forward.5} parent=35 // pred_check
        %p655 = pneg %p122
      $region38: #{wav2vec2_forward.5} parent=35 // pred_check_branch
        %657 = sbr.rel (%p655) target = $region40
      $region39: #{wav2vec2_forward.5} parent=35 // pred_region
        _
      $region40: #{wav2vec2_forward.5} parent=35 // pred_fallthru
        _
    $region36: #{wav2vec2_forward.5} parent=5 // pred_fallthru
      _
    %p658 = scmp.le.s32.totalorder 2, %s10
    // Predicated region
    $region41: #{wav2vec2_forward.5} parent=5 // pred_check
      %p659 = pneg %p658
    $region42: #{wav2vec2_forward.5} parent=5 // pred_check_branch
      %661 = sbr.rel (%p659) target = $region44
    $region43: #{wav2vec2_forward.5} parent=5 // pred_region
      %s662 = ssub.s32 %s10, 2
      // Predicated region
      $region45: #{wav2vec2_forward.5} parent=43 // pred_check
        %p663 = pneg %p128
      $region46: #{wav2vec2_forward.5} parent=43 // pred_check_branch
        %665 = sbr.rel (%p663) target = $region48
      $region47: #{wav2vec2_forward.5} parent=43 // pred_region
        %p666 = scmp.lt.s32.totalorder %s16, 1
        %s667 = scalar_select %p666, %s16, 1
        %s668 = smul.addr %s667, 8
        %s669 = smul.addr %s668, 8
        %s670 = scalar_lea.vmem %s4, %s669
      $region48: #{wav2vec2_forward.5} parent=43 // pred_fallthru
        _
    $region44: #{wav2vec2_forward.5} parent=5 // pred_fallthru
      _
  $region6: #{wav2vec2_forward.5} parent=0 // loop_footer
    %s14 = sadd.s32 1, %s10
  $region7: #{wav2vec2_forward.5} parent=0 // loop_footer_branch
    %9 = sbr.rel target = $region3
  $region8: #{wav2vec2_forward.5} parent=0 // loop_exit
    _

// kernel: wav2vec2_forward.6
$region0: #{wav2vec2_forward.6}
  #allocation0 [shape = 'u32[]', space=smem, size = 0x4, offset = 0x4, fixed_abs, tag = 'smem constant byte address 0x4 - core index']
  #allocation1 [shape = 'u32[144,128]{1,0:T(1,128)}', space=vmem, size = 0x12000, scoped, tag = 'internal scratch']
  %s0 = inlined_call_operand.vmem [shape: f32[2,32,256], index: 0, kind: input, shape index: {}]
  %s1 = inlined_call_operand.vmem [shape: f32[2,256,128], index: 1, kind: input, shape index: {}]
  %s2 = inlined_call_operand.vmem [shape: f32[1,128], index: 2, kind: input, shape index: {}]
  %s3 = inlined_call_operand.vmem [shape: f32[1,128], index: 3, kind: input, shape index: {}]
  %s4 = inlined_call_operand.vmem [shape: f32[128,128], index: 4, kind: input, shape index: {}]
  %s5 = inlined_call_operand.vmem [shape: f32[1,128], index: 5, kind: input, shape index: {}]
  %s6 = inlined_call_operand.vmem [shape: f32[2,31,128], index: 6, kind: output, shape index: {}]
  %s7 = sld [smem:[#allocation0]]
  $region57: #{wav2vec2_forward.6} parent=0
    _
  %s9 = ssub.s32 1, %s7
  %s10 = scalar_select 0, %s9, %s7
  loop: start=0, step=1, limit=4
  $region2: #{wav2vec2_forward.6} parent=0 // loop_pre_header
    _
  $region3: #{wav2vec2_forward.6} parent=0 // loop_header
    %s12 = sphi 0, %s16
    %p13 = scmp.ge.s32.totalorder %s12, 4
    %s22 = sphi 0, %s24
    %s25 = sphi 0, %s22
    %s26 = sphi 0, %s25
    %s42 = sphi 0, %s26
    %s46 = sphi 0, %s46
    %s48 = sphi 0, %s46
    %s49 = sphi 0, %s48
    %s63 = sphi 0, %s49
    %s67 = sphi 0, %s67
    %s69 = sphi 0, %s67
    %s70 = sphi 0, %s69
    %s84 = sphi 0, %s70
    %s88 = sphi 0, %s88
    %s90 = sphi 0, %s88
    %s91 = sphi 0, %s90
    %s105 = sphi 0, %s91
    %s109 = sphi 0, %s109
    %s111 = sphi 0, %s109
    %s112 = sphi 0, %s111
    %s126 = sphi 0, %s112
    %s130 = sphi 0, %s130
    %s132 = sphi 0, %s130
    %s133 = sphi 0, %s132
    %s147 = sphi 0, %s133
    %s153 = sphi 0, %s155
    %s156 = sphi 0, %s153
    %s157 = sphi 0, %s156
    %s173 = sphi 0, %s157
  $region4: #{wav2vec2_forward.6} parent=0 // loop_header_branch
    %15 = sbr.rel (%p13) target = $region8
  $region5: #{wav2vec2_forward.6} parent=0 // loop_body
    %s17 = ssub.s32 %s12, 1
    %s18 = ssub.s32 %s12, 2
    %s19 = sadd.s32 %s12, 1
    %s20 = ssub.s32 %s12, %s19
    %p21 = scmp.eq.s32.totalorder %s20, 0
    %s23 = sadd.s32 %s22, 1
    %s24 = scalar_select %p21, %s22, %s23
    %p27 = pneg %p21
    %p28 = scmp.eq.s32.totalorder %s12, 1
    %p29 = por %p27, %p28
    %p30 = scmp.ne.s32.totalorder %s22, %s25
    %p31 = scmp.eq.s32.totalorder %s12, 0
    %p32 = por %p30, %p31
    %p33 = scmp.ne.s32.totalorder %s22, %s25
    %p34 = scmp.eq.s32.totalorder %s17, 1
    %p35 = por %p33, %p34
    %p36 = scmp.ne.s32.totalorder %s25, %s26
    %p37 = scmp.eq.s32.totalorder %s17, 0
    %p38 = por %p36, %p37
    %p39 = scmp.ne.s32.totalorder %s25, %s26
    %p40 = scmp.eq.s32.totalorder %s18, 1
    %p41 = por %p39, %p40
    %p43 = scmp.ne.s32.totalorder %s26, %s42
    %p44 = scmp.eq.s32.totalorder %s18, 0
    %p45 = por %p43, %p44
    %s47 = sadd.s32 %s46, 1
    %p50 = scmp.eq.s32.totalorder %s12, 1
    %p51 = scmp.ne.s32.totalorder %s46, %s48
    %p52 = scmp.eq.s32.totalorder %s12, 0
    %p53 = por %p51, %p52
    %p54 = scmp.ne.s32.totalorder %s46, %s48
    %p55 = scmp.eq.s32.totalorder %s17, 1
    %p56 = por %p54, %p55
    %p57 = scmp.ne.s32.totalorder %s48, %s49
    %p58 = scmp.eq.s32.totalorder %s17, 0
    %p59 = por %p57, %p58
    %p60 = scmp.ne.s32.totalorder %s48, %s49
    %p61 = scmp.eq.s32.totalorder %s18, 1
    %p62 = por %p60, %p61
    %p64 = scmp.ne.s32.totalorder %s49, %s63
    %p65 = scmp.eq.s32.totalorder %s18, 0
    %p66 = por %p64, %p65
    %s68 = sadd.s32 %s67, 1
    %p71 = scmp.eq.s32.totalorder %s12, 1
    %p72 = scmp.ne.s32.totalorder %s67, %s69
    %p73 = scmp.eq.s32.totalorder %s12, 0
    %p74 = por %p72, %p73
    %p75 = scmp.ne.s32.totalorder %s67, %s69
    %p76 = scmp.eq.s32.totalorder %s17, 1
    %p77 = por %p75, %p76
    %p78 = scmp.ne.s32.totalorder %s69, %s70
    %p79 = scmp.eq.s32.totalorder %s17, 0
    %p80 = por %p78, %p79
    %p81 = scmp.ne.s32.totalorder %s69, %s70
    %p82 = scmp.eq.s32.totalorder %s18, 1
    %p83 = por %p81, %p82
    %p85 = scmp.ne.s32.totalorder %s70, %s84
    %p86 = scmp.eq.s32.totalorder %s18, 0
    %p87 = por %p85, %p86
    %s89 = sadd.s32 %s88, 1
    %p92 = scmp.eq.s32.totalorder %s12, 1
    %p93 = scmp.ne.s32.totalorder %s88, %s90
    %p94 = scmp.eq.s32.totalorder %s12, 0
    %p95 = por %p93, %p94
    %p96 = scmp.ne.s32.totalorder %s88, %s90
    %p97 = scmp.eq.s32.totalorder %s17, 1
    %p98 = por %p96, %p97
    %p99 = scmp.ne.s32.totalorder %s90, %s91
    %p100 = scmp.eq.s32.totalorder %s17, 0
    %p101 = por %p99, %p100
    %p102 = scmp.ne.s32.totalorder %s90, %s91
    %p103 = scmp.eq.s32.totalorder %s18, 1
    %p104 = por %p102, %p103
    %p106 = scmp.ne.s32.totalorder %s91, %s105
    %p107 = scmp.eq.s32.totalorder %s18, 0
    %p108 = por %p106, %p107
    %s110 = sadd.s32 %s109, 1
    %p113 = scmp.eq.s32.totalorder %s12, 1
    %p114 = scmp.ne.s32.totalorder %s109, %s111
    %p115 = scmp.eq.s32.totalorder %s12, 0
    %p116 = por %p114, %p115
    %p117 = scmp.ne.s32.totalorder %s109, %s111
    %p118 = scmp.eq.s32.totalorder %s17, 1
    %p119 = por %p117, %p118
    %p120 = scmp.ne.s32.totalorder %s111, %s112
    %p121 = scmp.eq.s32.totalorder %s17, 0
    %p122 = por %p120, %p121
    %p123 = scmp.ne.s32.totalorder %s111, %s112
    %p124 = scmp.eq.s32.totalorder %s18, 1
    %p125 = por %p123, %p124
    %p127 = scmp.ne.s32.totalorder %s112, %s126
    %p128 = scmp.eq.s32.totalorder %s18, 0
    %p129 = por %p127, %p128
    %s131 = sadd.s32 %s130, 1
    %p134 = scmp.eq.s32.totalorder %s12, 1
    %p135 = scmp.ne.s32.totalorder %s130, %s132
    %p136 = scmp.eq.s32.totalorder %s12, 0
    %p137 = por %p135, %p136
    %p138 = scmp.ne.s32.totalorder %s130, %s132
    %p139 = scmp.eq.s32.totalorder %s17, 1
    %p140 = por %p138, %p139
    %p141 = scmp.ne.s32.totalorder %s132, %s133
    %p142 = scmp.eq.s32.totalorder %s17, 0
    %p143 = por %p141, %p142
    %p144 = scmp.ne.s32.totalorder %s132, %s133
    %p145 = scmp.eq.s32.totalorder %s18, 1
    %p146 = por %p144, %p145
    %p148 = scmp.ne.s32.totalorder %s133, %s147
    %p149 = scmp.eq.s32.totalorder %s18, 0
    %p150 = por %p148, %p149
    %s151 = ssub.s32 %s12, %s19
    %p152 = scmp.eq.s32.totalorder %s151, 0
    %s154 = sadd.s32 %s153, 1
    %s155 = scalar_select %p152, %s153, %s154
    %p158 = pneg %p152
    %p159 = scmp.eq.s32.totalorder %s12, 1
    %p160 = por %p158, %p159
    %p161 = scmp.ne.s32.totalorder %s153, %s156
    %p162 = scmp.eq.s32.totalorder %s12, 0
    %p163 = por %p161, %p162
    %p164 = scmp.ne.s32.totalorder %s153, %s156
    %p165 = scmp.eq.s32.totalorder %s17, 1
    %p166 = por %p164, %p165
    %p167 = scmp.ne.s32.totalorder %s156, %s157
    %p168 = scmp.eq.s32.totalorder %s17, 0
    %p169 = por %p167, %p168
    %p170 = scmp.ne.s32.totalorder %s156, %s157
    %p171 = scmp.eq.s32.totalorder %s18, 1
    %p172 = por %p170, %p171
    %p174 = scmp.ne.s32.totalorder %s157, %s173
    %p175 = scmp.eq.s32.totalorder %s18, 0
    %p176 = por %p174, %p175
    %p177 = scmp.le.s32.totalorder 1, %s12
    %p178 = scmp.lt.s32.totalorder %s12, 3
    %p179 = pnand %p177, %p178
    %p180 = pneg %p179
    // Predicated region
    $region9: #{wav2vec2_forward.6} parent=5 // pred_check
      _
    $region10: #{wav2vec2_forward.6} parent=5 // pred_check_branch
      %182 = sbr.rel (%p179) target = $region12
    $region11: #{wav2vec2_forward.6} parent=5 // pred_region
      %s183 = ssub.s32 %s12, 1
      // Predicated region
      $region13: #{wav2vec2_forward.6} parent=11 // pred_check
        %p184 = pneg %p59
      $region14: #{wav2vec2_forward.6} parent=11 // pred_check_branch
        %186 = sbr.rel (%p184) target = $region16
      $region15: #{wav2vec2_forward.6} parent=11 // pred_region
        _
      $region16: #{wav2vec2_forward.6} parent=11 // pred_fallthru
        _
      // Predicated region
      $region17: #{wav2vec2_forward.6} parent=11 // pred_check
        %p187 = pneg %p80
      $region18: #{wav2vec2_forward.6} parent=11 // pred_check_branch
        %189 = sbr.rel (%p187) target = $region20
      $region19: #{wav2vec2_forward.6} parent=11 // pred_region
        _
      $region20: #{wav2vec2_forward.6} parent=11 // pred_fallthru
        _
      // Predicated region
      $region21: #{wav2vec2_forward.6} parent=11 // pred_check
        %p190 = pneg %p101
      $region22: #{wav2vec2_forward.6} parent=11 // pred_check_branch
        %192 = sbr.rel (%p190) target = $region24
      $region23: #{wav2vec2_forward.6} parent=11 // pred_region
        _
      $region24: #{wav2vec2_forward.6} parent=11 // pred_fallthru
        _
      // Predicated region
      $region25: #{wav2vec2_forward.6} parent=11 // pred_check
        %p193 = pneg %p122
      $region26: #{wav2vec2_forward.6} parent=11 // pred_check_branch
        %195 = sbr.rel (%p193) target = $region28
      $region27: #{wav2vec2_forward.6} parent=11 // pred_region
        _
      $region28: #{wav2vec2_forward.6} parent=11 // pred_fallthru
        _
      // Predicated region
      $region29: #{wav2vec2_forward.6} parent=11 // pred_check
        %p196 = pneg %p143
      $region30: #{wav2vec2_forward.6} parent=11 // pred_check_branch
        %198 = sbr.rel (%p196) target = $region32
      $region31: #{wav2vec2_forward.6} parent=11 // pred_region
        _
      $region32: #{wav2vec2_forward.6} parent=11 // pred_fallthru
        _
    $region12: #{wav2vec2_forward.6} parent=5 // pred_fallthru
      _
    %p199 = scmp.lt.s32.totalorder %s12, 2
    // Predicated region
    $region33: #{wav2vec2_forward.6} parent=5 // pred_check
      %p200 = pneg %p199
    $region34: #{wav2vec2_forward.6} parent=5 // pred_check_branch
      %202 = sbr.rel (%p200) target = $region36
    $region35: #{wav2vec2_forward.6} parent=5 // pred_region
      // Predicated region
      $region37: #{wav2vec2_forward.6} parent=35 // pred_check
        %p203 = pneg %p32
      $region38: #{wav2vec2_forward.6} parent=35 // pred_check_branch
        %205 = sbr.rel (%p203) target = $region40
      $region39: #{wav2vec2_forward.6} parent=35 // pred_region
        %p206 = scmp.lt.s32.totalorder %s12, 1
        %s207 = scalar_select %p206, %s12, 1
        %s208 = smul.addr %s207, 8
        %s209 = smul.addr %s208, 8
        %s210 = scalar_lea.vmem %s0, %s209
      $region40: #{wav2vec2_forward.6} parent=35 // pred_fallthru
        _
    $region36: #{wav2vec2_forward.6} parent=5 // pred_fallthru
      _
    %p211 = scmp.le.s32.totalorder 1, %s12
    %p212 = scmp.lt.s32.totalorder %s12, 3
    %p213 = pnand %p211, %p212
    %p214 = pneg %p213
    // Predicated region
    $region41: #{wav2vec2_forward.6} parent=5 // pred_check
      _
    $region42: #{wav2vec2_forward.6} parent=5 // pred_check_branch
      %216 = sbr.rel (%p213) target = $region44
    $region43: #{wav2vec2_forward.6} parent=5 // pred_region
      %s217 = ssub.s32 %s12, 1
      %p218 = scmp.lt.s32.totalorder %s17, 1
      %s219 = scalar_select %p218, %s17, 1
      %s220 = smul.addr %s219, 8
      %s221 = smul.addr %s220, 8
      %s222 = scalar_lea.vmem %s0, %s221
      %p223 = pneg %p38
      %p224 = pneg %p35
      %p225 = pneg %p59
      %p226 = pneg %p56
      %p227 = pneg %p80
      %p228 = pneg %p77
      %p229 = pneg %p101
      %p230 = pneg %p98
      %p231 = pneg %p122
      %p232 = pneg %p119
      %p233 = pneg %p143
      %p234 = pneg %p140
      %p235 = pneg %p169
      %p236 = pneg %p166
      %p237 = scmp.lt.s32.totalorder %s17, 1
      %s238 = scalar_select %p237, %s17, 1
      %s239 = smul.addr %s238, 4
      %s240 = smul.addr %s239, 8
      %s241 = scalar_lea.vmem %s6, %s240
      %p242 = scmp.lt.s32.totalorder %s17, 1
      %s243 = scalar_select %p242, %s17, 1
      %s244 = smul.addr %s243, 8
      %s245 = smul.addr %s244, 8
      %s246 = scalar_lea.vmem %s0, %s245
      %p247 = scmp.lt.s32.totalorder %s17, 1
      %s248 = scalar_select %p247, %s17, 1
      %s249 = smul.addr %s248, 4
      %s250 = smul.addr %s249, 8
      %s251 = scalar_lea.vmem %s6, %s250
      %v253 = vld [vmem:[%s246] sm:$0xff]
      %v254 = vld [vmem:[%s246 + $0x8] sm:$0xff]
      %v255 = vld [vmem:[%s246 + $0x10] sm:$0xff]
      %v256 = vld [vmem:[%s246 + $0x18] sm:$0xff]
      %v257 = vld [vmem:[%s246 + $0x20] sm:$0xff]
      %v258 = vld [vmem:[%s246 + $0x28] sm:$0xff]
      %v259 = vld [vmem:[%s246 + $0x30] sm:$0xff]
      %v260 = vld [vmem:[%s246 + $0x38] sm:$0xff]
      %v261 = vld [vmem:[%s1] sm:$0xff]
      %v262 = vld [vmem:[%s1 + $0x8] sm:$0xff]
      %v263 = vld [vmem:[%s1 + $0x10] sm:$0xff]
      %v264 = vld [vmem:[%s1 + $0x18] sm:$0xff]
      %v265 = vld [vmem:[%s1 + $0x20] sm:$0xff]
      %v266 = vld [vmem:[%s1 + $0x28] sm:$0xff]
      %v267 = vld [vmem:[%s1 + $0x30] sm:$0xff]
      %v268 = vld [vmem:[%s1 + $0x38] sm:$0xff]
      %v269 = vld [vmem:[%s1 + $0x40] sm:$0xff]
      %v270 = vld [vmem:[%s1 + $0x48] sm:$0xff]
      %v271 = vld [vmem:[%s1 + $0x50] sm:$0xff]
      %v272 = vld [vmem:[%s1 + $0x58] sm:$0xff]
      %v273 = vld [vmem:[%s1 + $0x60] sm:$0xff]
      %v274 = vld [vmem:[%s1 + $0x68] sm:$0xff]
      %v275 = vld [vmem:[%s1 + $0x70] sm:$0xff]
      %v276 = vld [vmem:[%s1 + $0x78] sm:$0xff]
      %v277 = vld [vmem:[%s1 + $0x80] sm:$0xff]
      %v278 = vld [vmem:[%s1 + $0x88] sm:$0xff]
      %v279 = vld [vmem:[%s1 + $0x90] sm:$0xff]
      %v280 = vld [vmem:[%s1 + $0x98] sm:$0xff]
      %v281 = vld [vmem:[%s1 + $0xa0] sm:$0xff]
      %v282 = vld [vmem:[%s1 + $0xa8] sm:$0xff]
      %v283 = vld [vmem:[%s1 + $0xb0] sm:$0xff]
      %v284 = vld [vmem:[%s1 + $0xb8] sm:$0xff]
      %v285 = vld [vmem:[%s1 + $0xc0] sm:$0xff]
      %v286 = vld [vmem:[%s1 + $0xc8] sm:$0xff]
      %v287 = vld [vmem:[%s1 + $0xd0] sm:$0xff]
      %v288 = vld [vmem:[%s1 + $0xd8] sm:$0xff]
      %v289 = vld [vmem:[%s1 + $0xe0] sm:$0xff]
      %v290 = vld [vmem:[%s1 + $0xe8] sm:$0xff]
      %v291 = vld [vmem:[%s1 + $0xf0] sm:$0xff]
      %v292 = vld [vmem:[%s1 + $0xf8] sm:$0xff]
      %v293 = vpack.c.bf16 %v255, %v253
      %v294 = vpack.c.bf16 %v256, %v254
      %v295 = vpack.c.bf16 %v259, %v257
      %v296 = vpack.c.bf16 %v260, %v258
      %v297 = vpack.c.bf16 %v262, %v261
      %v298 = vpack.c.bf16 %v264, %v263
      %v299 = vpack.c.bf16 %v266, %v265
      %v300 = vpack.c.bf16 %v268, %v267
      %v301 = vpack.c.bf16 %v270, %v269
      %v302 = vpack.c.bf16 %v272, %v271
      %v303 = vpack.c.bf16 %v274, %v273
      %v304 = vpack.c.bf16 %v276, %v275
      %v305 = vpack.c.bf16 %v278, %v277
      %v306 = vpack.c.bf16 %v280, %v279
      %v307 = vpack.c.bf16 %v282, %v281
      %v308 = vpack.c.bf16 %v284, %v283
      %v309 = vpack.c.bf16 %v286, %v285
      %v310 = vpack.c.bf16 %v288, %v287
      %v311 = vpack.c.bf16 %v290, %v289
      %v312 = vpack.c.bf16 %v292, %v291
      %s313 = scalar_lea.vmem %s1, 256
      %v314 = vld [vmem:[%s313] sm:$0xff]
      %v315 = vld [vmem:[%s313 + $0x8] sm:$0xff]
      %v316 = vld [vmem:[%s313 + $0x10] sm:$0xff]
      %v317 = vld [vmem:[%s313 + $0x18] sm:$0xff]
      %v318 = vld [vmem:[%s313 + $0x20] sm:$0xff]
      %v319 = vld [vmem:[%s313 + $0x28] sm:$0xff]
      %v320 = vld [vmem:[%s313 + $0x30] sm:$0xff]
      %v321 = vld [vmem:[%s313 + $0x38] sm:$0xff]
      %v322 = vld [vmem:[%s313 + $0x40] sm:$0xff]
      %v323 = vld [vmem:[%s313 + $0x48] sm:$0xff]
      %v324 = vld [vmem:[%s313 + $0x50] sm:$0xff]
      %v325 = vld [vmem:[%s313 + $0x58] sm:$0xff]
      %v326 = vld [vmem:[%s313 + $0x60] sm:$0xff]
      %v327 = vld [vmem:[%s313 + $0x68] sm:$0xff]
      %v328 = vld [vmem:[%s313 + $0x70] sm:$0xff]
      %v329 = vld [vmem:[%s313 + $0x78] sm:$0xff]
      %v330 = vld [vmem:[%s313 + $0x80] sm:$0xff]
      %v331 = vld [vmem:[%s313 + $0x88] sm:$0xff]
      %v332 = vld [vmem:[%s313 + $0x90] sm:$0xff]
      %v333 = vld [vmem:[%s313 + $0x98] sm:$0xff]
      %v334 = vld [vmem:[%s313 + $0xa0] sm:$0xff]
      %v335 = vld [vmem:[%s313 + $0xa8] sm:$0xff]
      %v336 = vld [vmem:[%s313 + $0xb0] sm:$0xff]
      %v337 = vld [vmem:[%s313 + $0xb8] sm:$0xff]
      %v338 = vld [vmem:[%s313 + $0xc0] sm:$0xff]
      %v339 = vld [vmem:[%s313 + $0xc8] sm:$0xff]
      %v340 = vld [vmem:[%s313 + $0xd0] sm:$0xff]
      %v341 = vld [vmem:[%s313 + $0xd8] sm:$0xff]
      %v342 = vld [vmem:[%s313 + $0xe0] sm:$0xff]
      %v343 = vld [vmem:[%s313 + $0xe8] sm:$0xff]
      %v344 = vld [vmem:[%s313 + $0xf0] sm:$0xff]
      %v345 = vld [vmem:[%s313 + $0xf8] sm:$0xff]
      %v346 = vpack.c.bf16 %v315, %v314
      %v347 = vpack.c.bf16 %v317, %v316
      %v348 = vpack.c.bf16 %v319, %v318
      %v349 = vpack.c.bf16 %v321, %v320
      %v350 = vpack.c.bf16 %v323, %v322
      %v351 = vpack.c.bf16 %v325, %v324
      %v352 = vpack.c.bf16 %v327, %v326
      %v353 = vpack.c.bf16 %v329, %v328
      %v354 = vpack.c.bf16 %v331, %v330
      %v355 = vpack.c.bf16 %v333, %v332
      %v356 = vpack.c.bf16 %v335, %v334
      %v357 = vpack.c.bf16 %v337, %v336
      %v358 = vpack.c.bf16 %v339, %v338
      %v359 = vpack.c.bf16 %v341, %v340
      %v360 = vpack.c.bf16 %v343, %v342
      %v361 = vpack.c.bf16 %v345, %v344
      %vm362 = vsmask.f32 7424
      %v364 = vshrl.u32 %v293, 16
      %v366 = vshll.u32 %v293, 16
      %v368 = vrot.slane %v366, 1
      %v369 = vor.u32 %v364, %v368
      %v371 = vshll.u32 %v295, 16
      %v373 = vrot.slane %v371, 1
      %v374 = vsel %vm362, %v369, %v373
      %v376 = vshrl.u32 %v294, 16
      %v378 = vshll.u32 %v294, 16
      %v380 = vrot.slane %v378, 1
      %v381 = vor.u32 %v376, %v380
      %v383 = vshll.u32 %v296, 16
      %v385 = vrot.slane %v383, 1
      %v386 = vsel %vm362, %v381, %v385
      %v387 = vshrl.u32 %v295, 16
      %v389 = vor.u32 %v387, %v373
      %v390 = vshrl.u32 %v296, 16
      %v392 = vor.u32 %v390, %v385
      %397 = vmatprep.subr.bf16.mxu0 0
      %398 = vmatpush1.bf16.msra.mxu0 %v353
      %399 = vmatprep.subr.bf16.mxu0 0
      %400 = vmatpush1.bf16.msra.mxu0 %v352
      %401 = vmatprep.subr.bf16.mxu0 0
      %402 = vmatpush1.bf16.msra.mxu0 %v351
      %403 = vmatprep.subr.bf16.mxu0 0
      %404 = vmatpush1.bf16.msra.mxu0 %v350
      %405 = vmatprep.subr.bf16.mxu0 0
      %406 = vmatpush1.bf16.msra.mxu0 %v349
      %407 = vmatprep.subr.bf16.mxu0 0
      %408 = vmatpush1.bf16.msra.mxu0 %v348
      %409 = vmatprep.subr.bf16.mxu0 0
      %410 = vmatpush1.bf16.msra.mxu0 %v347
      %411 = vmatprep.subr.bf16.mxu0 0
      %412 = vmatpush1.bf16.msra.mxu0 %v346
      %413 = vmatprep.subr.bf16.mxu0 0
      %414 = vmatpush2.bf16.msra.mxu0 %v361
      %415 = vmatprep.subr.bf16.mxu0 0
      %416 = vmatpush2.bf16.msra.mxu0 %v360
      %417 = vmatprep.subr.bf16.mxu0 0
      %418 = vmatpush2.bf16.msra.mxu0 %v359
      %419 = vmatprep.subr.bf16.mxu0 0
      %420 = vmatpush2.bf16.msra.mxu0 %v358
      %421 = vmatprep.subr.bf16.mxu0 0
      %422 = vmatpush2.bf16.msra.mxu0 %v357
      %423 = vmatprep.subr.bf16.mxu0 0
      %424 = vmatpush2.bf16.msra.mxu0 %v356
      %425 = vmatprep.subr.bf16.mxu0 0
      %426 = vmatpush2.bf16.msra.mxu0 %v355
      %427 = vmatprep.subr.bf16.mxu0 0
      %428 = vmatpush2.bf16.msra.mxu0 %v354
      %429 = vmatprep.mubr.bf16.mxu0 %v386
      %430 = vmatmul.mubr.bf16.gmra.mxu0 %v374
      %v431 = vpop.f32.mrf.mxu0
      %v432 = vadd.f32 0.0, %v431
      %v433 = vpop.f32.mrf.mxu0
      %v434 = vpop.f32.mrf.mxu0
      %v435 = vadd.f32 0.0, %v434
      %v436 = vpop.f32.mrf.mxu0
      %437 = vmatprep.mubr.bf16.mxu0 %v392
      %438 = vmatmul.mubr.bf16.gmra.mxu0 %v389
      %v439 = vpop.f32.mrf.mxu0
      %v440 = vadd.f32 0.0, %v439
      %v441 = vpop.f32.mrf.mxu0
      %v442 = vpop.f32.mrf.mxu0
      %v443 = vadd.f32 0.0, %v442
      %v444 = vpop.f32.mrf.mxu0
      %445 = vdwg.mxu0
      %446 = vmatprep.subr.bf16.mxu0 0
      %447 = vmatpush1.bf16.msra.mxu0 %v304
      %448 = vmatprep.subr.bf16.mxu0 0
      %449 = vmatpush1.bf16.msra.mxu0 %v303
      %450 = vmatprep.subr.bf16.mxu0 0
      %451 = vmatpush1.bf16.msra.mxu0 %v302
      %452 = vmatprep.subr.bf16.mxu0 0
      %453 = vmatpush1.bf16.msra.mxu0 %v301
      %454 = vmatprep.subr.bf16.mxu0 0
      %455 = vmatpush1.bf16.msra.mxu0 %v300
      %456 = vmatprep.subr.bf16.mxu0 0
      %457 = vmatpush1.bf16.msra.mxu0 %v299
      %458 = vmatprep.subr.bf16.mxu0 0
      %459 = vmatpush1.bf16.msra.mxu0 %v298
      %460 = vmatprep.subr.bf16.mxu0 0
      %461 = vmatpush1.bf16.msra.mxu0 %v297
      %462 = vmatprep.subr.bf16.mxu0 0
      %463 = vmatpush2.bf16.msra.mxu0 %v312
      %464 = vmatprep.subr.bf16.mxu0 0
      %465 = vmatpush2.bf16.msra.mxu0 %v311
      %466 = vmatprep.subr.bf16.mxu0 0
      %467 = vmatpush2.bf16.msra.mxu0 %v310
      %468 = vmatprep.subr.bf16.mxu0 0
      %469 = vmatpush2.bf16.msra.mxu0 %v309
      %470 = vmatprep.subr.bf16.mxu0 0
      %471 = vmatpush2.bf16.msra.mxu0 %v308
      %472 = vmatprep.subr.bf16.mxu0 0
      %473 = vmatpush2.bf16.msra.mxu0 %v307
      %474 = vmatprep.subr.bf16.mxu0 0
      %475 = vmatpush2.bf16.msra.mxu0 %v306
      %476 = vmatprep.subr.bf16.mxu0 0
      %477 = vmatpush2.bf16.msra.mxu0 %v305
      %478 = vmatprep.mubr.bf16.mxu0 %v294
      %479 = vmatmul.mubr.bf16.gmra.mxu0 %v293
      %v480 = vpop.f32.mrf.mxu0
      %v481 = vadd.f32 %v432, %v480
      %v482 = vpop.f32.mrf.mxu0
      %v483 = vpop.f32.mrf.mxu0
      %v484 = vadd.f32 %v435, %v483
      %v485 = vpop.f32.mrf.mxu0
      %486 = vmatprep.mubr.bf16.mxu0 %v296
      %487 = vmatmul.mubr.bf16.gmra.mxu0 %v295
      %v488 = vpop.f32.mrf.mxu0
      %v489 = vadd.f32 %v440, %v488
      %v490 = vpop.f32.mrf.mxu0
      %v491 = vpop.f32.mrf.mxu0
      %v492 = vadd.f32 %v443, %v491
      %v493 = vpop.f32.mrf.mxu0
      %494 = vdwg.mxu0
      %v495 = vmul.f32 %v481, %v481
      %v496 = vmul.f32 %v484, %v484
      %v497 = vmul.f32 %v489, %v489
      %v498 = vmul.f32 %v492, %v492
      %v499 = vmul.f32 %v481, %v495
      %v500 = vmul.f32 %v484, %v496
      %v501 = vmul.f32 %v489, %v497
      %v502 = vmul.f32 %v492, %v498
      %v503 = vmul.f32 %v499, 0.044715
      %v504 = vmul.f32 %v500, 0.044715
      %v505 = vmul.f32 %v501, 0.044715
      %v506 = vmul.f32 %v502, 0.044715
      %v507 = vadd.f32 %v481, %v503
      %v508 = vadd.f32 %v484, %v504
      %v509 = vadd.f32 %v489, %v505
      %v510 = vadd.f32 %v492, %v506
      %v511 = vmul.f32 %v507, 0.7978846
      %v512 = vmul.f32 %v508, 0.7978846
      %v513 = vmul.f32 %v509, 0.7978846
      %v514 = vmul.f32 %v510, 0.7978846
      %v515 = vtanh.pop %v511
      %v516 = vtanh.pop %v512
      %v517 = vtanh.pop %v513
      %v518 = vtanh.pop %v514
      %v519 = vadd.f32 %v515, 1.0
      %v520 = vadd.f32 %v516, 1.0
      %v521 = vadd.f32 %v517, 1.0
      %v522 = vadd.f32 %v518, 1.0
      %v523 = vmul.f32 %v519, 0.5
      %v524 = vmul.f32 %v520, 0.5
      %v525 = vmul.f32 %v521, 0.5
      %v526 = vmul.f32 %v522, 0.5
      %v527 = vmul.f32 %v481, %v523
      %v528 = vmul.f32 %v484, %v524
      %v529 = vmul.f32 %v489, %v525
      %v530 = vmul.f32 %v492, %v526
      %v531 = vld [vmem:[%s2] sm:$0x1]
      %v532 = vld [vmem:[%s3] sm:$0x1]
      %533 = vadd.xlane.f32.xlu0 %v527
      %v534 = vpop.xlane.xlu0 %533
      %535 = vadd.xlane.f32.xlu0 %v528
      %v536 = vpop.xlane.xlu0 %535
      %537 = vadd.xlane.f32.xlu0 %v529
      %v538 = vpop.xlane.xlu0 %537
      %vm539 = vcmask 1046528
      %v540 = vsel %vm539, %v530, 0.0
      %541 = vadd.xlane.f32.xlu0 %v540
      %v542 = vpop.xlane.xlu0 %541
      %v543 = vrcp.pop 128.0
      %v544 = vmul.f32 %v534, %v543
      %v545 = vmul.f32 %v536, %v543
      %v546 = vmul.f32 %v538, %v543
      %v547 = vmul.f32 %v542, %v543
      %v548 = vsub.f32 %v527, %v544
      %v549 = vsub.f32 %v528, %v545
      %v550 = vsub.f32 %v529, %v546
      %v551 = vsub.f32 %v530, %v547
      %v552 = vmul.f32 %v548, %v548
      %v553 = vmul.f32 %v549, %v549
      %v554 = vmul.f32 %v550, %v550
      %v555 = vmul.f32 %v551, %v551
      %556 = vadd.xlane.f32.xlu0 %v552
      %v557 = vpop.xlane.xlu0 %556
      %558 = vadd.xlane.f32.xlu0 %v553
      %v559 = vpop.xlane.xlu0 %558
      %560 = vadd.xlane.f32.xlu0 %v554
      %v561 = vpop.xlane.xlu0 %560
      %v562 = vsel %vm539, %v555, 0.0
      %563 = vadd.xlane.f32.xlu0 %v562
      %v564 = vpop.xlane.xlu0 %563
      %v565 = vmul.f32 %v557, %v543
      %v566 = vmul.f32 %v559, %v543
      %v567 = vmul.f32 %v561, %v543
      %v568 = vmul.f32 %v564, %v543
      %v569 = vadd.f32 %v565, 1e-05
      %v570 = vadd.f32 %v566, 1e-05
      %v571 = vadd.f32 %v567, 1e-05
      %v572 = vadd.f32 %v568, 1e-05
      %v573 = vrsqrt.pop %v569
      %v574 = vrsqrt.pop %v570
      %v575 = vrsqrt.pop %v571
      %v576 = vrsqrt.pop %v572
      %v577 = vmul.f32 %v548, %v573
      %v578 = vmul.f32 %v549, %v574
      %v579 = vmul.f32 %v550, %v575
      %v580 = vmul.f32 %v551, %v576
      %v582 = vlaneseq
      %v583 = vshrl.u32 %v582, 7
      %v584 = vsub.s32 0, %v583
      %v585 = vrot.slane %v531, %v584
      %v587 = vmul.f32 %v577, %v585
      %v588 = vmul.f32 %v578, %v585
      %v589 = vmul.f32 %v579, %v585
      %v590 = vmul.f32 %v580, %v585
      %v592 = vlaneseq
      %v593 = vshrl.u32 %v592, 7
      %v594 = vsub.s32 0, %v593
      %v595 = vrot.slane %v532, %v594
      %v597 = vadd.f32 %v587, %v595
      %v598 = vadd.f32 %v588, %v595
      %v599 = vadd.f32 %v589, %v595
      %v600 = vadd.f32 %v590, %v595
      %v601 = vld [vmem:[%s4] sm:$0xff]
      %v602 = vld [vmem:[%s4 + $0x8] sm:$0xff]
      %v603 = vld [vmem:[%s4 + $0x10] sm:$0xff]
      %v604 = vld [vmem:[%s4 + $0x18] sm:$0xff]
      %v605 = vld [vmem:[%s4 + $0x20] sm:$0xff]
      %v606 = vld [vmem:[%s4 + $0x28] sm:$0xff]
      %v607 = vld [vmem:[%s4 + $0x30] sm:$0xff]
      %v608 = vld [vmem:[%s4 + $0x38] sm:$0xff]
      %v609 = vld [vmem:[%s4 + $0x40] sm:$0xff]
      %v610 = vld [vmem:[%s4 + $0x48] sm:$0xff]
      %v611 = vld [vmem:[%s4 + $0x50] sm:$0xff]
      %v612 = vld [vmem:[%s4 + $0x58] sm:$0xff]
      %v613 = vld [vmem:[%s4 + $0x60] sm:$0xff]
      %v614 = vld [vmem:[%s4 + $0x68] sm:$0xff]
      %v615 = vld [vmem:[%s4 + $0x70] sm:$0xff]
      %v616 = vld [vmem:[%s4 + $0x78] sm:$0xff]
      %v617 = vld [vmem:[%s5] sm:$0x1]
      %v618 = vpack.c.bf16 %v598, %v597
      %v619 = vpack.c.bf16 %v600, %v599
      %v620 = vpack.c.bf16 %v602, %v601
      %v621 = vpack.c.bf16 %v604, %v603
      %v622 = vpack.c.bf16 %v606, %v605
      %v623 = vpack.c.bf16 %v608, %v607
      %v624 = vpack.c.bf16 %v610, %v609
      %v625 = vpack.c.bf16 %v612, %v611
      %v626 = vpack.c.bf16 %v614, %v613
      %v627 = vpack.c.bf16 %v616, %v615
      %v629 = vlaneseq
      %v630 = vshrl.u32 %v629, 7
      %v631 = vsub.s32 0, %v630
      %v632 = vrot.slane %v617, %v631
      %634 = vmatprep.subr.bf16.mxu0 0
      %635 = vmatpush1.bf16.msra.mxu0 %v627
      %636 = vmatprep.subr.bf16.mxu0 0
      %637 = vmatpush1.bf16.msra.mxu0 %v626
      %638 = vmatprep.subr.bf16.mxu0 0
      %639 = vmatpush1.bf16.msra.mxu0 %v625
      %640 = vmatprep.subr.bf16.mxu0 0
      %641 = vmatpush1.bf16.msra.mxu0 %v624
      %642 = vmatprep.subr.bf16.mxu0 0
      %643 = vmatpush1.bf16.msra.mxu0 %v623
      %644 = vmatprep.subr.bf16.mxu0 0
      %645 = vmatpush1.bf16.msra.mxu0 %v622
      %646 = vmatprep.subr.bf16.mxu0 0
      %647 = vmatpush1.bf16.msra.mxu0 %v621
      %648 = vmatprep.subr.bf16.mxu0 0
      %649 = vmatpush1.bf16.msra.mxu0 %v620
      %650 = vmatprep.subr.bf16.mxu0 0
      %651 = vmatpush2.bf16.msra.mxu0 0
      %652 = vmatprep.subr.bf16.mxu0 0
      %653 = vmatpush2.bf16.msra.mxu0 0
      %654 = vmatprep.subr.bf16.mxu0 0
      %655 = vmatpush2.bf16.msra.mxu0 0
      %656 = vmatprep.subr.bf16.mxu0 0
      %657 = vmatpush2.bf16.msra.mxu0 0
      %658 = vmatprep.subr.bf16.mxu0 0
      %659 = vmatpush2.bf16.msra.mxu0 0
      %660 = vmatprep.subr.bf16.mxu0 0
      %661 = vmatpush2.bf16.msra.mxu0 0
      %662 = vmatprep.subr.bf16.mxu0 0
      %663 = vmatpush2.bf16.msra.mxu0 0
      %664 = vmatprep.subr.bf16.mxu0 0
      %665 = vmatpush2.bf16.msra.mxu0 0
      %666 = vmatprep.mubr.bf16.mxu0 0
      %667 = vmatmul.mubr.bf16.gmra.mxu0 %v618
      %v668 = vpop.f32.mrf.mxu0
      %v669 = vadd.f32 %v632, %v668
      %v670 = vpop.f32.mrf.mxu0
      %v671 = vpop.f32.mrf.mxu0
      %v672 = vadd.f32 %v632, %v671
      %v673 = vpop.f32.mrf.mxu0
      %674 = vmatprep.mubr.bf16.mxu0 0
      %675 = vmatmul.mubr.bf16.gmra.mxu0 %v619
      %v676 = vpop.f32.mrf.mxu0
      %v677 = vadd.f32 %v632, %v676
      %v678 = vpop.f32.mrf.mxu0
      %v679 = vpop.f32.mrf.mxu0
      %v680 = vadd.f32 %v632, %v679
      %v681 = vpop.f32.mrf.mxu0
      %682 = vdwg.mxu0
      %683 = vst [vmem:[%s251] sm:$0xff] %v669
      %684 = vst [vmem:[%s251 + $0x8] sm:$0xff] %v672
      %685 = vst [vmem:[%s251 + $0x10] sm:$0xff] %v677
      %686 = vst [vmem:[%s251 + $0x18] sm:$0x7f] %v680
      %p687 = scmp.lt.s32.totalorder %s17, 1
      %s688 = scalar_select %p687, %s17, 1
      %s689 = smul.addr %s688, 4
      %s690 = smul.addr %s689, 8
      %s691 = scalar_lea.vmem %s6, %s690
      // Predicated region
      $region45: #{wav2vec2_forward.6} parent=43 // pred_check
        %p692 = pneg %p166
      $region46: #{wav2vec2_forward.6} parent=43 // pred_check_branch
        %694 = sbr.rel (%p692) target = $region48
      $region47: #{wav2vec2_forward.6} parent=43 // pred_region
        _
      $region48: #{wav2vec2_forward.6} parent=43 // pred_fallthru
        _
    $region44: #{wav2vec2_forward.6} parent=5 // pred_fallthru
      _
    %p695 = scmp.le.s32.totalorder 2, %s12
    // Predicated region
    $region49: #{wav2vec2_forward.6} parent=5 // pred_check
      %p696 = pneg %p695
    $region50: #{wav2vec2_forward.6} parent=5 // pred_check_branch
      %698 = sbr.rel (%p696) target = $region52
    $region51: #{wav2vec2_forward.6} parent=5 // pred_region
      %s699 = ssub.s32 %s12, 2
      // Predicated region
      $region53: #{wav2vec2_forward.6} parent=51 // pred_check
        %p700 = pneg %p172
      $region54: #{wav2vec2_forward.6} parent=51 // pred_check_branch
        %702 = sbr.rel (%p700) target = $region56
      $region55: #{wav2vec2_forward.6} parent=51 // pred_region
        %p703 = scmp.lt.s32.totalorder %s18, 1
        %s704 = scalar_select %p703, %s18, 1
        %s705 = smul.addr %s704, 4
        %s706 = smul.addr %s705, 8
        %s707 = scalar_lea.vmem %s6, %s706
      $region56: #{wav2vec2_forward.6} parent=51 // pred_fallthru
        _
    $region52: #{wav2vec2_forward.6} parent=5 // pred_fallthru
      _
  $region6: #{wav2vec2_forward.6} parent=0 // loop_footer
    %s16 = sadd.s32 1, %s12
  $region7: #{wav2vec2_forward.6} parent=0 // loop_footer_branch
    %11 = sbr.rel target = $region3
  $region8: #{wav2vec2_forward.6} parent=0 // loop_exit
    _

// kernel: wav2vec2_forward.8
$region0: #{wav2vec2_forward.8}
  #allocation0 [shape = 'u32[]', space=smem, size = 0x4, offset = 0x4, fixed_abs, tag = 'smem constant byte address 0x4 - core index']
  #allocation1 [shape = 'u32[144,128]{1,0:T(1,128)}', space=vmem, size = 0x12000, scoped, tag = 'internal scratch']
  %s0 = inlined_call_operand.vmem [shape: f32[2,31,128], index: 0, kind: input, shape index: {}]
  %s1 = inlined_call_operand.vmem [shape: f32[128,384], index: 1, kind: input, shape index: {}]
  %s2 = inlined_call_operand.vmem [shape: f32[1,384], index: 2, kind: input, shape index: {}]
  %s3 = inlined_call_operand.hbm [shape: f32[128,128], index: 3, kind: input, shape index: {}]
  %s4 = inlined_call_operand.vmem [shape: f32[1,128], index: 4, kind: input, shape index: {}]
  %s5 = inlined_call_operand.vmem [shape: f32[1,128], index: 5, kind: input, shape index: {}]
  %s6 = inlined_call_operand.vmem [shape: f32[1,128], index: 6, kind: input, shape index: {}]
  %s7 = inlined_call_operand.vmem [shape: f32[128,512], index: 7, kind: input, shape index: {}]
  %s8 = inlined_call_operand.vmem [shape: f32[1,512], index: 8, kind: input, shape index: {}]
  %s9 = inlined_call_operand.vmem [shape: f32[512,128], index: 9, kind: input, shape index: {}]
  %s10 = inlined_call_operand.vmem [shape: f32[1,128], index: 10, kind: input, shape index: {}]
  %s11 = inlined_call_operand.vmem [shape: f32[1,128], index: 11, kind: input, shape index: {}]
  %s12 = inlined_call_operand.vmem [shape: f32[1,128], index: 12, kind: input, shape index: {}]
  %s13 = inlined_call_operand.vmem [shape: f32[2,31,128], index: 13, kind: output, shape index: {}]
  %s14 = sld [smem:[#allocation0]]
  $region89: #{wav2vec2_forward.8} parent=0
    _
  %s16 = ssub.s32 1, %s14
  %s17 = scalar_select 0, %s16, %s14
  $region1: #{wav2vec2_forward.8} parent=0
    #allocation2 [shape = 'u8[65536]{0}', space=vmem, size = 0x10000, scoped, tag = 'input window, operand 3, single buffered']
    #allocation3 [shape = 's32[2]{0}', space=sflag, size = 0x8, scoped, tag = 'scoped memory for wav2vec2_forward.8']
    %18 = vsyncpa [#allocation3], 0
    loop: start=0, step=1, limit=4
    $region2: #{wav2vec2_forward.8} parent=1 // loop_pre_header
      _
    $region3: #{wav2vec2_forward.8} parent=1 // loop_header
      %s20 = sphi 0, %s24
      %p21 = scmp.ge.s32.totalorder %s20, 4
      %s30 = sphi 0, %s32
      %s33 = sphi 0, %s30
      %s34 = sphi 0, %s33
      %s50 = sphi 0, %s34
      %s54 = sphi 0, %s54
      %s56 = sphi 0, %s54
      %s57 = sphi 0, %s56
      %s71 = sphi 0, %s57
      %s75 = sphi 0, %s75
      %s77 = sphi 0, %s75
      %s78 = sphi 0, %s77
      %s92 = sphi 0, %s78
      %s96 = sphi 0, %s96
      %s98 = sphi 0, %s96
      %s99 = sphi 0, %s98
      %s113 = sphi 0, %s99
      %s117 = sphi 0, %s117
      %s119 = sphi 0, %s117
      %s120 = sphi 0, %s119
      %s134 = sphi 0, %s120
      %s138 = sphi 0, %s138
      %s140 = sphi 0, %s138
      %s141 = sphi 0, %s140
      %s155 = sphi 0, %s141
      %s159 = sphi 0, %s159
      %s161 = sphi 0, %s159
      %s162 = sphi 0, %s161
      %s176 = sphi 0, %s162
      %s180 = sphi 0, %s180
      %s182 = sphi 0, %s180
      %s183 = sphi 0, %s182
      %s197 = sphi 0, %s183
      %s201 = sphi 0, %s201
      %s203 = sphi 0, %s201
      %s204 = sphi 0, %s203
      %s218 = sphi 0, %s204
      %s222 = sphi 0, %s222
      %s224 = sphi 0, %s222
      %s225 = sphi 0, %s224
      %s239 = sphi 0, %s225
      %s243 = sphi 0, %s243
      %s245 = sphi 0, %s243
      %s246 = sphi 0, %s245
      %s260 = sphi 0, %s246
      %s264 = sphi 0, %s264
      %s266 = sphi 0, %s264
      %s267 = sphi 0, %s266
      %s281 = sphi 0, %s267
      %s285 = sphi 0, %s285
      %s287 = sphi 0, %s285
      %s288 = sphi 0, %s287
      %s302 = sphi 0, %s288
      %s308 = sphi 0, %s310
      %s311 = sphi 0, %s308
      %s312 = sphi 0, %s311
      %s328 = sphi 0, %s312
    $region4: #{wav2vec2_forward.8} parent=1 // loop_header_branch
      %23 = sbr.rel (%p21) target = $region8
    $region5: #{wav2vec2_forward.8} parent=1 // loop_body
      %s25 = ssub.s32 %s20, 1
      %s26 = ssub.s32 %s20, 2
      %s27 = sadd.s32 %s20, 1
      %s28 = ssub.s32 %s20, %s27
      %p29 = scmp.eq.s32.totalorder %s28, 0
      %s31 = sadd.s32 %s30, 1
      %s32 = scalar_select %p29, %s30, %s31
      %p35 = pneg %p29
      %p36 = scmp.eq.s32.totalorder %s20, 1
      %p37 = por %p35, %p36
      %p38 = scmp.ne.s32.totalorder %s30, %s33
      %p39 = scmp.eq.s32.totalorder %s20, 0
      %p40 = por %p38, %p39
      %p41 = scmp.ne.s32.totalorder %s30, %s33
      %p42 = scmp.eq.s32.totalorder %s25, 1
      %p43 = por %p41, %p42
      %p44 = scmp.ne.s32.totalorder %s33, %s34
      %p45 = scmp.eq.s32.totalorder %s25, 0
      %p46 = por %p44, %p45
      %p47 = scmp.ne.s32.totalorder %s33, %s34
      %p48 = scmp.eq.s32.totalorder %s26, 1
      %p49 = por %p47, %p48
      %p51 = scmp.ne.s32.totalorder %s34, %s50
      %p52 = scmp.eq.s32.totalorder %s26, 0
      %p53 = por %p51, %p52
      %s55 = sadd.s32 %s54, 1
      %p58 = scmp.eq.s32.totalorder %s20, 1
      %p59 = scmp.ne.s32.totalorder %s54, %s56
      %p60 = scmp.eq.s32.totalorder %s20, 0
      %p61 = por %p59, %p60
      %p62 = scmp.ne.s32.totalorder %s54, %s56
      %p63 = scmp.eq.s32.totalorder %s25, 1
      %p64 = por %p62, %p63
      %p65 = scmp.ne.s32.totalorder %s56, %s57
      %p66 = scmp.eq.s32.totalorder %s25, 0
      %p67 = por %p65, %p66
      %p68 = scmp.ne.s32.totalorder %s56, %s57
      %p69 = scmp.eq.s32.totalorder %s26, 1
      %p70 = por %p68, %p69
      %p72 = scmp.ne.s32.totalorder %s57, %s71
      %p73 = scmp.eq.s32.totalorder %s26, 0
      %p74 = por %p72, %p73
      %s76 = sadd.s32 %s75, 1
      %p79 = scmp.eq.s32.totalorder %s20, 1
      %p80 = scmp.ne.s32.totalorder %s75, %s77
      %p81 = scmp.eq.s32.totalorder %s20, 0
      %p82 = por %p80, %p81
      %p83 = scmp.ne.s32.totalorder %s75, %s77
      %p84 = scmp.eq.s32.totalorder %s25, 1
      %p85 = por %p83, %p84
      %p86 = scmp.ne.s32.totalorder %s77, %s78
      %p87 = scmp.eq.s32.totalorder %s25, 0
      %p88 = por %p86, %p87
      %p89 = scmp.ne.s32.totalorder %s77, %s78
      %p90 = scmp.eq.s32.totalorder %s26, 1
      %p91 = por %p89, %p90
      %p93 = scmp.ne.s32.totalorder %s78, %s92
      %p94 = scmp.eq.s32.totalorder %s26, 0
      %p95 = por %p93, %p94
      %s97 = sadd.s32 %s96, 1
      %p100 = scmp.eq.s32.totalorder %s20, 1
      %p101 = scmp.ne.s32.totalorder %s96, %s98
      %p102 = scmp.eq.s32.totalorder %s20, 0
      %p103 = por %p101, %p102
      %p104 = scmp.ne.s32.totalorder %s96, %s98
      %p105 = scmp.eq.s32.totalorder %s25, 1
      %p106 = por %p104, %p105
      %p107 = scmp.ne.s32.totalorder %s98, %s99
      %p108 = scmp.eq.s32.totalorder %s25, 0
      %p109 = por %p107, %p108
      %p110 = scmp.ne.s32.totalorder %s98, %s99
      %p111 = scmp.eq.s32.totalorder %s26, 1
      %p112 = por %p110, %p111
      %p114 = scmp.ne.s32.totalorder %s99, %s113
      %p115 = scmp.eq.s32.totalorder %s26, 0
      %p116 = por %p114, %p115
      %s118 = sadd.s32 %s117, 1
      %p121 = scmp.eq.s32.totalorder %s20, 1
      %p122 = scmp.ne.s32.totalorder %s117, %s119
      %p123 = scmp.eq.s32.totalorder %s20, 0
      %p124 = por %p122, %p123
      %p125 = scmp.ne.s32.totalorder %s117, %s119
      %p126 = scmp.eq.s32.totalorder %s25, 1
      %p127 = por %p125, %p126
      %p128 = scmp.ne.s32.totalorder %s119, %s120
      %p129 = scmp.eq.s32.totalorder %s25, 0
      %p130 = por %p128, %p129
      %p131 = scmp.ne.s32.totalorder %s119, %s120
      %p132 = scmp.eq.s32.totalorder %s26, 1
      %p133 = por %p131, %p132
      %p135 = scmp.ne.s32.totalorder %s120, %s134
      %p136 = scmp.eq.s32.totalorder %s26, 0
      %p137 = por %p135, %p136
      %s139 = sadd.s32 %s138, 1
      %p142 = scmp.eq.s32.totalorder %s20, 1
      %p143 = scmp.ne.s32.totalorder %s138, %s140
      %p144 = scmp.eq.s32.totalorder %s20, 0
      %p145 = por %p143, %p144
      %p146 = scmp.ne.s32.totalorder %s138, %s140
      %p147 = scmp.eq.s32.totalorder %s25, 1
      %p148 = por %p146, %p147
      %p149 = scmp.ne.s32.totalorder %s140, %s141
      %p150 = scmp.eq.s32.totalorder %s25, 0
      %p151 = por %p149, %p150
      %p152 = scmp.ne.s32.totalorder %s140, %s141
      %p153 = scmp.eq.s32.totalorder %s26, 1
      %p154 = por %p152, %p153
      %p156 = scmp.ne.s32.totalorder %s141, %s155
      %p157 = scmp.eq.s32.totalorder %s26, 0
      %p158 = por %p156, %p157
      %s160 = sadd.s32 %s159, 1
      %p163 = scmp.eq.s32.totalorder %s20, 1
      %p164 = scmp.ne.s32.totalorder %s159, %s161
      %p165 = scmp.eq.s32.totalorder %s20, 0
      %p166 = por %p164, %p165
      %p167 = scmp.ne.s32.totalorder %s159, %s161
      %p168 = scmp.eq.s32.totalorder %s25, 1
      %p169 = por %p167, %p168
      %p170 = scmp.ne.s32.totalorder %s161, %s162
      %p171 = scmp.eq.s32.totalorder %s25, 0
      %p172 = por %p170, %p171
      %p173 = scmp.ne.s32.totalorder %s161, %s162
      %p174 = scmp.eq.s32.totalorder %s26, 1
      %p175 = por %p173, %p174
      %p177 = scmp.ne.s32.totalorder %s162, %s176
      %p178 = scmp.eq.s32.totalorder %s26, 0
      %p179 = por %p177, %p178
      %s181 = sadd.s32 %s180, 1
      %p184 = scmp.eq.s32.totalorder %s20, 1
      %p185 = scmp.ne.s32.totalorder %s180, %s182
      %p186 = scmp.eq.s32.totalorder %s20, 0
      %p187 = por %p185, %p186
      %p188 = scmp.ne.s32.totalorder %s180, %s182
      %p189 = scmp.eq.s32.totalorder %s25, 1
      %p190 = por %p188, %p189
      %p191 = scmp.ne.s32.totalorder %s182, %s183
      %p192 = scmp.eq.s32.totalorder %s25, 0
      %p193 = por %p191, %p192
      %p194 = scmp.ne.s32.totalorder %s182, %s183
      %p195 = scmp.eq.s32.totalorder %s26, 1
      %p196 = por %p194, %p195
      %p198 = scmp.ne.s32.totalorder %s183, %s197
      %p199 = scmp.eq.s32.totalorder %s26, 0
      %p200 = por %p198, %p199
      %s202 = sadd.s32 %s201, 1
      %p205 = scmp.eq.s32.totalorder %s20, 1
      %p206 = scmp.ne.s32.totalorder %s201, %s203
      %p207 = scmp.eq.s32.totalorder %s20, 0
      %p208 = por %p206, %p207
      %p209 = scmp.ne.s32.totalorder %s201, %s203
      %p210 = scmp.eq.s32.totalorder %s25, 1
      %p211 = por %p209, %p210
      %p212 = scmp.ne.s32.totalorder %s203, %s204
      %p213 = scmp.eq.s32.totalorder %s25, 0
      %p214 = por %p212, %p213
      %p215 = scmp.ne.s32.totalorder %s203, %s204
      %p216 = scmp.eq.s32.totalorder %s26, 1
      %p217 = por %p215, %p216
      %p219 = scmp.ne.s32.totalorder %s204, %s218
      %p220 = scmp.eq.s32.totalorder %s26, 0
      %p221 = por %p219, %p220
      %s223 = sadd.s32 %s222, 1
      %p226 = scmp.eq.s32.totalorder %s20, 1
      %p227 = scmp.ne.s32.totalorder %s222, %s224
      %p228 = scmp.eq.s32.totalorder %s20, 0
      %p229 = por %p227, %p228
      %p230 = scmp.ne.s32.totalorder %s222, %s224
      %p231 = scmp.eq.s32.totalorder %s25, 1
      %p232 = por %p230, %p231
      %p233 = scmp.ne.s32.totalorder %s224, %s225
      %p234 = scmp.eq.s32.totalorder %s25, 0
      %p235 = por %p233, %p234
      %p236 = scmp.ne.s32.totalorder %s224, %s225
      %p237 = scmp.eq.s32.totalorder %s26, 1
      %p238 = por %p236, %p237
      %p240 = scmp.ne.s32.totalorder %s225, %s239
      %p241 = scmp.eq.s32.totalorder %s26, 0
      %p242 = por %p240, %p241
      %s244 = sadd.s32 %s243, 1
      %p247 = scmp.eq.s32.totalorder %s20, 1
      %p248 = scmp.ne.s32.totalorder %s243, %s245
      %p249 = scmp.eq.s32.totalorder %s20, 0
      %p250 = por %p248, %p249
      %p251 = scmp.ne.s32.totalorder %s243, %s245
      %p252 = scmp.eq.s32.totalorder %s25, 1
      %p253 = por %p251, %p252
      %p254 = scmp.ne.s32.totalorder %s245, %s246
      %p255 = scmp.eq.s32.totalorder %s25, 0
      %p256 = por %p254, %p255
      %p257 = scmp.ne.s32.totalorder %s245, %s246
      %p258 = scmp.eq.s32.totalorder %s26, 1
      %p259 = por %p257, %p258
      %p261 = scmp.ne.s32.totalorder %s246, %s260
      %p262 = scmp.eq.s32.totalorder %s26, 0
      %p263 = por %p261, %p262
      %s265 = sadd.s32 %s264, 1
      %p268 = scmp.eq.s32.totalorder %s20, 1
      %p269 = scmp.ne.s32.totalorder %s264, %s266
      %p270 = scmp.eq.s32.totalorder %s20, 0
      %p271 = por %p269, %p270
      %p272 = scmp.ne.s32.totalorder %s264, %s266
      %p273 = scmp.eq.s32.totalorder %s25, 1
      %p274 = por %p272, %p273
      %p275 = scmp.ne.s32.totalorder %s266, %s267
      %p276 = scmp.eq.s32.totalorder %s25, 0
      %p277 = por %p275, %p276
      %p278 = scmp.ne.s32.totalorder %s266, %s267
      %p279 = scmp.eq.s32.totalorder %s26, 1
      %p280 = por %p278, %p279
      %p282 = scmp.ne.s32.totalorder %s267, %s281
      %p283 = scmp.eq.s32.totalorder %s26, 0
      %p284 = por %p282, %p283
      %s286 = sadd.s32 %s285, 1
      %p289 = scmp.eq.s32.totalorder %s20, 1
      %p290 = scmp.ne.s32.totalorder %s285, %s287
      %p291 = scmp.eq.s32.totalorder %s20, 0
      %p292 = por %p290, %p291
      %p293 = scmp.ne.s32.totalorder %s285, %s287
      %p294 = scmp.eq.s32.totalorder %s25, 1
      %p295 = por %p293, %p294
      %p296 = scmp.ne.s32.totalorder %s287, %s288
      %p297 = scmp.eq.s32.totalorder %s25, 0
      %p298 = por %p296, %p297
      %p299 = scmp.ne.s32.totalorder %s287, %s288
      %p300 = scmp.eq.s32.totalorder %s26, 1
      %p301 = por %p299, %p300
      %p303 = scmp.ne.s32.totalorder %s288, %s302
      %p304 = scmp.eq.s32.totalorder %s26, 0
      %p305 = por %p303, %p304
      %s306 = ssub.s32 %s20, %s27
      %p307 = scmp.eq.s32.totalorder %s306, 0
      %s309 = sadd.s32 %s308, 1
      %s310 = scalar_select %p307, %s308, %s309
      %p313 = pneg %p307
      %p314 = scmp.eq.s32.totalorder %s20, 1
      %p315 = por %p313, %p314
      %p316 = scmp.ne.s32.totalorder %s308, %s311
      %p317 = scmp.eq.s32.totalorder %s20, 0
      %p318 = por %p316, %p317
      %p319 = scmp.ne.s32.totalorder %s308, %s311
      %p320 = scmp.eq.s32.totalorder %s25, 1
      %p321 = por %p319, %p320
      %p322 = scmp.ne.s32.totalorder %s311, %s312
      %p323 = scmp.eq.s32.totalorder %s25, 0
      %p324 = por %p322, %p323
      %p325 = scmp.ne.s32.totalorder %s311, %s312
      %p326 = scmp.eq.s32.totalorder %s26, 1
      %p327 = por %p325, %p326
      %p329 = scmp.ne.s32.totalorder %s312, %s328
      %p330 = scmp.eq.s32.totalorder %s26, 0
      %p331 = por %p329, %p330
      %p332 = scmp.le.s32.totalorder 1, %s20
      %p333 = scmp.lt.s32.totalorder %s20, 3
      %p334 = pnand %p332, %p333
      %p335 = pneg %p334
      // Predicated region
      $region9: #{wav2vec2_forward.8} parent=5 // pred_check
        _
      $region10: #{wav2vec2_forward.8} parent=5 // pred_check_branch
        %337 = sbr.rel (%p334) target = $region12
      $region11: #{wav2vec2_forward.8} parent=5 // pred_region
        %s338 = ssub.s32 %s20, 1
        // Predicated region
        $region13: #{wav2vec2_forward.8} parent=11 // pred_check
          %p339 = pneg %p67
        $region14: #{wav2vec2_forward.8} parent=11 // pred_check_branch
          %341 = sbr.rel (%p339) target = $region16
        $region15: #{wav2vec2_forward.8} parent=11 // pred_region
          _
        $region16: #{wav2vec2_forward.8} parent=11 // pred_fallthru
          _
        // Predicated region
        $region17: #{wav2vec2_forward.8} parent=11 // pred_check
          %p342 = pneg %p88
        $region18: #{wav2vec2_forward.8} parent=11 // pred_check_branch
          %344 = sbr.rel (%p342) target = $region20
        $region19: #{wav2vec2_forward.8} parent=11 // pred_region
          _
        $region20: #{wav2vec2_forward.8} parent=11 // pred_fallthru
          _
        // Predicated region
        $region21: #{wav2vec2_forward.8} parent=11 // pred_check
          %p345 = pneg %p109
        $region22: #{wav2vec2_forward.8} parent=11 // pred_check_branch
          %347 = sbr.rel (%p345) target = $region24
        $region23: #{wav2vec2_forward.8} parent=11 // pred_region
          %s349 = ssub.s32 2048, 2048
          %350 = vsyncadd [#allocation3], %s349
          %s351 = sshll.u32 [#allocation2], 4
          %s352 = int_to_ptr.vmem [resolvable:$true] %s351
          %357 = dma.hbm_to_vmem [thread:$0]  %s3, 2048, %s352, [#allocation3], 128, 128, 8
        $region24: #{wav2vec2_forward.8} parent=11 // pred_fallthru
          _
        // Predicated region
        $region25: #{wav2vec2_forward.8} parent=11 // pred_check
          %p358 = pneg %p130
        $region26: #{wav2vec2_forward.8} parent=11 // pred_check_branch
          %360 = sbr.rel (%p358) target = $region28
        $region27: #{wav2vec2_forward.8} parent=11 // pred_region
          _
        $region28: #{wav2vec2_forward.8} parent=11 // pred_fallthru
          _
        // Predicated region
        $region29: #{wav2vec2_forward.8} parent=11 // pred_check
          %p361 = pneg %p151
        $region30: #{wav2vec2_forward.8} parent=11 // pred_check_branch
          %363 = sbr.rel (%p361) target = $region32
        $region31: #{wav2vec2_forward.8} parent=11 // pred_region
          _
        $region32: #{wav2vec2_forward.8} parent=11 // pred_fallthru
          _
        // Predicated region
        $region33: #{wav2vec2_forward.8} parent=11 // pred_check
          %p364 = pneg %p172
        $region34: #{wav2vec2_forward.8} parent=11 // pred_check_branch
          %366 = sbr.rel (%p364) target = $region36
        $region35: #{wav2vec2_forward.8} parent=11 // pred_region
          _
        $region36: #{wav2vec2_forward.8} parent=11 // pred_fallthru
          _
        // Predicated region
        $region37: #{wav2vec2_forward.8} parent=11 // pred_check
          %p367 = pneg %p193
        $region38: #{wav2vec2_forward.8} parent=11 // pred_check_branch
          %369 = sbr.rel (%p367) target = $region40
        $region39: #{wav2vec2_forward.8} parent=11 // pred_region
          _
        $region40: #{wav2vec2_forward.8} parent=11 // pred_fallthru
          _
        // Predicated region
        $region41: #{wav2vec2_forward.8} parent=11 // pred_check
          %p370 = pneg %p214
        $region42: #{wav2vec2_forward.8} parent=11 // pred_check_branch
          %372 = sbr.rel (%p370) target = $region44
        $region43: #{wav2vec2_forward.8} parent=11 // pred_region
          _
        $region44: #{wav2vec2_forward.8} parent=11 // pred_fallthru
          _
        // Predicated region
        $region45: #{wav2vec2_forward.8} parent=11 // pred_check
          %p373 = pneg %p235
        $region46: #{wav2vec2_forward.8} parent=11 // pred_check_branch
          %375 = sbr.rel (%p373) target = $region48
        $region47: #{wav2vec2_forward.8} parent=11 // pred_region
          _
        $region48: #{wav2vec2_forward.8} parent=11 // pred_fallthru
          _
        // Predicated region
        $region49: #{wav2vec2_forward.8} parent=11 // pred_check
          %p376 = pneg %p256
        $region50: #{wav2vec2_forward.8} parent=11 // pred_check_branch
          %378 = sbr.rel (%p376) target = $region52
        $region51: #{wav2vec2_forward.8} parent=11 // pred_region
          _
        $region52: #{wav2vec2_forward.8} parent=11 // pred_fallthru
          _
        // Predicated region
        $region53: #{wav2vec2_forward.8} parent=11 // pred_check
          %p379 = pneg %p277
        $region54: #{wav2vec2_forward.8} parent=11 // pred_check_branch
          %381 = sbr.rel (%p379) target = $region56
        $region55: #{wav2vec2_forward.8} parent=11 // pred_region
          _
        $region56: #{wav2vec2_forward.8} parent=11 // pred_fallthru
          _
        // Predicated region
        $region57: #{wav2vec2_forward.8} parent=11 // pred_check
          %p382 = pneg %p298
        $region58: #{wav2vec2_forward.8} parent=11 // pred_check_branch
          %384 = sbr.rel (%p382) target = $region60
        $region59: #{wav2vec2_forward.8} parent=11 // pred_region
          _
        $region60: #{wav2vec2_forward.8} parent=11 // pred_fallthru
          _
      $region12: #{wav2vec2_forward.8} parent=5 // pred_fallthru
        _
      %p385 = scmp.lt.s32.totalorder %s20, 2
      // Predicated region
      $region61: #{wav2vec2_forward.8} parent=5 // pred_check
        %p386 = pneg %p385
      $region62: #{wav2vec2_forward.8} parent=5 // pred_check_branch
        %388 = sbr.rel (%p386) target = $region64
      $region63: #{wav2vec2_forward.8} parent=5 // pred_region
        // Predicated region
        $region65: #{wav2vec2_forward.8} parent=63 // pred_check
          %p389 = pneg %p40
        $region66: #{wav2vec2_forward.8} parent=63 // pred_check_branch
          %391 = sbr.rel (%p389) target = $region68
        $region67: #{wav2vec2_forward.8} parent=63 // pred_region
          %p392 = scmp.lt.s32.totalorder %s20, 1
          %s393 = scalar_select %p392, %s20, 1
          %s394 = smul.addr %s393, 4
          %s395 = smul.addr %s394, 8
          %s396 = scalar_lea.vmem %s0, %s395
        $region68: #{wav2vec2_forward.8} parent=63 // pred_fallthru
          _
      $region64: #{wav2vec2_forward.8} parent=5 // pred_fallthru
        _
      %p397 = scmp.le.s32.totalorder 1, %s20
      %p398 = scmp.lt.s32.totalorder %s20, 3
      %p399 = pnand %p397, %p398
      %p400 = pneg %p399
      // Predicated region
      $region69: #{wav2vec2_forward.8} parent=5 // pred_check
        _
      $region70: #{wav2vec2_forward.8} parent=5 // pred_check_branch
        %402 = sbr.rel (%p399) target = $region72
      $region71: #{wav2vec2_forward.8} parent=5 // pred_region
        %s403 = ssub.s32 %s20, 1
        // Predicated region
        $region73: #{wav2vec2_forward.8} parent=71 // pred_check
          %p404 = pneg %p109
        $region74: #{wav2vec2_forward.8} parent=71 // pred_check_branch
          %406 = sbr.rel (%p404) target = $region76
        $region75: #{wav2vec2_forward.8} parent=71 // pred_region
          %407 = dma.done [#allocation3], 2048
        $region76: #{wav2vec2_forward.8} parent=71 // pred_fallthru
          _
        %p408 = scmp.lt.s32.totalorder %s25, 1
        %s409 = scalar_select %p408, %s25, 1
        %s410 = smul.addr %s409, 4
        %s411 = smul.addr %s410, 8
        %s412 = scalar_lea.vmem %s0, %s411
        %p413 = pneg %p46
        %p414 = pneg %p43
        %p415 = pneg %p67
        %p416 = pneg %p64
        %p417 = pneg %p88
        %p418 = pneg %p85
        %p419 = pneg %p109
        %p420 = pneg %p106
        %p421 = pneg %p130
        %p422 = pneg %p127
        %p423 = pneg %p151
        %p424 = pneg %p148
        %p425 = pneg %p172
        %p426 = pneg %p169
        %p427 = pneg %p193
        %p428 = pneg %p190
        %p429 = pneg %p214
        %p430 = pneg %p211
        %p431 = pneg %p235
        %p432 = pneg %p232
        %p433 = pneg %p256
        %p434 = pneg %p253
        %p435 = pneg %p277
        %p436 = pneg %p274
        %p437 = pneg %p298
        %p438 = pneg %p295
        %p439 = pneg %p324
        %p440 = pneg %p321
        %p441 = scmp.lt.s32.totalorder %s25, 1
        %s442 = scalar_select %p441, %s25, 1
        %s443 = smul.addr %s442, 4
        %s444 = smul.addr %s443, 8
        %s445 = scalar_lea.vmem %s13, %s444
        %p446 = scmp.lt.s32.totalorder %s25, 1
        %s447 = scalar_select %p446, %s25, 1
        %s448 = smul.addr %s447, 4
        %s449 = smul.addr %s448, 8
        %s450 = scalar_lea.vmem %s0, %s449
        %p451 = scmp.lt.s32.totalorder %s25, 1
        %s452 = scalar_select %p451, %s25, 1
        %s453 = smul.addr %s452, 4
        %s454 = smul.addr %s453, 8
        %s455 = scalar_lea.vmem %s13, %s454
        %v457 = vld [vmem:[%s450] sm:$0xff]
        %v458 = vld [vmem:[%s450 + $0x8] sm:$0xff]
        %v459 = vld [vmem:[%s450 + $0x10] sm:$0xff]
        %v460 = vld [vmem:[%s450 + $0x18] sm:$0x7f]
        %v461 = vld [vmem:[%s1] sm:$0xff]
        %v462 = vld [vmem:[%s1 + $0x8] sm:$0xff]
        %v463 = vld [vmem:[%s1 + $0x10] sm:$0xff]
        %v464 = vld [vmem:[%s1 + $0x18] sm:$0xff]
        %v465 = vld [vmem:[%s1 + $0x20] sm:$0xff]
        %v466 = vld [vmem:[%s1 + $0x28] sm:$0xff]
        %v467 = vld [vmem:[%s1 + $0x30] sm:$0xff]
        %v468 = vld [vmem:[%s1 + $0x38] sm:$0xff]
        %v469 = vld [vmem:[%s1 + $0x40] sm:$0xff]
        %v470 = vld [vmem:[%s1 + $0x48] sm:$0xff]
        %v471 = vld [vmem:[%s1 + $0x50] sm:$0xff]
        %v472 = vld [vmem:[%s1 + $0x58] sm:$0xff]
        %v473 = vld [vmem:[%s1 + $0x60] sm:$0xff]
        %v474 = vld [vmem:[%s1 + $0x68] sm:$0xff]
        %v475 = vld [vmem:[%s1 + $0x70] sm:$0xff]
        %v476 = vld [vmem:[%s1 + $0x78] sm:$0xff]
        %v477 = vld [vmem:[%s1 + $0x80] sm:$0xff]
        %v478 = vld [vmem:[%s1 + $0x88] sm:$0xff]
        %v479 = vld [vmem:[%s1 + $0x90] sm:$0xff]
        %v480 = vld [vmem:[%s1 + $0x98] sm:$0xff]
        %v481 = vld [vmem:[%s1 + $0xa0] sm:$0xff]
        %v482 = vld [vmem:[%s1 + $0xa8] sm:$0xff]
        %v483 = vld [vmem:[%s1 + $0xb0] sm:$0xff]
        %v484 = vld [vmem:[%s1 + $0xb8] sm:$0xff]
        %v485 = vld [vmem:[%s1 + $0xc0] sm:$0xff]
        %v486 = vld [vmem:[%s1 + $0xc8] sm:$0xff]
        %v487 = vld [vmem:[%s1 + $0xd0] sm:$0xff]
        %v488 = vld [vmem:[%s1 + $0xd8] sm:$0xff]
        %v489 = vld [vmem:[%s1 + $0xe0] sm:$0xff]
        %v490 = vld [vmem:[%s1 + $0xe8] sm:$0xff]
        %v491 = vld [vmem:[%s1 + $0xf0] sm:$0xff]
        %v492 = vld [vmem:[%s1 + $0xf8] sm:$0xff]
        %v493 = vld [vmem:[%s1 + $0x100] sm:$0xff]
        %v494 = vld [vmem:[%s1 + $0x108] sm:$0xff]
        %v495 = vld [vmem:[%s1 + $0x110] sm:$0xff]
        %v496 = vld [vmem:[%s1 + $0x118] sm:$0xff]
        %v497 = vld [vmem:[%s1 + $0x120] sm:$0xff]
        %v498 = vld [vmem:[%s1 + $0x128] sm:$0xff]
        %v499 = vld [vmem:[%s1 + $0x130] sm:$0xff]
        %v500 = vld [vmem:[%s1 + $0x138] sm:$0xff]
        %v501 = vld [vmem:[%s1 + $0x140] sm:$0xff]
        %v502 = vld [vmem:[%s1 + $0x148] sm:$0xff]
        %v503 = vld [vmem:[%s1 + $0x150] sm:$0xff]
        %v504 = vld [vmem:[%s1 + $0x158] sm:$0xff]
        %v505 = vld [vmem:[%s1 + $0x160] sm:$0xff]
        %v506 = vld [vmem:[%s1 + $0x168] sm:$0xff]
        %v507 = vld [vmem:[%s1 + $0x170] sm:$0xff]
        %v508 = vld [vmem:[%s1 + $0x178] sm:$0xff]
        %v509 = vld [vmem:[%s2] sm:$0x7]
        %v510 = vpack.c.bf16 %v458, %v457
        %v511 = vpack.c.bf16 %v460, %v459
        %v512 = vpack.c.bf16 %v464, %v461
        %v513 = vpack.c.bf16 %v465, %v462
        %v514 = vpack.c.bf16 %v466, %v463
        %v515 = vpack.c.bf16 %v470, %v467
        %v516 = vpack.c.bf16 %v471, %v468
        %v517 = vpack.c.bf16 %v472, %v469
        %v518 = vpack.c.bf16 %v476, %v473
        %v519 = vpack.c.bf16 %v477, %v474
        %v520 = vpack.c.bf16 %v478, %v475
        %v521 = vpack.c.bf16 %v482, %v479
        %v522 = vpack.c.bf16 %v483, %v480
        %v523 = vpack.c.bf16 %v484, %v481
        %v524 = vpack.c.bf16 %v488, %v485
        %v525 = vpack.c.bf16 %v489, %v486
        %v526 = vpack.c.bf16 %v490, %v487
        %v527 = vpack.c.bf16 %v494, %v491
        %v528 = vpack.c.bf16 %v495, %v492
        %v529 = vpack.c.bf16 %v496, %v493
        %v530 = vpack.c.bf16 %v500, %v497
        %v531 = vpack.c.bf16 %v501, %v498
        %v532 = vpack.c.bf16 %v502, %v499
        %v533 = vpack.c.bf16 %v506, %v503
        %v534 = vpack.c.bf16 %v507, %v504
        %v535 = vpack.c.bf16 %v508, %v505
        %v537 = vlaneseq
        %v538 = vshrl.u32 %v537, 7
        %v539 = vsub.s32 0, %v538
        %v540 = vrot.slane %v509, %v539
        %v541 = vlaneseq
        %v542 = vshrl.u32 %v541, 7
        %v543 = vsub.s32 1, %v542
        %v544 = vrot.slane %v509, %v543
        %v545 = vlaneseq
        %v546 = vshrl.u32 %v545, 7
        %v547 = vsub.s32 2, %v546
        %v548 = vrot.slane %v509, %v547
        %552 = vmatprep.subr.bf16.mxu0 %v534
        %553 = vmatpush1.bf16.msra.mxu0 %v533
        %554 = vmatprep.subr.bf16.mxu0 %v531
        %555 = vmatpush1.bf16.msra.mxu0 %v530
        %556 = vmatprep.subr.bf16.mxu0 %v528
        %557 = vmatpush1.bf16.msra.mxu0 %v527
        %558 = vmatprep.subr.bf16.mxu0 %v525
        %559 = vmatpush1.bf16.msra.mxu0 %v524
        %560 = vmatprep.subr.bf16.mxu0 %v522
        %561 = vmatpush1.bf16.msra.mxu0 %v521
        %562 = vmatprep.subr.bf16.mxu0 %v519
        %563 = vmatpush1.bf16.msra.mxu0 %v518
        %564 = vmatprep.subr.bf16.mxu0 %v516
        %565 = vmatpush1.bf16.msra.mxu0 %v515
        %566 = vmatprep.subr.bf16.mxu0 %v513
        %567 = vmatpush1.bf16.msra.mxu0 %v512
        %568 = vmatprep.subr.bf16.mxu0 0
        %569 = vmatpush2.bf16.msra.mxu0 0
        %570 = vmatprep.subr.bf16.mxu0 0
        %571 = vmatpush2.bf16.msra.mxu0 0
        %572 = vmatprep.subr.bf16.mxu0 0
        %573 = vmatpush2.bf16.msra.mxu0 0
        %574 = vmatprep.subr.bf16.mxu0 0
        %575 = vmatpush2.bf16.msra.mxu0 0
        %576 = vmatprep.subr.bf16.mxu0 0
        %577 = vmatpush2.bf16.msra.mxu0 0
        %578 = vmatprep.subr.bf16.mxu0 0
        %579 = vmatpush2.bf16.msra.mxu0 0
        %580 = vmatprep.subr.bf16.mxu0 0
        %581 = vmatpush2.bf16.msra.mxu0 0
        %582 = vmatprep.subr.bf16.mxu0 0
        %583 = vmatpush2.bf16.msra.mxu0 0
        %584 = vmatprep.mubr.bf16.mxu0 0
        %585 = vmatmul.mubr.bf16.gmra.mxu0 %v510
        %v586 = vpop.f32.mrf.mxu0
        %v587 = vadd.f32 %v540, %v586
        %v588 = vpop.f32.mrf.mxu0
        %v589 = vadd.f32 %v544, %v588
        %v590 = vpop.f32.mrf.mxu0
        %v591 = vadd.f32 %v540, %v590
        %v592 = vpop.f32.mrf.mxu0
        %v593 = vadd.f32 %v544, %v592
        %594 = vmatprep.mubr.bf16.mxu0 0
        %595 = vmatmul.mubr.bf16.gmra.mxu0 %v511
        %v596 = vpop.f32.mrf.mxu0
        %v597 = vadd.f32 %v540, %v596
        %v598 = vpop.f32.mrf.mxu0
        %v599 = vadd.f32 %v544, %v598
        %v600 = vpop.f32.mrf.mxu0
        %v601 = vadd.f32 %v540, %v600
        %v602 = vpop.f32.mrf.mxu0
        %v603 = vadd.f32 %v544, %v602
        %604 = vdwg.mxu0
        %605 = vmatprep.subr.bf16.mxu0 0
        %606 = vmatpush1.bf16.msra.mxu0 %v535
        %607 = vmatprep.subr.bf16.mxu0 0
        %608 = vmatpush1.bf16.msra.mxu0 %v532
        %609 = vmatprep.subr.bf16.mxu0 0
        %610 = vmatpush1.bf16.msra.mxu0 %v529
        %611 = vmatprep.subr.bf16.mxu0 0
        %612 = vmatpush1.bf16.msra.mxu0 %v526
        %613 = vmatprep.subr.bf16.mxu0 0
        %614 = vmatpush1.bf16.msra.mxu0 %v523
        %615 = vmatprep.subr.bf16.mxu0 0
        %616 = vmatpush1.bf16.msra.mxu0 %v520
        %617 = vmatprep.subr.bf16.mxu0 0
        %618 = vmatpush1.bf16.msra.mxu0 %v517
        %619 = vmatprep.subr.bf16.mxu0 0
        %620 = vmatpush1.bf16.msra.mxu0 %v514
        %621 = vmatprep.subr.bf16.mxu0 0
        %622 = vmatpush2.bf16.msra.mxu0 0
        %623 = vmatprep.subr.bf16.mxu0 0
        %624 = vmatpush2.bf16.msra.mxu0 0
        %625 = vmatprep.subr.bf16.mxu0 0
        %626 = vmatpush2.bf16.msra.mxu0 0
        %627 = vmatprep.subr.bf16.mxu0 0
        %628 = vmatpush2.bf16.msra.mxu0 0
        %629 = vmatprep.subr.bf16.mxu0 0
        %630 = vmatpush2.bf16.msra.mxu0 0
        %631 = vmatprep.subr.bf16.mxu0 0
        %632 = vmatpush2.bf16.msra.mxu0 0
        %633 = vmatprep.subr.bf16.mxu0 0
        %634 = vmatpush2.bf16.msra.mxu0 0
        %635 = vmatprep.subr.bf16.mxu0 0
        %636 = vmatpush2.bf16.msra.mxu0 0
        %637 = vmatprep.mubr.bf16.mxu0 0
        %638 = vmatmul.mubr.bf16.gmra.mxu0 %v510
        %v639 = vpop.f32.mrf.mxu0
        %v640 = vadd.f32 %v548, %v639
        %v641 = vpop.f32.mrf.mxu0
        %v642 = vpop.f32.mrf.mxu0
        %v643 = vadd.f32 %v548, %v642
        %v644 = vpop.f32.mrf.mxu0
        %645 = vmatprep.mubr.bf16.mxu0 0
        %646 = vmatmul.mubr.bf16.gmra.mxu0 %v511
        %v647 = vpop.f32.mrf.mxu0
        %v648 = vadd.f32 %v548, %v647
        %v649 = vpop.f32.mrf.mxu0
        %v650 = vpop.f32.mrf.mxu0
        %v651 = vadd.f32 %v548, %v650
        %v652 = vpop.f32.mrf.mxu0
        %653 = vdwg.mxu0
        %v654 = vmul.f32 %v587, 0.125
        %v655 = vmul.f32 %v591, 0.125
        %v656 = vmul.f32 %v597, 0.125
        %v657 = vmul.f32 %v601, 0.125
        %v658 = vpack.c.bf16 %v655, %v654
        %v659 = vpack.c.bf16 %v657, %v656
        %v660 = vpack.c.bf16 %v593, %v589
        %v661 = vpack.c.bf16 %v603, %v599
        %v662 = vpack.c.bf16 %v643, %v640
        %v663 = vpack.c.bf16 %v651, %v648
        %vm664 = vcmask 523264
        %v666 = vsel %vm664, %v658, 0
        %v669 = vsel %vm664, %v659, 0
        %v672 = vsel %vm664, %v660, 0
        %v675 = vsel %vm664, %v661, 0
        %677 = vmatprep.subr.bf16.mxu0 0
        %678 = vmatpush1.bf16.xpose.msra.mxu0 0
        %679 = vmatprep.subr.bf16.mxu0 0
        %680 = vmatpush1.bf16.xpose.msra.mxu0 0
        %681 = vmatprep.subr.bf16.mxu0 0
        %682 = vmatpush1.bf16.xpose.msra.mxu0 0
        %683 = vmatprep.subr.bf16.mxu0 0
        %684 = vmatpush1.bf16.xpose.msra.mxu0 0
        %685 = vmatprep.subr.bf16.mxu0 0
        %686 = vmatpush1.bf16.xpose.msra.mxu0 0
        %687 = vmatprep.subr.bf16.mxu0 0
        %688 = vmatpush1.bf16.xpose.msra.mxu0 0
        %689 = vmatprep.subr.bf16.mxu0 0
        %690 = vmatpush1.bf16.xpose.msra.mxu0 %v675
        %691 = vmatprep.subr.bf16.mxu0 0
        %692 = vmatpush1.bf16.xpose.msra.mxu0 %v672
        %693 = vmatprep.subr.bf16.mxu0 0
        %694 = vmatpush2.bf16.xpose.msra.mxu0 0
        %695 = vmatprep.subr.bf16.mxu0 0
        %696 = vmatpush2.bf16.xpose.msra.mxu0 0
        %697 = vmatprep.subr.bf16.mxu0 0
        %698 = vmatpush2.bf16.xpose.msra.mxu0 0
        %699 = vmatprep.subr.bf16.mxu0 0
        %700 = vmatpush2.bf16.xpose.msra.mxu0 0
        %701 = vmatprep.subr.bf16.mxu0 0
        %702 = vmatpush2.bf16.xpose.msra.mxu0 0
        %703 = vmatprep.subr.bf16.mxu0 0
        %704 = vmatpush2.bf16.xpose.msra.mxu0 0
        %705 = vmatprep.subr.bf16.mxu0 0
        %706 = vmatpush2.bf16.xpose.msra.mxu0 0
        %707 = vmatprep.subr.bf16.mxu0 0
        %708 = vmatpush2.bf16.xpose.msra.mxu0 0
        %709 = vmatprep.mubr.bf16.mxu0 0
        %710 = vmatmul.mubr.bf16.gmra.mxu0 %v666
        %v711 = vpop.f32.mrf.mxu0
        %v712 = vadd.f32 0.0, %v711
        %v713 = vpop.f32.mrf.mxu0
        %v714 = vpop.f32.mrf.mxu0
        %v715 = vadd.f32 0.0, %v714
        %v716 = vpop.f32.mrf.mxu0
        %717 = vmatprep.mubr.bf16.mxu0 0
        %718 = vmatmul.mubr.bf16.gmra.mxu0 %v669
        %v719 = vpop.f32.mrf.mxu0
        %v720 = vadd.f32 0.0, %v719
        %v721 = vpop.f32.mrf.mxu0
        %v722 = vpop.f32.mrf.mxu0
        %v723 = vadd.f32 0.0, %v722
        %v724 = vpop.f32.mrf.mxu0
        %725 = vdwg.mxu0
        %vm726 = vcmask 252928
        %v727 = vsel %vm726, %v712, -inf
        %728 = vmax.xlane.f32.xlu0 %v727
        %v729 = vpop.xlane.xlu0 %728
        %v730 = vsel %vm726, %v715, -inf
        %731 = vmax.xlane.f32.xlu0 %v730
        %v732 = vpop.xlane.xlu0 %731
        %v733 = vsel %vm726, %v720, -inf
        %734 = vmax.xlane.f32.xlu0 %v733
        %v735 = vpop.xlane.xlu0 %734
        %vm736 = vcmask 251904
        %v737 = vsel %vm736, %v723, -inf
        %738 = vmax.xlane.f32.xlu0 %v737
        %v739 = vpop.xlane.xlu0 %738
        %v740 = vsub.f32 %v712, %v729
        %v741 = vsub.f32 %v715, %v732
        %v742 = vsub.f32 %v720, %v735
        %v743 = vsub.f32 %v723, %v739
        %v744 = vmul.f32 %v740, 1.442695
        %v745 = vpow.pop %v744
        %v746 = vmul.f32 %v741, 1.442695
        %v747 = vpow.pop %v746
        %v748 = vmul.f32 %v742, 1.442695
        %v749 = vpow.pop %v748
        %v750 = vmul.f32 %v743, 1.442695
        %v751 = vpow.pop %v750
        %v752 = vsel %vm726, %v745, 0.0
        %753 = vadd.xlane.f32.xlu0 %v752
        %v754 = vpop.xlane.xlu0 %753
        %v755 = vsel %vm726, %v747, 0.0
        %756 = vadd.xlane.f32.xlu0 %v755
        %v757 = vpop.xlane.xlu0 %756
        %v758 = vsel %vm726, %v749, 0.0
        %759 = vadd.xlane.f32.xlu0 %v758
        %v760 = vpop.xlane.xlu0 %759
        %v761 = vsel %vm736, %v751, 0.0
        %762 = vadd.xlane.f32.xlu0 %v761
        %v763 = vpop.xlane.xlu0 %762
        %v764 = vrcp.pop %v754
        %v765 = vrcp.pop %v757
        %v766 = vrcp.pop %v760
        %v767 = vrcp.pop %v763
        %v768 = vmul.f32 %v745, %v764
        %v769 = vmul.f32 %v747, %v765
        %v770 = vmul.f32 %v749, %v766
        %v771 = vmul.f32 %v751, %v767
        %v772 = vpack.c.bf16 %v769, %v768
        %v773 = vpack.c.bf16 %v771, %v770
        %v775 = vsel %vm726, %v772, 0
        %v778 = vsel %vm726, %v773, 0
        %vm780 = vcmask 1046528
        %vm781 = vcmask 1047552
        %v782 = vsel %vm780, 4294967295, 65535
        %v783 = vsel %vm781, %v782, 0
        %v785 = vand.u32 %v663, %v783
        %787 = vmatprep.subr.bf16.mxu0 0
        %788 = vmatpush1.bf16.msra.mxu0 0
        %789 = vmatprep.subr.bf16.mxu0 0
        %790 = vmatpush1.bf16.msra.mxu0 0
        %791 = vmatprep.subr.bf16.mxu0 0
        %792 = vmatpush1.bf16.msra.mxu0 0
        %793 = vmatprep.subr.bf16.mxu0 0
        %794 = vmatpush1.bf16.msra.mxu0 0
        %795 = vmatprep.subr.bf16.mxu0 0
        %796 = vmatpush1.bf16.msra.mxu0 0
        %797 = vmatprep.subr.bf16.mxu0 0
        %798 = vmatpush1.bf16.msra.mxu0 0
        %799 = vmatprep.subr.bf16.mxu0 0
        %800 = vmatpush1.bf16.msra.mxu0 %v785
        %801 = vmatprep.subr.bf16.mxu0 0
        %802 = vmatpush1.bf16.msra.mxu0 %v662
        %803 = vmatprep.subr.bf16.mxu0 0
        %804 = vmatpush2.bf16.msra.mxu0 0
        %805 = vmatprep.subr.bf16.mxu0 0
        %806 = vmatpush2.bf16.msra.mxu0 0
        %807 = vmatprep.subr.bf16.mxu0 0
        %808 = vmatpush2.bf16.msra.mxu0 0
        %809 = vmatprep.subr.bf16.mxu0 0
        %810 = vmatpush2.bf16.msra.mxu0 0
        %811 = vmatprep.subr.bf16.mxu0 0
        %812 = vmatpush2.bf16.msra.mxu0 0
        %813 = vmatprep.subr.bf16.mxu0 0
        %814 = vmatpush2.bf16.msra.mxu0 0
        %815 = vmatprep.subr.bf16.mxu0 0
        %816 = vmatpush2.bf16.msra.mxu0 0
        %817 = vmatprep.subr.bf16.mxu0 0
        %818 = vmatpush2.bf16.msra.mxu0 0
        %819 = vmatprep.mubr.bf16.mxu0 0
        %820 = vmatmul.mubr.bf16.gmra.mxu0 %v775
        %v821 = vpop.f32.mrf.mxu0
        %v822 = vadd.f32 0.0, %v821
        %v823 = vpop.f32.mrf.mxu0
        %v824 = vpop.f32.mrf.mxu0
        %v825 = vadd.f32 0.0, %v824
        %v826 = vpop.f32.mrf.mxu0
        %827 = vmatprep.mubr.bf16.mxu0 0
        %828 = vmatmul.mubr.bf16.gmra.mxu0 %v778
        %v829 = vpop.f32.mrf.mxu0
        %v830 = vadd.f32 0.0, %v829
        %v831 = vpop.f32.mrf.mxu0
        %v832 = vpop.f32.mrf.mxu0
        %v833 = vadd.f32 0.0, %v832
        %v834 = vpop.f32.mrf.mxu0
        %835 = vdwg.mxu0
        %838 = vrot.lane.b32.xlu0 %v658, 64
        %v839 = vpop.permute.xlu0 %838
        %840 = vrot.lane.b32.xlu0 %v659, 64
        %v841 = vpop.permute.xlu0 %840
        %844 = vrot.lane.b32.xlu0 %v660, 64
        %v845 = vpop.permute.xlu0 %844
        %846 = vrot.lane.b32.xlu0 %v661, 64
        %v847 = vpop.permute.xlu0 %846
        %v849 = vsel %vm664, %v839, 0
        %v852 = vsel %vm664, %v841, 0
        %v855 = vsel %vm664, %v845, 0
        %v858 = vsel %vm664, %v847, 0
        %860 = vmatprep.subr.bf16.mxu0 0
        %861 = vmatpush1.bf16.xpose.msra.mxu0 0
        %862 = vmatprep.subr.bf16.mxu0 0
        %863 = vmatpush1.bf16.xpose.msra.mxu0 0
        %864 = vmatprep.subr.bf16.mxu0 0
        %865 = vmatpush1.bf16.xpose.msra.mxu0 0
        %866 = vmatprep.subr.bf16.mxu0 0
        %867 = vmatpush1.bf16.xpose.msra.mxu0 0
        %868 = vmatprep.subr.bf16.mxu0 0
        %869 = vmatpush1.bf16.xpose.msra.mxu0 0
        %870 = vmatprep.subr.bf16.mxu0 0
        %871 = vmatpush1.bf16.xpose.msra.mxu0 0
        %872 = vmatprep.subr.bf16.mxu0 0
        %873 = vmatpush1.bf16.xpose.msra.mxu0 %v858
        %874 = vmatprep.subr.bf16.mxu0 0
        %875 = vmatpush1.bf16.xpose.msra.mxu0 %v855
        %876 = vmatprep.subr.bf16.mxu0 0
        %877 = vmatpush2.bf16.xpose.msra.mxu0 0
        %878 = vmatprep.subr.bf16.mxu0 0
        %879 = vmatpush2.bf16.xpose.msra.mxu0 0
        %880 = vmatprep.subr.bf16.mxu0 0
        %881 = vmatpush2.bf16.xpose.msra.mxu0 0
        %882 = vmatprep.subr.bf16.mxu0 0
        %883 = vmatpush2.bf16.xpose.msra.mxu0 0
        %884 = vmatprep.subr.bf16.mxu0 0
        %885 = vmatpush2.bf16.xpose.msra.mxu0 0
        %886 = vmatprep.subr.bf16.mxu0 0
        %887 = vmatpush2.bf16.xpose.msra.mxu0 0
        %888 = vmatprep.subr.bf16.mxu0 0
        %889 = vmatpush2.bf16.xpose.msra.mxu0 0
        %890 = vmatprep.subr.bf16.mxu0 0
        %891 = vmatpush2.bf16.xpose.msra.mxu0 0
        %892 = vmatprep.mubr.bf16.mxu0 0
        %893 = vmatmul.mubr.bf16.gmra.mxu0 %v849
        %v894 = vpop.f32.mrf.mxu0
        %v895 = vadd.f32 0.0, %v894
        %v896 = vpop.f32.mrf.mxu0
        %v897 = vpop.f32.mrf.mxu0
        %v898 = vadd.f32 0.0, %v897
        %v899 = vpop.f32.mrf.mxu0
        %900 = vmatprep.mubr.bf16.mxu0 0
        %901 = vmatmul.mubr.bf16.gmra.mxu0 %v852
        %v902 = vpop.f32.mrf.mxu0
        %v903 = vadd.f32 0.0, %v902
        %v904 = vpop.f32.mrf.mxu0
        %v905 = vpop.f32.mrf.mxu0
        %v906 = vadd.f32 0.0, %v905
        %v907 = vpop.f32.mrf.mxu0
        %908 = vdwg.mxu0
        %v909 = vsel %vm726, %v895, -inf
        %910 = vmax.xlane.f32.xlu0 %v909
        %v911 = vpop.xlane.xlu0 %910
        %v912 = vsel %vm726, %v898, -inf
        %913 = vmax.xlane.f32.xlu0 %v912
        %v914 = vpop.xlane.xlu0 %913
        %v915 = vsel %vm726, %v903, -inf
        %916 = vmax.xlane.f32.xlu0 %v915
        %v917 = vpop.xlane.xlu0 %916
        %v918 = vsel %vm736, %v906, -inf
        %919 = vmax.xlane.f32.xlu0 %v918
        %v920 = vpop.xlane.xlu0 %919
        %v921 = vsub.f32 %v895, %v911
        %v922 = vsub.f32 %v898, %v914
        %v923 = vsub.f32 %v903, %v917
        %v924 = vsub.f32 %v906, %v920
        %v925 = vmul.f32 %v921, 1.442695
        %v926 = vpow.pop %v925
        %v927 = vmul.f32 %v922, 1.442695
        %v928 = vpow.pop %v927
        %v929 = vmul.f32 %v923, 1.442695
        %v930 = vpow.pop %v929
        %v931 = vmul.f32 %v924, 1.442695
        %v932 = vpow.pop %v931
        %v933 = vsel %vm726, %v926, 0.0
        %934 = vadd.xlane.f32.xlu0 %v933
        %v935 = vpop.xlane.xlu0 %934
        %v936 = vsel %vm726, %v928, 0.0
        %937 = vadd.xlane.f32.xlu0 %v936
        %v938 = vpop.xlane.xlu0 %937
        %v939 = vsel %vm726, %v930, 0.0
        %940 = vadd.xlane.f32.xlu0 %v939
        %v941 = vpop.xlane.xlu0 %940
        %v942 = vsel %vm736, %v932, 0.0
        %943 = vadd.xlane.f32.xlu0 %v942
        %v944 = vpop.xlane.xlu0 %943
        %v945 = vrcp.pop %v935
        %v946 = vrcp.pop %v938
        %v947 = vrcp.pop %v941
        %v948 = vrcp.pop %v944
        %v949 = vmul.f32 %v926, %v945
        %v950 = vmul.f32 %v928, %v946
        %v951 = vmul.f32 %v930, %v947
        %v952 = vmul.f32 %v932, %v948
        %v953 = vpack.c.bf16 %v950, %v949
        %v954 = vpack.c.bf16 %v952, %v951
        %957 = vrot.lane.b32.xlu0 %v662, 64
        %v958 = vpop.permute.xlu0 %957
        %959 = vrot.lane.b32.xlu0 %v663, 64
        %v960 = vpop.permute.xlu0 %959
        %v963 = vsel %vm726, %v953, 0
        %v966 = vsel %vm726, %v954, 0
        %v969 = vand.u32 %v960, %v783
        %971 = vmatprep.subr.bf16.mxu0 0
        %972 = vmatpush1.bf16.msra.mxu0 0
        %973 = vmatprep.subr.bf16.mxu0 0
        %974 = vmatpush1.bf16.msra.mxu0 0
        %975 = vmatprep.subr.bf16.mxu0 0
        %976 = vmatpush1.bf16.msra.mxu0 0
        %977 = vmatprep.subr.bf16.mxu0 0
        %978 = vmatpush1.bf16.msra.mxu0 0
        %979 = vmatprep.subr.bf16.mxu0 0
        %980 = vmatpush1.bf16.msra.mxu0 0
        %981 = vmatprep.subr.bf16.mxu0 0
        %982 = vmatpush1.bf16.msra.mxu0 0
        %983 = vmatprep.subr.bf16.mxu0 0
        %984 = vmatpush1.bf16.msra.mxu0 %v969
        %985 = vmatprep.subr.bf16.mxu0 0
        %986 = vmatpush1.bf16.msra.mxu0 %v958
        %987 = vmatprep.subr.bf16.mxu0 0
        %988 = vmatpush2.bf16.msra.mxu0 0
        %989 = vmatprep.subr.bf16.mxu0 0
        %990 = vmatpush2.bf16.msra.mxu0 0
        %991 = vmatprep.subr.bf16.mxu0 0
        %992 = vmatpush2.bf16.msra.mxu0 0
        %993 = vmatprep.subr.bf16.mxu0 0
        %994 = vmatpush2.bf16.msra.mxu0 0
        %995 = vmatprep.subr.bf16.mxu0 0
        %996 = vmatpush2.bf16.msra.mxu0 0
        %997 = vmatprep.subr.bf16.mxu0 0
        %998 = vmatpush2.bf16.msra.mxu0 0
        %999 = vmatprep.subr.bf16.mxu0 0
        %1000 = vmatpush2.bf16.msra.mxu0 0
        %1001 = vmatprep.subr.bf16.mxu0 0
        %1002 = vmatpush2.bf16.msra.mxu0 0
        %1003 = vmatprep.mubr.bf16.mxu0 0
        %1004 = vmatmul.mubr.bf16.gmra.mxu0 %v963
        %v1005 = vpop.f32.mrf.mxu0
        %v1006 = vadd.f32 0.0, %v1005
        %v1007 = vpop.f32.mrf.mxu0
        %v1008 = vpop.f32.mrf.mxu0
        %v1009 = vadd.f32 0.0, %v1008
        %v1010 = vpop.f32.mrf.mxu0
        %1011 = vmatprep.mubr.bf16.mxu0 0
        %1012 = vmatmul.mubr.bf16.gmra.mxu0 %v966
        %v1013 = vpop.f32.mrf.mxu0
        %v1014 = vadd.f32 0.0, %v1013
        %v1015 = vpop.f32.mrf.mxu0
        %v1016 = vpop.f32.mrf.mxu0
        %v1017 = vadd.f32 0.0, %v1016
        %v1018 = vpop.f32.mrf.mxu0
        %1019 = vdwg.mxu0
        %1024 = vrot.lane.b32.xlu0 %v1006, 64
        %v1025 = vpop.permute.xlu0 %1024
        %1026 = vrot.lane.b32.xlu0 %v1009, 64
        %v1027 = vpop.permute.xlu0 %1026
        %1028 = vrot.lane.b32.xlu0 %v1014, 64
        %v1029 = vpop.permute.xlu0 %1028
        %1030 = vrot.lane.b32.xlu0 %v1017, 64
        %v1031 = vpop.permute.xlu0 %1030
        %v1036 = vsel %vm664, %v822, %v1025
        %v1037 = vsel %vm664, %v825, %v1027
        %v1038 = vsel %vm664, %v830, %v1029
        %v1039 = vsel %vm664, %v833, %v1031
        %v1040 = vld [vmem:[#allocation2] sm:$0xff]
        %v1041 = vld [vmem:[#allocation2 + $0x8] sm:$0xff]
        %v1042 = vld [vmem:[#allocation2 + $0x10] sm:$0xff]
        %v1043 = vld [vmem:[#allocation2 + $0x18] sm:$0xff]
        %v1044 = vld [vmem:[#allocation2 + $0x20] sm:$0xff]
        %v1045 = vld [vmem:[#allocation2 + $0x28] sm:$0xff]
        %v1046 = vld [vmem:[#allocation2 + $0x30] sm:$0xff]
        %v1047 = vld [vmem:[#allocation2 + $0x38] sm:$0xff]
        %v1048 = vld [vmem:[#allocation2 + $0x40] sm:$0xff]
        %v1049 = vld [vmem:[#allocation2 + $0x48] sm:$0xff]
        %v1050 = vld [vmem:[#allocation2 + $0x50] sm:$0xff]
        %v1051 = vld [vmem:[#allocation2 + $0x58] sm:$0xff]
        %v1052 = vld [vmem:[#allocation2 + $0x60] sm:$0xff]
        %v1053 = vld [vmem:[#allocation2 + $0x68] sm:$0xff]
        %v1054 = vld [vmem:[#allocation2 + $0x70] sm:$0xff]
        %v1055 = vld [vmem:[#allocation2 + $0x78] sm:$0xff]
        %v1056 = vld [vmem:[%s4] sm:$0x1]
        %v1057 = vpack.c.bf16 %v1037, %v1036
        %v1058 = vpack.c.bf16 %v1039, %v1038
        %v1059 = vpack.c.bf16 %v1041, %v1040
        %v1060 = vpack.c.bf16 %v1043, %v1042
        %v1061 = vpack.c.bf16 %v1045, %v1044
        %v1062 = vpack.c.bf16 %v1047, %v1046
        %v1063 = vpack.c.bf16 %v1049, %v1048
        %v1064 = vpack.c.bf16 %v1051, %v1050
        %v1065 = vpack.c.bf16 %v1053, %v1052
        %v1066 = vpack.c.bf16 %v1055, %v1054
        %v1068 = vlaneseq
        %v1069 = vshrl.u32 %v1068, 7
        %v1070 = vsub.s32 0, %v1069
        %v1071 = vrot.slane %v1056, %v1070
        %1073 = vmatprep.subr.bf16.mxu0 0
        %1074 = vmatpush1.bf16.msra.mxu0 %v1066
        %1075 = vmatprep.subr.bf16.mxu0 0
        %1076 = vmatpush1.bf16.msra.mxu0 %v1065
        %1077 = vmatprep.subr.bf16.mxu0 0
        %1078 = vmatpush1.bf16.msra.mxu0 %v1064
        %1079 = vmatprep.subr.bf16.mxu0 0
        %1080 = vmatpush1.bf16.msra.mxu0 %v1063
        %1081 = vmatprep.subr.bf16.mxu0 0
        %1082 = vmatpush1.bf16.msra.mxu0 %v1062
        %1083 = vmatprep.subr.bf16.mxu0 0
        %1084 = vmatpush1.bf16.msra.mxu0 %v1061
        %1085 = vmatprep.subr.bf16.mxu0 0
        %1086 = vmatpush1.bf16.msra.mxu0 %v1060
        %1087 = vmatprep.subr.bf16.mxu0 0
        %1088 = vmatpush1.bf16.msra.mxu0 %v1059
        %1089 = vmatprep.subr.bf16.mxu0 0
        %1090 = vmatpush2.bf16.msra.mxu0 0
        %1091 = vmatprep.subr.bf16.mxu0 0
        %1092 = vmatpush2.bf16.msra.mxu0 0
        %1093 = vmatprep.subr.bf16.mxu0 0
        %1094 = vmatpush2.bf16.msra.mxu0 0
        %1095 = vmatprep.subr.bf16.mxu0 0
        %1096 = vmatpush2.bf16.msra.mxu0 0
        %1097 = vmatprep.subr.bf16.mxu0 0
        %1098 = vmatpush2.bf16.msra.mxu0 0
        %1099 = vmatprep.subr.bf16.mxu0 0
        %1100 = vmatpush2.bf16.msra.mxu0 0
        %1101 = vmatprep.subr.bf16.mxu0 0
        %1102 = vmatpush2.bf16.msra.mxu0 0
        %1103 = vmatprep.subr.bf16.mxu0 0
        %1104 = vmatpush2.bf16.msra.mxu0 0
        %1105 = vmatprep.mubr.bf16.mxu0 0
        %1106 = vmatmul.mubr.bf16.gmra.mxu0 %v1057
        %v1107 = vpop.f32.mrf.mxu0
        %v1108 = vadd.f32 %v1071, %v1107
        %v1109 = vpop.f32.mrf.mxu0
        %v1110 = vpop.f32.mrf.mxu0
        %v1111 = vadd.f32 %v1071, %v1110
        %v1112 = vpop.f32.mrf.mxu0
        %1113 = vmatprep.mubr.bf16.mxu0 0
        %1114 = vmatmul.mubr.bf16.gmra.mxu0 %v1058
        %v1115 = vpop.f32.mrf.mxu0
        %v1116 = vadd.f32 %v1071, %v1115
        %v1117 = vpop.f32.mrf.mxu0
        %v1118 = vpop.f32.mrf.mxu0
        %v1119 = vadd.f32 %v1071, %v1118
        %v1120 = vpop.f32.mrf.mxu0
        %1121 = vdwg.mxu0
        %v1122 = vadd.f32 %v457, %v1108
        %v1123 = vadd.f32 %v458, %v1111
        %v1124 = vadd.f32 %v459, %v1116
        %v1125 = vadd.f32 %v460, %v1119
        %v1126 = vld [vmem:[%s5] sm:$0x1]
        %v1127 = vld [vmem:[%s6] sm:$0x1]
        %1128 = vadd.xlane.f32.xlu0 %v1122
        %v1129 = vpop.xlane.xlu0 %1128
        %1130 = vadd.xlane.f32.xlu0 %v1123
        %v1131 = vpop.xlane.xlu0 %1130
        %1132 = vadd.xlane.f32.xlu0 %v1124
        %v1133 = vpop.xlane.xlu0 %1132
        %v1134 = vsel %vm780, %v1125, 0.0
        %1135 = vadd.xlane.f32.xlu0 %v1134
        %v1136 = vpop.xlane.xlu0 %1135
        %v1137 = vrcp.pop 128.0
        %v1138 = vmul.f32 %v1129, %v1137
        %v1139 = vmul.f32 %v1131, %v1137
        %v1140 = vmul.f32 %v1133, %v1137
        %v1141 = vmul.f32 %v1136, %v1137
        %v1142 = vsub.f32 %v1122, %v1138
        %v1143 = vsub.f32 %v1123, %v1139
        %v1144 = vsub.f32 %v1124, %v1140
        %v1145 = vsub.f32 %v1125, %v1141
        %v1146 = vmul.f32 %v1142, %v1142
        %v1147 = vmul.f32 %v1143, %v1143
        %v1148 = vmul.f32 %v1144, %v1144
        %v1149 = vmul.f32 %v1145, %v1145
        %1150 = vadd.xlane.f32.xlu0 %v1146
        %v1151 = vpop.xlane.xlu0 %1150
        %1152 = vadd.xlane.f32.xlu0 %v1147
        %v1153 = vpop.xlane.xlu0 %1152
        %1154 = vadd.xlane.f32.xlu0 %v1148
        %v1155 = vpop.xlane.xlu0 %1154
        %v1156 = vsel %vm780, %v1149, 0.0
        %1157 = vadd.xlane.f32.xlu0 %v1156
        %v1158 = vpop.xlane.xlu0 %1157
        %v1159 = vmul.f32 %v1151, %v1137
        %v1160 = vmul.f32 %v1153, %v1137
        %v1161 = vmul.f32 %v1155, %v1137
        %v1162 = vmul.f32 %v1158, %v1137
        %v1163 = vadd.f32 %v1159, 1e-05
        %v1164 = vadd.f32 %v1160, 1e-05
        %v1165 = vadd.f32 %v1161, 1e-05
        %v1166 = vadd.f32 %v1162, 1e-05
        %v1167 = vrsqrt.pop %v1163
        %v1168 = vrsqrt.pop %v1164
        %v1169 = vrsqrt.pop %v1165
        %v1170 = vrsqrt.pop %v1166
        %v1171 = vmul.f32 %v1142, %v1167
        %v1172 = vmul.f32 %v1143, %v1168
        %v1173 = vmul.f32 %v1144, %v1169
        %v1174 = vmul.f32 %v1145, %v1170
        %v1176 = vlaneseq
        %v1177 = vshrl.u32 %v1176, 7
        %v1178 = vsub.s32 0, %v1177
        %v1179 = vrot.slane %v1126, %v1178
        %v1181 = vmul.f32 %v1171, %v1179
        %v1182 = vmul.f32 %v1172, %v1179
        %v1183 = vmul.f32 %v1173, %v1179
        %v1184 = vmul.f32 %v1174, %v1179
        %v1186 = vlaneseq
        %v1187 = vshrl.u32 %v1186, 7
        %v1188 = vsub.s32 0, %v1187
        %v1189 = vrot.slane %v1127, %v1188
        %v1191 = vadd.f32 %v1181, %v1189
        %v1192 = vadd.f32 %v1182, %v1189
        %v1193 = vadd.f32 %v1183, %v1189
        %v1194 = vadd.f32 %v1184, %v1189
        %v1195 = vld [vmem:[%s7] sm:$0xff]
        %v1196 = vld [vmem:[%s7 + $0x8] sm:$0xff]
        %v1197 = vld [vmem:[%s7 + $0x10] sm:$0xff]
        %v1198 = vld [vmem:[%s7 + $0x18] sm:$0xff]
        %v1199 = vld [vmem:[%s7 + $0x20] sm:$0xff]
        %v1200 = vld [vmem:[%s7 + $0x28] sm:$0xff]
        %v1201 = vld [vmem:[%s7 + $0x30] sm:$0xff]
        %v1202 = vld [vmem:[%s7 + $0x38] sm:$0xff]
        %v1203 = vld [vmem:[%s7 + $0x40] sm:$0xff]
        %v1204 = vld [vmem:[%s7 + $0x48] sm:$0xff]
        %v1205 = vld [vmem:[%s7 + $0x50] sm:$0xff]
        %v1206 = vld [vmem:[%s7 + $0x58] sm:$0xff]
        %v1207 = vld [vmem:[%s7 + $0x60] sm:$0xff]
        %v1208 = vld [vmem:[%s7 + $0x68] sm:$0xff]
        %v1209 = vld [vmem:[%s7 + $0x70] sm:$0xff]
        %v1210 = vld [vmem:[%s7 + $0x78] sm:$0xff]
        %v1211 = vld [vmem:[%s7 + $0x80] sm:$0xff]
        %v1212 = vld [vmem:[%s7 + $0x88] sm:$0xff]
        %v1213 = vld [vmem:[%s7 + $0x90] sm:$0xff]
        %v1214 = vld [vmem:[%s7 + $0x98] sm:$0xff]
        %v1215 = vld [vmem:[%s7 + $0xa0] sm:$0xff]
        %v1216 = vld [vmem:[%s7 + $0xa8] sm:$0xff]
        %v1217 = vld [vmem:[%s7 + $0xb0] sm:$0xff]
        %v1218 = vld [vmem:[%s7 + $0xb8] sm:$0xff]
        %v1219 = vld [vmem:[%s7 + $0xc0] sm:$0xff]
        %v1220 = vld [vmem:[%s7 + $0xc8] sm:$0xff]
        %v1221 = vld [vmem:[%s7 + $0xd0] sm:$0xff]
        %v1222 = vld [vmem:[%s7 + $0xd8] sm:$0xff]
        %v1223 = vld [vmem:[%s7 + $0xe0] sm:$0xff]
        %v1224 = vld [vmem:[%s7 + $0xe8] sm:$0xff]
        %v1225 = vld [vmem:[%s7 + $0xf0] sm:$0xff]
        %v1226 = vld [vmem:[%s7 + $0xf8] sm:$0xff]
        %v1227 = vld [vmem:[%s7 + $0x100] sm:$0xff]
        %v1228 = vld [vmem:[%s7 + $0x108] sm:$0xff]
        %v1229 = vld [vmem:[%s7 + $0x110] sm:$0xff]
        %v1230 = vld [vmem:[%s7 + $0x118] sm:$0xff]
        %v1231 = vld [vmem:[%s7 + $0x120] sm:$0xff]
        %v1232 = vld [vmem:[%s7 + $0x128] sm:$0xff]
        %v1233 = vld [vmem:[%s7 + $0x130] sm:$0xff]
        %v1234 = vld [vmem:[%s7 + $0x138] sm:$0xff]
        %v1235 = vld [vmem:[%s7 + $0x140] sm:$0xff]
        %v1236 = vld [vmem:[%s7 + $0x148] sm:$0xff]
        %v1237 = vld [vmem:[%s7 + $0x150] sm:$0xff]
        %v1238 = vld [vmem:[%s7 + $0x158] sm:$0xff]
        %v1239 = vld [vmem:[%s7 + $0x160] sm:$0xff]
        %v1240 = vld [vmem:[%s7 + $0x168] sm:$0xff]
        %v1241 = vld [vmem:[%s7 + $0x170] sm:$0xff]
        %v1242 = vld [vmem:[%s7 + $0x178] sm:$0xff]
        %v1243 = vld [vmem:[%s7 + $0x180] sm:$0xff]
        %v1244 = vld [vmem:[%s7 + $0x188] sm:$0xff]
        %v1245 = vld [vmem:[%s7 + $0x190] sm:$0xff]
        %v1246 = vld [vmem:[%s7 + $0x198] sm:$0xff]
        %v1247 = vld [vmem:[%s7 + $0x1a0] sm:$0xff]
        %v1248 = vld [vmem:[%s7 + $0x1a8] sm:$0xff]
        %v1249 = vld [vmem:[%s7 + $0x1b0] sm:$0xff]
        %v1250 = vld [vmem:[%s7 + $0x1b8] sm:$0xff]
        %v1251 = vld [vmem:[%s7 + $0x1c0] sm:$0xff]
        %v1252 = vld [vmem:[%s7 + $0x1c8] sm:$0xff]
        %v1253 = vld [vmem:[%s7 + $0x1d0] sm:$0xff]
        %v1254 = vld [vmem:[%s7 + $0x1d8] sm:$0xff]
        %v1255 = vld [vmem:[%s7 + $0x1e0] sm:$0xff]
        %v1256 = vld [vmem:[%s7 + $0x1e8] sm:$0xff]
        %v1257 = vld [vmem:[%s7 + $0x1f0] sm:$0xff]
        %v1258 = vld [vmem:[%s7 + $0x1f8] sm:$0xff]
        %v1259 = vld [vmem:[%s8] sm:$0xf]
        %v1260 = vpack.c.bf16 %v1192, %v1191
        %v1261 = vpack.c.bf16 %v1194, %v1193
        %v1262 = vpack.c.bf16 %v1199, %v1195
        %v1263 = vpack.c.bf16 %v1200, %v1196
        %v1264 = vpack.c.bf16 %v1201, %v1197
        %v1265 = vpack.c.bf16 %v1202, %v1198
        %v1266 = vpack.c.bf16 %v1207, %v1203
        %v1267 = vpack.c.bf16 %v1208, %v1204
        %v1268 = vpack.c.bf16 %v1209, %v1205
        %v1269 = vpack.c.bf16 %v1210, %v1206
        %v1270 = vpack.c.bf16 %v1215, %v1211
        %v1271 = vpack.c.bf16 %v1216, %v1212
        %v1272 = vpack.c.bf16 %v1217, %v1213
        %v1273 = vpack.c.bf16 %v1218, %v1214
        %v1274 = vpack.c.bf16 %v1223, %v1219
        %v1275 = vpack.c.bf16 %v1224, %v1220
        %v1276 = vpack.c.bf16 %v1225, %v1221
        %v1277 = vpack.c.bf16 %v1226, %v1222
        %v1278 = vpack.c.bf16 %v1231, %v1227
        %v1279 = vpack.c.bf16 %v1232, %v1228
        %v1280 = vpack.c.bf16 %v1233, %v1229
        %v1281 = vpack.c.bf16 %v1234, %v1230
        %v1282 = vpack.c.bf16 %v1239, %v1235
        %v1283 = vpack.c.bf16 %v1240, %v1236
        %v1284 = vpack.c.bf16 %v1241, %v1237
        %v1285 = vpack.c.bf16 %v1242, %v1238
        %v1286 = vpack.c.bf16 %v1247, %v1243
        %v1287 = vpack.c.bf16 %v1248, %v1244
        %v1288 = vpack.c.bf16 %v1249, %v1245
        %v1289 = vpack.c.bf16 %v1250, %v1246
        %v1290 = vpack.c.bf16 %v1255, %v1251
        %v1291 = vpack.c.bf16 %v1256, %v1252
        %v1292 = vpack.c.bf16 %v1257, %v1253
        %v1293 = vpack.c.bf16 %v1258, %v1254
        %v1295 = vlaneseq
        %v1296 = vshrl.u32 %v1295, 7
        %v1297 = vsub.s32 0, %v1296
        %v1298 = vrot.slane %v1259, %v1297
        %v1299 = vlaneseq
        %v1300 = vshrl.u32 %v1299, 7
        %v1301 = vsub.s32 1, %v1300
        %v1302 = vrot.slane %v1259, %v1301
        %v1303 = vlaneseq
        %v1304 = vshrl.u32 %v1303, 7
        %v1305 = vsub.s32 2, %v1304
        %v1306 = vrot.slane %v1259, %v1305
        %v1307 = vlaneseq
        %v1308 = vshrl.u32 %v1307, 7
        %v1309 = vsub.s32 3, %v1308
        %v1310 = vrot.slane %v1259, %v1309
        %1315 = vmatprep.subr.bf16.mxu0 %v1291
        %1316 = vmatpush1.bf16.msra.mxu0 %v1290
        %1317 = vmatprep.subr.bf16.mxu0 %v1287
        %1318 = vmatpush1.bf16.msra.mxu0 %v1286
        %1319 = vmatprep.subr.bf16.mxu0 %v1283
        %1320 = vmatpush1.bf16.msra.mxu0 %v1282
        %1321 = vmatprep.subr.bf16.mxu0 %v1279
        %1322 = vmatpush1.bf16.msra.mxu0 %v1278
        %1323 = vmatprep.subr.bf16.mxu0 %v1275
        %1324 = vmatpush1.bf16.msra.mxu0 %v1274
        %1325 = vmatprep.subr.bf16.mxu0 %v1271
        %1326 = vmatpush1.bf16.msra.mxu0 %v1270
        %1327 = vmatprep.subr.bf16.mxu0 %v1267
        %1328 = vmatpush1.bf16.msra.mxu0 %v1266
        %1329 = vmatprep.subr.bf16.mxu0 %v1263
        %1330 = vmatpush1.bf16.msra.mxu0 %v1262
        %1331 = vmatprep.subr.bf16.mxu0 0
        %1332 = vmatpush2.bf16.msra.mxu0 0
        %1333 = vmatprep.subr.bf16.mxu0 0
        %1334 = vmatpush2.bf16.msra.mxu0 0
        %1335 = vmatprep.subr.bf16.mxu0 0
        %1336 = vmatpush2.bf16.msra.mxu0 0
        %1337 = vmatprep.subr.bf16.mxu0 0
        %1338 = vmatpush2.bf16.msra.mxu0 0
        %1339 = vmatprep.subr.bf16.mxu0 0
        %1340 = vmatpush2.bf16.msra.mxu0 0
        %1341 = vmatprep.subr.bf16.mxu0 0
        %1342 = vmatpush2.bf16.msra.mxu0 0
        %1343 = vmatprep.subr.bf16.mxu0 0
        %1344 = vmatpush2.bf16.msra.mxu0 0
        %1345 = vmatprep.subr.bf16.mxu0 0
        %1346 = vmatpush2.bf16.msra.mxu0 0
        %1347 = vmatprep.mubr.bf16.mxu0 0
        %1348 = vmatmul.mubr.bf16.gmra.mxu0 %v1260
        %v1349 = vpop.f32.mrf.mxu0
        %v1350 = vadd.f32 %v1298, %v1349
        %v1351 = vpop.f32.mrf.mxu0
        %v1352 = vadd.f32 %v1302, %v1351
        %v1353 = vpop.f32.mrf.mxu0
        %v1354 = vadd.f32 %v1298, %v1353
        %v1355 = vpop.f32.mrf.mxu0
        %v1356 = vadd.f32 %v1302, %v1355
        %1357 = vmatprep.mubr.bf16.mxu0 0
        %1358 = vmatmul.mubr.bf16.gmra.mxu0 %v1261
        %v1359 = vpop.f32.mrf.mxu0
        %v1360 = vadd.f32 %v1298, %v1359
        %v1361 = vpop.f32.mrf.mxu0
        %v1362 = vadd.f32 %v1302, %v1361
        %v1363 = vpop.f32.mrf.mxu0
        %v1364 = vadd.f32 %v1298, %v1363
        %v1365 = vpop.f32.mrf.mxu0
        %v1366 = vadd.f32 %v1302, %v1365
        %1367 = vdwg.mxu0
        %1368 = vmatprep.subr.bf16.mxu0 %v1293
        %1369 = vmatpush1.bf16.msra.mxu0 %v1292
        %1370 = vmatprep.subr.bf16.mxu0 %v1289
        %1371 = vmatpush1.bf16.msra.mxu0 %v1288
        %1372 = vmatprep.subr.bf16.mxu0 %v1285
        %1373 = vmatpush1.bf16.msra.mxu0 %v1284
        %1374 = vmatprep.subr.bf16.mxu0 %v1281
        %1375 = vmatpush1.bf16.msra.mxu0 %v1280
        %1376 = vmatprep.subr.bf16.mxu0 %v1277
        %1377 = vmatpush1.bf16.msra.mxu0 %v1276
        %1378 = vmatprep.subr.bf16.mxu0 %v1273
        %1379 = vmatpush1.bf16.msra.mxu0 %v1272
        %1380 = vmatprep.subr.bf16.mxu0 %v1269
        %1381 = vmatpush1.bf16.msra.mxu0 %v1268
        %1382 = vmatprep.subr.bf16.mxu0 %v1265
        %1383 = vmatpush1.bf16.msra.mxu0 %v1264
        %1384 = vmatprep.subr.bf16.mxu0 0
        %1385 = vmatpush2.bf16.msra.mxu0 0
        %1386 = vmatprep.subr.bf16.mxu0 0
        %1387 = vmatpush2.bf16.msra.mxu0 0
        %1388 = vmatprep.subr.bf16.mxu0 0
        %1389 = vmatpush2.bf16.msra.mxu0 0
        %1390 = vmatprep.subr.bf16.mxu0 0
        %1391 = vmatpush2.bf16.msra.mxu0 0
        %1392 = vmatprep.subr.bf16.mxu0 0
        %1393 = vmatpush2.bf16.msra.mxu0 0
        %1394 = vmatprep.subr.bf16.mxu0 0
        %1395 = vmatpush2.bf16.msra.mxu0 0
        %1396 = vmatprep.subr.bf16.mxu0 0
        %1397 = vmatpush2.bf16.msra.mxu0 0
        %1398 = vmatprep.subr.bf16.mxu0 0
        %1399 = vmatpush2.bf16.msra.mxu0 0
        %1400 = vmatprep.mubr.bf16.mxu0 0
        %1401 = vmatmul.mubr.bf16.gmra.mxu0 %v1260
        %v1402 = vpop.f32.mrf.mxu0
        %v1403 = vadd.f32 %v1306, %v1402
        %v1404 = vpop.f32.mrf.mxu0
        %v1405 = vadd.f32 %v1310, %v1404
        %v1406 = vpop.f32.mrf.mxu0
        %v1407 = vadd.f32 %v1306, %v1406
        %v1408 = vpop.f32.mrf.mxu0
        %v1409 = vadd.f32 %v1310, %v1408
        %1410 = vmatprep.mubr.bf16.mxu0 0
        %1411 = vmatmul.mubr.bf16.gmra.mxu0 %v1261
        %v1412 = vpop.f32.mrf.mxu0
        %v1413 = vadd.f32 %v1306, %v1412
        %v1414 = vpop.f32.mrf.mxu0
        %v1415 = vadd.f32 %v1310, %v1414
        %v1416 = vpop.f32.mrf.mxu0
        %v1417 = vadd.f32 %v1306, %v1416
        %v1418 = vpop.f32.mrf.mxu0
        %v1419 = vadd.f32 %v1310, %v1418
        %1420 = vdwg.mxu0
        %v1421 = vmul.f32 %v1350, %v1350
        %v1422 = vmul.f32 %v1352, %v1352
        %v1423 = vmul.f32 %v1403, %v1403
        %v1424 = vmul.f32 %v1405, %v1405
        %v1425 = vmul.f32 %v1354, %v1354
        %v1426 = vmul.f32 %v1356, %v1356
        %v1427 = vmul.f32 %v1407, %v1407
        %v1428 = vmul.f32 %v1409, %v1409
        %v1429 = vmul.f32 %v1360, %v1360
        %v1430 = vmul.f32 %v1362, %v1362
        %v1431 = vmul.f32 %v1413, %v1413
        %v1432 = vmul.f32 %v1415, %v1415
        %v1433 = vmul.f32 %v1364, %v1364
        %v1434 = vmul.f32 %v1366, %v1366
        %v1435 = vmul.f32 %v1417, %v1417
        %v1436 = vmul.f32 %v1419, %v1419
        %v1437 = vmul.f32 %v1350, %v1421
        %v1438 = vmul.f32 %v1352, %v1422
        %v1439 = vmul.f32 %v1403, %v1423
        %v1440 = vmul.f32 %v1405, %v1424
        %v1441 = vmul.f32 %v1354, %v1425
        %v1442 = vmul.f32 %v1356, %v1426
        %v1443 = vmul.f32 %v1407, %v1427
        %v1444 = vmul.f32 %v1409, %v1428
        %v1445 = vmul.f32 %v1360, %v1429
        %v1446 = vmul.f32 %v1362, %v1430
        %v1447 = vmul.f32 %v1413, %v1431
        %v1448 = vmul.f32 %v1415, %v1432
        %v1449 = vmul.f32 %v1364, %v1433
        %v1450 = vmul.f32 %v1366, %v1434
        %v1451 = vmul.f32 %v1417, %v1435
        %v1452 = vmul.f32 %v1419, %v1436
        %v1453 = vmul.f32 %v1437, 0.044715
        %v1454 = vmul.f32 %v1438, 0.044715
        %v1455 = vmul.f32 %v1439, 0.044715
        %v1456 = vmul.f32 %v1440, 0.044715
        %v1457 = vmul.f32 %v1441, 0.044715
        %v1458 = vmul.f32 %v1442, 0.044715
        %v1459 = vmul.f32 %v1443, 0.044715
        %v1460 = vmul.f32 %v1444, 0.044715
        %v1461 = vmul.f32 %v1445, 0.044715
        %v1462 = vmul.f32 %v1446, 0.044715
        %v1463 = vmul.f32 %v1447, 0.044715
        %v1464 = vmul.f32 %v1448, 0.044715
        %v1465 = vmul.f32 %v1449, 0.044715
        %v1466 = vmul.f32 %v1450, 0.044715
        %v1467 = vmul.f32 %v1451, 0.044715
        %v1468 = vmul.f32 %v1452, 0.044715
        %v1469 = vadd.f32 %v1350, %v1453
        %v1470 = vadd.f32 %v1352, %v1454
        %v1471 = vadd.f32 %v1403, %v1455
        %v1472 = vadd.f32 %v1405, %v1456
        %v1473 = vadd.f32 %v1354, %v1457
        %v1474 = vadd.f32 %v1356, %v1458
        %v1475 = vadd.f32 %v1407, %v1459
        %v1476 = vadd.f32 %v1409, %v1460
        %v1477 = vadd.f32 %v1360, %v1461
        %v1478 = vadd.f32 %v1362, %v1462
        %v1479 = vadd.f32 %v1413, %v1463
        %v1480 = vadd.f32 %v1415, %v1464
        %v1481 = vadd.f32 %v1364, %v1465
        %v1482 = vadd.f32 %v1366, %v1466
        %v1483 = vadd.f32 %v1417, %v1467
        %v1484 = vadd.f32 %v1419, %v1468
        %v1485 = vmul.f32 %v1469, 0.7978846
        %v1486 = vmul.f32 %v1470, 0.7978846
        %v1487 = vmul.f32 %v1471, 0.7978846
        %v1488 = vmul.f32 %v1472, 0.7978846
        %v1489 = vmul.f32 %v1473, 0.7978846
        %v1490 = vmul.f32 %v1474, 0.7978846
        %v1491 = vmul.f32 %v1475, 0.7978846
        %v1492 = vmul.f32 %v1476, 0.7978846
        %v1493 = vmul.f32 %v1477, 0.7978846
        %v1494 = vmul.f32 %v1478, 0.7978846
        %v1495 = vmul.f32 %v1479, 0.7978846
        %v1496 = vmul.f32 %v1480, 0.7978846
        %v1497 = vmul.f32 %v1481, 0.7978846
        %v1498 = vmul.f32 %v1482, 0.7978846
        %v1499 = vmul.f32 %v1483, 0.7978846
        %v1500 = vmul.f32 %v1484, 0.7978846
        %v1501 = vtanh.pop %v1485
        %v1502 = vtanh.pop %v1486
        %v1503 = vtanh.pop %v1487
        %v1504 = vtanh.pop %v1488
        %v1505 = vtanh.pop %v1489
        %v1506 = vtanh.pop %v1490
        %v1507 = vtanh.pop %v1491
        %v1508 = vtanh.pop %v1492
        %v1509 = vtanh.pop %v1493
        %v1510 = vtanh.pop %v1494
        %v1511 = vtanh.pop %v1495
        %v1512 = vtanh.pop %v1496
        %v1513 = vtanh.pop %v1497
        %v1514 = vtanh.pop %v1498
        %v1515 = vtanh.pop %v1499
        %v1516 = vtanh.pop %v1500
        %v1517 = vadd.f32 %v1501, 1.0
        %v1518 = vadd.f32 %v1502, 1.0
        %v1519 = vadd.f32 %v1503, 1.0
        %v1520 = vadd.f32 %v1504, 1.0
        %v1521 = vadd.f32 %v1505, 1.0
        %v1522 = vadd.f32 %v1506, 1.0
        %v1523 = vadd.f32 %v1507, 1.0
        %v1524 = vadd.f32 %v1508, 1.0
        %v1525 = vadd.f32 %v1509, 1.0
        %v1526 = vadd.f32 %v1510, 1.0
        %v1527 = vadd.f32 %v1511, 1.0
        %v1528 = vadd.f32 %v1512, 1.0
        %v1529 = vadd.f32 %v1513, 1.0
        %v1530 = vadd.f32 %v1514, 1.0
        %v1531 = vadd.f32 %v1515, 1.0
        %v1532 = vadd.f32 %v1516, 1.0
        %v1533 = vmul.f32 %v1517, 0.5
        %v1534 = vmul.f32 %v1518, 0.5
        %v1535 = vmul.f32 %v1519, 0.5
        %v1536 = vmul.f32 %v1520, 0.5
        %v1537 = vmul.f32 %v1521, 0.5
        %v1538 = vmul.f32 %v1522, 0.5
        %v1539 = vmul.f32 %v1523, 0.5
        %v1540 = vmul.f32 %v1524, 0.5
        %v1541 = vmul.f32 %v1525, 0.5
        %v1542 = vmul.f32 %v1526, 0.5
        %v1543 = vmul.f32 %v1527, 0.5
        %v1544 = vmul.f32 %v1528, 0.5
        %v1545 = vmul.f32 %v1529, 0.5
        %v1546 = vmul.f32 %v1530, 0.5
        %v1547 = vmul.f32 %v1531, 0.5
        %v1548 = vmul.f32 %v1532, 0.5
        %v1549 = vmul.f32 %v1350, %v1533
        %v1550 = vmul.f32 %v1352, %v1534
        %v1551 = vmul.f32 %v1403, %v1535
        %v1552 = vmul.f32 %v1405, %v1536
        %v1553 = vmul.f32 %v1354, %v1537
        %v1554 = vmul.f32 %v1356, %v1538
        %v1555 = vmul.f32 %v1407, %v1539
        %v1556 = vmul.f32 %v1409, %v1540
        %v1557 = vmul.f32 %v1360, %v1541
        %v1558 = vmul.f32 %v1362, %v1542
        %v1559 = vmul.f32 %v1413, %v1543
        %v1560 = vmul.f32 %v1415, %v1544
        %v1561 = vmul.f32 %v1364, %v1545
        %v1562 = vmul.f32 %v1366, %v1546
        %v1563 = vmul.f32 %v1417, %v1547
        %v1564 = vmul.f32 %v1419, %v1548
        %v1565 = vld [vmem:[%s9] sm:$0xff]
        %v1566 = vld [vmem:[%s9 + $0x8] sm:$0xff]
        %v1567 = vld [vmem:[%s9 + $0x10] sm:$0xff]
        %v1568 = vld [vmem:[%s9 + $0x18] sm:$0xff]
        %v1569 = vld [vmem:[%s9 + $0x20] sm:$0xff]
        %v1570 = vld [vmem:[%s9 + $0x28] sm:$0xff]
        %v1571 = vld [vmem:[%s9 + $0x30] sm:$0xff]
        %v1572 = vld [vmem:[%s9 + $0x38] sm:$0xff]
        %v1573 = vld [vmem:[%s9 + $0x40] sm:$0xff]
        %v1574 = vld [vmem:[%s9 + $0x48] sm:$0xff]
        %v1575 = vld [vmem:[%s9 + $0x50] sm:$0xff]
        %v1576 = vld [vmem:[%s9 + $0x58] sm:$0xff]
        %v1577 = vld [vmem:[%s9 + $0x60] sm:$0xff]
        %v1578 = vld [vmem:[%s9 + $0x68] sm:$0xff]
        %v1579 = vld [vmem:[%s9 + $0x70] sm:$0xff]
        %v1580 = vld [vmem:[%s9 + $0x78] sm:$0xff]
        %v1581 = vld [vmem:[%s9 + $0x80] sm:$0xff]
        %v1582 = vld [vmem:[%s9 + $0x88] sm:$0xff]
        %v1583 = vld [vmem:[%s9 + $0x90] sm:$0xff]
        %v1584 = vld [vmem:[%s9 + $0x98] sm:$0xff]
        %v1585 = vld [vmem:[%s9 + $0xa0] sm:$0xff]
        %v1586 = vld [vmem:[%s9 + $0xa8] sm:$0xff]
        %v1587 = vld [vmem:[%s9 + $0xb0] sm:$0xff]
        %v1588 = vld [vmem:[%s9 + $0xb8] sm:$0xff]
        %v1589 = vld [vmem:[%s9 + $0xc0] sm:$0xff]
        %v1590 = vld [vmem:[%s9 + $0xc8] sm:$0xff]
        %v1591 = vld [vmem:[%s9 + $0xd0] sm:$0xff]
        %v1592 = vld [vmem:[%s9 + $0xd8] sm:$0xff]
        %v1593 = vld [vmem:[%s9 + $0xe0] sm:$0xff]
        %v1594 = vld [vmem:[%s9 + $0xe8] sm:$0xff]
        %v1595 = vld [vmem:[%s9 + $0xf0] sm:$0xff]
        %v1596 = vld [vmem:[%s9 + $0xf8] sm:$0xff]
        %v1597 = vld [vmem:[%s9 + $0x100] sm:$0xff]
        %v1598 = vld [vmem:[%s9 + $0x108] sm:$0xff]
        %v1599 = vld [vmem:[%s9 + $0x110] sm:$0xff]
        %v1600 = vld [vmem:[%s9 + $0x118] sm:$0xff]
        %v1601 = vld [vmem:[%s9 + $0x120] sm:$0xff]
        %v1602 = vld [vmem:[%s9 + $0x128] sm:$0xff]
        %v1603 = vld [vmem:[%s9 + $0x130] sm:$0xff]
        %v1604 = vld [vmem:[%s9 + $0x138] sm:$0xff]
        %v1605 = vld [vmem:[%s9 + $0x140] sm:$0xff]
        %v1606 = vld [vmem:[%s9 + $0x148] sm:$0xff]
        %v1607 = vld [vmem:[%s9 + $0x150] sm:$0xff]
        %v1608 = vld [vmem:[%s9 + $0x158] sm:$0xff]
        %v1609 = vld [vmem:[%s9 + $0x160] sm:$0xff]
        %v1610 = vld [vmem:[%s9 + $0x168] sm:$0xff]
        %v1611 = vld [vmem:[%s9 + $0x170] sm:$0xff]
        %v1612 = vld [vmem:[%s9 + $0x178] sm:$0xff]
        %v1613 = vld [vmem:[%s9 + $0x180] sm:$0xff]
        %v1614 = vld [vmem:[%s9 + $0x188] sm:$0xff]
        %v1615 = vld [vmem:[%s9 + $0x190] sm:$0xff]
        %v1616 = vld [vmem:[%s9 + $0x198] sm:$0xff]
        %v1617 = vld [vmem:[%s9 + $0x1a0] sm:$0xff]
        %v1618 = vld [vmem:[%s9 + $0x1a8] sm:$0xff]
        %v1619 = vld [vmem:[%s9 + $0x1b0] sm:$0xff]
        %v1620 = vld [vmem:[%s9 + $0x1b8] sm:$0xff]
        %v1621 = vld [vmem:[%s9 + $0x1c0] sm:$0xff]
        %v1622 = vld [vmem:[%s9 + $0x1c8] sm:$0xff]
        %v1623 = vld [vmem:[%s9 + $0x1d0] sm:$0xff]
        %v1624 = vld [vmem:[%s9 + $0x1d8] sm:$0xff]
        %v1625 = vld [vmem:[%s9 + $0x1e0] sm:$0xff]
        %v1626 = vld [vmem:[%s9 + $0x1e8] sm:$0xff]
        %v1627 = vld [vmem:[%s9 + $0x1f0] sm:$0xff]
        %v1628 = vld [vmem:[%s9 + $0x1f8] sm:$0xff]
        %v1629 = vld [vmem:[%s10] sm:$0x1]
        %v1630 = vpack.c.bf16 %v1553, %v1549
        %v1631 = vpack.c.bf16 %v1554, %v1550
        %v1632 = vpack.c.bf16 %v1555, %v1551
        %v1633 = vpack.c.bf16 %v1556, %v1552
        %v1634 = vpack.c.bf16 %v1561, %v1557
        %v1635 = vpack.c.bf16 %v1562, %v1558
        %v1636 = vpack.c.bf16 %v1563, %v1559
        %v1637 = vpack.c.bf16 %v1564, %v1560
        %v1638 = vpack.c.bf16 %v1566, %v1565
        %v1639 = vpack.c.bf16 %v1568, %v1567
        %v1640 = vpack.c.bf16 %v1570, %v1569
        %v1641 = vpack.c.bf16 %v1572, %v1571
        %v1642 = vpack.c.bf16 %v1574, %v1573
        %v1643 = vpack.c.bf16 %v1576, %v1575
        %v1644 = vpack.c.bf16 %v1578, %v1577
        %v1645 = vpack.c.bf16 %v1580, %v1579
        %v1646 = vpack.c.bf16 %v1582, %v1581
        %v1647 = vpack.c.bf16 %v1584, %v1583
        %v1648 = vpack.c.bf16 %v1586, %v1585
        %v1649 = vpack.c.bf16 %v1588, %v1587
        %v1650 = vpack.c.bf16 %v1590, %v1589
        %v1651 = vpack.c.bf16 %v1592, %v1591
        %v1652 = vpack.c.bf16 %v1594, %v1593
        %v1653 = vpack.c.bf16 %v1596, %v1595
        %v1654 = vpack.c.bf16 %v1598, %v1597
        %v1655 = vpack.c.bf16 %v1600, %v1599
        %v1656 = vpack.c.bf16 %v1602, %v1601
        %v1657 = vpack.c.bf16 %v1604, %v1603
        %v1658 = vpack.c.bf16 %v1606, %v1605
        %v1659 = vpack.c.bf16 %v1608, %v1607
        %v1660 = vpack.c.bf16 %v1610, %v1609
        %v1661 = vpack.c.bf16 %v1612, %v1611
        %v1662 = vpack.c.bf16 %v1614, %v1613
        %v1663 = vpack.c.bf16 %v1616, %v1615
        %v1664 = vpack.c.bf16 %v1618, %v1617
        %v1665 = vpack.c.bf16 %v1620, %v1619
        %v1666 = vpack.c.bf16 %v1622, %v1621
        %v1667 = vpack.c.bf16 %v1624, %v1623
        %v1668 = vpack.c.bf16 %v1626, %v1625
        %v1669 = vpack.c.bf16 %v1628, %v1627
        %v1671 = vlaneseq
        %v1672 = vshrl.u32 %v1671, 7
        %v1673 = vsub.s32 0, %v1672
        %v1674 = vrot.slane %v1629, %v1673
        %1676 = vmatprep.subr.bf16.mxu0 0
        %1677 = vmatpush1.bf16.msra.mxu0 %v1645
        %1678 = vmatprep.subr.bf16.mxu0 0
        %1679 = vmatpush1.bf16.msra.mxu0 %v1644
        %1680 = vmatprep.subr.bf16.mxu0 0
        %1681 = vmatpush1.bf16.msra.mxu0 %v1643
        %1682 = vmatprep.subr.bf16.mxu0 0
        %1683 = vmatpush1.bf16.msra.mxu0 %v1642
        %1684 = vmatprep.subr.bf16.mxu0 0
        %1685 = vmatpush1.bf16.msra.mxu0 %v1641
        %1686 = vmatprep.subr.bf16.mxu0 0
        %1687 = vmatpush1.bf16.msra.mxu0 %v1640
        %1688 = vmatprep.subr.bf16.mxu0 0
        %1689 = vmatpush1.bf16.msra.mxu0 %v1639
        %1690 = vmatprep.subr.bf16.mxu0 0
        %1691 = vmatpush1.bf16.msra.mxu0 %v1638
        %1692 = vmatprep.subr.bf16.mxu0 0
        %1693 = vmatpush2.bf16.msra.mxu0 %v1653
        %1694 = vmatprep.subr.bf16.mxu0 0
        %1695 = vmatpush2.bf16.msra.mxu0 %v1652
        %1696 = vmatprep.subr.bf16.mxu0 0
        %1697 = vmatpush2.bf16.msra.mxu0 %v1651
        %1698 = vmatprep.subr.bf16.mxu0 0
        %1699 = vmatpush2.bf16.msra.mxu0 %v1650
        %1700 = vmatprep.subr.bf16.mxu0 0
        %1701 = vmatpush2.bf16.msra.mxu0 %v1649
        %1702 = vmatprep.subr.bf16.mxu0 0
        %1703 = vmatpush2.bf16.msra.mxu0 %v1648
        %1704 = vmatprep.subr.bf16.mxu0 0
        %1705 = vmatpush2.bf16.msra.mxu0 %v1647
        %1706 = vmatprep.subr.bf16.mxu0 0
        %1707 = vmatpush2.bf16.msra.mxu0 %v1646
        %1708 = vmatprep.mubr.bf16.mxu0 %v1631
        %1709 = vmatmul.mubr.bf16.gmra.mxu0 %v1630
        %v1710 = vpop.f32.mrf.mxu0
        %v1711 = vadd.f32 %v1674, %v1710
        %v1712 = vpop.f32.mrf.mxu0
        %v1713 = vpop.f32.mrf.mxu0
        %v1714 = vadd.f32 %v1674, %v1713
        %v1715 = vpop.f32.mrf.mxu0
        %1716 = vmatprep.mubr.bf16.mxu0 %v1635
        %1717 = vmatmul.mubr.bf16.gmra.mxu0 %v1634
        %v1718 = vpop.f32.mrf.mxu0
        %v1719 = vadd.f32 %v1674, %v1718
        %v1720 = vpop.f32.mrf.mxu0
        %v1721 = vpop.f32.mrf.mxu0
        %v1722 = vadd.f32 %v1674, %v1721
        %v1723 = vpop.f32.mrf.mxu0
        %1724 = vdwg.mxu0
        %1725 = vmatprep.subr.bf16.mxu0 0
        %1726 = vmatpush1.bf16.msra.mxu0 %v1661
        %1727 = vmatprep.subr.bf16.mxu0 0
        %1728 = vmatpush1.bf16.msra.mxu0 %v1660
        %1729 = vmatprep.subr.bf16.mxu0 0
        %1730 = vmatpush1.bf16.msra.mxu0 %v1659
        %1731 = vmatprep.subr.bf16.mxu0 0
        %1732 = vmatpush1.bf16.msra.mxu0 %v1658
        %1733 = vmatprep.subr.bf16.mxu0 0
        %1734 = vmatpush1.bf16.msra.mxu0 %v1657
        %1735 = vmatprep.subr.bf16.mxu0 0
        %1736 = vmatpush1.bf16.msra.mxu0 %v1656
        %1737 = vmatprep.subr.bf16.mxu0 0
        %1738 = vmatpush1.bf16.msra.mxu0 %v1655
        %1739 = vmatprep.subr.bf16.mxu0 0
        %1740 = vmatpush1.bf16.msra.mxu0 %v1654
        %1741 = vmatprep.subr.bf16.mxu0 0
        %1742 = vmatpush2.bf16.msra.mxu0 %v1669
        %1743 = vmatprep.subr.bf16.mxu0 0
        %1744 = vmatpush2.bf16.msra.mxu0 %v1668
        %1745 = vmatprep.subr.bf16.mxu0 0
        %1746 = vmatpush2.bf16.msra.mxu0 %v1667
        %1747 = vmatprep.subr.bf16.mxu0 0
        %1748 = vmatpush2.bf16.msra.mxu0 %v1666
        %1749 = vmatprep.subr.bf16.mxu0 0
        %1750 = vmatpush2.bf16.msra.mxu0 %v1665
        %1751 = vmatprep.subr.bf16.mxu0 0
        %1752 = vmatpush2.bf16.msra.mxu0 %v1664
        %1753 = vmatprep.subr.bf16.mxu0 0
        %1754 = vmatpush2.bf16.msra.mxu0 %v1663
        %1755 = vmatprep.subr.bf16.mxu0 0
        %1756 = vmatpush2.bf16.msra.mxu0 %v1662
        %1757 = vmatprep.mubr.bf16.mxu0 %v1633
        %1758 = vmatmul.mubr.bf16.gmra.mxu0 %v1632
        %v1759 = vpop.f32.mrf.mxu0
        %v1760 = vadd.f32 %v1711, %v1759
        %v1761 = vpop.f32.mrf.mxu0
        %v1762 = vpop.f32.mrf.mxu0
        %v1763 = vadd.f32 %v1714, %v1762
        %v1764 = vpop.f32.mrf.mxu0
        %1765 = vmatprep.mubr.bf16.mxu0 %v1637
        %1766 = vmatmul.mubr.bf16.gmra.mxu0 %v1636
        %v1767 = vpop.f32.mrf.mxu0
        %v1768 = vadd.f32 %v1719, %v1767
        %v1769 = vpop.f32.mrf.mxu0
        %v1770 = vpop.f32.mrf.mxu0
        %v1771 = vadd.f32 %v1722, %v1770
        %v1772 = vpop.f32.mrf.mxu0
        %1773 = vdwg.mxu0
        %v1774 = vadd.f32 %v1191, %v1760
        %v1775 = vadd.f32 %v1192, %v1763
        %v1776 = vadd.f32 %v1193, %v1768
        %v1777 = vadd.f32 %v1194, %v1771
        %v1778 = vld [vmem:[%s11] sm:$0x1]
        %v1779 = vld [vmem:[%s12] sm:$0x1]
        %1780 = vadd.xlane.f32.xlu0 %v1774
        %v1781 = vpop.xlane.xlu0 %1780
        %1782 = vadd.xlane.f32.xlu0 %v1775
        %v1783 = vpop.xlane.xlu0 %1782
        %1784 = vadd.xlane.f32.xlu0 %v1776
        %v1785 = vpop.xlane.xlu0 %1784
        %v1786 = vsel %vm780, %v1777, 0.0
        %1787 = vadd.xlane.f32.xlu0 %v1786
        %v1788 = vpop.xlane.xlu0 %1787
        %v1789 = vmul.f32 %v1781, %v1137
        %v1790 = vmul.f32 %v1783, %v1137
        %v1791 = vmul.f32 %v1785, %v1137
        %v1792 = vmul.f32 %v1788, %v1137
        %v1793 = vsub.f32 %v1774, %v1789
        %v1794 = vsub.f32 %v1775, %v1790
        %v1795 = vsub.f32 %v1776, %v1791
        %v1796 = vsub.f32 %v1777, %v1792
        %v1797 = vmul.f32 %v1793, %v1793
        %v1798 = vmul.f32 %v1794, %v1794
        %v1799 = vmul.f32 %v1795, %v1795
        %v1800 = vmul.f32 %v1796, %v1796
        %1801 = vadd.xlane.f32.xlu0 %v1797
        %v1802 = vpop.xlane.xlu0 %1801
        %1803 = vadd.xlane.f32.xlu0 %v1798
        %v1804 = vpop.xlane.xlu0 %1803
        %1805 = vadd.xlane.f32.xlu0 %v1799
        %v1806 = vpop.xlane.xlu0 %1805
        %v1807 = vsel %vm780, %v1800, 0.0
        %1808 = vadd.xlane.f32.xlu0 %v1807
        %v1809 = vpop.xlane.xlu0 %1808
        %v1810 = vmul.f32 %v1802, %v1137
        %v1811 = vmul.f32 %v1804, %v1137
        %v1812 = vmul.f32 %v1806, %v1137
        %v1813 = vmul.f32 %v1809, %v1137
        %v1814 = vadd.f32 %v1810, 1e-05
        %v1815 = vadd.f32 %v1811, 1e-05
        %v1816 = vadd.f32 %v1812, 1e-05
        %v1817 = vadd.f32 %v1813, 1e-05
        %v1818 = vrsqrt.pop %v1814
        %v1819 = vrsqrt.pop %v1815
        %v1820 = vrsqrt.pop %v1816
        %v1821 = vrsqrt.pop %v1817
        %v1822 = vmul.f32 %v1793, %v1818
        %v1823 = vmul.f32 %v1794, %v1819
        %v1824 = vmul.f32 %v1795, %v1820
        %v1825 = vmul.f32 %v1796, %v1821
        %v1827 = vlaneseq
        %v1828 = vshrl.u32 %v1827, 7
        %v1829 = vsub.s32 0, %v1828
        %v1830 = vrot.slane %v1778, %v1829
        %v1832 = vmul.f32 %v1822, %v1830
        %v1833 = vmul.f32 %v1823, %v1830
        %v1834 = vmul.f32 %v1824, %v1830
        %v1835 = vmul.f32 %v1825, %v1830
        %v1837 = vlaneseq
        %v1838 = vshrl.u32 %v1837, 7
        %v1839 = vsub.s32 0, %v1838
        %v1840 = vrot.slane %v1779, %v1839
        %v1842 = vadd.f32 %v1832, %v1840
        %v1843 = vadd.f32 %v1833, %v1840
        %v1844 = vadd.f32 %v1834, %v1840
        %v1845 = vadd.f32 %v1835, %v1840
        %1846 = vst [vmem:[%s455] sm:$0xff] %v1842
        %1847 = vst [vmem:[%s455 + $0x8] sm:$0xff] %v1843
        %1848 = vst [vmem:[%s455 + $0x10] sm:$0xff] %v1844
        %1849 = vst [vmem:[%s455 + $0x18] sm:$0x7f] %v1845
        %p1850 = scmp.lt.s32.totalorder %s25, 1
        %s1851 = scalar_select %p1850, %s25, 1
        %s1852 = smul.addr %s1851, 4
        %s1853 = smul.addr %s1852, 8
        %s1854 = scalar_lea.vmem %s13, %s1853
        // Predicated region
        $region77: #{wav2vec2_forward.8} parent=71 // pred_check
          %p1855 = pneg %p321
        $region78: #{wav2vec2_forward.8} parent=71 // pred_check_branch
          %1857 = sbr.rel (%p1855) target = $region80
        $region79: #{wav2vec2_forward.8} parent=71 // pred_region
          _
        $region80: #{wav2vec2_forward.8} parent=71 // pred_fallthru
          _
      $region72: #{wav2vec2_forward.8} parent=5 // pred_fallthru
        _
      %p1858 = scmp.le.s32.totalorder 2, %s20
      // Predicated region
      $region81: #{wav2vec2_forward.8} parent=5 // pred_check
        %p1859 = pneg %p1858
      $region82: #{wav2vec2_forward.8} parent=5 // pred_check_branch
        %1861 = sbr.rel (%p1859) target = $region84
      $region83: #{wav2vec2_forward.8} parent=5 // pred_region
        %s1862 = ssub.s32 %s20, 2
        // Predicated region
        $region85: #{wav2vec2_forward.8} parent=83 // pred_check
          %p1863 = pneg %p327
        $region86: #{wav2vec2_forward.8} parent=83 // pred_check_branch
          %1865 = sbr.rel (%p1863) target = $region88
        $region87: #{wav2vec2_forward.8} parent=83 // pred_region
          %p1866 = scmp.lt.s32.totalorder %s26, 1
          %s1867 = scalar_select %p1866, %s26, 1
          %s1868 = smul.addr %s1867, 4
          %s1869 = smul.addr %s1868, 8
          %s1870 = scalar_lea.vmem %s13, %s1869
        $region88: #{wav2vec2_forward.8} parent=83 // pred_fallthru
          _
      $region84: #{wav2vec2_forward.8} parent=5 // pred_fallthru
        _
    $region6: #{wav2vec2_forward.8} parent=1 // loop_footer
      %s24 = sadd.s32 1, %s20
    $region7: #{wav2vec2_forward.8} parent=1 // loop_footer_branch
      %19 = sbr.rel target = $region3
    $region8: #{wav2vec2_forward.8} parent=1 // loop_exit
      _
    %1871 = vsyncpa [#allocation3], 1
    %s1872 = scalar_lea.sflag [#allocation3], 1
    %1873 = vsyncpa %s1872, 1

// kernel: wav2vec2_forward.7
$region0: #{wav2vec2_forward.7}
  #allocation0 [shape = 'u32[]', space=smem, size = 0x4, offset = 0x4, fixed_abs, tag = 'smem constant byte address 0x4 - core index']
  #allocation1 [shape = 'u32[144,128]{1,0:T(1,128)}', space=vmem, size = 0x12000, scoped, tag = 'internal scratch']
  %s0 = inlined_call_operand.vmem [shape: f32[2,35,128], index: 0, kind: input, shape index: {}]
  %s1 = inlined_call_operand.vmem [shape: f32[16,32,32], index: 1, kind: input, shape index: {}]
  %s2 = inlined_call_operand.vmem [shape: f32[1,128], index: 2, kind: input, shape index: {}]
  %s3 = inlined_call_operand.vmem [shape: f32[1,128], index: 3, kind: input, shape index: {}]
  %s4 = inlined_call_operand.vmem [shape: f32[1,128], index: 4, kind: input, shape index: {}]
  %s5 = inlined_call_operand.vmem [shape: f32[2,31,128], index: 5, kind: output, shape index: {}]
  %s6 = sld [smem:[#allocation0]]
  $region53: #{wav2vec2_forward.7} parent=0
    _
  %s8 = ssub.s32 1, %s6
  %s9 = scalar_select 0, %s8, %s6
  loop: start=0, step=1, limit=4
  $region2: #{wav2vec2_forward.7} parent=0 // loop_pre_header
    _
  $region3: #{wav2vec2_forward.7} parent=0 // loop_header
    %s11 = sphi 0, %s15
    %p12 = scmp.ge.s32.totalorder %s11, 4
    %s21 = sphi 0, %s23
    %s24 = sphi 0, %s21
    %s25 = sphi 0, %s24
    %s41 = sphi 0, %s25
    %s45 = sphi 0, %s45
    %s47 = sphi 0, %s45
    %s48 = sphi 0, %s47
    %s62 = sphi 0, %s48
    %s66 = sphi 0, %s66
    %s68 = sphi 0, %s66
    %s69 = sphi 0, %s68
    %s83 = sphi 0, %s69
    %s87 = sphi 0, %s87
    %s89 = sphi 0, %s87
    %s90 = sphi 0, %s89
    %s104 = sphi 0, %s90
    %s108 = sphi 0, %s108
    %s110 = sphi 0, %s108
    %s111 = sphi 0, %s110
    %s125 = sphi 0, %s111
    %s131 = sphi 0, %s133
    %s134 = sphi 0, %s131
    %s135 = sphi 0, %s134
    %s151 = sphi 0, %s135
  $region4: #{wav2vec2_forward.7} parent=0 // loop_header_branch
    %14 = sbr.rel (%p12) target = $region8
  $region5: #{wav2vec2_forward.7} parent=0 // loop_body
    %s16 = ssub.s32 %s11, 1
    %s17 = ssub.s32 %s11, 2
    %s18 = sadd.s32 %s11, 1
    %s19 = ssub.s32 %s11, %s18
    %p20 = scmp.eq.s32.totalorder %s19, 0
    %s22 = sadd.s32 %s21, 1
    %s23 = scalar_select %p20, %s21, %s22
    %p26 = pneg %p20
    %p27 = scmp.eq.s32.totalorder %s11, 1
    %p28 = por %p26, %p27
    %p29 = scmp.ne.s32.totalorder %s21, %s24
    %p30 = scmp.eq.s32.totalorder %s11, 0
    %p31 = por %p29, %p30
    %p32 = scmp.ne.s32.totalorder %s21, %s24
    %p33 = scmp.eq.s32.totalorder %s16, 1
    %p34 = por %p32, %p33
    %p35 = scmp.ne.s32.totalorder %s24, %s25
    %p36 = scmp.eq.s32.totalorder %s16, 0
    %p37 = por %p35, %p36
    %p38 = scmp.ne.s32.totalorder %s24, %s25
    %p39 = scmp.eq.s32.totalorder %s17, 1
    %p40 = por %p38, %p39
    %p42 = scmp.ne.s32.totalorder %s25, %s41
    %p43 = scmp.eq.s32.totalorder %s17, 0
    %p44 = por %p42, %p43
    %s46 = sadd.s32 %s45, 1
    %p49 = scmp.eq.s32.totalorder %s11, 1
    %p50 = scmp.ne.s32.totalorder %s45, %s47
    %p51 = scmp.eq.s32.totalorder %s11, 0
    %p52 = por %p50, %p51
    %p53 = scmp.ne.s32.totalorder %s45, %s47
    %p54 = scmp.eq.s32.totalorder %s16, 1
    %p55 = por %p53, %p54
    %p56 = scmp.ne.s32.totalorder %s47, %s48
    %p57 = scmp.eq.s32.totalorder %s16, 0
    %p58 = por %p56, %p57
    %p59 = scmp.ne.s32.totalorder %s47, %s48
    %p60 = scmp.eq.s32.totalorder %s17, 1
    %p61 = por %p59, %p60
    %p63 = scmp.ne.s32.totalorder %s48, %s62
    %p64 = scmp.eq.s32.totalorder %s17, 0
    %p65 = por %p63, %p64
    %s67 = sadd.s32 %s66, 1
    %p70 = scmp.eq.s32.totalorder %s11, 1
    %p71 = scmp.ne.s32.totalorder %s66, %s68
    %p72 = scmp.eq.s32.totalorder %s11, 0
    %p73 = por %p71, %p72
    %p74 = scmp.ne.s32.totalorder %s66, %s68
    %p75 = scmp.eq.s32.totalorder %s16, 1
    %p76 = por %p74, %p75
    %p77 = scmp.ne.s32.totalorder %s68, %s69
    %p78 = scmp.eq.s32.totalorder %s16, 0
    %p79 = por %p77, %p78
    %p80 = scmp.ne.s32.totalorder %s68, %s69
    %p81 = scmp.eq.s32.totalorder %s17, 1
    %p82 = por %p80, %p81
    %p84 = scmp.ne.s32.totalorder %s69, %s83
    %p85 = scmp.eq.s32.totalorder %s17, 0
    %p86 = por %p84, %p85
    %s88 = sadd.s32 %s87, 1
    %p91 = scmp.eq.s32.totalorder %s11, 1
    %p92 = scmp.ne.s32.totalorder %s87, %s89
    %p93 = scmp.eq.s32.totalorder %s11, 0
    %p94 = por %p92, %p93
    %p95 = scmp.ne.s32.totalorder %s87, %s89
    %p96 = scmp.eq.s32.totalorder %s16, 1
    %p97 = por %p95, %p96
    %p98 = scmp.ne.s32.totalorder %s89, %s90
    %p99 = scmp.eq.s32.totalorder %s16, 0
    %p100 = por %p98, %p99
    %p101 = scmp.ne.s32.totalorder %s89, %s90
    %p102 = scmp.eq.s32.totalorder %s17, 1
    %p103 = por %p101, %p102
    %p105 = scmp.ne.s32.totalorder %s90, %s104
    %p106 = scmp.eq.s32.totalorder %s17, 0
    %p107 = por %p105, %p106
    %s109 = sadd.s32 %s108, 1
    %p112 = scmp.eq.s32.totalorder %s11, 1
    %p113 = scmp.ne.s32.totalorder %s108, %s110
    %p114 = scmp.eq.s32.totalorder %s11, 0
    %p115 = por %p113, %p114
    %p116 = scmp.ne.s32.totalorder %s108, %s110
    %p117 = scmp.eq.s32.totalorder %s16, 1
    %p118 = por %p116, %p117
    %p119 = scmp.ne.s32.totalorder %s110, %s111
    %p120 = scmp.eq.s32.totalorder %s16, 0
    %p121 = por %p119, %p120
    %p122 = scmp.ne.s32.totalorder %s110, %s111
    %p123 = scmp.eq.s32.totalorder %s17, 1
    %p124 = por %p122, %p123
    %p126 = scmp.ne.s32.totalorder %s111, %s125
    %p127 = scmp.eq.s32.totalorder %s17, 0
    %p128 = por %p126, %p127
    %s129 = ssub.s32 %s11, %s18
    %p130 = scmp.eq.s32.totalorder %s129, 0
    %s132 = sadd.s32 %s131, 1
    %s133 = scalar_select %p130, %s131, %s132
    %p136 = pneg %p130
    %p137 = scmp.eq.s32.totalorder %s11, 1
    %p138 = por %p136, %p137
    %p139 = scmp.ne.s32.totalorder %s131, %s134
    %p140 = scmp.eq.s32.totalorder %s11, 0
    %p141 = por %p139, %p140
    %p142 = scmp.ne.s32.totalorder %s131, %s134
    %p143 = scmp.eq.s32.totalorder %s16, 1
    %p144 = por %p142, %p143
    %p145 = scmp.ne.s32.totalorder %s134, %s135
    %p146 = scmp.eq.s32.totalorder %s16, 0
    %p147 = por %p145, %p146
    %p148 = scmp.ne.s32.totalorder %s134, %s135
    %p149 = scmp.eq.s32.totalorder %s17, 1
    %p150 = por %p148, %p149
    %p152 = scmp.ne.s32.totalorder %s135, %s151
    %p153 = scmp.eq.s32.totalorder %s17, 0
    %p154 = por %p152, %p153
    %p155 = scmp.le.s32.totalorder 1, %s11
    %p156 = scmp.lt.s32.totalorder %s11, 3
    %p157 = pnand %p155, %p156
    %p158 = pneg %p157
    // Predicated region
    $region9: #{wav2vec2_forward.7} parent=5 // pred_check
      _
    $region10: #{wav2vec2_forward.7} parent=5 // pred_check_branch
      %160 = sbr.rel (%p157) target = $region12
    $region11: #{wav2vec2_forward.7} parent=5 // pred_region
      %s161 = ssub.s32 %s11, 1
      // Predicated region
      $region13: #{wav2vec2_forward.7} parent=11 // pred_check
        %p162 = pneg %p58
      $region14: #{wav2vec2_forward.7} parent=11 // pred_check_branch
        %164 = sbr.rel (%p162) target = $region16
      $region15: #{wav2vec2_forward.7} parent=11 // pred_region
        _
      $region16: #{wav2vec2_forward.7} parent=11 // pred_fallthru
        _
      // Predicated region
      $region17: #{wav2vec2_forward.7} parent=11 // pred_check
        %p165 = pneg %p79
      $region18: #{wav2vec2_forward.7} parent=11 // pred_check_branch
        %167 = sbr.rel (%p165) target = $region20
      $region19: #{wav2vec2_forward.7} parent=11 // pred_region
        _
      $region20: #{wav2vec2_forward.7} parent=11 // pred_fallthru
        _
      // Predicated region
      $region21: #{wav2vec2_forward.7} parent=11 // pred_check
        %p168 = pneg %p100
      $region22: #{wav2vec2_forward.7} parent=11 // pred_check_branch
        %170 = sbr.rel (%p168) target = $region24
      $region23: #{wav2vec2_forward.7} parent=11 // pred_region
        _
      $region24: #{wav2vec2_forward.7} parent=11 // pred_fallthru
        _
      // Predicated region
      $region25: #{wav2vec2_forward.7} parent=11 // pred_check
        %p171 = pneg %p121
      $region26: #{wav2vec2_forward.7} parent=11 // pred_check_branch
        %173 = sbr.rel (%p171) target = $region28
      $region27: #{wav2vec2_forward.7} parent=11 // pred_region
        _
      $region28: #{wav2vec2_forward.7} parent=11 // pred_fallthru
        _
    $region12: #{wav2vec2_forward.7} parent=5 // pred_fallthru
      _
    %p174 = scmp.lt.s32.totalorder %s11, 2
    // Predicated region
    $region29: #{wav2vec2_forward.7} parent=5 // pred_check
      %p175 = pneg %p174
    $region30: #{wav2vec2_forward.7} parent=5 // pred_check_branch
      %177 = sbr.rel (%p175) target = $region32
    $region31: #{wav2vec2_forward.7} parent=5 // pred_region
      // Predicated region
      $region33: #{wav2vec2_forward.7} parent=31 // pred_check
        %p178 = pneg %p31
      $region34: #{wav2vec2_forward.7} parent=31 // pred_check_branch
        %180 = sbr.rel (%p178) target = $region36
      $region35: #{wav2vec2_forward.7} parent=31 // pred_region
        %p181 = scmp.lt.s32.totalorder %s11, 1
        %s182 = scalar_select %p181, %s11, 1
        %s183 = smul.addr %s182, 5
        %s184 = smul.addr %s183, 8
        %s185 = scalar_lea.vmem %s0, %s184
      $region36: #{wav2vec2_forward.7} parent=31 // pred_fallthru
        _
    $region32: #{wav2vec2_forward.7} parent=5 // pred_fallthru
      _
    %p186 = scmp.le.s32.totalorder 1, %s11
    %p187 = scmp.lt.s32.totalorder %s11, 3
    %p188 = pnand %p186, %p187
    %p189 = pneg %p188
    // Predicated region
    $region37: #{wav2vec2_forward.7} parent=5 // pred_check
      _
    $region38: #{wav2vec2_forward.7} parent=5 // pred_check_branch
      %191 = sbr.rel (%p188) target = $region40
    $region39: #{wav2vec2_forward.7} parent=5 // pred_region
      %s192 = ssub.s32 %s11, 1
      %p193 = scmp.lt.s32.totalorder %s16, 1
      %s194 = scalar_select %p193, %s16, 1
      %s195 = smul.addr %s194, 5
      %s196 = smul.addr %s195, 8
      %s197 = scalar_lea.vmem %s0, %s196
      %p198 = pneg %p37
      %p199 = pneg %p34
      %p200 = pneg %p58
      %p201 = pneg %p55
      %p202 = pneg %p79
      %p203 = pneg %p76
      %p204 = pneg %p100
      %p205 = pneg %p97
      %p206 = pneg %p121
      %p207 = pneg %p118
      %p208 = pneg %p147
      %p209 = pneg %p144
      %p210 = scmp.lt.s32.totalorder %s16, 1
      %s211 = scalar_select %p210, %s16, 1
      %s212 = smul.addr %s211, 4
      %s213 = smul.addr %s212, 8
      %s214 = scalar_lea.vmem %s5, %s213
      %p215 = scmp.lt.s32.totalorder %s16, 1
      %s216 = scalar_select %p215, %s16, 1
      %s217 = smul.addr %s216, 5
      %s218 = smul.addr %s217, 8
      %s219 = scalar_lea.vmem %s0, %s218
      %p220 = scmp.lt.s32.totalorder %s16, 1
      %s221 = scalar_select %p220, %s16, 1
      %s222 = smul.addr %s221, 4
      %s223 = smul.addr %s222, 8
      %s224 = scalar_lea.vmem %s5, %s223
      %v226 = vld [vmem:[%s219] sm:$0xff]
      %v227 = vld [vmem:[%s219 + $0x8] sm:$0xff]
      %v228 = vld [vmem:[%s219 + $0x10] sm:$0xff]
      %v229 = vld [vmem:[%s219 + $0x18] sm:$0xff]
      %v230 = vld [vmem:[%s219 + $0x20] sm:$0x7]
      %v231 = vld [vmem:[%s1] sm:$0xff]
      %v232 = vld [vmem:[%s1 + $0x8] sm:$0xff]
      %v233 = vld [vmem:[%s1 + $0x10] sm:$0xff]
      %v234 = vld [vmem:[%s1 + $0x18] sm:$0xff]
      %v235 = vpack.c.bf16 %v227, %v226
      %v236 = vpack.c.bf16 %v229, %v228
      %v237 = vpack.c.bf16 %v232, %v231
      %v238 = vpack.c.bf16 %v234, %v233
      %s239 = scalar_lea.vmem %s1, 128
      %v240 = vld [vmem:[%s239] sm:$0xff]
      %v241 = vld [vmem:[%s239 + $0x8] sm:$0xff]
      %v242 = vld [vmem:[%s239 + $0x10] sm:$0xff]
      %v243 = vld [vmem:[%s239 + $0x18] sm:$0xff]
      %v244 = vpack.c.bf16 %v241, %v240
      %v245 = vpack.c.bf16 %v243, %v242
      %vm246 = vsmask.f32 7424
      %v248 = vshrl.u32 %v235, 16
      %v250 = vshll.u32 %v235, 16
      %v252 = vrot.slane %v250, 1
      %v253 = vor.u32 %v248, %v252
      %v255 = vshll.u32 %v236, 16
      %v257 = vrot.slane %v255, 1
      %v258 = vsel %vm246, %v253, %v257
      %v259 = vshrl.u32 %v236, 16
      %v261 = vor.u32 %v259, %v257
      %vm262 = vcmask 261120
      %v264 = vsel %vm262, %v258, 0
      %v267 = vsel %vm262, %v261, 0
      %269 = vmatprep.subr.bf16.mxu0 0
      %270 = vmatpush1.bf16.msra.mxu0 0
      %271 = vmatprep.subr.bf16.mxu0 0
      %272 = vmatpush1.bf16.msra.mxu0 0
      %273 = vmatprep.subr.bf16.mxu0 0
      %274 = vmatpush1.bf16.msra.mxu0 0
      %275 = vmatprep.subr.bf16.mxu0 0
      %276 = vmatpush1.bf16.msra.mxu0 0
      %277 = vmatprep.subr.bf16.mxu0 0
      %278 = vmatpush1.bf16.msra.mxu0 0
      %279 = vmatprep.subr.bf16.mxu0 0
      %280 = vmatpush1.bf16.msra.mxu0 0
      %281 = vmatprep.subr.bf16.mxu0 0
      %282 = vmatpush1.bf16.msra.mxu0 %v245
      %283 = vmatprep.subr.bf16.mxu0 0
      %284 = vmatpush1.bf16.msra.mxu0 %v244
      %285 = vmatprep.subr.bf16.mxu0 0
      %286 = vmatpush2.bf16.msra.mxu0 0
      %287 = vmatprep.subr.bf16.mxu0 0
      %288 = vmatpush2.bf16.msra.mxu0 0
      %289 = vmatprep.subr.bf16.mxu0 0
      %290 = vmatpush2.bf16.msra.mxu0 0
      %291 = vmatprep.subr.bf16.mxu0 0
      %292 = vmatpush2.bf16.msra.mxu0 0
      %293 = vmatprep.subr.bf16.mxu0 0
      %294 = vmatpush2.bf16.msra.mxu0 0
      %295 = vmatprep.subr.bf16.mxu0 0
      %296 = vmatpush2.bf16.msra.mxu0 0
      %297 = vmatprep.subr.bf16.mxu0 0
      %298 = vmatpush2.bf16.msra.mxu0 0
      %299 = vmatprep.subr.bf16.mxu0 0
      %300 = vmatpush2.bf16.msra.mxu0 0
      %301 = vmatprep.mubr.bf16.mxu0 0
      %302 = vmatmul.mubr.bf16.gmra.mxu0 %v264
      %v303 = vpop.f32.mrf.mxu0
      %v304 = vadd.f32 0.0, %v303
      %v305 = vpop.f32.mrf.mxu0
      %v306 = vpop.f32.mrf.mxu0
      %v307 = vadd.f32 0.0, %v306
      %v308 = vpop.f32.mrf.mxu0
      %309 = vmatprep.mubr.bf16.mxu0 0
      %310 = vmatmul.mubr.bf16.gmra.mxu0 %v267
      %v311 = vpop.f32.mrf.mxu0
      %v312 = vadd.f32 0.0, %v311
      %v313 = vpop.f32.mrf.mxu0
      %v314 = vpop.f32.mrf.mxu0
      %v315 = vadd.f32 0.0, %v314
      %v316 = vpop.f32.mrf.mxu0
      %317 = vdwg.mxu0
      %v318 = vsel %vm262, %v235, 0
      %v320 = vsel %vm262, %v236, 0
      %322 = vmatprep.subr.bf16.mxu0 0
      %323 = vmatpush1.bf16.msra.mxu0 0
      %324 = vmatprep.subr.bf16.mxu0 0
      %325 = vmatpush1.bf16.msra.mxu0 0
      %326 = vmatprep.subr.bf16.mxu0 0
      %327 = vmatpush1.bf16.msra.mxu0 0
      %328 = vmatprep.subr.bf16.mxu0 0
      %329 = vmatpush1.bf16.msra.mxu0 0
      %330 = vmatprep.subr.bf16.mxu0 0
      %331 = vmatpush1.bf16.msra.mxu0 0
      %332 = vmatprep.subr.bf16.mxu0 0
      %333 = vmatpush1.bf16.msra.mxu0 0
      %334 = vmatprep.subr.bf16.mxu0 0
      %335 = vmatpush1.bf16.msra.mxu0 %v238
      %336 = vmatprep.subr.bf16.mxu0 0
      %337 = vmatpush1.bf16.msra.mxu0 %v237
      %338 = vmatprep.subr.bf16.mxu0 0
      %339 = vmatpush2.bf16.msra.mxu0 0
      %340 = vmatprep.subr.bf16.mxu0 0
      %341 = vmatpush2.bf16.msra.mxu0 0
      %342 = vmatprep.subr.bf16.mxu0 0
      %343 = vmatpush2.bf16.msra.mxu0 0
      %344 = vmatprep.subr.bf16.mxu0 0
      %345 = vmatpush2.bf16.msra.mxu0 0
      %346 = vmatprep.subr.bf16.mxu0 0
      %347 = vmatpush2.bf16.msra.mxu0 0
      %348 = vmatprep.subr.bf16.mxu0 0
      %349 = vmatpush2.bf16.msra.mxu0 0
      %350 = vmatprep.subr.bf16.mxu0 0
      %351 = vmatpush2.bf16.msra.mxu0 0
      %352 = vmatprep.subr.bf16.mxu0 0
      %353 = vmatpush2.bf16.msra.mxu0 0
      %354 = vmatprep.mubr.bf16.mxu0 0
      %355 = vmatmul.mubr.bf16.gmra.mxu0 %v318
      %v356 = vpop.f32.mrf.mxu0
      %v357 = vadd.f32 %v304, %v356
      %v358 = vpop.f32.mrf.mxu0
      %v359 = vpop.f32.mrf.mxu0
      %v360 = vadd.f32 %v307, %v359
      %v361 = vpop.f32.mrf.mxu0
      %362 = vmatprep.mubr.bf16.mxu0 0
      %363 = vmatmul.mubr.bf16.gmra.mxu0 %v320
      %v364 = vpop.f32.mrf.mxu0
      %v365 = vadd.f32 %v312, %v364
      %v366 = vpop.f32.mrf.mxu0
      %v367 = vpop.f32.mrf.mxu0
      %v368 = vadd.f32 %v315, %v367
      %v369 = vpop.f32.mrf.mxu0
      %370 = vdwg.mxu0
      %s371 = scalar_lea.vmem %s1, 256
      %v372 = vld [vmem:[%s371] sm:$0xff]
      %v373 = vld [vmem:[%s371 + $0x8] sm:$0xff]
      %v374 = vld [vmem:[%s371 + $0x10] sm:$0xff]
      %v375 = vld [vmem:[%s371 + $0x18] sm:$0xff]
      %v376 = vpack.c.bf16 %v230, %v230
      %v377 = vpack.c.bf16 %v373, %v372
      %v378 = vpack.c.bf16 %v375, %v374
      %vm382 = vcmask 1046528
      %v383 = vrot.slane %v235, 1
      %v384 = vrot.slane %v236, 1
      %v385 = vsel %vm382, %v383, %v384
      %v386 = vrot.slane %v376, 1
      %v387 = vsel %vm382, %v384, %v386
      %v389 = vsel %vm262, %v385, 0
      %v392 = vsel %vm262, %v387, 0
      %394 = vmatprep.subr.bf16.mxu0 0
      %395 = vmatpush1.bf16.msra.mxu0 0
      %396 = vmatprep.subr.bf16.mxu0 0
      %397 = vmatpush1.bf16.msra.mxu0 0
      %398 = vmatprep.subr.bf16.mxu0 0
      %399 = vmatpush1.bf16.msra.mxu0 0
      %400 = vmatprep.subr.bf16.mxu0 0
      %401 = vmatpush1.bf16.msra.mxu0 0
      %402 = vmatprep.subr.bf16.mxu0 0
      %403 = vmatpush1.bf16.msra.mxu0 0
      %404 = vmatprep.subr.bf16.mxu0 0
      %405 = vmatpush1.bf16.msra.mxu0 0
      %406 = vmatprep.subr.bf16.mxu0 0
      %407 = vmatpush1.bf16.msra.mxu0 %v378
      %408 = vmatprep.subr.bf16.mxu0 0
      %409 = vmatpush1.bf16.msra.mxu0 %v377
      %410 = vmatprep.subr.bf16.mxu0 0
      %411 = vmatpush2.bf16.msra.mxu0 0
      %412 = vmatprep.subr.bf16.mxu0 0
      %413 = vmatpush2.bf16.msra.mxu0 0
      %414 = vmatprep.subr.bf16.mxu0 0
      %415 = vmatpush2.bf16.msra.mxu0 0
      %416 = vmatprep.subr.bf16.mxu0 0
      %417 = vmatpush2.bf16.msra.mxu0 0
      %418 = vmatprep.subr.bf16.mxu0 0
      %419 = vmatpush2.bf16.msra.mxu0 0
      %420 = vmatprep.subr.bf16.mxu0 0
      %421 = vmatpush2.bf16.msra.mxu0 0
      %422 = vmatprep.subr.bf16.mxu0 0
      %423 = vmatpush2.bf16.msra.mxu0 0
      %424 = vmatprep.subr.bf16.mxu0 0
      %425 = vmatpush2.bf16.msra.mxu0 0
      %426 = vmatprep.mubr.bf16.mxu0 0
      %427 = vmatmul.mubr.bf16.gmra.mxu0 %v389
      %v428 = vpop.f32.mrf.mxu0
      %v429 = vadd.f32 0.0, %v428
      %v430 = vpop.f32.mrf.mxu0
      %v431 = vpop.f32.mrf.mxu0
      %v432 = vadd.f32 0.0, %v431
      %v433 = vpop.f32.mrf.mxu0
      %434 = vmatprep.mubr.bf16.mxu0 0
      %435 = vmatmul.mubr.bf16.gmra.mxu0 %v392
      %v436 = vpop.f32.mrf.mxu0
      %v437 = vadd.f32 0.0, %v436
      %v438 = vpop.f32.mrf.mxu0
      %v439 = vpop.f32.mrf.mxu0
      %v440 = vadd.f32 0.0, %v439
      %v441 = vpop.f32.mrf.mxu0
      %442 = vdwg.mxu0
      %v443 = vadd.f32 %v357, %v429
      %v444 = vadd.f32 %v360, %v432
      %v445 = vadd.f32 %v365, %v437
      %v446 = vadd.f32 %v368, %v440
      %s447 = scalar_lea.vmem %s1, 384
      %v448 = vld [vmem:[%s447] sm:$0xff]
      %v449 = vld [vmem:[%s447 + $0x8] sm:$0xff]
      %v450 = vld [vmem:[%s447 + $0x10] sm:$0xff]
      %v451 = vld [vmem:[%s447 + $0x18] sm:$0xff]
      %v452 = vpack.c.bf16 %v449, %v448
      %v453 = vpack.c.bf16 %v451, %v450
      %vm454 = vsmask.f32 6400
      %v455 = vrot.slane %v248, 1
      %v456 = vrot.slane %v250, 2
      %v457 = vor.u32 %v455, %v456
      %v458 = vrot.slane %v259, 1
      %v459 = vrot.slane %v255, 2
      %v460 = vor.u32 %v458, %v459
      %v461 = vsel %vm454, %v457, %v460
      %v463 = vshrl.u32 %v376, 16
      %v465 = vrot.slane %v463, 1
      %v466 = vshll.u32 %v376, 16
      %v468 = vrot.slane %v466, 2
      %v469 = vor.u32 %v465, %v468
      %v470 = vsel %vm454, %v460, %v469
      %v472 = vsel %vm262, %v461, 0
      %v475 = vsel %vm262, %v470, 0
      %477 = vmatprep.subr.bf16.mxu0 0
      %478 = vmatpush1.bf16.msra.mxu0 0
      %479 = vmatprep.subr.bf16.mxu0 0
      %480 = vmatpush1.bf16.msra.mxu0 0
      %481 = vmatprep.subr.bf16.mxu0 0
      %482 = vmatpush1.bf16.msra.mxu0 0
      %483 = vmatprep.subr.bf16.mxu0 0
      %484 = vmatpush1.bf16.msra.mxu0 0
      %485 = vmatprep.subr.bf16.mxu0 0
      %486 = vmatpush1.bf16.msra.mxu0 0
      %487 = vmatprep.subr.bf16.mxu0 0
      %488 = vmatpush1.bf16.msra.mxu0 0
      %489 = vmatprep.subr.bf16.mxu0 0
      %490 = vmatpush1.bf16.msra.mxu0 %v453
      %491 = vmatprep.subr.bf16.mxu0 0
      %492 = vmatpush1.bf16.msra.mxu0 %v452
      %493 = vmatprep.subr.bf16.mxu0 0
      %494 = vmatpush2.bf16.msra.mxu0 0
      %495 = vmatprep.subr.bf16.mxu0 0
      %496 = vmatpush2.bf16.msra.mxu0 0
      %497 = vmatprep.subr.bf16.mxu0 0
      %498 = vmatpush2.bf16.msra.mxu0 0
      %499 = vmatprep.subr.bf16.mxu0 0
      %500 = vmatpush2.bf16.msra.mxu0 0
      %501 = vmatprep.subr.bf16.mxu0 0
      %502 = vmatpush2.bf16.msra.mxu0 0
      %503 = vmatprep.subr.bf16.mxu0 0
      %504 = vmatpush2.bf16.msra.mxu0 0
      %505 = vmatprep.subr.bf16.mxu0 0
      %506 = vmatpush2.bf16.msra.mxu0 0
      %507 = vmatprep.subr.bf16.mxu0 0
      %508 = vmatpush2.bf16.msra.mxu0 0
      %509 = vmatprep.mubr.bf16.mxu0 0
      %510 = vmatmul.mubr.bf16.gmra.mxu0 %v472
      %v511 = vpop.f32.mrf.mxu0
      %v512 = vadd.f32 0.0, %v511
      %v513 = vpop.f32.mrf.mxu0
      %v514 = vpop.f32.mrf.mxu0
      %v515 = vadd.f32 0.0, %v514
      %v516 = vpop.f32.mrf.mxu0
      %517 = vmatprep.mubr.bf16.mxu0 0
      %518 = vmatmul.mubr.bf16.gmra.mxu0 %v475
      %v519 = vpop.f32.mrf.mxu0
      %v520 = vadd.f32 0.0, %v519
      %v521 = vpop.f32.mrf.mxu0
      %v522 = vpop.f32.mrf.mxu0
      %v523 = vadd.f32 0.0, %v522
      %v524 = vpop.f32.mrf.mxu0
      %525 = vdwg.mxu0
      %v526 = vadd.f32 %v443, %v512
      %v527 = vadd.f32 %v444, %v515
      %v528 = vadd.f32 %v445, %v520
      %v529 = vadd.f32 %v446, %v523
      %s530 = scalar_lea.vmem %s1, 32
      %v531 = vld [vmem:[%s530] sm:$0xff]
      %v532 = vld [vmem:[%s530 + $0x8] sm:$0xff]
      %v533 = vld [vmem:[%s530 + $0x10] sm:$0xff]
      %v534 = vld [vmem:[%s530 + $0x18] sm:$0xff]
      %v535 = vpack.c.bf16 %v532, %v531
      %v536 = vpack.c.bf16 %v534, %v533
      %s537 = scalar_lea.vmem %s1, 160
      %v538 = vld [vmem:[%s537] sm:$0xff]
      %v539 = vld [vmem:[%s537 + $0x8] sm:$0xff]
      %v540 = vld [vmem:[%s537 + $0x10] sm:$0xff]
      %v541 = vld [vmem:[%s537 + $0x18] sm:$0xff]
      %v542 = vpack.c.bf16 %v539, %v538
      %v543 = vpack.c.bf16 %v541, %v540
      %544 = vrot.lane.b32.xlu0 %v258, 96
      %v545 = vpop.permute.xlu0 %544
      %546 = vrot.lane.b32.xlu0 %v261, 96
      %v547 = vpop.permute.xlu0 %546
      %v549 = vsel %vm262, %v545, 0
      %v552 = vsel %vm262, %v547, 0
      %554 = vmatprep.subr.bf16.mxu0 0
      %555 = vmatpush1.bf16.msra.mxu0 0
      %556 = vmatprep.subr.bf16.mxu0 0
      %557 = vmatpush1.bf16.msra.mxu0 0
      %558 = vmatprep.subr.bf16.mxu0 0
      %559 = vmatpush1.bf16.msra.mxu0 0
      %560 = vmatprep.subr.bf16.mxu0 0
      %561 = vmatpush1.bf16.msra.mxu0 0
      %562 = vmatprep.subr.bf16.mxu0 0
      %563 = vmatpush1.bf16.msra.mxu0 0
      %564 = vmatprep.subr.bf16.mxu0 0
      %565 = vmatpush1.bf16.msra.mxu0 0
      %566 = vmatprep.subr.bf16.mxu0 0
      %567 = vmatpush1.bf16.msra.mxu0 %v543
      %568 = vmatprep.subr.bf16.mxu0 0
      %569 = vmatpush1.bf16.msra.mxu0 %v542
      %570 = vmatprep.subr.bf16.mxu0 0
      %571 = vmatpush2.bf16.msra.mxu0 0
      %572 = vmatprep.subr.bf16.mxu0 0
      %573 = vmatpush2.bf16.msra.mxu0 0
      %574 = vmatprep.subr.bf16.mxu0 0
      %575 = vmatpush2.bf16.msra.mxu0 0
      %576 = vmatprep.subr.bf16.mxu0 0
      %577 = vmatpush2.bf16.msra.mxu0 0
      %578 = vmatprep.subr.bf16.mxu0 0
      %579 = vmatpush2.bf16.msra.mxu0 0
      %580 = vmatprep.subr.bf16.mxu0 0
      %581 = vmatpush2.bf16.msra.mxu0 0
      %582 = vmatprep.subr.bf16.mxu0 0
      %583 = vmatpush2.bf16.msra.mxu0 0
      %584 = vmatprep.subr.bf16.mxu0 0
      %585 = vmatpush2.bf16.msra.mxu0 0
      %586 = vmatprep.mubr.bf16.mxu0 0
      %587 = vmatmul.mubr.bf16.gmra.mxu0 %v549
      %v588 = vpop.f32.mrf.mxu0
      %v589 = vadd.f32 0.0, %v588
      %v590 = vpop.f32.mrf.mxu0
      %v591 = vpop.f32.mrf.mxu0
      %v592 = vadd.f32 0.0, %v591
      %v593 = vpop.f32.mrf.mxu0
      %594 = vmatprep.mubr.bf16.mxu0 0
      %595 = vmatmul.mubr.bf16.gmra.mxu0 %v552
      %v596 = vpop.f32.mrf.mxu0
      %v597 = vadd.f32 0.0, %v596
      %v598 = vpop.f32.mrf.mxu0
      %v599 = vpop.f32.mrf.mxu0
      %v600 = vadd.f32 0.0, %v599
      %v601 = vpop.f32.mrf.mxu0
      %602 = vdwg.mxu0
      %603 = vrot.lane.b32.xlu0 %v235, 96
      %v604 = vpop.permute.xlu0 %603
      %605 = vrot.lane.b32.xlu0 %v236, 96
      %v606 = vpop.permute.xlu0 %605
      %v608 = vsel %vm262, %v604, 0
      %v611 = vsel %vm262, %v606, 0
      %613 = vmatprep.subr.bf16.mxu0 0
      %614 = vmatpush1.bf16.msra.mxu0 0
      %615 = vmatprep.subr.bf16.mxu0 0
      %616 = vmatpush1.bf16.msra.mxu0 0
      %617 = vmatprep.subr.bf16.mxu0 0
      %618 = vmatpush1.bf16.msra.mxu0 0
      %619 = vmatprep.subr.bf16.mxu0 0
      %620 = vmatpush1.bf16.msra.mxu0 0
      %621 = vmatprep.subr.bf16.mxu0 0
      %622 = vmatpush1.bf16.msra.mxu0 0
      %623 = vmatprep.subr.bf16.mxu0 0
      %624 = vmatpush1.bf16.msra.mxu0 0
      %625 = vmatprep.subr.bf16.mxu0 0
      %626 = vmatpush1.bf16.msra.mxu0 %v536
      %627 = vmatprep.subr.bf16.mxu0 0
      %628 = vmatpush1.bf16.msra.mxu0 %v535
      %629 = vmatprep.subr.bf16.mxu0 0
      %630 = vmatpush2.bf16.msra.mxu0 0
      %631 = vmatprep.subr.bf16.mxu0 0
      %632 = vmatpush2.bf16.msra.mxu0 0
      %633 = vmatprep.subr.bf16.mxu0 0
      %634 = vmatpush2.bf16.msra.mxu0 0
      %635 = vmatprep.subr.bf16.mxu0 0
      %636 = vmatpush2.bf16.msra.mxu0 0
      %637 = vmatprep.subr.bf16.mxu0 0
      %638 = vmatpush2.bf16.msra.mxu0 0
      %639 = vmatprep.subr.bf16.mxu0 0
      %640 = vmatpush2.bf16.msra.mxu0 0
      %641 = vmatprep.subr.bf16.mxu0 0
      %642 = vmatpush2.bf16.msra.mxu0 0
      %643 = vmatprep.subr.bf16.mxu0 0
      %644 = vmatpush2.bf16.msra.mxu0 0
      %645 = vmatprep.mubr.bf16.mxu0 0
      %646 = vmatmul.mubr.bf16.gmra.mxu0 %v608
      %v647 = vpop.f32.mrf.mxu0
      %v648 = vadd.f32 %v589, %v647
      %v649 = vpop.f32.mrf.mxu0
      %v650 = vpop.f32.mrf.mxu0
      %v651 = vadd.f32 %v592, %v650
      %v652 = vpop.f32.mrf.mxu0
      %653 = vmatprep.mubr.bf16.mxu0 0
      %654 = vmatmul.mubr.bf16.gmra.mxu0 %v611
      %v655 = vpop.f32.mrf.mxu0
      %v656 = vadd.f32 %v597, %v655
      %v657 = vpop.f32.mrf.mxu0
      %v658 = vpop.f32.mrf.mxu0
      %v659 = vadd.f32 %v600, %v658
      %v660 = vpop.f32.mrf.mxu0
      %661 = vdwg.mxu0
      %s662 = scalar_lea.vmem %s1, 288
      %v663 = vld [vmem:[%s662] sm:$0xff]
      %v664 = vld [vmem:[%s662 + $0x8] sm:$0xff]
      %v665 = vld [vmem:[%s662 + $0x10] sm:$0xff]
      %v666 = vld [vmem:[%s662 + $0x18] sm:$0xff]
      %v667 = vpack.c.bf16 %v664, %v663
      %v668 = vpack.c.bf16 %v666, %v665
      %669 = vrot.lane.b32.xlu0 %v385, 96
      %v670 = vpop.permute.xlu0 %669
      %671 = vrot.lane.b32.xlu0 %v387, 96
      %v672 = vpop.permute.xlu0 %671
      %v674 = vsel %vm262, %v670, 0
      %v677 = vsel %vm262, %v672, 0
      %679 = vmatprep.subr.bf16.mxu0 0
      %680 = vmatpush1.bf16.msra.mxu0 0
      %681 = vmatprep.subr.bf16.mxu0 0
      %682 = vmatpush1.bf16.msra.mxu0 0
      %683 = vmatprep.subr.bf16.mxu0 0
      %684 = vmatpush1.bf16.msra.mxu0 0
      %685 = vmatprep.subr.bf16.mxu0 0
      %686 = vmatpush1.bf16.msra.mxu0 0
      %687 = vmatprep.subr.bf16.mxu0 0
      %688 = vmatpush1.bf16.msra.mxu0 0
      %689 = vmatprep.subr.bf16.mxu0 0
      %690 = vmatpush1.bf16.msra.mxu0 0
      %691 = vmatprep.subr.bf16.mxu0 0
      %692 = vmatpush1.bf16.msra.mxu0 %v668
      %693 = vmatprep.subr.bf16.mxu0 0
      %694 = vmatpush1.bf16.msra.mxu0 %v667
      %695 = vmatprep.subr.bf16.mxu0 0
      %696 = vmatpush2.bf16.msra.mxu0 0
      %697 = vmatprep.subr.bf16.mxu0 0
      %698 = vmatpush2.bf16.msra.mxu0 0
      %699 = vmatprep.subr.bf16.mxu0 0
      %700 = vmatpush2.bf16.msra.mxu0 0
      %701 = vmatprep.subr.bf16.mxu0 0
      %702 = vmatpush2.bf16.msra.mxu0 0
      %703 = vmatprep.subr.bf16.mxu0 0
      %704 = vmatpush2.bf16.msra.mxu0 0
      %705 = vmatprep.subr.bf16.mxu0 0
      %706 = vmatpush2.bf16.msra.mxu0 0
      %707 = vmatprep.subr.bf16.mxu0 0
      %708 = vmatpush2.bf16.msra.mxu0 0
      %709 = vmatprep.subr.bf16.mxu0 0
      %710 = vmatpush2.bf16.msra.mxu0 0
      %711 = vmatprep.mubr.bf16.mxu0 0
      %712 = vmatmul.mubr.bf16.gmra.mxu0 %v674
      %v713 = vpop.f32.mrf.mxu0
      %v714 = vadd.f32 0.0, %v713
      %v715 = vpop.f32.mrf.mxu0
      %v716 = vpop.f32.mrf.mxu0
      %v717 = vadd.f32 0.0, %v716
      %v718 = vpop.f32.mrf.mxu0
      %719 = vmatprep.mubr.bf16.mxu0 0
      %720 = vmatmul.mubr.bf16.gmra.mxu0 %v677
      %v721 = vpop.f32.mrf.mxu0
      %v722 = vadd.f32 0.0, %v721
      %v723 = vpop.f32.mrf.mxu0
      %v724 = vpop.f32.mrf.mxu0
      %v725 = vadd.f32 0.0, %v724
      %v726 = vpop.f32.mrf.mxu0
      %727 = vdwg.mxu0
      %v728 = vadd.f32 %v648, %v714
      %v729 = vadd.f32 %v651, %v717
      %v730 = vadd.f32 %v656, %v722
      %v731 = vadd.f32 %v659, %v725
      %s732 = scalar_lea.vmem %s1, 416
      %v733 = vld [vmem:[%s732] sm:$0xff]
      %v734 = vld [vmem:[%s732 + $0x8] sm:$0xff]
      %v735 = vld [vmem:[%s732 + $0x10] sm:$0xff]
      %v736 = vld [vmem:[%s732 + $0x18] sm:$0xff]
      %v737 = vpack.c.bf16 %v734, %v733
      %v738 = vpack.c.bf16 %v736, %v735
      %739 = vrot.lane.b32.xlu0 %v461, 96
      %v740 = vpop.permute.xlu0 %739
      %741 = vrot.lane.b32.xlu0 %v470, 96
      %v742 = vpop.permute.xlu0 %741
      %v744 = vsel %vm262, %v740, 0
      %v747 = vsel %vm262, %v742, 0
      %749 = vmatprep.subr.bf16.mxu0 0
      %750 = vmatpush1.bf16.msra.mxu0 0
      %751 = vmatprep.subr.bf16.mxu0 0
      %752 = vmatpush1.bf16.msra.mxu0 0
      %753 = vmatprep.subr.bf16.mxu0 0
      %754 = vmatpush1.bf16.msra.mxu0 0
      %755 = vmatprep.subr.bf16.mxu0 0
      %756 = vmatpush1.bf16.msra.mxu0 0
      %757 = vmatprep.subr.bf16.mxu0 0
      %758 = vmatpush1.bf16.msra.mxu0 0
      %759 = vmatprep.subr.bf16.mxu0 0
      %760 = vmatpush1.bf16.msra.mxu0 0
      %761 = vmatprep.subr.bf16.mxu0 0
      %762 = vmatpush1.bf16.msra.mxu0 %v738
      %763 = vmatprep.subr.bf16.mxu0 0
      %764 = vmatpush1.bf16.msra.mxu0 %v737
      %765 = vmatprep.subr.bf16.mxu0 0
      %766 = vmatpush2.bf16.msra.mxu0 0
      %767 = vmatprep.subr.bf16.mxu0 0
      %768 = vmatpush2.bf16.msra.mxu0 0
      %769 = vmatprep.subr.bf16.mxu0 0
      %770 = vmatpush2.bf16.msra.mxu0 0
      %771 = vmatprep.subr.bf16.mxu0 0
      %772 = vmatpush2.bf16.msra.mxu0 0
      %773 = vmatprep.subr.bf16.mxu0 0
      %774 = vmatpush2.bf16.msra.mxu0 0
      %775 = vmatprep.subr.bf16.mxu0 0
      %776 = vmatpush2.bf16.msra.mxu0 0
      %777 = vmatprep.subr.bf16.mxu0 0
      %778 = vmatpush2.bf16.msra.mxu0 0
      %779 = vmatprep.subr.bf16.mxu0 0
      %780 = vmatpush2.bf16.msra.mxu0 0
      %781 = vmatprep.mubr.bf16.mxu0 0
      %782 = vmatmul.mubr.bf16.gmra.mxu0 %v744
      %v783 = vpop.f32.mrf.mxu0
      %v784 = vadd.f32 0.0, %v783
      %v785 = vpop.f32.mrf.mxu0
      %v786 = vpop.f32.mrf.mxu0
      %v787 = vadd.f32 0.0, %v786
      %v788 = vpop.f32.mrf.mxu0
      %789 = vmatprep.mubr.bf16.mxu0 0
      %790 = vmatmul.mubr.bf16.gmra.mxu0 %v747
      %v791 = vpop.f32.mrf.mxu0
      %v792 = vadd.f32 0.0, %v791
      %v793 = vpop.f32.mrf.mxu0
      %v794 = vpop.f32.mrf.mxu0
      %v795 = vadd.f32 0.0, %v794
      %v796 = vpop.f32.mrf.mxu0
      %797 = vdwg.mxu0
      %v798 = vadd.f32 %v728, %v784
      %v799 = vadd.f32 %v729, %v787
      %v800 = vadd.f32 %v730, %v792
      %v801 = vadd.f32 %v731, %v795
      %s802 = scalar_lea.vmem %s1, 64
      %v803 = vld [vmem:[%s802] sm:$0xff]
      %v804 = vld [vmem:[%s802 + $0x8] sm:$0xff]
      %v805 = vld [vmem:[%s802 + $0x10] sm:$0xff]
      %v806 = vld [vmem:[%s802 + $0x18] sm:$0xff]
      %v807 = vpack.c.bf16 %v804, %v803
      %v808 = vpack.c.bf16 %v806, %v805
      %s809 = scalar_lea.vmem %s1, 192
      %v810 = vld [vmem:[%s809] sm:$0xff]
      %v811 = vld [vmem:[%s809 + $0x8] sm:$0xff]
      %v812 = vld [vmem:[%s809 + $0x10] sm:$0xff]
      %v813 = vld [vmem:[%s809 + $0x18] sm:$0xff]
      %v814 = vpack.c.bf16 %v811, %v810
      %v815 = vpack.c.bf16 %v813, %v812
      %816 = vrot.lane.b32.xlu0 %v258, 64
      %v817 = vpop.permute.xlu0 %816
      %818 = vrot.lane.b32.xlu0 %v261, 64
      %v819 = vpop.permute.xlu0 %818
      %v821 = vsel %vm262, %v817, 0
      %v824 = vsel %vm262, %v819, 0
      %826 = vmatprep.subr.bf16.mxu0 0
      %827 = vmatpush1.bf16.msra.mxu0 0
      %828 = vmatprep.subr.bf16.mxu0 0
      %829 = vmatpush1.bf16.msra.mxu0 0
      %830 = vmatprep.subr.bf16.mxu0 0
      %831 = vmatpush1.bf16.msra.mxu0 0
      %832 = vmatprep.subr.bf16.mxu0 0
      %833 = vmatpush1.bf16.msra.mxu0 0
      %834 = vmatprep.subr.bf16.mxu0 0
      %835 = vmatpush1.bf16.msra.mxu0 0
      %836 = vmatprep.subr.bf16.mxu0 0
      %837 = vmatpush1.bf16.msra.mxu0 0
      %838 = vmatprep.subr.bf16.mxu0 0
      %839 = vmatpush1.bf16.msra.mxu0 %v815
      %840 = vmatprep.subr.bf16.mxu0 0
      %841 = vmatpush1.bf16.msra.mxu0 %v814
      %842 = vmatprep.subr.bf16.mxu0 0
      %843 = vmatpush2.bf16.msra.mxu0 0
      %844 = vmatprep.subr.bf16.mxu0 0
      %845 = vmatpush2.bf16.msra.mxu0 0
      %846 = vmatprep.subr.bf16.mxu0 0
      %847 = vmatpush2.bf16.msra.mxu0 0
      %848 = vmatprep.subr.bf16.mxu0 0
      %849 = vmatpush2.bf16.msra.mxu0 0
      %850 = vmatprep.subr.bf16.mxu0 0
      %851 = vmatpush2.bf16.msra.mxu0 0
      %852 = vmatprep.subr.bf16.mxu0 0
      %853 = vmatpush2.bf16.msra.mxu0 0
      %854 = vmatprep.subr.bf16.mxu0 0
      %855 = vmatpush2.bf16.msra.mxu0 0
      %856 = vmatprep.subr.bf16.mxu0 0
      %857 = vmatpush2.bf16.msra.mxu0 0
      %858 = vmatprep.mubr.bf16.mxu0 0
      %859 = vmatmul.mubr.bf16.gmra.mxu0 %v821
      %v860 = vpop.f32.mrf.mxu0
      %v861 = vadd.f32 0.0, %v860
      %v862 = vpop.f32.mrf.mxu0
      %v863 = vpop.f32.mrf.mxu0
      %v864 = vadd.f32 0.0, %v863
      %v865 = vpop.f32.mrf.mxu0
      %866 = vmatprep.mubr.bf16.mxu0 0
      %867 = vmatmul.mubr.bf16.gmra.mxu0 %v824
      %v868 = vpop.f32.mrf.mxu0
      %v869 = vadd.f32 0.0, %v868
      %v870 = vpop.f32.mrf.mxu0
      %v871 = vpop.f32.mrf.mxu0
      %v872 = vadd.f32 0.0, %v871
      %v873 = vpop.f32.mrf.mxu0
      %874 = vdwg.mxu0
      %875 = vrot.lane.b32.xlu0 %v235, 64
      %v876 = vpop.permute.xlu0 %875
      %877 = vrot.lane.b32.xlu0 %v236, 64
      %v878 = vpop.permute.xlu0 %877
      %v880 = vsel %vm262, %v876, 0
      %v883 = vsel %vm262, %v878, 0
      %885 = vmatprep.subr.bf16.mxu0 0
      %886 = vmatpush1.bf16.msra.mxu0 0
      %887 = vmatprep.subr.bf16.mxu0 0
      %888 = vmatpush1.bf16.msra.mxu0 0
      %889 = vmatprep.subr.bf16.mxu0 0
      %890 = vmatpush1.bf16.msra.mxu0 0
      %891 = vmatprep.subr.bf16.mxu0 0
      %892 = vmatpush1.bf16.msra.mxu0 0
      %893 = vmatprep.subr.bf16.mxu0 0
      %894 = vmatpush1.bf16.msra.mxu0 0
      %895 = vmatprep.subr.bf16.mxu0 0
      %896 = vmatpush1.bf16.msra.mxu0 0
      %897 = vmatprep.subr.bf16.mxu0 0
      %898 = vmatpush1.bf16.msra.mxu0 %v808
      %899 = vmatprep.subr.bf16.mxu0 0
      %900 = vmatpush1.bf16.msra.mxu0 %v807
      %901 = vmatprep.subr.bf16.mxu0 0
      %902 = vmatpush2.bf16.msra.mxu0 0
      %903 = vmatprep.subr.bf16.mxu0 0
      %904 = vmatpush2.bf16.msra.mxu0 0
      %905 = vmatprep.subr.bf16.mxu0 0
      %906 = vmatpush2.bf16.msra.mxu0 0
      %907 = vmatprep.subr.bf16.mxu0 0
      %908 = vmatpush2.bf16.msra.mxu0 0
      %909 = vmatprep.subr.bf16.mxu0 0
      %910 = vmatpush2.bf16.msra.mxu0 0
      %911 = vmatprep.subr.bf16.mxu0 0
      %912 = vmatpush2.bf16.msra.mxu0 0
      %913 = vmatprep.subr.bf16.mxu0 0
      %914 = vmatpush2.bf16.msra.mxu0 0
      %915 = vmatprep.subr.bf16.mxu0 0
      %916 = vmatpush2.bf16.msra.mxu0 0
      %917 = vmatprep.mubr.bf16.mxu0 0
      %918 = vmatmul.mubr.bf16.gmra.mxu0 %v880
      %v919 = vpop.f32.mrf.mxu0
      %v920 = vadd.f32 %v861, %v919
      %v921 = vpop.f32.mrf.mxu0
      %v922 = vpop.f32.mrf.mxu0
      %v923 = vadd.f32 %v864, %v922
      %v924 = vpop.f32.mrf.mxu0
      %925 = vmatprep.mubr.bf16.mxu0 0
      %926 = vmatmul.mubr.bf16.gmra.mxu0 %v883
      %v927 = vpop.f32.mrf.mxu0
      %v928 = vadd.f32 %v869, %v927
      %v929 = vpop.f32.mrf.mxu0
      %v930 = vpop.f32.mrf.mxu0
      %v931 = vadd.f32 %v872, %v930
      %v932 = vpop.f32.mrf.mxu0
      %933 = vdwg.mxu0
      %s934 = scalar_lea.vmem %s1, 320
      %v935 = vld [vmem:[%s934] sm:$0xff]
      %v936 = vld [vmem:[%s934 + $0x8] sm:$0xff]
      %v937 = vld [vmem:[%s934 + $0x10] sm:$0xff]
      %v938 = vld [vmem:[%s934 + $0x18] sm:$0xff]
      %v939 = vpack.c.bf16 %v936, %v935
      %v940 = vpack.c.bf16 %v938, %v937
      %941 = vrot.lane.b32.xlu0 %v385, 64
      %v942 = vpop.permute.xlu0 %941
      %943 = vrot.lane.b32.xlu0 %v387, 64
      %v944 = vpop.permute.xlu0 %943
      %v946 = vsel %vm262, %v942, 0
      %v949 = vsel %vm262, %v944, 0
      %951 = vmatprep.subr.bf16.mxu0 0
      %952 = vmatpush1.bf16.msra.mxu0 0
      %953 = vmatprep.subr.bf16.mxu0 0
      %954 = vmatpush1.bf16.msra.mxu0 0
      %955 = vmatprep.subr.bf16.mxu0 0
      %956 = vmatpush1.bf16.msra.mxu0 0
      %957 = vmatprep.subr.bf16.mxu0 0
      %958 = vmatpush1.bf16.msra.mxu0 0
      %959 = vmatprep.subr.bf16.mxu0 0
      %960 = vmatpush1.bf16.msra.mxu0 0
      %961 = vmatprep.subr.bf16.mxu0 0
      %962 = vmatpush1.bf16.msra.mxu0 0
      %963 = vmatprep.subr.bf16.mxu0 0
      %964 = vmatpush1.bf16.msra.mxu0 %v940
      %965 = vmatprep.subr.bf16.mxu0 0
      %966 = vmatpush1.bf16.msra.mxu0 %v939
      %967 = vmatprep.subr.bf16.mxu0 0
      %968 = vmatpush2.bf16.msra.mxu0 0
      %969 = vmatprep.subr.bf16.mxu0 0
      %970 = vmatpush2.bf16.msra.mxu0 0
      %971 = vmatprep.subr.bf16.mxu0 0
      %972 = vmatpush2.bf16.msra.mxu0 0
      %973 = vmatprep.subr.bf16.mxu0 0
      %974 = vmatpush2.bf16.msra.mxu0 0
      %975 = vmatprep.subr.bf16.mxu0 0
      %976 = vmatpush2.bf16.msra.mxu0 0
      %977 = vmatprep.subr.bf16.mxu0 0
      %978 = vmatpush2.bf16.msra.mxu0 0
      %979 = vmatprep.subr.bf16.mxu0 0
      %980 = vmatpush2.bf16.msra.mxu0 0
      %981 = vmatprep.subr.bf16.mxu0 0
      %982 = vmatpush2.bf16.msra.mxu0 0
      %983 = vmatprep.mubr.bf16.mxu0 0
      %984 = vmatmul.mubr.bf16.gmra.mxu0 %v946
      %v985 = vpop.f32.mrf.mxu0
      %v986 = vadd.f32 0.0, %v985
      %v987 = vpop.f32.mrf.mxu0
      %v988 = vpop.f32.mrf.mxu0
      %v989 = vadd.f32 0.0, %v988
      %v990 = vpop.f32.mrf.mxu0
      %991 = vmatprep.mubr.bf16.mxu0 0
      %992 = vmatmul.mubr.bf16.gmra.mxu0 %v949
      %v993 = vpop.f32.mrf.mxu0
      %v994 = vadd.f32 0.0, %v993
      %v995 = vpop.f32.mrf.mxu0
      %v996 = vpop.f32.mrf.mxu0
      %v997 = vadd.f32 0.0, %v996
      %v998 = vpop.f32.mrf.mxu0
      %999 = vdwg.mxu0
      %v1000 = vadd.f32 %v920, %v986
      %v1001 = vadd.f32 %v923, %v989
      %v1002 = vadd.f32 %v928, %v994
      %v1003 = vadd.f32 %v931, %v997
      %s1004 = scalar_lea.vmem %s1, 448
      %v1005 = vld [vmem:[%s1004] sm:$0xff]
      %v1006 = vld [vmem:[%s1004 + $0x8] sm:$0xff]
      %v1007 = vld [vmem:[%s1004 + $0x10] sm:$0xff]
      %v1008 = vld [vmem:[%s1004 + $0x18] sm:$0xff]
      %v1009 = vpack.c.bf16 %v1006, %v1005
      %v1010 = vpack.c.bf16 %v1008, %v1007
      %1011 = vrot.lane.b32.xlu0 %v461, 64
      %v1012 = vpop.permute.xlu0 %1011
      %1013 = vrot.lane.b32.xlu0 %v470, 64
      %v1014 = vpop.permute.xlu0 %1013
      %v1016 = vsel %vm262, %v1012, 0
      %v1019 = vsel %vm262, %v1014, 0
      %1021 = vmatprep.subr.bf16.mxu0 0
      %1022 = vmatpush1.bf16.msra.mxu0 0
      %1023 = vmatprep.subr.bf16.mxu0 0
      %1024 = vmatpush1.bf16.msra.mxu0 0
      %1025 = vmatprep.subr.bf16.mxu0 0
      %1026 = vmatpush1.bf16.msra.mxu0 0
      %1027 = vmatprep.subr.bf16.mxu0 0
      %1028 = vmatpush1.bf16.msra.mxu0 0
      %1029 = vmatprep.subr.bf16.mxu0 0
      %1030 = vmatpush1.bf16.msra.mxu0 0
      %1031 = vmatprep.subr.bf16.mxu0 0
      %1032 = vmatpush1.bf16.msra.mxu0 0
      %1033 = vmatprep.subr.bf16.mxu0 0
      %1034 = vmatpush1.bf16.msra.mxu0 %v1010
      %1035 = vmatprep.subr.bf16.mxu0 0
      %1036 = vmatpush1.bf16.msra.mxu0 %v1009
      %1037 = vmatprep.subr.bf16.mxu0 0
      %1038 = vmatpush2.bf16.msra.mxu0 0
      %1039 = vmatprep.subr.bf16.mxu0 0
      %1040 = vmatpush2.bf16.msra.mxu0 0
      %1041 = vmatprep.subr.bf16.mxu0 0
      %1042 = vmatpush2.bf16.msra.mxu0 0
      %1043 = vmatprep.subr.bf16.mxu0 0
      %1044 = vmatpush2.bf16.msra.mxu0 0
      %1045 = vmatprep.subr.bf16.mxu0 0
      %1046 = vmatpush2.bf16.msra.mxu0 0
      %1047 = vmatprep.subr.bf16.mxu0 0
      %1048 = vmatpush2.bf16.msra.mxu0 0
      %1049 = vmatprep.subr.bf16.mxu0 0
      %1050 = vmatpush2.bf16.msra.mxu0 0
      %1051 = vmatprep.subr.bf16.mxu0 0
      %1052 = vmatpush2.bf16.msra.mxu0 0
      %1053 = vmatprep.mubr.bf16.mxu0 0
      %1054 = vmatmul.mubr.bf16.gmra.mxu0 %v1016
      %v1055 = vpop.f32.mrf.mxu0
      %v1056 = vadd.f32 0.0, %v1055
      %v1057 = vpop.f32.mrf.mxu0
      %v1058 = vpop.f32.mrf.mxu0
      %v1059 = vadd.f32 0.0, %v1058
      %v1060 = vpop.f32.mrf.mxu0
      %1061 = vmatprep.mubr.bf16.mxu0 0
      %1062 = vmatmul.mubr.bf16.gmra.mxu0 %v1019
      %v1063 = vpop.f32.mrf.mxu0
      %v1064 = vadd.f32 0.0, %v1063
      %v1065 = vpop.f32.mrf.mxu0
      %v1066 = vpop.f32.mrf.mxu0
      %v1067 = vadd.f32 0.0, %v1066
      %v1068 = vpop.f32.mrf.mxu0
      %1069 = vdwg.mxu0
      %v1070 = vadd.f32 %v1000, %v1056
      %v1071 = vadd.f32 %v1001, %v1059
      %v1072 = vadd.f32 %v1002, %v1064
      %v1073 = vadd.f32 %v1003, %v1067
      %s1074 = scalar_lea.vmem %s1, 96
      %v1075 = vld [vmem:[%s1074] sm:$0xff]
      %v1076 = vld [vmem:[%s1074 + $0x8] sm:$0xff]
      %v1077 = vld [vmem:[%s1074 + $0x10] sm:$0xff]
      %v1078 = vld [vmem:[%s1074 + $0x18] sm:$0xff]
      %v1079 = vpack.c.bf16 %v1076, %v1075
      %v1080 = vpack.c.bf16 %v1078, %v1077
      %s1081 = scalar_lea.vmem %s1, 224
      %v1082 = vld [vmem:[%s1081] sm:$0xff]
      %v1083 = vld [vmem:[%s1081 + $0x8] sm:$0xff]
      %v1084 = vld [vmem:[%s1081 + $0x10] sm:$0xff]
      %v1085 = vld [vmem:[%s1081 + $0x18] sm:$0xff]
      %v1086 = vpack.c.bf16 %v1083, %v1082
      %v1087 = vpack.c.bf16 %v1085, %v1084
      %1088 = vrot.lane.b32.xlu0 %v258, 32
      %v1089 = vpop.permute.xlu0 %1088
      %1090 = vrot.lane.b32.xlu0 %v261, 32
      %v1091 = vpop.permute.xlu0 %1090
      %v1093 = vsel %vm262, %v1089, 0
      %v1096 = vsel %vm262, %v1091, 0
      %1098 = vmatprep.subr.bf16.mxu0 0
      %1099 = vmatpush1.bf16.msra.mxu0 0
      %1100 = vmatprep.subr.bf16.mxu0 0
      %1101 = vmatpush1.bf16.msra.mxu0 0
      %1102 = vmatprep.subr.bf16.mxu0 0
      %1103 = vmatpush1.bf16.msra.mxu0 0
      %1104 = vmatprep.subr.bf16.mxu0 0
      %1105 = vmatpush1.bf16.msra.mxu0 0
      %1106 = vmatprep.subr.bf16.mxu0 0
      %1107 = vmatpush1.bf16.msra.mxu0 0
      %1108 = vmatprep.subr.bf16.mxu0 0
      %1109 = vmatpush1.bf16.msra.mxu0 0
      %1110 = vmatprep.subr.bf16.mxu0 0
      %1111 = vmatpush1.bf16.msra.mxu0 %v1087
      %1112 = vmatprep.subr.bf16.mxu0 0
      %1113 = vmatpush1.bf16.msra.mxu0 %v1086
      %1114 = vmatprep.subr.bf16.mxu0 0
      %1115 = vmatpush2.bf16.msra.mxu0 0
      %1116 = vmatprep.subr.bf16.mxu0 0
      %1117 = vmatpush2.bf16.msra.mxu0 0
      %1118 = vmatprep.subr.bf16.mxu0 0
      %1119 = vmatpush2.bf16.msra.mxu0 0
      %1120 = vmatprep.subr.bf16.mxu0 0
      %1121 = vmatpush2.bf16.msra.mxu0 0
      %1122 = vmatprep.subr.bf16.mxu0 0
      %1123 = vmatpush2.bf16.msra.mxu0 0
      %1124 = vmatprep.subr.bf16.mxu0 0
      %1125 = vmatpush2.bf16.msra.mxu0 0
      %1126 = vmatprep.subr.bf16.mxu0 0
      %1127 = vmatpush2.bf16.msra.mxu0 0
      %1128 = vmatprep.subr.bf16.mxu0 0
      %1129 = vmatpush2.bf16.msra.mxu0 0
      %1130 = vmatprep.mubr.bf16.mxu0 0
      %1131 = vmatmul.mubr.bf16.gmra.mxu0 %v1093
      %v1132 = vpop.f32.mrf.mxu0
      %v1133 = vadd.f32 0.0, %v1132
      %v1134 = vpop.f32.mrf.mxu0
      %v1135 = vpop.f32.mrf.mxu0
      %v1136 = vadd.f32 0.0, %v1135
      %v1137 = vpop.f32.mrf.mxu0
      %1138 = vmatprep.mubr.bf16.mxu0 0
      %1139 = vmatmul.mubr.bf16.gmra.mxu0 %v1096
      %v1140 = vpop.f32.mrf.mxu0
      %v1141 = vadd.f32 0.0, %v1140
      %v1142 = vpop.f32.mrf.mxu0
      %v1143 = vpop.f32.mrf.mxu0
      %v1144 = vadd.f32 0.0, %v1143
      %v1145 = vpop.f32.mrf.mxu0
      %1146 = vdwg.mxu0
      %1147 = vrot.lane.b32.xlu0 %v235, 32
      %v1148 = vpop.permute.xlu0 %1147
      %1149 = vrot.lane.b32.xlu0 %v236, 32
      %v1150 = vpop.permute.xlu0 %1149
      %v1152 = vsel %vm262, %v1148, 0
      %v1155 = vsel %vm262, %v1150, 0
      %1157 = vmatprep.subr.bf16.mxu0 0
      %1158 = vmatpush1.bf16.msra.mxu0 0
      %1159 = vmatprep.subr.bf16.mxu0 0
      %1160 = vmatpush1.bf16.msra.mxu0 0
      %1161 = vmatprep.subr.bf16.mxu0 0
      %1162 = vmatpush1.bf16.msra.mxu0 0
      %1163 = vmatprep.subr.bf16.mxu0 0
      %1164 = vmatpush1.bf16.msra.mxu0 0
      %1165 = vmatprep.subr.bf16.mxu0 0
      %1166 = vmatpush1.bf16.msra.mxu0 0
      %1167 = vmatprep.subr.bf16.mxu0 0
      %1168 = vmatpush1.bf16.msra.mxu0 0
      %1169 = vmatprep.subr.bf16.mxu0 0
      %1170 = vmatpush1.bf16.msra.mxu0 %v1080
      %1171 = vmatprep.subr.bf16.mxu0 0
      %1172 = vmatpush1.bf16.msra.mxu0 %v1079
      %1173 = vmatprep.subr.bf16.mxu0 0
      %1174 = vmatpush2.bf16.msra.mxu0 0
      %1175 = vmatprep.subr.bf16.mxu0 0
      %1176 = vmatpush2.bf16.msra.mxu0 0
      %1177 = vmatprep.subr.bf16.mxu0 0
      %1178 = vmatpush2.bf16.msra.mxu0 0
      %1179 = vmatprep.subr.bf16.mxu0 0
      %1180 = vmatpush2.bf16.msra.mxu0 0
      %1181 = vmatprep.subr.bf16.mxu0 0
      %1182 = vmatpush2.bf16.msra.mxu0 0
      %1183 = vmatprep.subr.bf16.mxu0 0
      %1184 = vmatpush2.bf16.msra.mxu0 0
      %1185 = vmatprep.subr.bf16.mxu0 0
      %1186 = vmatpush2.bf16.msra.mxu0 0
      %1187 = vmatprep.subr.bf16.mxu0 0
      %1188 = vmatpush2.bf16.msra.mxu0 0
      %1189 = vmatprep.mubr.bf16.mxu0 0
      %1190 = vmatmul.mubr.bf16.gmra.mxu0 %v1152
      %v1191 = vpop.f32.mrf.mxu0
      %v1192 = vadd.f32 %v1133, %v1191
      %v1193 = vpop.f32.mrf.mxu0
      %v1194 = vpop.f32.mrf.mxu0
      %v1195 = vadd.f32 %v1136, %v1194
      %v1196 = vpop.f32.mrf.mxu0
      %1197 = vmatprep.mubr.bf16.mxu0 0
      %1198 = vmatmul.mubr.bf16.gmra.mxu0 %v1155
      %v1199 = vpop.f32.mrf.mxu0
      %v1200 = vadd.f32 %v1141, %v1199
      %v1201 = vpop.f32.mrf.mxu0
      %v1202 = vpop.f32.mrf.mxu0
      %v1203 = vadd.f32 %v1144, %v1202
      %v1204 = vpop.f32.mrf.mxu0
      %1205 = vdwg.mxu0
      %s1206 = scalar_lea.vmem %s1, 352
      %v1207 = vld [vmem:[%s1206] sm:$0xff]
      %v1208 = vld [vmem:[%s1206 + $0x8] sm:$0xff]
      %v1209 = vld [vmem:[%s1206 + $0x10] sm:$0xff]
      %v1210 = vld [vmem:[%s1206 + $0x18] sm:$0xff]
      %v1211 = vpack.c.bf16 %v1208, %v1207
      %v1212 = vpack.c.bf16 %v1210, %v1209
      %1213 = vrot.lane.b32.xlu0 %v385, 32
      %v1214 = vpop.permute.xlu0 %1213
      %1215 = vrot.lane.b32.xlu0 %v387, 32
      %v1216 = vpop.permute.xlu0 %1215
      %v1218 = vsel %vm262, %v1214, 0
      %v1221 = vsel %vm262, %v1216, 0
      %1223 = vmatprep.subr.bf16.mxu0 0
      %1224 = vmatpush1.bf16.msra.mxu0 0
      %1225 = vmatprep.subr.bf16.mxu0 0
      %1226 = vmatpush1.bf16.msra.mxu0 0
      %1227 = vmatprep.subr.bf16.mxu0 0
      %1228 = vmatpush1.bf16.msra.mxu0 0
      %1229 = vmatprep.subr.bf16.mxu0 0
      %1230 = vmatpush1.bf16.msra.mxu0 0
      %1231 = vmatprep.subr.bf16.mxu0 0
      %1232 = vmatpush1.bf16.msra.mxu0 0
      %1233 = vmatprep.subr.bf16.mxu0 0
      %1234 = vmatpush1.bf16.msra.mxu0 0
      %1235 = vmatprep.subr.bf16.mxu0 0
      %1236 = vmatpush1.bf16.msra.mxu0 %v1212
      %1237 = vmatprep.subr.bf16.mxu0 0
      %1238 = vmatpush1.bf16.msra.mxu0 %v1211
      %1239 = vmatprep.subr.bf16.mxu0 0
      %1240 = vmatpush2.bf16.msra.mxu0 0
      %1241 = vmatprep.subr.bf16.mxu0 0
      %1242 = vmatpush2.bf16.msra.mxu0 0
      %1243 = vmatprep.subr.bf16.mxu0 0
      %1244 = vmatpush2.bf16.msra.mxu0 0
      %1245 = vmatprep.subr.bf16.mxu0 0
      %1246 = vmatpush2.bf16.msra.mxu0 0
      %1247 = vmatprep.subr.bf16.mxu0 0
      %1248 = vmatpush2.bf16.msra.mxu0 0
      %1249 = vmatprep.subr.bf16.mxu0 0
      %1250 = vmatpush2.bf16.msra.mxu0 0
      %1251 = vmatprep.subr.bf16.mxu0 0
      %1252 = vmatpush2.bf16.msra.mxu0 0
      %1253 = vmatprep.subr.bf16.mxu0 0
      %1254 = vmatpush2.bf16.msra.mxu0 0
      %1255 = vmatprep.mubr.bf16.mxu0 0
      %1256 = vmatmul.mubr.bf16.gmra.mxu0 %v1218
      %v1257 = vpop.f32.mrf.mxu0
      %v1258 = vadd.f32 0.0, %v1257
      %v1259 = vpop.f32.mrf.mxu0
      %v1260 = vpop.f32.mrf.mxu0
      %v1261 = vadd.f32 0.0, %v1260
      %v1262 = vpop.f32.mrf.mxu0
      %1263 = vmatprep.mubr.bf16.mxu0 0
      %1264 = vmatmul.mubr.bf16.gmra.mxu0 %v1221
      %v1265 = vpop.f32.mrf.mxu0
      %v1266 = vadd.f32 0.0, %v1265
      %v1267 = vpop.f32.mrf.mxu0
      %v1268 = vpop.f32.mrf.mxu0
      %v1269 = vadd.f32 0.0, %v1268
      %v1270 = vpop.f32.mrf.mxu0
      %1271 = vdwg.mxu0
      %v1272 = vadd.f32 %v1192, %v1258
      %v1273 = vadd.f32 %v1195, %v1261
      %v1274 = vadd.f32 %v1200, %v1266
      %v1275 = vadd.f32 %v1203, %v1269
      %s1276 = scalar_lea.vmem %s1, 480
      %v1277 = vld [vmem:[%s1276] sm:$0xff]
      %v1278 = vld [vmem:[%s1276 + $0x8] sm:$0xff]
      %v1279 = vld [vmem:[%s1276 + $0x10] sm:$0xff]
      %v1280 = vld [vmem:[%s1276 + $0x18] sm:$0xff]
      %v1281 = vpack.c.bf16 %v1278, %v1277
      %v1282 = vpack.c.bf16 %v1280, %v1279
      %1283 = vrot.lane.b32.xlu0 %v461, 32
      %v1284 = vpop.permute.xlu0 %1283
      %1285 = vrot.lane.b32.xlu0 %v470, 32
      %v1286 = vpop.permute.xlu0 %1285
      %v1288 = vsel %vm262, %v1284, 0
      %v1291 = vsel %vm262, %v1286, 0
      %1293 = vmatprep.subr.bf16.mxu0 0
      %1294 = vmatpush1.bf16.msra.mxu0 0
      %1295 = vmatprep.subr.bf16.mxu0 0
      %1296 = vmatpush1.bf16.msra.mxu0 0
      %1297 = vmatprep.subr.bf16.mxu0 0
      %1298 = vmatpush1.bf16.msra.mxu0 0
      %1299 = vmatprep.subr.bf16.mxu0 0
      %1300 = vmatpush1.bf16.msra.mxu0 0
      %1301 = vmatprep.subr.bf16.mxu0 0
      %1302 = vmatpush1.bf16.msra.mxu0 0
      %1303 = vmatprep.subr.bf16.mxu0 0
      %1304 = vmatpush1.bf16.msra.mxu0 0
      %1305 = vmatprep.subr.bf16.mxu0 0
      %1306 = vmatpush1.bf16.msra.mxu0 %v1282
      %1307 = vmatprep.subr.bf16.mxu0 0
      %1308 = vmatpush1.bf16.msra.mxu0 %v1281
      %1309 = vmatprep.subr.bf16.mxu0 0
      %1310 = vmatpush2.bf16.msra.mxu0 0
      %1311 = vmatprep.subr.bf16.mxu0 0
      %1312 = vmatpush2.bf16.msra.mxu0 0
      %1313 = vmatprep.subr.bf16.mxu0 0
      %1314 = vmatpush2.bf16.msra.mxu0 0
      %1315 = vmatprep.subr.bf16.mxu0 0
      %1316 = vmatpush2.bf16.msra.mxu0 0
      %1317 = vmatprep.subr.bf16.mxu0 0
      %1318 = vmatpush2.bf16.msra.mxu0 0
      %1319 = vmatprep.subr.bf16.mxu0 0
      %1320 = vmatpush2.bf16.msra.mxu0 0
      %1321 = vmatprep.subr.bf16.mxu0 0
      %1322 = vmatpush2.bf16.msra.mxu0 0
      %1323 = vmatprep.subr.bf16.mxu0 0
      %1324 = vmatpush2.bf16.msra.mxu0 0
      %1325 = vmatprep.mubr.bf16.mxu0 0
      %1326 = vmatmul.mubr.bf16.gmra.mxu0 %v1288
      %v1327 = vpop.f32.mrf.mxu0
      %v1328 = vadd.f32 0.0, %v1327
      %v1329 = vpop.f32.mrf.mxu0
      %v1330 = vpop.f32.mrf.mxu0
      %v1331 = vadd.f32 0.0, %v1330
      %v1332 = vpop.f32.mrf.mxu0
      %1333 = vmatprep.mubr.bf16.mxu0 0
      %1334 = vmatmul.mubr.bf16.gmra.mxu0 %v1291
      %v1335 = vpop.f32.mrf.mxu0
      %v1336 = vadd.f32 0.0, %v1335
      %v1337 = vpop.f32.mrf.mxu0
      %v1338 = vpop.f32.mrf.mxu0
      %v1339 = vadd.f32 0.0, %v1338
      %v1340 = vpop.f32.mrf.mxu0
      %1341 = vdwg.mxu0
      %v1342 = vadd.f32 %v1272, %v1328
      %v1343 = vadd.f32 %v1273, %v1331
      %v1344 = vadd.f32 %v1274, %v1336
      %v1345 = vadd.f32 %v1275, %v1339
      %1350 = vrot.lane.b32.xlu0 %v798, 32
      %v1351 = vpop.permute.xlu0 %1350
      %1352 = vrot.lane.b32.xlu0 %v799, 32
      %v1353 = vpop.permute.xlu0 %1352
      %1354 = vrot.lane.b32.xlu0 %v800, 32
      %v1355 = vpop.permute.xlu0 %1354
      %1356 = vrot.lane.b32.xlu0 %v801, 32
      %v1357 = vpop.permute.xlu0 %1356
      %1366 = vrot.lane.b32.xlu0 %v1070, 64
      %v1367 = vpop.permute.xlu0 %1366
      %1368 = vrot.lane.b32.xlu0 %v1071, 64
      %v1369 = vpop.permute.xlu0 %1368
      %1370 = vrot.lane.b32.xlu0 %v1072, 64
      %v1371 = vpop.permute.xlu0 %1370
      %1372 = vrot.lane.b32.xlu0 %v1073, 64
      %v1373 = vpop.permute.xlu0 %1372
      %1382 = vrot.lane.b32.xlu0 %v1342, 96
      %v1383 = vpop.permute.xlu0 %1382
      %1384 = vrot.lane.b32.xlu0 %v1343, 96
      %v1385 = vpop.permute.xlu0 %1384
      %1386 = vrot.lane.b32.xlu0 %v1344, 96
      %v1387 = vpop.permute.xlu0 %1386
      %1388 = vrot.lane.b32.xlu0 %v1345, 96
      %v1389 = vpop.permute.xlu0 %1388
      %v1394 = vsel %vm262, %v526, %v1351
      %v1395 = vsel %vm262, %v527, %v1353
      %v1396 = vsel %vm262, %v528, %v1355
      %v1397 = vsel %vm262, %v529, %v1357
      %vm1398 = vcmask 523264
      %v1399 = vsel %vm1398, %v1394, %v1367
      %v1400 = vsel %vm1398, %v1395, %v1369
      %v1401 = vsel %vm1398, %v1396, %v1371
      %v1402 = vsel %vm1398, %v1397, %v1373
      %vm1403 = vcmask 785408
      %v1404 = vsel %vm1403, %v1399, %v1383
      %v1405 = vsel %vm1403, %v1400, %v1385
      %v1406 = vsel %vm1403, %v1401, %v1387
      %v1407 = vsel %vm1403, %v1402, %v1389
      %v1408 = vld [vmem:[%s2] sm:$0x1]
      %v1410 = vlaneseq
      %v1411 = vshrl.u32 %v1410, 7
      %v1412 = vsub.s32 0, %v1411
      %v1413 = vrot.slane %v1408, %v1412
      %v1415 = vadd.f32 %v1404, %v1413
      %v1416 = vadd.f32 %v1405, %v1413
      %v1417 = vadd.f32 %v1406, %v1413
      %v1418 = vadd.f32 %v1407, %v1413
      %v1419 = vmul.f32 %v1415, %v1415
      %v1420 = vmul.f32 %v1416, %v1416
      %v1421 = vmul.f32 %v1417, %v1417
      %v1422 = vmul.f32 %v1418, %v1418
      %v1423 = vmul.f32 %v1415, %v1419
      %v1424 = vmul.f32 %v1416, %v1420
      %v1425 = vmul.f32 %v1417, %v1421
      %v1426 = vmul.f32 %v1418, %v1422
      %v1427 = vmul.f32 %v1423, 0.044715
      %v1428 = vmul.f32 %v1424, 0.044715
      %v1429 = vmul.f32 %v1425, 0.044715
      %v1430 = vmul.f32 %v1426, 0.044715
      %v1431 = vadd.f32 %v1415, %v1427
      %v1432 = vadd.f32 %v1416, %v1428
      %v1433 = vadd.f32 %v1417, %v1429
      %v1434 = vadd.f32 %v1418, %v1430
      %v1435 = vmul.f32 %v1431, 0.7978846
      %v1436 = vmul.f32 %v1432, 0.7978846
      %v1437 = vmul.f32 %v1433, 0.7978846
      %v1438 = vmul.f32 %v1434, 0.7978846
      %v1439 = vtanh.pop %v1435
      %v1440 = vtanh.pop %v1436
      %v1441 = vtanh.pop %v1437
      %v1442 = vtanh.pop %v1438
      %v1443 = vadd.f32 %v1439, 1.0
      %v1444 = vadd.f32 %v1440, 1.0
      %v1445 = vadd.f32 %v1441, 1.0
      %v1446 = vadd.f32 %v1442, 1.0
      %v1447 = vmul.f32 %v1443, 0.5
      %v1448 = vmul.f32 %v1444, 0.5
      %v1449 = vmul.f32 %v1445, 0.5
      %v1450 = vmul.f32 %v1446, 0.5
      %v1451 = vmul.f32 %v1415, %v1447
      %v1452 = vmul.f32 %v1416, %v1448
      %v1453 = vmul.f32 %v1417, %v1449
      %v1454 = vmul.f32 %v1418, %v1450
      %vm1459 = vcmask 1041408
      %v1460 = vrot.slane %v1451, 6
      %v1461 = vrot.slane %v1452, 6
      %v1462 = vsel %vm1459, %v1460, %v1461
      %v1463 = vrot.slane %v1453, 6
      %v1464 = vsel %vm1459, %v1461, %v1463
      %v1465 = vrot.slane %v1454, 6
      %v1466 = vsel %vm1459, %v1463, %v1465
      %v1472 = vadd.f32 %v226, %v1460
      %v1473 = vadd.f32 %v227, %v1462
      %v1474 = vadd.f32 %v228, %v1464
      %v1475 = vadd.f32 %v229, %v1466
      %v1476 = vadd.f32 %v230, %v1465
      %v1477 = vld [vmem:[%s3] sm:$0x1]
      %v1478 = vld [vmem:[%s4] sm:$0x1]
      %vm1479 = vcmask 1047554
      %v1480 = vsel %vm1479, %v1472, 0.0
      %1481 = vadd.xlane.f32.xlu0 %v1480
      %v1482 = vpop.xlane.xlu0 %1481
      %1483 = vadd.xlane.f32.xlu0 %v1473
      %v1484 = vpop.xlane.xlu0 %1483
      %1485 = vadd.xlane.f32.xlu0 %v1474
      %v1486 = vpop.xlane.xlu0 %1485
      %1487 = vadd.xlane.f32.xlu0 %v1475
      %v1488 = vpop.xlane.xlu0 %1487
      %vm1489 = vcmask 1040384
      %v1490 = vsel %vm1489, %v1476, 0.0
      %1491 = vadd.xlane.f32.xlu0 %v1490
      %v1492 = vpop.xlane.xlu0 %1491
      %v1493 = vrcp.pop 128.0
      %v1494 = vmul.f32 %v1482, %v1493
      %v1495 = vmul.f32 %v1484, %v1493
      %v1496 = vmul.f32 %v1486, %v1493
      %v1497 = vmul.f32 %v1488, %v1493
      %v1498 = vmul.f32 %v1492, %v1493
      %v1499 = vsub.f32 %v1472, %v1494
      %v1500 = vsub.f32 %v1473, %v1495
      %v1501 = vsub.f32 %v1474, %v1496
      %v1502 = vsub.f32 %v1475, %v1497
      %v1503 = vsub.f32 %v1476, %v1498
      %v1504 = vmul.f32 %v1499, %v1499
      %v1505 = vmul.f32 %v1500, %v1500
      %v1506 = vmul.f32 %v1501, %v1501
      %v1507 = vmul.f32 %v1502, %v1502
      %v1508 = vmul.f32 %v1503, %v1503
      %v1509 = vsel %vm1479, %v1504, 0.0
      %1510 = vadd.xlane.f32.xlu0 %v1509
      %v1511 = vpop.xlane.xlu0 %1510
      %1512 = vadd.xlane.f32.xlu0 %v1505
      %v1513 = vpop.xlane.xlu0 %1512
      %1514 = vadd.xlane.f32.xlu0 %v1506
      %v1515 = vpop.xlane.xlu0 %1514
      %1516 = vadd.xlane.f32.xlu0 %v1507
      %v1517 = vpop.xlane.xlu0 %1516
      %v1518 = vsel %vm1489, %v1508, 0.0
      %1519 = vadd.xlane.f32.xlu0 %v1518
      %v1520 = vpop.xlane.xlu0 %1519
      %v1521 = vmul.f32 %v1511, %v1493
      %v1522 = vmul.f32 %v1513, %v1493
      %v1523 = vmul.f32 %v1515, %v1493
      %v1524 = vmul.f32 %v1517, %v1493
      %v1525 = vmul.f32 %v1520, %v1493
      %v1526 = vadd.f32 %v1521, 1e-05
      %v1527 = vadd.f32 %v1522, 1e-05
      %v1528 = vadd.f32 %v1523, 1e-05
      %v1529 = vadd.f32 %v1524, 1e-05
      %v1530 = vadd.f32 %v1525, 1e-05
      %v1531 = vrsqrt.pop %v1526
      %v1532 = vrsqrt.pop %v1527
      %v1533 = vrsqrt.pop %v1528
      %v1534 = vrsqrt.pop %v1529
      %v1535 = vrsqrt.pop %v1530
      %v1536 = vmul.f32 %v1499, %v1531
      %v1537 = vmul.f32 %v1500, %v1532
      %v1538 = vmul.f32 %v1501, %v1533
      %v1539 = vmul.f32 %v1502, %v1534
      %v1540 = vmul.f32 %v1503, %v1535
      %v1542 = vlaneseq
      %v1543 = vshrl.u32 %v1542, 7
      %v1544 = vsub.s32 0, %v1543
      %v1545 = vrot.slane %v1477, %v1544
      %v1547 = vmul.f32 %v1536, %v1545
      %v1548 = vmul.f32 %v1537, %v1545
      %v1549 = vmul.f32 %v1538, %v1545
      %v1550 = vmul.f32 %v1539, %v1545
      %v1551 = vmul.f32 %v1540, %v1545
      %v1553 = vlaneseq
      %v1554 = vshrl.u32 %v1553, 7
      %v1555 = vsub.s32 0, %v1554
      %v1556 = vrot.slane %v1478, %v1555
      %v1558 = vadd.f32 %v1547, %v1556
      %v1559 = vadd.f32 %v1548, %v1556
      %v1560 = vadd.f32 %v1549, %v1556
      %v1561 = vadd.f32 %v1550, %v1556
      %v1562 = vadd.f32 %v1551, %v1556
      %1563 = vst [vmem:[%s224 - $0x2] sm:$0xfc] %v1558
      %1564 = vst [vmem:[%s224 + $0x6] sm:$0xff] %v1559
      %1565 = vst [vmem:[%s224 + $0xe] sm:$0xff] %v1560
      %1566 = vst [vmem:[%s224 + $0x16] sm:$0xff] %v1561
      %1567 = vst [vmem:[%s224 + $0x1e] sm:$0x1] %v1562
      %p1568 = scmp.lt.s32.totalorder %s16, 1
      %s1569 = scalar_select %p1568, %s16, 1
      %s1570 = smul.addr %s1569, 4
      %s1571 = smul.addr %s1570, 8
      %s1572 = scalar_lea.vmem %s5, %s1571
      // Predicated region
      $region41: #{wav2vec2_forward.7} parent=39 // pred_check
        %p1573 = pneg %p144
      $region42: #{wav2vec2_forward.7} parent=39 // pred_check_branch
        %1575 = sbr.rel (%p1573) target = $region44
      $region43: #{wav2vec2_forward.7} parent=39 // pred_region
        _
      $region44: #{wav2vec2_forward.7} parent=39 // pred_fallthru
        _
    $region40: #{wav2vec2_forward.7} parent=5 // pred_fallthru
      _
    %p1576 = scmp.le.s32.totalorder 2, %s11
    // Predicated region
    $region45: #{wav2vec2_forward.7} parent=5 // pred_check
      %p1577 = pneg %p1576
    $region46: #{wav2vec2_forward.7} parent=5 // pred_check_branch
      %1579 = sbr.rel (%p1577) target = $region48
    $region47: #{wav2vec2_forward.7} parent=5 // pred_region
      %s1580 = ssub.s32 %s11, 2
      // Predicated region
      $region49: #{wav2vec2_forward.7} parent=47 // pred_check
        %p1581 = pneg %p150
      $region50: #{wav2vec2_forward.7} parent=47 // pred_check_branch
        %1583 = sbr.rel (%p1581) target = $region52
      $region51: #{wav2vec2_forward.7} parent=47 // pred_region
        %p1584 = scmp.lt.s32.totalorder %s17, 1
        %s1585 = scalar_select %p1584, %s17, 1
        %s1586 = smul.addr %s1585, 4
        %s1587 = smul.addr %s1586, 8
        %s1588 = scalar_lea.vmem %s5, %s1587
      $region52: #{wav2vec2_forward.7} parent=47 // pred_fallthru
        _
    $region48: #{wav2vec2_forward.7} parent=5 // pred_fallthru
      _
  $region6: #{wav2vec2_forward.7} parent=0 // loop_footer
    %s15 = sadd.s32 1, %s11
  $region7: #{wav2vec2_forward.7} parent=0 // loop_footer_branch
    %10 = sbr.rel target = $region3
  $region8: #{wav2vec2_forward.7} parent=0 // loop_exit
    _

// kernel: wav2vec2_forward.9
$region0: #{wav2vec2_forward.9}
  #allocation0 [shape = 'u32[]', space=smem, size = 0x4, offset = 0x4, fixed_abs, tag = 'smem constant byte address 0x4 - core index']
  #allocation1 [shape = 'u32[144,128]{1,0:T(1,128)}', space=vmem, size = 0x12000, scoped, tag = 'internal scratch']
  %s0 = inlined_call_operand.vmem [shape: f32[2,31,128], index: 0, kind: input, shape index: {}]
  %s1 = inlined_call_operand.vmem [shape: f32[128,384], index: 1, kind: input, shape index: {}]
  %s2 = inlined_call_operand.vmem [shape: f32[1,384], index: 2, kind: input, shape index: {}]
  %s3 = inlined_call_operand.vmem [shape: f32[128,128], index: 3, kind: input, shape index: {}]
  %s4 = inlined_call_operand.vmem [shape: f32[1,128], index: 4, kind: input, shape index: {}]
  %s5 = inlined_call_operand.vmem [shape: f32[1,128], index: 5, kind: input, shape index: {}]
  %s6 = inlined_call_operand.vmem [shape: f32[1,128], index: 6, kind: input, shape index: {}]
  %s7 = inlined_call_operand.vmem [shape: f32[128,512], index: 7, kind: input, shape index: {}]
  %s8 = inlined_call_operand.vmem [shape: f32[1,512], index: 8, kind: input, shape index: {}]
  %s9 = inlined_call_operand.vmem [shape: f32[512,128], index: 9, kind: input, shape index: {}]
  %s10 = inlined_call_operand.vmem [shape: f32[1,128], index: 10, kind: input, shape index: {}]
  %s11 = inlined_call_operand.vmem [shape: f32[1,128], index: 11, kind: input, shape index: {}]
  %s12 = inlined_call_operand.vmem [shape: f32[1,128], index: 12, kind: input, shape index: {}]
  %s13 = inlined_call_operand.vmem [shape: f32[2,31,128], index: 13, kind: output, shape index: {}]
  %s14 = sld [smem:[#allocation0]]
  $region85: #{wav2vec2_forward.9} parent=0
    _
  %s16 = ssub.s32 1, %s14
  %s17 = scalar_select 0, %s16, %s14
  loop: start=0, step=1, limit=4
  $region2: #{wav2vec2_forward.9} parent=0 // loop_pre_header
    _
  $region3: #{wav2vec2_forward.9} parent=0 // loop_header
    %s19 = sphi 0, %s23
    %p20 = scmp.ge.s32.totalorder %s19, 4
    %s29 = sphi 0, %s31
    %s32 = sphi 0, %s29
    %s33 = sphi 0, %s32
    %s49 = sphi 0, %s33
    %s53 = sphi 0, %s53
    %s55 = sphi 0, %s53
    %s56 = sphi 0, %s55
    %s70 = sphi 0, %s56
    %s74 = sphi 0, %s74
    %s76 = sphi 0, %s74
    %s77 = sphi 0, %s76
    %s91 = sphi 0, %s77
    %s95 = sphi 0, %s95
    %s97 = sphi 0, %s95
    %s98 = sphi 0, %s97
    %s112 = sphi 0, %s98
    %s116 = sphi 0, %s116
    %s118 = sphi 0, %s116
    %s119 = sphi 0, %s118
    %s133 = sphi 0, %s119
    %s137 = sphi 0, %s137
    %s139 = sphi 0, %s137
    %s140 = sphi 0, %s139
    %s154 = sphi 0, %s140
    %s158 = sphi 0, %s158
    %s160 = sphi 0, %s158
    %s161 = sphi 0, %s160
    %s175 = sphi 0, %s161
    %s179 = sphi 0, %s179
    %s181 = sphi 0, %s179
    %s182 = sphi 0, %s181
    %s196 = sphi 0, %s182
    %s200 = sphi 0, %s200
    %s202 = sphi 0, %s200
    %s203 = sphi 0, %s202
    %s217 = sphi 0, %s203
    %s221 = sphi 0, %s221
    %s223 = sphi 0, %s221
    %s224 = sphi 0, %s223
    %s238 = sphi 0, %s224
    %s242 = sphi 0, %s242
    %s244 = sphi 0, %s242
    %s245 = sphi 0, %s244
    %s259 = sphi 0, %s245
    %s263 = sphi 0, %s263
    %s265 = sphi 0, %s263
    %s266 = sphi 0, %s265
    %s280 = sphi 0, %s266
    %s284 = sphi 0, %s284
    %s286 = sphi 0, %s284
    %s287 = sphi 0, %s286
    %s301 = sphi 0, %s287
    %s307 = sphi 0, %s309
    %s310 = sphi 0, %s307
    %s311 = sphi 0, %s310
    %s327 = sphi 0, %s311
  $region4: #{wav2vec2_forward.9} parent=0 // loop_header_branch
    %22 = sbr.rel (%p20) target = $region8
  $region5: #{wav2vec2_forward.9} parent=0 // loop_body
    %s24 = ssub.s32 %s19, 1
    %s25 = ssub.s32 %s19, 2
    %s26 = sadd.s32 %s19, 1
    %s27 = ssub.s32 %s19, %s26
    %p28 = scmp.eq.s32.totalorder %s27, 0
    %s30 = sadd.s32 %s29, 1
    %s31 = scalar_select %p28, %s29, %s30
    %p34 = pneg %p28
    %p35 = scmp.eq.s32.totalorder %s19, 1
    %p36 = por %p34, %p35
    %p37 = scmp.ne.s32.totalorder %s29, %s32
    %p38 = scmp.eq.s32.totalorder %s19, 0
    %p39 = por %p37, %p38
    %p40 = scmp.ne.s32.totalorder %s29, %s32
    %p41 = scmp.eq.s32.totalorder %s24, 1
    %p42 = por %p40, %p41
    %p43 = scmp.ne.s32.totalorder %s32, %s33
    %p44 = scmp.eq.s32.totalorder %s24, 0
    %p45 = por %p43, %p44
    %p46 = scmp.ne.s32.totalorder %s32, %s33
    %p47 = scmp.eq.s32.totalorder %s25, 1
    %p48 = por %p46, %p47
    %p50 = scmp.ne.s32.totalorder %s33, %s49
    %p51 = scmp.eq.s32.totalorder %s25, 0
    %p52 = por %p50, %p51
    %s54 = sadd.s32 %s53, 1
    %p57 = scmp.eq.s32.totalorder %s19, 1
    %p58 = scmp.ne.s32.totalorder %s53, %s55
    %p59 = scmp.eq.s32.totalorder %s19, 0
    %p60 = por %p58, %p59
    %p61 = scmp.ne.s32.totalorder %s53, %s55
    %p62 = scmp.eq.s32.totalorder %s24, 1
    %p63 = por %p61, %p62
    %p64 = scmp.ne.s32.totalorder %s55, %s56
    %p65 = scmp.eq.s32.totalorder %s24, 0
    %p66 = por %p64, %p65
    %p67 = scmp.ne.s32.totalorder %s55, %s56
    %p68 = scmp.eq.s32.totalorder %s25, 1
    %p69 = por %p67, %p68
    %p71 = scmp.ne.s32.totalorder %s56, %s70
    %p72 = scmp.eq.s32.totalorder %s25, 0
    %p73 = por %p71, %p72
    %s75 = sadd.s32 %s74, 1
    %p78 = scmp.eq.s32.totalorder %s19, 1
    %p79 = scmp.ne.s32.totalorder %s74, %s76
    %p80 = scmp.eq.s32.totalorder %s19, 0
    %p81 = por %p79, %p80
    %p82 = scmp.ne.s32.totalorder %s74, %s76
    %p83 = scmp.eq.s32.totalorder %s24, 1
    %p84 = por %p82, %p83
    %p85 = scmp.ne.s32.totalorder %s76, %s77
    %p86 = scmp.eq.s32.totalorder %s24, 0
    %p87 = por %p85, %p86
    %p88 = scmp.ne.s32.totalorder %s76, %s77
    %p89 = scmp.eq.s32.totalorder %s25, 1
    %p90 = por %p88, %p89
    %p92 = scmp.ne.s32.totalorder %s77, %s91
    %p93 = scmp.eq.s32.totalorder %s25, 0
    %p94 = por %p92, %p93
    %s96 = sadd.s32 %s95, 1
    %p99 = scmp.eq.s32.totalorder %s19, 1
    %p100 = scmp.ne.s32.totalorder %s95, %s97
    %p101 = scmp.eq.s32.totalorder %s19, 0
    %p102 = por %p100, %p101
    %p103 = scmp.ne.s32.totalorder %s95, %s97
    %p104 = scmp.eq.s32.totalorder %s24, 1
    %p105 = por %p103, %p104
    %p106 = scmp.ne.s32.totalorder %s97, %s98
    %p107 = scmp.eq.s32.totalorder %s24, 0
    %p108 = por %p106, %p107
    %p109 = scmp.ne.s32.totalorder %s97, %s98
    %p110 = scmp.eq.s32.totalorder %s25, 1
    %p111 = por %p109, %p110
    %p113 = scmp.ne.s32.totalorder %s98, %s112
    %p114 = scmp.eq.s32.totalorder %s25, 0
    %p115 = por %p113, %p114
    %s117 = sadd.s32 %s116, 1
    %p120 = scmp.eq.s32.totalorder %s19, 1
    %p121 = scmp.ne.s32.totalorder %s116, %s118
    %p122 = scmp.eq.s32.totalorder %s19, 0
    %p123 = por %p121, %p122
    %p124 = scmp.ne.s32.totalorder %s116, %s118
    %p125 = scmp.eq.s32.totalorder %s24, 1
    %p126 = por %p124, %p125
    %p127 = scmp.ne.s32.totalorder %s118, %s119
    %p128 = scmp.eq.s32.totalorder %s24, 0
    %p129 = por %p127, %p128
    %p130 = scmp.ne.s32.totalorder %s118, %s119
    %p131 = scmp.eq.s32.totalorder %s25, 1
    %p132 = por %p130, %p131
    %p134 = scmp.ne.s32.totalorder %s119, %s133
    %p135 = scmp.eq.s32.totalorder %s25, 0
    %p136 = por %p134, %p135
    %s138 = sadd.s32 %s137, 1
    %p141 = scmp.eq.s32.totalorder %s19, 1
    %p142 = scmp.ne.s32.totalorder %s137, %s139
    %p143 = scmp.eq.s32.totalorder %s19, 0
    %p144 = por %p142, %p143
    %p145 = scmp.ne.s32.totalorder %s137, %s139
    %p146 = scmp.eq.s32.totalorder %s24, 1
    %p147 = por %p145, %p146
    %p148 = scmp.ne.s32.totalorder %s139, %s140
    %p149 = scmp.eq.s32.totalorder %s24, 0
    %p150 = por %p148, %p149
    %p151 = scmp.ne.s32.totalorder %s139, %s140
    %p152 = scmp.eq.s32.totalorder %s25, 1
    %p153 = por %p151, %p152
    %p155 = scmp.ne.s32.totalorder %s140, %s154
    %p156 = scmp.eq.s32.totalorder %s25, 0
    %p157 = por %p155, %p156
    %s159 = sadd.s32 %s158, 1
    %p162 = scmp.eq.s32.totalorder %s19, 1
    %p163 = scmp.ne.s32.totalorder %s158, %s160
    %p164 = scmp.eq.s32.totalorder %s19, 0
    %p165 = por %p163, %p164
    %p166 = scmp.ne.s32.totalorder %s158, %s160
    %p167 = scmp.eq.s32.totalorder %s24, 1
    %p168 = por %p166, %p167
    %p169 = scmp.ne.s32.totalorder %s160, %s161
    %p170 = scmp.eq.s32.totalorder %s24, 0
    %p171 = por %p169, %p170
    %p172 = scmp.ne.s32.totalorder %s160, %s161
    %p173 = scmp.eq.s32.totalorder %s25, 1
    %p174 = por %p172, %p173
    %p176 = scmp.ne.s32.totalorder %s161, %s175
    %p177 = scmp.eq.s32.totalorder %s25, 0
    %p178 = por %p176, %p177
    %s180 = sadd.s32 %s179, 1
    %p183 = scmp.eq.s32.totalorder %s19, 1
    %p184 = scmp.ne.s32.totalorder %s179, %s181
    %p185 = scmp.eq.s32.totalorder %s19, 0
    %p186 = por %p184, %p185
    %p187 = scmp.ne.s32.totalorder %s179, %s181
    %p188 = scmp.eq.s32.totalorder %s24, 1
    %p189 = por %p187, %p188
    %p190 = scmp.ne.s32.totalorder %s181, %s182
    %p191 = scmp.eq.s32.totalorder %s24, 0
    %p192 = por %p190, %p191
    %p193 = scmp.ne.s32.totalorder %s181, %s182
    %p194 = scmp.eq.s32.totalorder %s25, 1
    %p195 = por %p193, %p194
    %p197 = scmp.ne.s32.totalorder %s182, %s196
    %p198 = scmp.eq.s32.totalorder %s25, 0
    %p199 = por %p197, %p198
    %s201 = sadd.s32 %s200, 1
    %p204 = scmp.eq.s32.totalorder %s19, 1
    %p205 = scmp.ne.s32.totalorder %s200, %s202
    %p206 = scmp.eq.s32.totalorder %s19, 0
    %p207 = por %p205, %p206
    %p208 = scmp.ne.s32.totalorder %s200, %s202
    %p209 = scmp.eq.s32.totalorder %s24, 1
    %p210 = por %p208, %p209
    %p211 = scmp.ne.s32.totalorder %s202, %s203
    %p212 = scmp.eq.s32.totalorder %s24, 0
    %p213 = por %p211, %p212
    %p214 = scmp.ne.s32.totalorder %s202, %s203
    %p215 = scmp.eq.s32.totalorder %s25, 1
    %p216 = por %p214, %p215
    %p218 = scmp.ne.s32.totalorder %s203, %s217
    %p219 = scmp.eq.s32.totalorder %s25, 0
    %p220 = por %p218, %p219
    %s222 = sadd.s32 %s221, 1
    %p225 = scmp.eq.s32.totalorder %s19, 1
    %p226 = scmp.ne.s32.totalorder %s221, %s223
    %p227 = scmp.eq.s32.totalorder %s19, 0
    %p228 = por %p226, %p227
    %p229 = scmp.ne.s32.totalorder %s221, %s223
    %p230 = scmp.eq.s32.totalorder %s24, 1
    %p231 = por %p229, %p230
    %p232 = scmp.ne.s32.totalorder %s223, %s224
    %p233 = scmp.eq.s32.totalorder %s24, 0
    %p234 = por %p232, %p233
    %p235 = scmp.ne.s32.totalorder %s223, %s224
    %p236 = scmp.eq.s32.totalorder %s25, 1
    %p237 = por %p235, %p236
    %p239 = scmp.ne.s32.totalorder %s224, %s238
    %p240 = scmp.eq.s32.totalorder %s25, 0
    %p241 = por %p239, %p240
    %s243 = sadd.s32 %s242, 1
    %p246 = scmp.eq.s32.totalorder %s19, 1
    %p247 = scmp.ne.s32.totalorder %s242, %s244
    %p248 = scmp.eq.s32.totalorder %s19, 0
    %p249 = por %p247, %p248
    %p250 = scmp.ne.s32.totalorder %s242, %s244
    %p251 = scmp.eq.s32.totalorder %s24, 1
    %p252 = por %p250, %p251
    %p253 = scmp.ne.s32.totalorder %s244, %s245
    %p254 = scmp.eq.s32.totalorder %s24, 0
    %p255 = por %p253, %p254
    %p256 = scmp.ne.s32.totalorder %s244, %s245
    %p257 = scmp.eq.s32.totalorder %s25, 1
    %p258 = por %p256, %p257
    %p260 = scmp.ne.s32.totalorder %s245, %s259
    %p261 = scmp.eq.s32.totalorder %s25, 0
    %p262 = por %p260, %p261
    %s264 = sadd.s32 %s263, 1
    %p267 = scmp.eq.s32.totalorder %s19, 1
    %p268 = scmp.ne.s32.totalorder %s263, %s265
    %p269 = scmp.eq.s32.totalorder %s19, 0
    %p270 = por %p268, %p269
    %p271 = scmp.ne.s32.totalorder %s263, %s265
    %p272 = scmp.eq.s32.totalorder %s24, 1
    %p273 = por %p271, %p272
    %p274 = scmp.ne.s32.totalorder %s265, %s266
    %p275 = scmp.eq.s32.totalorder %s24, 0
    %p276 = por %p274, %p275
    %p277 = scmp.ne.s32.totalorder %s265, %s266
    %p278 = scmp.eq.s32.totalorder %s25, 1
    %p279 = por %p277, %p278
    %p281 = scmp.ne.s32.totalorder %s266, %s280
    %p282 = scmp.eq.s32.totalorder %s25, 0
    %p283 = por %p281, %p282
    %s285 = sadd.s32 %s284, 1
    %p288 = scmp.eq.s32.totalorder %s19, 1
    %p289 = scmp.ne.s32.totalorder %s284, %s286
    %p290 = scmp.eq.s32.totalorder %s19, 0
    %p291 = por %p289, %p290
    %p292 = scmp.ne.s32.totalorder %s284, %s286
    %p293 = scmp.eq.s32.totalorder %s24, 1
    %p294 = por %p292, %p293
    %p295 = scmp.ne.s32.totalorder %s286, %s287
    %p296 = scmp.eq.s32.totalorder %s24, 0
    %p297 = por %p295, %p296
    %p298 = scmp.ne.s32.totalorder %s286, %s287
    %p299 = scmp.eq.s32.totalorder %s25, 1
    %p300 = por %p298, %p299
    %p302 = scmp.ne.s32.totalorder %s287, %s301
    %p303 = scmp.eq.s32.totalorder %s25, 0
    %p304 = por %p302, %p303
    %s305 = ssub.s32 %s19, %s26
    %p306 = scmp.eq.s32.totalorder %s305, 0
    %s308 = sadd.s32 %s307, 1
    %s309 = scalar_select %p306, %s307, %s308
    %p312 = pneg %p306
    %p313 = scmp.eq.s32.totalorder %s19, 1
    %p314 = por %p312, %p313
    %p315 = scmp.ne.s32.totalorder %s307, %s310
    %p316 = scmp.eq.s32.totalorder %s19, 0
    %p317 = por %p315, %p316
    %p318 = scmp.ne.s32.totalorder %s307, %s310
    %p319 = scmp.eq.s32.totalorder %s24, 1
    %p320 = por %p318, %p319
    %p321 = scmp.ne.s32.totalorder %s310, %s311
    %p322 = scmp.eq.s32.totalorder %s24, 0
    %p323 = por %p321, %p322
    %p324 = scmp.ne.s32.totalorder %s310, %s311
    %p325 = scmp.eq.s32.totalorder %s25, 1
    %p326 = por %p324, %p325
    %p328 = scmp.ne.s32.totalorder %s311, %s327
    %p329 = scmp.eq.s32.totalorder %s25, 0
    %p330 = por %p328, %p329
    %p331 = scmp.le.s32.totalorder 1, %s19
    %p332 = scmp.lt.s32.totalorder %s19, 3
    %p333 = pnand %p331, %p332
    %p334 = pneg %p333
    // Predicated region
    $region9: #{wav2vec2_forward.9} parent=5 // pred_check
      _
    $region10: #{wav2vec2_forward.9} parent=5 // pred_check_branch
      %336 = sbr.rel (%p333) target = $region12
    $region11: #{wav2vec2_forward.9} parent=5 // pred_region
      %s337 = ssub.s32 %s19, 1
      // Predicated region
      $region13: #{wav2vec2_forward.9} parent=11 // pred_check
        %p338 = pneg %p66
      $region14: #{wav2vec2_forward.9} parent=11 // pred_check_branch
        %340 = sbr.rel (%p338) target = $region16
      $region15: #{wav2vec2_forward.9} parent=11 // pred_region
        _
      $region16: #{wav2vec2_forward.9} parent=11 // pred_fallthru
        _
      // Predicated region
      $region17: #{wav2vec2_forward.9} parent=11 // pred_check
        %p341 = pneg %p87
      $region18: #{wav2vec2_forward.9} parent=11 // pred_check_branch
        %343 = sbr.rel (%p341) target = $region20
      $region19: #{wav2vec2_forward.9} parent=11 // pred_region
        _
      $region20: #{wav2vec2_forward.9} parent=11 // pred_fallthru
        _
      // Predicated region
      $region21: #{wav2vec2_forward.9} parent=11 // pred_check
        %p344 = pneg %p108
      $region22: #{wav2vec2_forward.9} parent=11 // pred_check_branch
        %346 = sbr.rel (%p344) target = $region24
      $region23: #{wav2vec2_forward.9} parent=11 // pred_region
        _
      $region24: #{wav2vec2_forward.9} parent=11 // pred_fallthru
        _
      // Predicated region
      $region25: #{wav2vec2_forward.9} parent=11 // pred_check
        %p347 = pneg %p129
      $region26: #{wav2vec2_forward.9} parent=11 // pred_check_branch
        %349 = sbr.rel (%p347) target = $region28
      $region27: #{wav2vec2_forward.9} parent=11 // pred_region
        _
      $region28: #{wav2vec2_forward.9} parent=11 // pred_fallthru
        _
      // Predicated region
      $region29: #{wav2vec2_forward.9} parent=11 // pred_check
        %p350 = pneg %p150
      $region30: #{wav2vec2_forward.9} parent=11 // pred_check_branch
        %352 = sbr.rel (%p350) target = $region32
      $region31: #{wav2vec2_forward.9} parent=11 // pred_region
        _
      $region32: #{wav2vec2_forward.9} parent=11 // pred_fallthru
        _
      // Predicated region
      $region33: #{wav2vec2_forward.9} parent=11 // pred_check
        %p353 = pneg %p171
      $region34: #{wav2vec2_forward.9} parent=11 // pred_check_branch
        %355 = sbr.rel (%p353) target = $region36
      $region35: #{wav2vec2_forward.9} parent=11 // pred_region
        _
      $region36: #{wav2vec2_forward.9} parent=11 // pred_fallthru
        _
      // Predicated region
      $region37: #{wav2vec2_forward.9} parent=11 // pred_check
        %p356 = pneg %p192
      $region38: #{wav2vec2_forward.9} parent=11 // pred_check_branch
        %358 = sbr.rel (%p356) target = $region40
      $region39: #{wav2vec2_forward.9} parent=11 // pred_region
        _
      $region40: #{wav2vec2_forward.9} parent=11 // pred_fallthru
        _
      // Predicated region
      $region41: #{wav2vec2_forward.9} parent=11 // pred_check
        %p359 = pneg %p213
      $region42: #{wav2vec2_forward.9} parent=11 // pred_check_branch
        %361 = sbr.rel (%p359) target = $region44
      $region43: #{wav2vec2_forward.9} parent=11 // pred_region
        _
      $region44: #{wav2vec2_forward.9} parent=11 // pred_fallthru
        _
      // Predicated region
      $region45: #{wav2vec2_forward.9} parent=11 // pred_check
        %p362 = pneg %p234
      $region46: #{wav2vec2_forward.9} parent=11 // pred_check_branch
        %364 = sbr.rel (%p362) target = $region48
      $region47: #{wav2vec2_forward.9} parent=11 // pred_region
        _
      $region48: #{wav2vec2_forward.9} parent=11 // pred_fallthru
        _
      // Predicated region
      $region49: #{wav2vec2_forward.9} parent=11 // pred_check
        %p365 = pneg %p255
      $region50: #{wav2vec2_forward.9} parent=11 // pred_check_branch
        %367 = sbr.rel (%p365) target = $region52
      $region51: #{wav2vec2_forward.9} parent=11 // pred_region
        _
      $region52: #{wav2vec2_forward.9} parent=11 // pred_fallthru
        _
      // Predicated region
      $region53: #{wav2vec2_forward.9} parent=11 // pred_check
        %p368 = pneg %p276
      $region54: #{wav2vec2_forward.9} parent=11 // pred_check_branch
        %370 = sbr.rel (%p368) target = $region56
      $region55: #{wav2vec2_forward.9} parent=11 // pred_region
        _
      $region56: #{wav2vec2_forward.9} parent=11 // pred_fallthru
        _
      // Predicated region
      $region57: #{wav2vec2_forward.9} parent=11 // pred_check
        %p371 = pneg %p297
      $region58: #{wav2vec2_forward.9} parent=11 // pred_check_branch
        %373 = sbr.rel (%p371) target = $region60
      $region59: #{wav2vec2_forward.9} parent=11 // pred_region
        _
      $region60: #{wav2vec2_forward.9} parent=11 // pred_fallthru
        _
    $region12: #{wav2vec2_forward.9} parent=5 // pred_fallthru
      _
    %p374 = scmp.lt.s32.totalorder %s19, 2
    // Predicated region
    $region61: #{wav2vec2_forward.9} parent=5 // pred_check
      %p375 = pneg %p374
    $region62: #{wav2vec2_forward.9} parent=5 // pred_check_branch
      %377 = sbr.rel (%p375) target = $region64
    $region63: #{wav2vec2_forward.9} parent=5 // pred_region
      // Predicated region
      $region65: #{wav2vec2_forward.9} parent=63 // pred_check
        %p378 = pneg %p39
      $region66: #{wav2vec2_forward.9} parent=63 // pred_check_branch
        %380 = sbr.rel (%p378) target = $region68
      $region67: #{wav2vec2_forward.9} parent=63 // pred_region
        %p381 = scmp.lt.s32.totalorder %s19, 1
        %s382 = scalar_select %p381, %s19, 1
        %s383 = smul.addr %s382, 4
        %s384 = smul.addr %s383, 8
        %s385 = scalar_lea.vmem %s0, %s384
      $region68: #{wav2vec2_forward.9} parent=63 // pred_fallthru
        _
    $region64: #{wav2vec2_forward.9} parent=5 // pred_fallthru
      _
    %p386 = scmp.le.s32.totalorder 1, %s19
    %p387 = scmp.lt.s32.totalorder %s19, 3
    %p388 = pnand %p386, %p387
    %p389 = pneg %p388
    // Predicated region
    $region69: #{wav2vec2_forward.9} parent=5 // pred_check
      _
    $region70: #{wav2vec2_forward.9} parent=5 // pred_check_branch
      %391 = sbr.rel (%p388) target = $region72
    $region71: #{wav2vec2_forward.9} parent=5 // pred_region
      %s392 = ssub.s32 %s19, 1
      %p393 = scmp.lt.s32.totalorder %s24, 1
      %s394 = scalar_select %p393, %s24, 1
      %s395 = smul.addr %s394, 4
      %s396 = smul.addr %s395, 8
      %s397 = scalar_lea.vmem %s0, %s396
      %p398 = pneg %p45
      %p399 = pneg %p42
      %p400 = pneg %p66
      %p401 = pneg %p63
      %p402 = pneg %p87
      %p403 = pneg %p84
      %p404 = pneg %p108
      %p405 = pneg %p105
      %p406 = pneg %p129
      %p407 = pneg %p126
      %p408 = pneg %p150
      %p409 = pneg %p147
      %p410 = pneg %p171
      %p411 = pneg %p168
      %p412 = pneg %p192
      %p413 = pneg %p189
      %p414 = pneg %p213
      %p415 = pneg %p210
      %p416 = pneg %p234
      %p417 = pneg %p231
      %p418 = pneg %p255
      %p419 = pneg %p252
      %p420 = pneg %p276
      %p421 = pneg %p273
      %p422 = pneg %p297
      %p423 = pneg %p294
      %p424 = pneg %p323
      %p425 = pneg %p320
      %p426 = scmp.lt.s32.totalorder %s24, 1
      %s427 = scalar_select %p426, %s24, 1
      %s428 = smul.addr %s427, 4
      %s429 = smul.addr %s428, 8
      %s430 = scalar_lea.vmem %s13, %s429
      %p431 = scmp.lt.s32.totalorder %s24, 1
      %s432 = scalar_select %p431, %s24, 1
      %s433 = smul.addr %s432, 4
      %s434 = smul.addr %s433, 8
      %s435 = scalar_lea.vmem %s0, %s434
      %p436 = scmp.lt.s32.totalorder %s24, 1
      %s437 = scalar_select %p436, %s24, 1
      %s438 = smul.addr %s437, 4
      %s439 = smul.addr %s438, 8
      %s440 = scalar_lea.vmem %s13, %s439
      %v442 = vld [vmem:[%s435] sm:$0xff]
      %v443 = vld [vmem:[%s435 + $0x8] sm:$0xff]
      %v444 = vld [vmem:[%s435 + $0x10] sm:$0xff]
      %v445 = vld [vmem:[%s435 + $0x18] sm:$0x7f]
      %v446 = vld [vmem:[%s1] sm:$0xff]
      %v447 = vld [vmem:[%s1 + $0x8] sm:$0xff]
      %v448 = vld [vmem:[%s1 + $0x10] sm:$0xff]
      %v449 = vld [vmem:[%s1 + $0x18] sm:$0xff]
      %v450 = vld [vmem:[%s1 + $0x20] sm:$0xff]
      %v451 = vld [vmem:[%s1 + $0x28] sm:$0xff]
      %v452 = vld [vmem:[%s1 + $0x30] sm:$0xff]
      %v453 = vld [vmem:[%s1 + $0x38] sm:$0xff]
      %v454 = vld [vmem:[%s1 + $0x40] sm:$0xff]
      %v455 = vld [vmem:[%s1 + $0x48] sm:$0xff]
      %v456 = vld [vmem:[%s1 + $0x50] sm:$0xff]
      %v457 = vld [vmem:[%s1 + $0x58] sm:$0xff]
      %v458 = vld [vmem:[%s1 + $0x60] sm:$0xff]
      %v459 = vld [vmem:[%s1 + $0x68] sm:$0xff]
      %v460 = vld [vmem:[%s1 + $0x70] sm:$0xff]
      %v461 = vld [vmem:[%s1 + $0x78] sm:$0xff]
      %v462 = vld [vmem:[%s1 + $0x80] sm:$0xff]
      %v463 = vld [vmem:[%s1 + $0x88] sm:$0xff]
      %v464 = vld [vmem:[%s1 + $0x90] sm:$0xff]
      %v465 = vld [vmem:[%s1 + $0x98] sm:$0xff]
      %v466 = vld [vmem:[%s1 + $0xa0] sm:$0xff]
      %v467 = vld [vmem:[%s1 + $0xa8] sm:$0xff]
      %v468 = vld [vmem:[%s1 + $0xb0] sm:$0xff]
      %v469 = vld [vmem:[%s1 + $0xb8] sm:$0xff]
      %v470 = vld [vmem:[%s1 + $0xc0] sm:$0xff]
      %v471 = vld [vmem:[%s1 + $0xc8] sm:$0xff]
      %v472 = vld [vmem:[%s1 + $0xd0] sm:$0xff]
      %v473 = vld [vmem:[%s1 + $0xd8] sm:$0xff]
      %v474 = vld [vmem:[%s1 + $0xe0] sm:$0xff]
      %v475 = vld [vmem:[%s1 + $0xe8] sm:$0xff]
      %v476 = vld [vmem:[%s1 + $0xf0] sm:$0xff]
      %v477 = vld [vmem:[%s1 + $0xf8] sm:$0xff]
      %v478 = vld [vmem:[%s1 + $0x100] sm:$0xff]
      %v479 = vld [vmem:[%s1 + $0x108] sm:$0xff]
      %v480 = vld [vmem:[%s1 + $0x110] sm:$0xff]
      %v481 = vld [vmem:[%s1 + $0x118] sm:$0xff]
      %v482 = vld [vmem:[%s1 + $0x120] sm:$0xff]
      %v483 = vld [vmem:[%s1 + $0x128] sm:$0xff]
      %v484 = vld [vmem:[%s1 + $0x130] sm:$0xff]
      %v485 = vld [vmem:[%s1 + $0x138] sm:$0xff]
      %v486 = vld [vmem:[%s1 + $0x140] sm:$0xff]
      %v487 = vld [vmem:[%s1 + $0x148] sm:$0xff]
      %v488 = vld [vmem:[%s1 + $0x150] sm:$0xff]
      %v489 = vld [vmem:[%s1 + $0x158] sm:$0xff]
      %v490 = vld [vmem:[%s1 + $0x160] sm:$0xff]
      %v491 = vld [vmem:[%s1 + $0x168] sm:$0xff]
      %v492 = vld [vmem:[%s1 + $0x170] sm:$0xff]
      %v493 = vld [vmem:[%s1 + $0x178] sm:$0xff]
      %v494 = vld [vmem:[%s2] sm:$0x7]
      %v495 = vpack.c.bf16 %v443, %v442
      %v496 = vpack.c.bf16 %v445, %v444
      %v497 = vpack.c.bf16 %v449, %v446
      %v498 = vpack.c.bf16 %v450, %v447
      %v499 = vpack.c.bf16 %v451, %v448
      %v500 = vpack.c.bf16 %v455, %v452
      %v501 = vpack.c.bf16 %v456, %v453
      %v502 = vpack.c.bf16 %v457, %v454
      %v503 = vpack.c.bf16 %v461, %v458
      %v504 = vpack.c.bf16 %v462, %v459
      %v505 = vpack.c.bf16 %v463, %v460
      %v506 = vpack.c.bf16 %v467, %v464
      %v507 = vpack.c.bf16 %v468, %v465
      %v508 = vpack.c.bf16 %v469, %v466
      %v509 = vpack.c.bf16 %v473, %v470
      %v510 = vpack.c.bf16 %v474, %v471
      %v511 = vpack.c.bf16 %v475, %v472
      %v512 = vpack.c.bf16 %v479, %v476
      %v513 = vpack.c.bf16 %v480, %v477
      %v514 = vpack.c.bf16 %v481, %v478
      %v515 = vpack.c.bf16 %v485, %v482
      %v516 = vpack.c.bf16 %v486, %v483
      %v517 = vpack.c.bf16 %v487, %v484
      %v518 = vpack.c.bf16 %v491, %v488
      %v519 = vpack.c.bf16 %v492, %v489
      %v520 = vpack.c.bf16 %v493, %v490
      %v522 = vlaneseq
      %v523 = vshrl.u32 %v522, 7
      %v524 = vsub.s32 0, %v523
      %v525 = vrot.slane %v494, %v524
      %v526 = vlaneseq
      %v527 = vshrl.u32 %v526, 7
      %v528 = vsub.s32 1, %v527
      %v529 = vrot.slane %v494, %v528
      %v530 = vlaneseq
      %v531 = vshrl.u32 %v530, 7
      %v532 = vsub.s32 2, %v531
      %v533 = vrot.slane %v494, %v532
      %537 = vmatprep.subr.bf16.mxu0 %v519
      %538 = vmatpush1.bf16.msra.mxu0 %v518
      %539 = vmatprep.subr.bf16.mxu0 %v516
      %540 = vmatpush1.bf16.msra.mxu0 %v515
      %541 = vmatprep.subr.bf16.mxu0 %v513
      %542 = vmatpush1.bf16.msra.mxu0 %v512
      %543 = vmatprep.subr.bf16.mxu0 %v510
      %544 = vmatpush1.bf16.msra.mxu0 %v509
      %545 = vmatprep.subr.bf16.mxu0 %v507
      %546 = vmatpush1.bf16.msra.mxu0 %v506
      %547 = vmatprep.subr.bf16.mxu0 %v504
      %548 = vmatpush1.bf16.msra.mxu0 %v503
      %549 = vmatprep.subr.bf16.mxu0 %v501
      %550 = vmatpush1.bf16.msra.mxu0 %v500
      %551 = vmatprep.subr.bf16.mxu0 %v498
      %552 = vmatpush1.bf16.msra.mxu0 %v497
      %553 = vmatprep.subr.bf16.mxu0 0
      %554 = vmatpush2.bf16.msra.mxu0 0
      %555 = vmatprep.subr.bf16.mxu0 0
      %556 = vmatpush2.bf16.msra.mxu0 0
      %557 = vmatprep.subr.bf16.mxu0 0
      %558 = vmatpush2.bf16.msra.mxu0 0
      %559 = vmatprep.subr.bf16.mxu0 0
      %560 = vmatpush2.bf16.msra.mxu0 0
      %561 = vmatprep.subr.bf16.mxu0 0
      %562 = vmatpush2.bf16.msra.mxu0 0
      %563 = vmatprep.subr.bf16.mxu0 0
      %564 = vmatpush2.bf16.msra.mxu0 0
      %565 = vmatprep.subr.bf16.mxu0 0
      %566 = vmatpush2.bf16.msra.mxu0 0
      %567 = vmatprep.subr.bf16.mxu0 0
      %568 = vmatpush2.bf16.msra.mxu0 0
      %569 = vmatprep.mubr.bf16.mxu0 0
      %570 = vmatmul.mubr.bf16.gmra.mxu0 %v495
      %v571 = vpop.f32.mrf.mxu0
      %v572 = vadd.f32 %v525, %v571
      %v573 = vpop.f32.mrf.mxu0
      %v574 = vadd.f32 %v529, %v573
      %v575 = vpop.f32.mrf.mxu0
      %v576 = vadd.f32 %v525, %v575
      %v577 = vpop.f32.mrf.mxu0
      %v578 = vadd.f32 %v529, %v577
      %579 = vmatprep.mubr.bf16.mxu0 0
      %580 = vmatmul.mubr.bf16.gmra.mxu0 %v496
      %v581 = vpop.f32.mrf.mxu0
      %v582 = vadd.f32 %v525, %v581
      %v583 = vpop.f32.mrf.mxu0
      %v584 = vadd.f32 %v529, %v583
      %v585 = vpop.f32.mrf.mxu0
      %v586 = vadd.f32 %v525, %v585
      %v587 = vpop.f32.mrf.mxu0
      %v588 = vadd.f32 %v529, %v587
      %589 = vdwg.mxu0
      %590 = vmatprep.subr.bf16.mxu0 0
      %591 = vmatpush1.bf16.msra.mxu0 %v520
      %592 = vmatprep.subr.bf16.mxu0 0
      %593 = vmatpush1.bf16.msra.mxu0 %v517
      %594 = vmatprep.subr.bf16.mxu0 0
      %595 = vmatpush1.bf16.msra.mxu0 %v514
      %596 = vmatprep.subr.bf16.mxu0 0
      %597 = vmatpush1.bf16.msra.mxu0 %v511
      %598 = vmatprep.subr.bf16.mxu0 0
      %599 = vmatpush1.bf16.msra.mxu0 %v508
      %600 = vmatprep.subr.bf16.mxu0 0
      %601 = vmatpush1.bf16.msra.mxu0 %v505
      %602 = vmatprep.subr.bf16.mxu0 0
      %603 = vmatpush1.bf16.msra.mxu0 %v502
      %604 = vmatprep.subr.bf16.mxu0 0
      %605 = vmatpush1.bf16.msra.mxu0 %v499
      %606 = vmatprep.subr.bf16.mxu0 0
      %607 = vmatpush2.bf16.msra.mxu0 0
      %608 = vmatprep.subr.bf16.mxu0 0
      %609 = vmatpush2.bf16.msra.mxu0 0
      %610 = vmatprep.subr.bf16.mxu0 0
      %611 = vmatpush2.bf16.msra.mxu0 0
      %612 = vmatprep.subr.bf16.mxu0 0
      %613 = vmatpush2.bf16.msra.mxu0 0
      %614 = vmatprep.subr.bf16.mxu0 0
      %615 = vmatpush2.bf16.msra.mxu0 0
      %616 = vmatprep.subr.bf16.mxu0 0
      %617 = vmatpush2.bf16.msra.mxu0 0
      %618 = vmatprep.subr.bf16.mxu0 0
      %619 = vmatpush2.bf16.msra.mxu0 0
      %620 = vmatprep.subr.bf16.mxu0 0
      %621 = vmatpush2.bf16.msra.mxu0 0
      %622 = vmatprep.mubr.bf16.mxu0 0
      %623 = vmatmul.mubr.bf16.gmra.mxu0 %v495
      %v624 = vpop.f32.mrf.mxu0
      %v625 = vadd.f32 %v533, %v624
      %v626 = vpop.f32.mrf.mxu0
      %v627 = vpop.f32.mrf.mxu0
      %v628 = vadd.f32 %v533, %v627
      %v629 = vpop.f32.mrf.mxu0
      %630 = vmatprep.mubr.bf16.mxu0 0
      %631 = vmatmul.mubr.bf16.gmra.mxu0 %v496
      %v632 = vpop.f32.mrf.mxu0
      %v633 = vadd.f32 %v533, %v632
      %v634 = vpop.f32.mrf.mxu0
      %v635 = vpop.f32.mrf.mxu0
      %v636 = vadd.f32 %v533, %v635
      %v637 = vpop.f32.mrf.mxu0
      %638 = vdwg.mxu0
      %v639 = vmul.f32 %v572, 0.125
      %v640 = vmul.f32 %v576, 0.125
      %v641 = vmul.f32 %v582, 0.125
      %v642 = vmul.f32 %v586, 0.125
      %v643 = vpack.c.bf16 %v640, %v639
      %v644 = vpack.c.bf16 %v642, %v641
      %v645 = vpack.c.bf16 %v578, %v574
      %v646 = vpack.c.bf16 %v588, %v584
      %v647 = vpack.c.bf16 %v628, %v625
      %v648 = vpack.c.bf16 %v636, %v633
      %vm649 = vcmask 523264
      %v651 = vsel %vm649, %v643, 0
      %v654 = vsel %vm649, %v644, 0
      %v657 = vsel %vm649, %v645, 0
      %v660 = vsel %vm649, %v646, 0
      %662 = vmatprep.subr.bf16.mxu0 0
      %663 = vmatpush1.bf16.xpose.msra.mxu0 0
      %664 = vmatprep.subr.bf16.mxu0 0
      %665 = vmatpush1.bf16.xpose.msra.mxu0 0
      %666 = vmatprep.subr.bf16.mxu0 0
      %667 = vmatpush1.bf16.xpose.msra.mxu0 0
      %668 = vmatprep.subr.bf16.mxu0 0
      %669 = vmatpush1.bf16.xpose.msra.mxu0 0
      %670 = vmatprep.subr.bf16.mxu0 0
      %671 = vmatpush1.bf16.xpose.msra.mxu0 0
      %672 = vmatprep.subr.bf16.mxu0 0
      %673 = vmatpush1.bf16.xpose.msra.mxu0 0
      %674 = vmatprep.subr.bf16.mxu0 0
      %675 = vmatpush1.bf16.xpose.msra.mxu0 %v660
      %676 = vmatprep.subr.bf16.mxu0 0
      %677 = vmatpush1.bf16.xpose.msra.mxu0 %v657
      %678 = vmatprep.subr.bf16.mxu0 0
      %679 = vmatpush2.bf16.xpose.msra.mxu0 0
      %680 = vmatprep.subr.bf16.mxu0 0
      %681 = vmatpush2.bf16.xpose.msra.mxu0 0
      %682 = vmatprep.subr.bf16.mxu0 0
      %683 = vmatpush2.bf16.xpose.msra.mxu0 0
      %684 = vmatprep.subr.bf16.mxu0 0
      %685 = vmatpush2.bf16.xpose.msra.mxu0 0
      %686 = vmatprep.subr.bf16.mxu0 0
      %687 = vmatpush2.bf16.xpose.msra.mxu0 0
      %688 = vmatprep.subr.bf16.mxu0 0
      %689 = vmatpush2.bf16.xpose.msra.mxu0 0
      %690 = vmatprep.subr.bf16.mxu0 0
      %691 = vmatpush2.bf16.xpose.msra.mxu0 0
      %692 = vmatprep.subr.bf16.mxu0 0
      %693 = vmatpush2.bf16.xpose.msra.mxu0 0
      %694 = vmatprep.mubr.bf16.mxu0 0
      %695 = vmatmul.mubr.bf16.gmra.mxu0 %v651
      %v696 = vpop.f32.mrf.mxu0
      %v697 = vadd.f32 0.0, %v696
      %v698 = vpop.f32.mrf.mxu0
      %v699 = vpop.f32.mrf.mxu0
      %v700 = vadd.f32 0.0, %v699
      %v701 = vpop.f32.mrf.mxu0
      %702 = vmatprep.mubr.bf16.mxu0 0
      %703 = vmatmul.mubr.bf16.gmra.mxu0 %v654
      %v704 = vpop.f32.mrf.mxu0
      %v705 = vadd.f32 0.0, %v704
      %v706 = vpop.f32.mrf.mxu0
      %v707 = vpop.f32.mrf.mxu0
      %v708 = vadd.f32 0.0, %v707
      %v709 = vpop.f32.mrf.mxu0
      %710 = vdwg.mxu0
      %vm711 = vcmask 252928
      %v712 = vsel %vm711, %v697, -inf
      %713 = vmax.xlane.f32.xlu0 %v712
      %v714 = vpop.xlane.xlu0 %713
      %v715 = vsel %vm711, %v700, -inf
      %716 = vmax.xlane.f32.xlu0 %v715
      %v717 = vpop.xlane.xlu0 %716
      %v718 = vsel %vm711, %v705, -inf
      %719 = vmax.xlane.f32.xlu0 %v718
      %v720 = vpop.xlane.xlu0 %719
      %vm721 = vcmask 251904
      %v722 = vsel %vm721, %v708, -inf
      %723 = vmax.xlane.f32.xlu0 %v722
      %v724 = vpop.xlane.xlu0 %723
      %v725 = vsub.f32 %v697, %v714
      %v726 = vsub.f32 %v700, %v717
      %v727 = vsub.f32 %v705, %v720
      %v728 = vsub.f32 %v708, %v724
      %v729 = vmul.f32 %v725, 1.442695
      %v730 = vpow.pop %v729
      %v731 = vmul.f32 %v726, 1.442695
      %v732 = vpow.pop %v731
      %v733 = vmul.f32 %v727, 1.442695
      %v734 = vpow.pop %v733
      %v735 = vmul.f32 %v728, 1.442695
      %v736 = vpow.pop %v735
      %v737 = vsel %vm711, %v730, 0.0
      %738 = vadd.xlane.f32.xlu0 %v737
      %v739 = vpop.xlane.xlu0 %738
      %v740 = vsel %vm711, %v732, 0.0
      %741 = vadd.xlane.f32.xlu0 %v740
      %v742 = vpop.xlane.xlu0 %741
      %v743 = vsel %vm711, %v734, 0.0
      %744 = vadd.xlane.f32.xlu0 %v743
      %v745 = vpop.xlane.xlu0 %744
      %v746 = vsel %vm721, %v736, 0.0
      %747 = vadd.xlane.f32.xlu0 %v746
      %v748 = vpop.xlane.xlu0 %747
      %v749 = vrcp.pop %v739
      %v750 = vrcp.pop %v742
      %v751 = vrcp.pop %v745
      %v752 = vrcp.pop %v748
      %v753 = vmul.f32 %v730, %v749
      %v754 = vmul.f32 %v732, %v750
      %v755 = vmul.f32 %v734, %v751
      %v756 = vmul.f32 %v736, %v752
      %v757 = vpack.c.bf16 %v754, %v753
      %v758 = vpack.c.bf16 %v756, %v755
      %v760 = vsel %vm711, %v757, 0
      %v763 = vsel %vm711, %v758, 0
      %vm765 = vcmask 1046528
      %vm766 = vcmask 1047552
      %v767 = vsel %vm765, 4294967295, 65535
      %v768 = vsel %vm766, %v767, 0
      %v770 = vand.u32 %v648, %v768
      %772 = vmatprep.subr.bf16.mxu0 0
      %773 = vmatpush1.bf16.msra.mxu0 0
      %774 = vmatprep.subr.bf16.mxu0 0
      %775 = vmatpush1.bf16.msra.mxu0 0
      %776 = vmatprep.subr.bf16.mxu0 0
      %777 = vmatpush1.bf16.msra.mxu0 0
      %778 = vmatprep.subr.bf16.mxu0 0
      %779 = vmatpush1.bf16.msra.mxu0 0
      %780 = vmatprep.subr.bf16.mxu0 0
      %781 = vmatpush1.bf16.msra.mxu0 0
      %782 = vmatprep.subr.bf16.mxu0 0
      %783 = vmatpush1.bf16.msra.mxu0 0
      %784 = vmatprep.subr.bf16.mxu0 0
      %785 = vmatpush1.bf16.msra.mxu0 %v770
      %786 = vmatprep.subr.bf16.mxu0 0
      %787 = vmatpush1.bf16.msra.mxu0 %v647
      %788 = vmatprep.subr.bf16.mxu0 0
      %789 = vmatpush2.bf16.msra.mxu0 0
      %790 = vmatprep.subr.bf16.mxu0 0
      %791 = vmatpush2.bf16.msra.mxu0 0
      %792 = vmatprep.subr.bf16.mxu0 0
      %793 = vmatpush2.bf16.msra.mxu0 0
      %794 = vmatprep.subr.bf16.mxu0 0
      %795 = vmatpush2.bf16.msra.mxu0 0
      %796 = vmatprep.subr.bf16.mxu0 0
      %797 = vmatpush2.bf16.msra.mxu0 0
      %798 = vmatprep.subr.bf16.mxu0 0
      %799 = vmatpush2.bf16.msra.mxu0 0
      %800 = vmatprep.subr.bf16.mxu0 0
      %801 = vmatpush2.bf16.msra.mxu0 0
      %802 = vmatprep.subr.bf16.mxu0 0
      %803 = vmatpush2.bf16.msra.mxu0 0
      %804 = vmatprep.mubr.bf16.mxu0 0
      %805 = vmatmul.mubr.bf16.gmra.mxu0 %v760
      %v806 = vpop.f32.mrf.mxu0
      %v807 = vadd.f32 0.0, %v806
      %v808 = vpop.f32.mrf.mxu0
      %v809 = vpop.f32.mrf.mxu0
      %v810 = vadd.f32 0.0, %v809
      %v811 = vpop.f32.mrf.mxu0
      %812 = vmatprep.mubr.bf16.mxu0 0
      %813 = vmatmul.mubr.bf16.gmra.mxu0 %v763
      %v814 = vpop.f32.mrf.mxu0
      %v815 = vadd.f32 0.0, %v814
      %v816 = vpop.f32.mrf.mxu0
      %v817 = vpop.f32.mrf.mxu0
      %v818 = vadd.f32 0.0, %v817
      %v819 = vpop.f32.mrf.mxu0
      %820 = vdwg.mxu0
      %823 = vrot.lane.b32.xlu0 %v643, 64
      %v824 = vpop.permute.xlu0 %823
      %825 = vrot.lane.b32.xlu0 %v644, 64
      %v826 = vpop.permute.xlu0 %825
      %829 = vrot.lane.b32.xlu0 %v645, 64
      %v830 = vpop.permute.xlu0 %829
      %831 = vrot.lane.b32.xlu0 %v646, 64
      %v832 = vpop.permute.xlu0 %831
      %v834 = vsel %vm649, %v824, 0
      %v837 = vsel %vm649, %v826, 0
      %v840 = vsel %vm649, %v830, 0
      %v843 = vsel %vm649, %v832, 0
      %845 = vmatprep.subr.bf16.mxu0 0
      %846 = vmatpush1.bf16.xpose.msra.mxu0 0
      %847 = vmatprep.subr.bf16.mxu0 0
      %848 = vmatpush1.bf16.xpose.msra.mxu0 0
      %849 = vmatprep.subr.bf16.mxu0 0
      %850 = vmatpush1.bf16.xpose.msra.mxu0 0
      %851 = vmatprep.subr.bf16.mxu0 0
      %852 = vmatpush1.bf16.xpose.msra.mxu0 0
      %853 = vmatprep.subr.bf16.mxu0 0
      %854 = vmatpush1.bf16.xpose.msra.mxu0 0
      %855 = vmatprep.subr.bf16.mxu0 0
      %856 = vmatpush1.bf16.xpose.msra.mxu0 0
      %857 = vmatprep.subr.bf16.mxu0 0
      %858 = vmatpush1.bf16.xpose.msra.mxu0 %v843
      %859 = vmatprep.subr.bf16.mxu0 0
      %860 = vmatpush1.bf16.xpose.msra.mxu0 %v840
      %861 = vmatprep.subr.bf16.mxu0 0
      %862 = vmatpush2.bf16.xpose.msra.mxu0 0
      %863 = vmatprep.subr.bf16.mxu0 0
      %864 = vmatpush2.bf16.xpose.msra.mxu0 0
      %865 = vmatprep.subr.bf16.mxu0 0
      %866 = vmatpush2.bf16.xpose.msra.mxu0 0
      %867 = vmatprep.subr.bf16.mxu0 0
      %868 = vmatpush2.bf16.xpose.msra.mxu0 0
      %869 = vmatprep.subr.bf16.mxu0 0
      %870 = vmatpush2.bf16.xpose.msra.mxu0 0
      %871 = vmatprep.subr.bf16.mxu0 0
      %872 = vmatpush2.bf16.xpose.msra.mxu0 0
      %873 = vmatprep.subr.bf16.mxu0 0
      %874 = vmatpush2.bf16.xpose.msra.mxu0 0
      %875 = vmatprep.subr.bf16.mxu0 0
      %876 = vmatpush2.bf16.xpose.msra.mxu0 0
      %877 = vmatprep.mubr.bf16.mxu0 0
      %878 = vmatmul.mubr.bf16.gmra.mxu0 %v834
      %v879 = vpop.f32.mrf.mxu0
      %v880 = vadd.f32 0.0, %v879
      %v881 = vpop.f32.mrf.mxu0
      %v882 = vpop.f32.mrf.mxu0
      %v883 = vadd.f32 0.0, %v882
      %v884 = vpop.f32.mrf.mxu0
      %885 = vmatprep.mubr.bf16.mxu0 0
      %886 = vmatmul.mubr.bf16.gmra.mxu0 %v837
      %v887 = vpop.f32.mrf.mxu0
      %v888 = vadd.f32 0.0, %v887
      %v889 = vpop.f32.mrf.mxu0
      %v890 = vpop.f32.mrf.mxu0
      %v891 = vadd.f32 0.0, %v890
      %v892 = vpop.f32.mrf.mxu0
      %893 = vdwg.mxu0
      %v894 = vsel %vm711, %v880, -inf
      %895 = vmax.xlane.f32.xlu0 %v894
      %v896 = vpop.xlane.xlu0 %895
      %v897 = vsel %vm711, %v883, -inf
      %898 = vmax.xlane.f32.xlu0 %v897
      %v899 = vpop.xlane.xlu0 %898
      %v900 = vsel %vm711, %v888, -inf
      %901 = vmax.xlane.f32.xlu0 %v900
      %v902 = vpop.xlane.xlu0 %901
      %v903 = vsel %vm721, %v891, -inf
      %904 = vmax.xlane.f32.xlu0 %v903
      %v905 = vpop.xlane.xlu0 %904
      %v906 = vsub.f32 %v880, %v896
      %v907 = vsub.f32 %v883, %v899
      %v908 = vsub.f32 %v888, %v902
      %v909 = vsub.f32 %v891, %v905
      %v910 = vmul.f32 %v906, 1.442695
      %v911 = vpow.pop %v910
      %v912 = vmul.f32 %v907, 1.442695
      %v913 = vpow.pop %v912
      %v914 = vmul.f32 %v908, 1.442695
      %v915 = vpow.pop %v914
      %v916 = vmul.f32 %v909, 1.442695
      %v917 = vpow.pop %v916
      %v918 = vsel %vm711, %v911, 0.0
      %919 = vadd.xlane.f32.xlu0 %v918
      %v920 = vpop.xlane.xlu0 %919
      %v921 = vsel %vm711, %v913, 0.0
      %922 = vadd.xlane.f32.xlu0 %v921
      %v923 = vpop.xlane.xlu0 %922
      %v924 = vsel %vm711, %v915, 0.0
      %925 = vadd.xlane.f32.xlu0 %v924
      %v926 = vpop.xlane.xlu0 %925
      %v927 = vsel %vm721, %v917, 0.0
      %928 = vadd.xlane.f32.xlu0 %v927
      %v929 = vpop.xlane.xlu0 %928
      %v930 = vrcp.pop %v920
      %v931 = vrcp.pop %v923
      %v932 = vrcp.pop %v926
      %v933 = vrcp.pop %v929
      %v934 = vmul.f32 %v911, %v930
      %v935 = vmul.f32 %v913, %v931
      %v936 = vmul.f32 %v915, %v932
      %v937 = vmul.f32 %v917, %v933
      %v938 = vpack.c.bf16 %v935, %v934
      %v939 = vpack.c.bf16 %v937, %v936
      %942 = vrot.lane.b32.xlu0 %v647, 64
      %v943 = vpop.permute.xlu0 %942
      %944 = vrot.lane.b32.xlu0 %v648, 64
      %v945 = vpop.permute.xlu0 %944
      %v948 = vsel %vm711, %v938, 0
      %v951 = vsel %vm711, %v939, 0
      %v954 = vand.u32 %v945, %v768
      %956 = vmatprep.subr.bf16.mxu0 0
      %957 = vmatpush1.bf16.msra.mxu0 0
      %958 = vmatprep.subr.bf16.mxu0 0
      %959 = vmatpush1.bf16.msra.mxu0 0
      %960 = vmatprep.subr.bf16.mxu0 0
      %961 = vmatpush1.bf16.msra.mxu0 0
      %962 = vmatprep.subr.bf16.mxu0 0
      %963 = vmatpush1.bf16.msra.mxu0 0
      %964 = vmatprep.subr.bf16.mxu0 0
      %965 = vmatpush1.bf16.msra.mxu0 0
      %966 = vmatprep.subr.bf16.mxu0 0
      %967 = vmatpush1.bf16.msra.mxu0 0
      %968 = vmatprep.subr.bf16.mxu0 0
      %969 = vmatpush1.bf16.msra.mxu0 %v954
      %970 = vmatprep.subr.bf16.mxu0 0
      %971 = vmatpush1.bf16.msra.mxu0 %v943
      %972 = vmatprep.subr.bf16.mxu0 0
      %973 = vmatpush2.bf16.msra.mxu0 0
      %974 = vmatprep.subr.bf16.mxu0 0
      %975 = vmatpush2.bf16.msra.mxu0 0
      %976 = vmatprep.subr.bf16.mxu0 0
      %977 = vmatpush2.bf16.msra.mxu0 0
      %978 = vmatprep.subr.bf16.mxu0 0
      %979 = vmatpush2.bf16.msra.mxu0 0
      %980 = vmatprep.subr.bf16.mxu0 0
      %981 = vmatpush2.bf16.msra.mxu0 0
      %982 = vmatprep.subr.bf16.mxu0 0
      %983 = vmatpush2.bf16.msra.mxu0 0
      %984 = vmatprep.subr.bf16.mxu0 0
      %985 = vmatpush2.bf16.msra.mxu0 0
      %986 = vmatprep.subr.bf16.mxu0 0
      %987 = vmatpush2.bf16.msra.mxu0 0
      %988 = vmatprep.mubr.bf16.mxu0 0
      %989 = vmatmul.mubr.bf16.gmra.mxu0 %v948
      %v990 = vpop.f32.mrf.mxu0
      %v991 = vadd.f32 0.0, %v990
      %v992 = vpop.f32.mrf.mxu0
      %v993 = vpop.f32.mrf.mxu0
      %v994 = vadd.f32 0.0, %v993
      %v995 = vpop.f32.mrf.mxu0
      %996 = vmatprep.mubr.bf16.mxu0 0
      %997 = vmatmul.mubr.bf16.gmra.mxu0 %v951
      %v998 = vpop.f32.mrf.mxu0
      %v999 = vadd.f32 0.0, %v998
      %v1000 = vpop.f32.mrf.mxu0
      %v1001 = vpop.f32.mrf.mxu0
      %v1002 = vadd.f32 0.0, %v1001
      %v1003 = vpop.f32.mrf.mxu0
      %1004 = vdwg.mxu0
      %1009 = vrot.lane.b32.xlu0 %v991, 64
      %v1010 = vpop.permute.xlu0 %1009
      %1011 = vrot.lane.b32.xlu0 %v994, 64
      %v1012 = vpop.permute.xlu0 %1011
      %1013 = vrot.lane.b32.xlu0 %v999, 64
      %v1014 = vpop.permute.xlu0 %1013
      %1015 = vrot.lane.b32.xlu0 %v1002, 64
      %v1016 = vpop.permute.xlu0 %1015
      %v1021 = vsel %vm649, %v807, %v1010
      %v1022 = vsel %vm649, %v810, %v1012
      %v1023 = vsel %vm649, %v815, %v1014
      %v1024 = vsel %vm649, %v818, %v1016
      %v1025 = vld [vmem:[%s3] sm:$0xff]
      %v1026 = vld [vmem:[%s3 + $0x8] sm:$0xff]
      %v1027 = vld [vmem:[%s3 + $0x10] sm:$0xff]
      %v1028 = vld [vmem:[%s3 + $0x18] sm:$0xff]
      %v1029 = vld [vmem:[%s3 + $0x20] sm:$0xff]
      %v1030 = vld [vmem:[%s3 + $0x28] sm:$0xff]
      %v1031 = vld [vmem:[%s3 + $0x30] sm:$0xff]
      %v1032 = vld [vmem:[%s3 + $0x38] sm:$0xff]
      %v1033 = vld [vmem:[%s3 + $0x40] sm:$0xff]
      %v1034 = vld [vmem:[%s3 + $0x48] sm:$0xff]
      %v1035 = vld [vmem:[%s3 + $0x50] sm:$0xff]
      %v1036 = vld [vmem:[%s3 + $0x58] sm:$0xff]
      %v1037 = vld [vmem:[%s3 + $0x60] sm:$0xff]
      %v1038 = vld [vmem:[%s3 + $0x68] sm:$0xff]
      %v1039 = vld [vmem:[%s3 + $0x70] sm:$0xff]
      %v1040 = vld [vmem:[%s3 + $0x78] sm:$0xff]
      %v1041 = vld [vmem:[%s4] sm:$0x1]
      %v1042 = vpack.c.bf16 %v1022, %v1021
      %v1043 = vpack.c.bf16 %v1024, %v1023
      %v1044 = vpack.c.bf16 %v1026, %v1025
      %v1045 = vpack.c.bf16 %v1028, %v1027
      %v1046 = vpack.c.bf16 %v1030, %v1029
      %v1047 = vpack.c.bf16 %v1032, %v1031
      %v1048 = vpack.c.bf16 %v1034, %v1033
      %v1049 = vpack.c.bf16 %v1036, %v1035
      %v1050 = vpack.c.bf16 %v1038, %v1037
      %v1051 = vpack.c.bf16 %v1040, %v1039
      %v1053 = vlaneseq
      %v1054 = vshrl.u32 %v1053, 7
      %v1055 = vsub.s32 0, %v1054
      %v1056 = vrot.slane %v1041, %v1055
      %1058 = vmatprep.subr.bf16.mxu0 0
      %1059 = vmatpush1.bf16.msra.mxu0 %v1051
      %1060 = vmatprep.subr.bf16.mxu0 0
      %1061 = vmatpush1.bf16.msra.mxu0 %v1050
      %1062 = vmatprep.subr.bf16.mxu0 0
      %1063 = vmatpush1.bf16.msra.mxu0 %v1049
      %1064 = vmatprep.subr.bf16.mxu0 0
      %1065 = vmatpush1.bf16.msra.mxu0 %v1048
      %1066 = vmatprep.subr.bf16.mxu0 0
      %1067 = vmatpush1.bf16.msra.mxu0 %v1047
      %1068 = vmatprep.subr.bf16.mxu0 0
      %1069 = vmatpush1.bf16.msra.mxu0 %v1046
      %1070 = vmatprep.subr.bf16.mxu0 0
      %1071 = vmatpush1.bf16.msra.mxu0 %v1045
      %1072 = vmatprep.subr.bf16.mxu0 0
      %1073 = vmatpush1.bf16.msra.mxu0 %v1044
      %1074 = vmatprep.subr.bf16.mxu0 0
      %1075 = vmatpush2.bf16.msra.mxu0 0
      %1076 = vmatprep.subr.bf16.mxu0 0
      %1077 = vmatpush2.bf16.msra.mxu0 0
      %1078 = vmatprep.subr.bf16.mxu0 0
      %1079 = vmatpush2.bf16.msra.mxu0 0
      %1080 = vmatprep.subr.bf16.mxu0 0
      %1081 = vmatpush2.bf16.msra.mxu0 0
      %1082 = vmatprep.subr.bf16.mxu0 0
      %1083 = vmatpush2.bf16.msra.mxu0 0
      %1084 = vmatprep.subr.bf16.mxu0 0
      %1085 = vmatpush2.bf16.msra.mxu0 0
      %1086 = vmatprep.subr.bf16.mxu0 0
      %1087 = vmatpush2.bf16.msra.mxu0 0
      %1088 = vmatprep.subr.bf16.mxu0 0
      %1089 = vmatpush2.bf16.msra.mxu0 0
      %1090 = vmatprep.mubr.bf16.mxu0 0
      %1091 = vmatmul.mubr.bf16.gmra.mxu0 %v1042
      %v1092 = vpop.f32.mrf.mxu0
      %v1093 = vadd.f32 %v1056, %v1092
      %v1094 = vpop.f32.mrf.mxu0
      %v1095 = vpop.f32.mrf.mxu0
      %v1096 = vadd.f32 %v1056, %v1095
      %v1097 = vpop.f32.mrf.mxu0
      %1098 = vmatprep.mubr.bf16.mxu0 0
      %1099 = vmatmul.mubr.bf16.gmra.mxu0 %v1043
      %v1100 = vpop.f32.mrf.mxu0
      %v1101 = vadd.f32 %v1056, %v1100
      %v1102 = vpop.f32.mrf.mxu0
      %v1103 = vpop.f32.mrf.mxu0
      %v1104 = vadd.f32 %v1056, %v1103
      %v1105 = vpop.f32.mrf.mxu0
      %1106 = vdwg.mxu0
      %v1107 = vadd.f32 %v442, %v1093
      %v1108 = vadd.f32 %v443, %v1096
      %v1109 = vadd.f32 %v444, %v1101
      %v1110 = vadd.f32 %v445, %v1104
      %v1111 = vld [vmem:[%s5] sm:$0x1]
      %v1112 = vld [vmem:[%s6] sm:$0x1]
      %1113 = vadd.xlane.f32.xlu0 %v1107
      %v1114 = vpop.xlane.xlu0 %1113
      %1115 = vadd.xlane.f32.xlu0 %v1108
      %v1116 = vpop.xlane.xlu0 %1115
      %1117 = vadd.xlane.f32.xlu0 %v1109
      %v1118 = vpop.xlane.xlu0 %1117
      %v1119 = vsel %vm765, %v1110, 0.0
      %1120 = vadd.xlane.f32.xlu0 %v1119
      %v1121 = vpop.xlane.xlu0 %1120
      %v1122 = vrcp.pop 128.0
      %v1123 = vmul.f32 %v1114, %v1122
      %v1124 = vmul.f32 %v1116, %v1122
      %v1125 = vmul.f32 %v1118, %v1122
      %v1126 = vmul.f32 %v1121, %v1122
      %v1127 = vsub.f32 %v1107, %v1123
      %v1128 = vsub.f32 %v1108, %v1124
      %v1129 = vsub.f32 %v1109, %v1125
      %v1130 = vsub.f32 %v1110, %v1126
      %v1131 = vmul.f32 %v1127, %v1127
      %v1132 = vmul.f32 %v1128, %v1128
      %v1133 = vmul.f32 %v1129, %v1129
      %v1134 = vmul.f32 %v1130, %v1130
      %1135 = vadd.xlane.f32.xlu0 %v1131
      %v1136 = vpop.xlane.xlu0 %1135
      %1137 = vadd.xlane.f32.xlu0 %v1132
      %v1138 = vpop.xlane.xlu0 %1137
      %1139 = vadd.xlane.f32.xlu0 %v1133
      %v1140 = vpop.xlane.xlu0 %1139
      %v1141 = vsel %vm765, %v1134, 0.0
      %1142 = vadd.xlane.f32.xlu0 %v1141
      %v1143 = vpop.xlane.xlu0 %1142
      %v1144 = vmul.f32 %v1136, %v1122
      %v1145 = vmul.f32 %v1138, %v1122
      %v1146 = vmul.f32 %v1140, %v1122
      %v1147 = vmul.f32 %v1143, %v1122
      %v1148 = vadd.f32 %v1144, 1e-05
      %v1149 = vadd.f32 %v1145, 1e-05
      %v1150 = vadd.f32 %v1146, 1e-05
      %v1151 = vadd.f32 %v1147, 1e-05
      %v1152 = vrsqrt.pop %v1148
      %v1153 = vrsqrt.pop %v1149
      %v1154 = vrsqrt.pop %v1150
      %v1155 = vrsqrt.pop %v1151
      %v1156 = vmul.f32 %v1127, %v1152
      %v1157 = vmul.f32 %v1128, %v1153
      %v1158 = vmul.f32 %v1129, %v1154
      %v1159 = vmul.f32 %v1130, %v1155
      %v1161 = vlaneseq
      %v1162 = vshrl.u32 %v1161, 7
      %v1163 = vsub.s32 0, %v1162
      %v1164 = vrot.slane %v1111, %v1163
      %v1166 = vmul.f32 %v1156, %v1164
      %v1167 = vmul.f32 %v1157, %v1164
      %v1168 = vmul.f32 %v1158, %v1164
      %v1169 = vmul.f32 %v1159, %v1164
      %v1171 = vlaneseq
      %v1172 = vshrl.u32 %v1171, 7
      %v1173 = vsub.s32 0, %v1172
      %v1174 = vrot.slane %v1112, %v1173
      %v1176 = vadd.f32 %v1166, %v1174
      %v1177 = vadd.f32 %v1167, %v1174
      %v1178 = vadd.f32 %v1168, %v1174
      %v1179 = vadd.f32 %v1169, %v1174
      %v1180 = vld [vmem:[%s7] sm:$0xff]
      %v1181 = vld [vmem:[%s7 + $0x8] sm:$0xff]
      %v1182 = vld [vmem:[%s7 + $0x10] sm:$0xff]
      %v1183 = vld [vmem:[%s7 + $0x18] sm:$0xff]
      %v1184 = vld [vmem:[%s7 + $0x20] sm:$0xff]
      %v1185 = vld [vmem:[%s7 + $0x28] sm:$0xff]
      %v1186 = vld [vmem:[%s7 + $0x30] sm:$0xff]
      %v1187 = vld [vmem:[%s7 + $0x38] sm:$0xff]
      %v1188 = vld [vmem:[%s7 + $0x40] sm:$0xff]
      %v1189 = vld [vmem:[%s7 + $0x48] sm:$0xff]
      %v1190 = vld [vmem:[%s7 + $0x50] sm:$0xff]
      %v1191 = vld [vmem:[%s7 + $0x58] sm:$0xff]
      %v1192 = vld [vmem:[%s7 + $0x60] sm:$0xff]
      %v1193 = vld [vmem:[%s7 + $0x68] sm:$0xff]
      %v1194 = vld [vmem:[%s7 + $0x70] sm:$0xff]
      %v1195 = vld [vmem:[%s7 + $0x78] sm:$0xff]
      %v1196 = vld [vmem:[%s7 + $0x80] sm:$0xff]
      %v1197 = vld [vmem:[%s7 + $0x88] sm:$0xff]
      %v1198 = vld [vmem:[%s7 + $0x90] sm:$0xff]
      %v1199 = vld [vmem:[%s7 + $0x98] sm:$0xff]
      %v1200 = vld [vmem:[%s7 + $0xa0] sm:$0xff]
      %v1201 = vld [vmem:[%s7 + $0xa8] sm:$0xff]
      %v1202 = vld [vmem:[%s7 + $0xb0] sm:$0xff]
      %v1203 = vld [vmem:[%s7 + $0xb8] sm:$0xff]
      %v1204 = vld [vmem:[%s7 + $0xc0] sm:$0xff]
      %v1205 = vld [vmem:[%s7 + $0xc8] sm:$0xff]
      %v1206 = vld [vmem:[%s7 + $0xd0] sm:$0xff]
      %v1207 = vld [vmem:[%s7 + $0xd8] sm:$0xff]
      %v1208 = vld [vmem:[%s7 + $0xe0] sm:$0xff]
      %v1209 = vld [vmem:[%s7 + $0xe8] sm:$0xff]
      %v1210 = vld [vmem:[%s7 + $0xf0] sm:$0xff]
      %v1211 = vld [vmem:[%s7 + $0xf8] sm:$0xff]
      %v1212 = vld [vmem:[%s7 + $0x100] sm:$0xff]
      %v1213 = vld [vmem:[%s7 + $0x108] sm:$0xff]
      %v1214 = vld [vmem:[%s7 + $0x110] sm:$0xff]
      %v1215 = vld [vmem:[%s7 + $0x118] sm:$0xff]
      %v1216 = vld [vmem:[%s7 + $0x120] sm:$0xff]
      %v1217 = vld [vmem:[%s7 + $0x128] sm:$0xff]
      %v1218 = vld [vmem:[%s7 + $0x130] sm:$0xff]
      %v1219 = vld [vmem:[%s7 + $0x138] sm:$0xff]
      %v1220 = vld [vmem:[%s7 + $0x140] sm:$0xff]
      %v1221 = vld [vmem:[%s7 + $0x148] sm:$0xff]
      %v1222 = vld [vmem:[%s7 + $0x150] sm:$0xff]
      %v1223 = vld [vmem:[%s7 + $0x158] sm:$0xff]
      %v1224 = vld [vmem:[%s7 + $0x160] sm:$0xff]
      %v1225 = vld [vmem:[%s7 + $0x168] sm:$0xff]
      %v1226 = vld [vmem:[%s7 + $0x170] sm:$0xff]
      %v1227 = vld [vmem:[%s7 + $0x178] sm:$0xff]
      %v1228 = vld [vmem:[%s7 + $0x180] sm:$0xff]
      %v1229 = vld [vmem:[%s7 + $0x188] sm:$0xff]
      %v1230 = vld [vmem:[%s7 + $0x190] sm:$0xff]
      %v1231 = vld [vmem:[%s7 + $0x198] sm:$0xff]
      %v1232 = vld [vmem:[%s7 + $0x1a0] sm:$0xff]
      %v1233 = vld [vmem:[%s7 + $0x1a8] sm:$0xff]
      %v1234 = vld [vmem:[%s7 + $0x1b0] sm:$0xff]
      %v1235 = vld [vmem:[%s7 + $0x1b8] sm:$0xff]
      %v1236 = vld [vmem:[%s7 + $0x1c0] sm:$0xff]
      %v1237 = vld [vmem:[%s7 + $0x1c8] sm:$0xff]
      %v1238 = vld [vmem:[%s7 + $0x1d0] sm:$0xff]
      %v1239 = vld [vmem:[%s7 + $0x1d8] sm:$0xff]
      %v1240 = vld [vmem:[%s7 + $0x1e0] sm:$0xff]
      %v1241 = vld [vmem:[%s7 + $0x1e8] sm:$0xff]
      %v1242 = vld [vmem:[%s7 + $0x1f0] sm:$0xff]
      %v1243 = vld [vmem:[%s7 + $0x1f8] sm:$0xff]
      %v1244 = vld [vmem:[%s8] sm:$0xf]
      %v1245 = vpack.c.bf16 %v1177, %v1176
      %v1246 = vpack.c.bf16 %v1179, %v1178
      %v1247 = vpack.c.bf16 %v1184, %v1180
      %v1248 = vpack.c.bf16 %v1185, %v1181
      %v1249 = vpack.c.bf16 %v1186, %v1182
      %v1250 = vpack.c.bf16 %v1187, %v1183
      %v1251 = vpack.c.bf16 %v1192, %v1188
      %v1252 = vpack.c.bf16 %v1193, %v1189
      %v1253 = vpack.c.bf16 %v1194, %v1190
      %v1254 = vpack.c.bf16 %v1195, %v1191
      %v1255 = vpack.c.bf16 %v1200, %v1196
      %v1256 = vpack.c.bf16 %v1201, %v1197
      %v1257 = vpack.c.bf16 %v1202, %v1198
      %v1258 = vpack.c.bf16 %v1203, %v1199
      %v1259 = vpack.c.bf16 %v1208, %v1204
      %v1260 = vpack.c.bf16 %v1209, %v1205
      %v1261 = vpack.c.bf16 %v1210, %v1206
      %v1262 = vpack.c.bf16 %v1211, %v1207
      %v1263 = vpack.c.bf16 %v1216, %v1212
      %v1264 = vpack.c.bf16 %v1217, %v1213
      %v1265 = vpack.c.bf16 %v1218, %v1214
      %v1266 = vpack.c.bf16 %v1219, %v1215
      %v1267 = vpack.c.bf16 %v1224, %v1220
      %v1268 = vpack.c.bf16 %v1225, %v1221
      %v1269 = vpack.c.bf16 %v1226, %v1222
      %v1270 = vpack.c.bf16 %v1227, %v1223
      %v1271 = vpack.c.bf16 %v1232, %v1228
      %v1272 = vpack.c.bf16 %v1233, %v1229
      %v1273 = vpack.c.bf16 %v1234, %v1230
      %v1274 = vpack.c.bf16 %v1235, %v1231
      %v1275 = vpack.c.bf16 %v1240, %v1236
      %v1276 = vpack.c.bf16 %v1241, %v1237
      %v1277 = vpack.c.bf16 %v1242, %v1238
      %v1278 = vpack.c.bf16 %v1243, %v1239
      %v1280 = vlaneseq
      %v1281 = vshrl.u32 %v1280, 7
      %v1282 = vsub.s32 0, %v1281
      %v1283 = vrot.slane %v1244, %v1282
      %v1284 = vlaneseq
      %v1285 = vshrl.u32 %v1284, 7
      %v1286 = vsub.s32 1, %v1285
      %v1287 = vrot.slane %v1244, %v1286
      %v1288 = vlaneseq
      %v1289 = vshrl.u32 %v1288, 7
      %v1290 = vsub.s32 2, %v1289
      %v1291 = vrot.slane %v1244, %v1290
      %v1292 = vlaneseq
      %v1293 = vshrl.u32 %v1292, 7
      %v1294 = vsub.s32 3, %v1293
      %v1295 = vrot.slane %v1244, %v1294
      %1300 = vmatprep.subr.bf16.mxu0 %v1276
      %1301 = vmatpush1.bf16.msra.mxu0 %v1275
      %1302 = vmatprep.subr.bf16.mxu0 %v1272
      %1303 = vmatpush1.bf16.msra.mxu0 %v1271
      %1304 = vmatprep.subr.bf16.mxu0 %v1268
      %1305 = vmatpush1.bf16.msra.mxu0 %v1267
      %1306 = vmatprep.subr.bf16.mxu0 %v1264
      %1307 = vmatpush1.bf16.msra.mxu0 %v1263
      %1308 = vmatprep.subr.bf16.mxu0 %v1260
      %1309 = vmatpush1.bf16.msra.mxu0 %v1259
      %1310 = vmatprep.subr.bf16.mxu0 %v1256
      %1311 = vmatpush1.bf16.msra.mxu0 %v1255
      %1312 = vmatprep.subr.bf16.mxu0 %v1252
      %1313 = vmatpush1.bf16.msra.mxu0 %v1251
      %1314 = vmatprep.subr.bf16.mxu0 %v1248
      %1315 = vmatpush1.bf16.msra.mxu0 %v1247
      %1316 = vmatprep.subr.bf16.mxu0 0
      %1317 = vmatpush2.bf16.msra.mxu0 0
      %1318 = vmatprep.subr.bf16.mxu0 0
      %1319 = vmatpush2.bf16.msra.mxu0 0
      %1320 = vmatprep.subr.bf16.mxu0 0
      %1321 = vmatpush2.bf16.msra.mxu0 0
      %1322 = vmatprep.subr.bf16.mxu0 0
      %1323 = vmatpush2.bf16.msra.mxu0 0
      %1324 = vmatprep.subr.bf16.mxu0 0
      %1325 = vmatpush2.bf16.msra.mxu0 0
      %1326 = vmatprep.subr.bf16.mxu0 0
      %1327 = vmatpush2.bf16.msra.mxu0 0
      %1328 = vmatprep.subr.bf16.mxu0 0
      %1329 = vmatpush2.bf16.msra.mxu0 0
      %1330 = vmatprep.subr.bf16.mxu0 0
      %1331 = vmatpush2.bf16.msra.mxu0 0
      %1332 = vmatprep.mubr.bf16.mxu0 0
      %1333 = vmatmul.mubr.bf16.gmra.mxu0 %v1245
      %v1334 = vpop.f32.mrf.mxu0
      %v1335 = vadd.f32 %v1283, %v1334
      %v1336 = vpop.f32.mrf.mxu0
      %v1337 = vadd.f32 %v1287, %v1336
      %v1338 = vpop.f32.mrf.mxu0
      %v1339 = vadd.f32 %v1283, %v1338
      %v1340 = vpop.f32.mrf.mxu0
      %v1341 = vadd.f32 %v1287, %v1340
      %1342 = vmatprep.mubr.bf16.mxu0 0
      %1343 = vmatmul.mubr.bf16.gmra.mxu0 %v1246
      %v1344 = vpop.f32.mrf.mxu0
      %v1345 = vadd.f32 %v1283, %v1344
      %v1346 = vpop.f32.mrf.mxu0
      %v1347 = vadd.f32 %v1287, %v1346
      %v1348 = vpop.f32.mrf.mxu0
      %v1349 = vadd.f32 %v1283, %v1348
      %v1350 = vpop.f32.mrf.mxu0
      %v1351 = vadd.f32 %v1287, %v1350
      %1352 = vdwg.mxu0
      %1353 = vmatprep.subr.bf16.mxu0 %v1278
      %1354 = vmatpush1.bf16.msra.mxu0 %v1277
      %1355 = vmatprep.subr.bf16.mxu0 %v1274
      %1356 = vmatpush1.bf16.msra.mxu0 %v1273
      %1357 = vmatprep.subr.bf16.mxu0 %v1270
      %1358 = vmatpush1.bf16.msra.mxu0 %v1269
      %1359 = vmatprep.subr.bf16.mxu0 %v1266
      %1360 = vmatpush1.bf16.msra.mxu0 %v1265
      %1361 = vmatprep.subr.bf16.mxu0 %v1262
      %1362 = vmatpush1.bf16.msra.mxu0 %v1261
      %1363 = vmatprep.subr.bf16.mxu0 %v1258
      %1364 = vmatpush1.bf16.msra.mxu0 %v1257
      %1365 = vmatprep.subr.bf16.mxu0 %v1254
      %1366 = vmatpush1.bf16.msra.mxu0 %v1253
      %1367 = vmatprep.subr.bf16.mxu0 %v1250
      %1368 = vmatpush1.bf16.msra.mxu0 %v1249
      %1369 = vmatprep.subr.bf16.mxu0 0
      %1370 = vmatpush2.bf16.msra.mxu0 0
      %1371 = vmatprep.subr.bf16.mxu0 0
      %1372 = vmatpush2.bf16.msra.mxu0 0
      %1373 = vmatprep.subr.bf16.mxu0 0
      %1374 = vmatpush2.bf16.msra.mxu0 0
      %1375 = vmatprep.subr.bf16.mxu0 0
      %1376 = vmatpush2.bf16.msra.mxu0 0
      %1377 = vmatprep.subr.bf16.mxu0 0
      %1378 = vmatpush2.bf16.msra.mxu0 0
      %1379 = vmatprep.subr.bf16.mxu0 0
      %1380 = vmatpush2.bf16.msra.mxu0 0
      %1381 = vmatprep.subr.bf16.mxu0 0
      %1382 = vmatpush2.bf16.msra.mxu0 0
      %1383 = vmatprep.subr.bf16.mxu0 0
      %1384 = vmatpush2.bf16.msra.mxu0 0
      %1385 = vmatprep.mubr.bf16.mxu0 0
      %1386 = vmatmul.mubr.bf16.gmra.mxu0 %v1245
      %v1387 = vpop.f32.mrf.mxu0
      %v1388 = vadd.f32 %v1291, %v1387
      %v1389 = vpop.f32.mrf.mxu0
      %v1390 = vadd.f32 %v1295, %v1389
      %v1391 = vpop.f32.mrf.mxu0
      %v1392 = vadd.f32 %v1291, %v1391
      %v1393 = vpop.f32.mrf.mxu0
      %v1394 = vadd.f32 %v1295, %v1393
      %1395 = vmatprep.mubr.bf16.mxu0 0
      %1396 = vmatmul.mubr.bf16.gmra.mxu0 %v1246
      %v1397 = vpop.f32.mrf.mxu0
      %v1398 = vadd.f32 %v1291, %v1397
      %v1399 = vpop.f32.mrf.mxu0
      %v1400 = vadd.f32 %v1295, %v1399
      %v1401 = vpop.f32.mrf.mxu0
      %v1402 = vadd.f32 %v1291, %v1401
      %v1403 = vpop.f32.mrf.mxu0
      %v1404 = vadd.f32 %v1295, %v1403
      %1405 = vdwg.mxu0
      %v1406 = vmul.f32 %v1335, %v1335
      %v1407 = vmul.f32 %v1337, %v1337
      %v1408 = vmul.f32 %v1388, %v1388
      %v1409 = vmul.f32 %v1390, %v1390
      %v1410 = vmul.f32 %v1339, %v1339
      %v1411 = vmul.f32 %v1341, %v1341
      %v1412 = vmul.f32 %v1392, %v1392
      %v1413 = vmul.f32 %v1394, %v1394
      %v1414 = vmul.f32 %v1345, %v1345
      %v1415 = vmul.f32 %v1347, %v1347
      %v1416 = vmul.f32 %v1398, %v1398
      %v1417 = vmul.f32 %v1400, %v1400
      %v1418 = vmul.f32 %v1349, %v1349
      %v1419 = vmul.f32 %v1351, %v1351
      %v1420 = vmul.f32 %v1402, %v1402
      %v1421 = vmul.f32 %v1404, %v1404
      %v1422 = vmul.f32 %v1335, %v1406
      %v1423 = vmul.f32 %v1337, %v1407
      %v1424 = vmul.f32 %v1388, %v1408
      %v1425 = vmul.f32 %v1390, %v1409
      %v1426 = vmul.f32 %v1339, %v1410
      %v1427 = vmul.f32 %v1341, %v1411
      %v1428 = vmul.f32 %v1392, %v1412
      %v1429 = vmul.f32 %v1394, %v1413
      %v1430 = vmul.f32 %v1345, %v1414
      %v1431 = vmul.f32 %v1347, %v1415
      %v1432 = vmul.f32 %v1398, %v1416
      %v1433 = vmul.f32 %v1400, %v1417
      %v1434 = vmul.f32 %v1349, %v1418
      %v1435 = vmul.f32 %v1351, %v1419
      %v1436 = vmul.f32 %v1402, %v1420
      %v1437 = vmul.f32 %v1404, %v1421
      %v1438 = vmul.f32 %v1422, 0.044715
      %v1439 = vmul.f32 %v1423, 0.044715
      %v1440 = vmul.f32 %v1424, 0.044715
      %v1441 = vmul.f32 %v1425, 0.044715
      %v1442 = vmul.f32 %v1426, 0.044715
      %v1443 = vmul.f32 %v1427, 0.044715
      %v1444 = vmul.f32 %v1428, 0.044715
      %v1445 = vmul.f32 %v1429, 0.044715
      %v1446 = vmul.f32 %v1430, 0.044715
      %v1447 = vmul.f32 %v1431, 0.044715
      %v1448 = vmul.f32 %v1432, 0.044715
      %v1449 = vmul.f32 %v1433, 0.044715
      %v1450 = vmul.f32 %v1434, 0.044715
      %v1451 = vmul.f32 %v1435, 0.044715
      %v1452 = vmul.f32 %v1436, 0.044715
      %v1453 = vmul.f32 %v1437, 0.044715
      %v1454 = vadd.f32 %v1335, %v1438
      %v1455 = vadd.f32 %v1337, %v1439
      %v1456 = vadd.f32 %v1388, %v1440
      %v1457 = vadd.f32 %v1390, %v1441
      %v1458 = vadd.f32 %v1339, %v1442
      %v1459 = vadd.f32 %v1341, %v1443
      %v1460 = vadd.f32 %v1392, %v1444
      %v1461 = vadd.f32 %v1394, %v1445
      %v1462 = vadd.f32 %v1345, %v1446
      %v1463 = vadd.f32 %v1347, %v1447
      %v1464 = vadd.f32 %v1398, %v1448
      %v1465 = vadd.f32 %v1400, %v1449
      %v1466 = vadd.f32 %v1349, %v1450
      %v1467 = vadd.f32 %v1351, %v1451
      %v1468 = vadd.f32 %v1402, %v1452
      %v1469 = vadd.f32 %v1404, %v1453
      %v1470 = vmul.f32 %v1454, 0.7978846
      %v1471 = vmul.f32 %v1455, 0.7978846
      %v1472 = vmul.f32 %v1456, 0.7978846
      %v1473 = vmul.f32 %v1457, 0.7978846
      %v1474 = vmul.f32 %v1458, 0.7978846
      %v1475 = vmul.f32 %v1459, 0.7978846
      %v1476 = vmul.f32 %v1460, 0.7978846
      %v1477 = vmul.f32 %v1461, 0.7978846
      %v1478 = vmul.f32 %v1462, 0.7978846
      %v1479 = vmul.f32 %v1463, 0.7978846
      %v1480 = vmul.f32 %v1464, 0.7978846
      %v1481 = vmul.f32 %v1465, 0.7978846
      %v1482 = vmul.f32 %v1466, 0.7978846
      %v1483 = vmul.f32 %v1467, 0.7978846
      %v1484 = vmul.f32 %v1468, 0.7978846
      %v1485 = vmul.f32 %v1469, 0.7978846
      %v1486 = vtanh.pop %v1470
      %v1487 = vtanh.pop %v1471
      %v1488 = vtanh.pop %v1472
      %v1489 = vtanh.pop %v1473
      %v1490 = vtanh.pop %v1474
      %v1491 = vtanh.pop %v1475
      %v1492 = vtanh.pop %v1476
      %v1493 = vtanh.pop %v1477
      %v1494 = vtanh.pop %v1478
      %v1495 = vtanh.pop %v1479
      %v1496 = vtanh.pop %v1480
      %v1497 = vtanh.pop %v1481
      %v1498 = vtanh.pop %v1482
      %v1499 = vtanh.pop %v1483
      %v1500 = vtanh.pop %v1484
      %v1501 = vtanh.pop %v1485
      %v1502 = vadd.f32 %v1486, 1.0
      %v1503 = vadd.f32 %v1487, 1.0
      %v1504 = vadd.f32 %v1488, 1.0
      %v1505 = vadd.f32 %v1489, 1.0
      %v1506 = vadd.f32 %v1490, 1.0
      %v1507 = vadd.f32 %v1491, 1.0
      %v1508 = vadd.f32 %v1492, 1.0
      %v1509 = vadd.f32 %v1493, 1.0
      %v1510 = vadd.f32 %v1494, 1.0
      %v1511 = vadd.f32 %v1495, 1.0
      %v1512 = vadd.f32 %v1496, 1.0
      %v1513 = vadd.f32 %v1497, 1.0
      %v1514 = vadd.f32 %v1498, 1.0
      %v1515 = vadd.f32 %v1499, 1.0
      %v1516 = vadd.f32 %v1500, 1.0
      %v1517 = vadd.f32 %v1501, 1.0
      %v1518 = vmul.f32 %v1502, 0.5
      %v1519 = vmul.f32 %v1503, 0.5
      %v1520 = vmul.f32 %v1504, 0.5
      %v1521 = vmul.f32 %v1505, 0.5
      %v1522 = vmul.f32 %v1506, 0.5
      %v1523 = vmul.f32 %v1507, 0.5
      %v1524 = vmul.f32 %v1508, 0.5
      %v1525 = vmul.f32 %v1509, 0.5
      %v1526 = vmul.f32 %v1510, 0.5
      %v1527 = vmul.f32 %v1511, 0.5
      %v1528 = vmul.f32 %v1512, 0.5
      %v1529 = vmul.f32 %v1513, 0.5
      %v1530 = vmul.f32 %v1514, 0.5
      %v1531 = vmul.f32 %v1515, 0.5
      %v1532 = vmul.f32 %v1516, 0.5
      %v1533 = vmul.f32 %v1517, 0.5
      %v1534 = vmul.f32 %v1335, %v1518
      %v1535 = vmul.f32 %v1337, %v1519
      %v1536 = vmul.f32 %v1388, %v1520
      %v1537 = vmul.f32 %v1390, %v1521
      %v1538 = vmul.f32 %v1339, %v1522
      %v1539 = vmul.f32 %v1341, %v1523
      %v1540 = vmul.f32 %v1392, %v1524
      %v1541 = vmul.f32 %v1394, %v1525
      %v1542 = vmul.f32 %v1345, %v1526
      %v1543 = vmul.f32 %v1347, %v1527
      %v1544 = vmul.f32 %v1398, %v1528
      %v1545 = vmul.f32 %v1400, %v1529
      %v1546 = vmul.f32 %v1349, %v1530
      %v1547 = vmul.f32 %v1351, %v1531
      %v1548 = vmul.f32 %v1402, %v1532
      %v1549 = vmul.f32 %v1404, %v1533
      %v1550 = vld [vmem:[%s9] sm:$0xff]
      %v1551 = vld [vmem:[%s9 + $0x8] sm:$0xff]
      %v1552 = vld [vmem:[%s9 + $0x10] sm:$0xff]
      %v1553 = vld [vmem:[%s9 + $0x18] sm:$0xff]
      %v1554 = vld [vmem:[%s9 + $0x20] sm:$0xff]
      %v1555 = vld [vmem:[%s9 + $0x28] sm:$0xff]
      %v1556 = vld [vmem:[%s9 + $0x30] sm:$0xff]
      %v1557 = vld [vmem:[%s9 + $0x38] sm:$0xff]
      %v1558 = vld [vmem:[%s9 + $0x40] sm:$0xff]
      %v1559 = vld [vmem:[%s9 + $0x48] sm:$0xff]
      %v1560 = vld [vmem:[%s9 + $0x50] sm:$0xff]
      %v1561 = vld [vmem:[%s9 + $0x58] sm:$0xff]
      %v1562 = vld [vmem:[%s9 + $0x60] sm:$0xff]
      %v1563 = vld [vmem:[%s9 + $0x68] sm:$0xff]
      %v1564 = vld [vmem:[%s9 + $0x70] sm:$0xff]
      %v1565 = vld [vmem:[%s9 + $0x78] sm:$0xff]
      %v1566 = vld [vmem:[%s9 + $0x80] sm:$0xff]
      %v1567 = vld [vmem:[%s9 + $0x88] sm:$0xff]
      %v1568 = vld [vmem:[%s9 + $0x90] sm:$0xff]
      %v1569 = vld [vmem:[%s9 + $0x98] sm:$0xff]
      %v1570 = vld [vmem:[%s9 + $0xa0] sm:$0xff]
      %v1571 = vld [vmem:[%s9 + $0xa8] sm:$0xff]
      %v1572 = vld [vmem:[%s9 + $0xb0] sm:$0xff]
      %v1573 = vld [vmem:[%s9 + $0xb8] sm:$0xff]
      %v1574 = vld [vmem:[%s9 + $0xc0] sm:$0xff]
      %v1575 = vld [vmem:[%s9 + $0xc8] sm:$0xff]
      %v1576 = vld [vmem:[%s9 + $0xd0] sm:$0xff]
      %v1577 = vld [vmem:[%s9 + $0xd8] sm:$0xff]
      %v1578 = vld [vmem:[%s9 + $0xe0] sm:$0xff]
      %v1579 = vld [vmem:[%s9 + $0xe8] sm:$0xff]
      %v1580 = vld [vmem:[%s9 + $0xf0] sm:$0xff]
      %v1581 = vld [vmem:[%s9 + $0xf8] sm:$0xff]
      %v1582 = vld [vmem:[%s9 + $0x100] sm:$0xff]
      %v1583 = vld [vmem:[%s9 + $0x108] sm:$0xff]
      %v1584 = vld [vmem:[%s9 + $0x110] sm:$0xff]
      %v1585 = vld [vmem:[%s9 + $0x118] sm:$0xff]
      %v1586 = vld [vmem:[%s9 + $0x120] sm:$0xff]
      %v1587 = vld [vmem:[%s9 + $0x128] sm:$0xff]
      %v1588 = vld [vmem:[%s9 + $0x130] sm:$0xff]
      %v1589 = vld [vmem:[%s9 + $0x138] sm:$0xff]
      %v1590 = vld [vmem:[%s9 + $0x140] sm:$0xff]
      %v1591 = vld [vmem:[%s9 + $0x148] sm:$0xff]
      %v1592 = vld [vmem:[%s9 + $0x150] sm:$0xff]
      %v1593 = vld [vmem:[%s9 + $0x158] sm:$0xff]
      %v1594 = vld [vmem:[%s9 + $0x160] sm:$0xff]
      %v1595 = vld [vmem:[%s9 + $0x168] sm:$0xff]
      %v1596 = vld [vmem:[%s9 + $0x170] sm:$0xff]
      %v1597 = vld [vmem:[%s9 + $0x178] sm:$0xff]
      %v1598 = vld [vmem:[%s9 + $0x180] sm:$0xff]
      %v1599 = vld [vmem:[%s9 + $0x188] sm:$0xff]
      %v1600 = vld [vmem:[%s9 + $0x190] sm:$0xff]
      %v1601 = vld [vmem:[%s9 + $0x198] sm:$0xff]
      %v1602 = vld [vmem:[%s9 + $0x1a0] sm:$0xff]
      %v1603 = vld [vmem:[%s9 + $0x1a8] sm:$0xff]
      %v1604 = vld [vmem:[%s9 + $0x1b0] sm:$0xff]
      %v1605 = vld [vmem:[%s9 + $0x1b8] sm:$0xff]
      %v1606 = vld [vmem:[%s9 + $0x1c0] sm:$0xff]
      %v1607 = vld [vmem:[%s9 + $0x1c8] sm:$0xff]
      %v1608 = vld [vmem:[%s9 + $0x1d0] sm:$0xff]
      %v1609 = vld [vmem:[%s9 + $0x1d8] sm:$0xff]
      %v1610 = vld [vmem:[%s9 + $0x1e0] sm:$0xff]
      %v1611 = vld [vmem:[%s9 + $0x1e8] sm:$0xff]
      %v1612 = vld [vmem:[%s9 + $0x1f0] sm:$0xff]
      %v1613 = vld [vmem:[%s9 + $0x1f8] sm:$0xff]
      %v1614 = vld [vmem:[%s10] sm:$0x1]
      %v1615 = vpack.c.bf16 %v1538, %v1534
      %v1616 = vpack.c.bf16 %v1539, %v1535
      %v1617 = vpack.c.bf16 %v1540, %v1536
      %v1618 = vpack.c.bf16 %v1541, %v1537
      %v1619 = vpack.c.bf16 %v1546, %v1542
      %v1620 = vpack.c.bf16 %v1547, %v1543
      %v1621 = vpack.c.bf16 %v1548, %v1544
      %v1622 = vpack.c.bf16 %v1549, %v1545
      %v1623 = vpack.c.bf16 %v1551, %v1550
      %v1624 = vpack.c.bf16 %v1553, %v1552
      %v1625 = vpack.c.bf16 %v1555, %v1554
      %v1626 = vpack.c.bf16 %v1557, %v1556
      %v1627 = vpack.c.bf16 %v1559, %v1558
      %v1628 = vpack.c.bf16 %v1561, %v1560
      %v1629 = vpack.c.bf16 %v1563, %v1562
      %v1630 = vpack.c.bf16 %v1565, %v1564
      %v1631 = vpack.c.bf16 %v1567, %v1566
      %v1632 = vpack.c.bf16 %v1569, %v1568
      %v1633 = vpack.c.bf16 %v1571, %v1570
      %v1634 = vpack.c.bf16 %v1573, %v1572
      %v1635 = vpack.c.bf16 %v1575, %v1574
      %v1636 = vpack.c.bf16 %v1577, %v1576
      %v1637 = vpack.c.bf16 %v1579, %v1578
      %v1638 = vpack.c.bf16 %v1581, %v1580
      %v1639 = vpack.c.bf16 %v1583, %v1582
      %v1640 = vpack.c.bf16 %v1585, %v1584
      %v1641 = vpack.c.bf16 %v1587, %v1586
      %v1642 = vpack.c.bf16 %v1589, %v1588
      %v1643 = vpack.c.bf16 %v1591, %v1590
      %v1644 = vpack.c.bf16 %v1593, %v1592
      %v1645 = vpack.c.bf16 %v1595, %v1594
      %v1646 = vpack.c.bf16 %v1597, %v1596
      %v1647 = vpack.c.bf16 %v1599, %v1598
      %v1648 = vpack.c.bf16 %v1601, %v1600
      %v1649 = vpack.c.bf16 %v1603, %v1602
      %v1650 = vpack.c.bf16 %v1605, %v1604
      %v1651 = vpack.c.bf16 %v1607, %v1606
      %v1652 = vpack.c.bf16 %v1609, %v1608
      %v1653 = vpack.c.bf16 %v1611, %v1610
      %v1654 = vpack.c.bf16 %v1613, %v1612
      %v1656 = vlaneseq
      %v1657 = vshrl.u32 %v1656, 7
      %v1658 = vsub.s32 0, %v1657
      %v1659 = vrot.slane %v1614, %v1658
      %1661 = vmatprep.subr.bf16.mxu0 0
      %1662 = vmatpush1.bf16.msra.mxu0 %v1630
      %1663 = vmatprep.subr.bf16.mxu0 0
      %1664 = vmatpush1.bf16.msra.mxu0 %v1629
      %1665 = vmatprep.subr.bf16.mxu0 0
      %1666 = vmatpush1.bf16.msra.mxu0 %v1628
      %1667 = vmatprep.subr.bf16.mxu0 0
      %1668 = vmatpush1.bf16.msra.mxu0 %v1627
      %1669 = vmatprep.subr.bf16.mxu0 0
      %1670 = vmatpush1.bf16.msra.mxu0 %v1626
      %1671 = vmatprep.subr.bf16.mxu0 0
      %1672 = vmatpush1.bf16.msra.mxu0 %v1625
      %1673 = vmatprep.subr.bf16.mxu0 0
      %1674 = vmatpush1.bf16.msra.mxu0 %v1624
      %1675 = vmatprep.subr.bf16.mxu0 0
      %1676 = vmatpush1.bf16.msra.mxu0 %v1623
      %1677 = vmatprep.subr.bf16.mxu0 0
      %1678 = vmatpush2.bf16.msra.mxu0 %v1638
      %1679 = vmatprep.subr.bf16.mxu0 0
      %1680 = vmatpush2.bf16.msra.mxu0 %v1637
      %1681 = vmatprep.subr.bf16.mxu0 0
      %1682 = vmatpush2.bf16.msra.mxu0 %v1636
      %1683 = vmatprep.subr.bf16.mxu0 0
      %1684 = vmatpush2.bf16.msra.mxu0 %v1635
      %1685 = vmatprep.subr.bf16.mxu0 0
      %1686 = vmatpush2.bf16.msra.mxu0 %v1634
      %1687 = vmatprep.subr.bf16.mxu0 0
      %1688 = vmatpush2.bf16.msra.mxu0 %v1633
      %1689 = vmatprep.subr.bf16.mxu0 0
      %1690 = vmatpush2.bf16.msra.mxu0 %v1632
      %1691 = vmatprep.subr.bf16.mxu0 0
      %1692 = vmatpush2.bf16.msra.mxu0 %v1631
      %1693 = vmatprep.mubr.bf16.mxu0 %v1616
      %1694 = vmatmul.mubr.bf16.gmra.mxu0 %v1615
      %v1695 = vpop.f32.mrf.mxu0
      %v1696 = vadd.f32 %v1659, %v1695
      %v1697 = vpop.f32.mrf.mxu0
      %v1698 = vpop.f32.mrf.mxu0
      %v1699 = vadd.f32 %v1659, %v1698
      %v1700 = vpop.f32.mrf.mxu0
      %1701 = vmatprep.mubr.bf16.mxu0 %v1620
      %1702 = vmatmul.mubr.bf16.gmra.mxu0 %v1619
      %v1703 = vpop.f32.mrf.mxu0
      %v1704 = vadd.f32 %v1659, %v1703
      %v1705 = vpop.f32.mrf.mxu0
      %v1706 = vpop.f32.mrf.mxu0
      %v1707 = vadd.f32 %v1659, %v1706
      %v1708 = vpop.f32.mrf.mxu0
      %1709 = vdwg.mxu0
      %1710 = vmatprep.subr.bf16.mxu0 0
      %1711 = vmatpush1.bf16.msra.mxu0 %v1646
      %1712 = vmatprep.subr.bf16.mxu0 0
      %1713 = vmatpush1.bf16.msra.mxu0 %v1645
      %1714 = vmatprep.subr.bf16.mxu0 0
      %1715 = vmatpush1.bf16.msra.mxu0 %v1644
      %1716 = vmatprep.subr.bf16.mxu0 0
      %1717 = vmatpush1.bf16.msra.mxu0 %v1643
      %1718 = vmatprep.subr.bf16.mxu0 0
      %1719 = vmatpush1.bf16.msra.mxu0 %v1642
      %1720 = vmatprep.subr.bf16.mxu0 0
      %1721 = vmatpush1.bf16.msra.mxu0 %v1641
      %1722 = vmatprep.subr.bf16.mxu0 0
      %1723 = vmatpush1.bf16.msra.mxu0 %v1640
      %1724 = vmatprep.subr.bf16.mxu0 0
      %1725 = vmatpush1.bf16.msra.mxu0 %v1639
      %1726 = vmatprep.subr.bf16.mxu0 0
      %1727 = vmatpush2.bf16.msra.mxu0 %v1654
      %1728 = vmatprep.subr.bf16.mxu0 0
      %1729 = vmatpush2.bf16.msra.mxu0 %v1653
      %1730 = vmatprep.subr.bf16.mxu0 0
      %1731 = vmatpush2.bf16.msra.mxu0 %v1652
      %1732 = vmatprep.subr.bf16.mxu0 0
      %1733 = vmatpush2.bf16.msra.mxu0 %v1651
      %1734 = vmatprep.subr.bf16.mxu0 0
      %1735 = vmatpush2.bf16.msra.mxu0 %v1650
      %1736 = vmatprep.subr.bf16.mxu0 0
      %1737 = vmatpush2.bf16.msra.mxu0 %v1649
      %1738 = vmatprep.subr.bf16.mxu0 0
      %1739 = vmatpush2.bf16.msra.mxu0 %v1648
      %1740 = vmatprep.subr.bf16.mxu0 0
      %1741 = vmatpush2.bf16.msra.mxu0 %v1647
      %1742 = vmatprep.mubr.bf16.mxu0 %v1618
      %1743 = vmatmul.mubr.bf16.gmra.mxu0 %v1617
      %v1744 = vpop.f32.mrf.mxu0
      %v1745 = vadd.f32 %v1696, %v1744
      %v1746 = vpop.f32.mrf.mxu0
      %v1747 = vpop.f32.mrf.mxu0
      %v1748 = vadd.f32 %v1699, %v1747
      %v1749 = vpop.f32.mrf.mxu0
      %1750 = vmatprep.mubr.bf16.mxu0 %v1622
      %1751 = vmatmul.mubr.bf16.gmra.mxu0 %v1621
      %v1752 = vpop.f32.mrf.mxu0
      %v1753 = vadd.f32 %v1704, %v1752
      %v1754 = vpop.f32.mrf.mxu0
      %v1755 = vpop.f32.mrf.mxu0
      %v1756 = vadd.f32 %v1707, %v1755
      %v1757 = vpop.f32.mrf.mxu0
      %1758 = vdwg.mxu0
      %v1759 = vadd.f32 %v1176, %v1745
      %v1760 = vadd.f32 %v1177, %v1748
      %v1761 = vadd.f32 %v1178, %v1753
      %v1762 = vadd.f32 %v1179, %v1756
      %v1763 = vld [vmem:[%s11] sm:$0x1]
      %v1764 = vld [vmem:[%s12] sm:$0x1]
      %1765 = vadd.xlane.f32.xlu0 %v1759
      %v1766 = vpop.xlane.xlu0 %1765
      %1767 = vadd.xlane.f32.xlu0 %v1760
      %v1768 = vpop.xlane.xlu0 %1767
      %1769 = vadd.xlane.f32.xlu0 %v1761
      %v1770 = vpop.xlane.xlu0 %1769
      %v1771 = vsel %vm765, %v1762, 0.0
      %1772 = vadd.xlane.f32.xlu0 %v1771
      %v1773 = vpop.xlane.xlu0 %1772
      %v1774 = vmul.f32 %v1766, %v1122
      %v1775 = vmul.f32 %v1768, %v1122
      %v1776 = vmul.f32 %v1770, %v1122
      %v1777 = vmul.f32 %v1773, %v1122
      %v1778 = vsub.f32 %v1759, %v1774
      %v1779 = vsub.f32 %v1760, %v1775
      %v1780 = vsub.f32 %v1761, %v1776
      %v1781 = vsub.f32 %v1762, %v1777
      %v1782 = vmul.f32 %v1778, %v1778
      %v1783 = vmul.f32 %v1779, %v1779
      %v1784 = vmul.f32 %v1780, %v1780
      %v1785 = vmul.f32 %v1781, %v1781
      %1786 = vadd.xlane.f32.xlu0 %v1782
      %v1787 = vpop.xlane.xlu0 %1786
      %1788 = vadd.xlane.f32.xlu0 %v1783
      %v1789 = vpop.xlane.xlu0 %1788
      %1790 = vadd.xlane.f32.xlu0 %v1784
      %v1791 = vpop.xlane.xlu0 %1790
      %v1792 = vsel %vm765, %v1785, 0.0
      %1793 = vadd.xlane.f32.xlu0 %v1792
      %v1794 = vpop.xlane.xlu0 %1793
      %v1795 = vmul.f32 %v1787, %v1122
      %v1796 = vmul.f32 %v1789, %v1122
      %v1797 = vmul.f32 %v1791, %v1122
      %v1798 = vmul.f32 %v1794, %v1122
      %v1799 = vadd.f32 %v1795, 1e-05
      %v1800 = vadd.f32 %v1796, 1e-05
      %v1801 = vadd.f32 %v1797, 1e-05
      %v1802 = vadd.f32 %v1798, 1e-05
      %v1803 = vrsqrt.pop %v1799
      %v1804 = vrsqrt.pop %v1800
      %v1805 = vrsqrt.pop %v1801
      %v1806 = vrsqrt.pop %v1802
      %v1807 = vmul.f32 %v1778, %v1803
      %v1808 = vmul.f32 %v1779, %v1804
      %v1809 = vmul.f32 %v1780, %v1805
      %v1810 = vmul.f32 %v1781, %v1806
      %v1812 = vlaneseq
      %v1813 = vshrl.u32 %v1812, 7
      %v1814 = vsub.s32 0, %v1813
      %v1815 = vrot.slane %v1763, %v1814
      %v1817 = vmul.f32 %v1807, %v1815
      %v1818 = vmul.f32 %v1808, %v1815
      %v1819 = vmul.f32 %v1809, %v1815
      %v1820 = vmul.f32 %v1810, %v1815
      %v1822 = vlaneseq
      %v1823 = vshrl.u32 %v1822, 7
      %v1824 = vsub.s32 0, %v1823
      %v1825 = vrot.slane %v1764, %v1824
      %v1827 = vadd.f32 %v1817, %v1825
      %v1828 = vadd.f32 %v1818, %v1825
      %v1829 = vadd.f32 %v1819, %v1825
      %v1830 = vadd.f32 %v1820, %v1825
      %1831 = vst [vmem:[%s440] sm:$0xff] %v1827
      %1832 = vst [vmem:[%s440 + $0x8] sm:$0xff] %v1828
      %1833 = vst [vmem:[%s440 + $0x10] sm:$0xff] %v1829
      %1834 = vst [vmem:[%s440 + $0x18] sm:$0x7f] %v1830
      %p1835 = scmp.lt.s32.totalorder %s24, 1
      %s1836 = scalar_select %p1835, %s24, 1
      %s1837 = smul.addr %s1836, 4
      %s1838 = smul.addr %s1837, 8
      %s1839 = scalar_lea.vmem %s13, %s1838
      // Predicated region
      $region73: #{wav2vec2_forward.9} parent=71 // pred_check
        %p1840 = pneg %p320
      $region74: #{wav2vec2_forward.9} parent=71 // pred_check_branch
        %1842 = sbr.rel (%p1840) target = $region76
      $region75: #{wav2vec2_forward.9} parent=71 // pred_region
        _
      $region76: #{wav2vec2_forward.9} parent=71 // pred_fallthru
        _
    $region72: #{wav2vec2_forward.9} parent=5 // pred_fallthru
      _
    %p1843 = scmp.le.s32.totalorder 2, %s19
    // Predicated region
    $region77: #{wav2vec2_forward.9} parent=5 // pred_check
      %p1844 = pneg %p1843
    $region78: #{wav2vec2_forward.9} parent=5 // pred_check_branch
      %1846 = sbr.rel (%p1844) target = $region80
    $region79: #{wav2vec2_forward.9} parent=5 // pred_region
      %s1847 = ssub.s32 %s19, 2
      // Predicated region
      $region81: #{wav2vec2_forward.9} parent=79 // pred_check
        %p1848 = pneg %p326
      $region82: #{wav2vec2_forward.9} parent=79 // pred_check_branch
        %1850 = sbr.rel (%p1848) target = $region84
      $region83: #{wav2vec2_forward.9} parent=79 // pred_region
        %p1851 = scmp.lt.s32.totalorder %s25, 1
        %s1852 = scalar_select %p1851, %s25, 1
        %s1853 = smul.addr %s1852, 4
        %s1854 = smul.addr %s1853, 8
        %s1855 = scalar_lea.vmem %s13, %s1854
      $region84: #{wav2vec2_forward.9} parent=79 // pred_fallthru
        _
    $region80: #{wav2vec2_forward.9} parent=5 // pred_fallthru
      _
  $region6: #{wav2vec2_forward.9} parent=0 // loop_footer
    %s23 = sadd.s32 1, %s19
  $region7: #{wav2vec2_forward.9} parent=0 // loop_footer_branch
    %18 = sbr.rel target = $region3
  $region8: #{wav2vec2_forward.9} parent=0 // loop_exit
    _

</llo_original>
